<compile_context>
chip_gen: v7x
topology: tpu7x:2x2x1
jax: 0.10.0
libtpu: 0.0.40
codegen_flags: <defaults>
</compile_context>

<pallas_src>
import functools
import math

import jax
import jax.numpy as jnp
from jax import lax
from jax.experimental import pallas as pl
from jax.experimental.pallas import tpu as pltpu


_MSE_LANES = 1024      # lane-dense MSE layout (multiple of 128)
_MSE_MAX_ROWS = 512    # rows of the [., 1024] MSE view per grid step (~85% HBM roofline)
_Z_MAX_ROWS = 2048     # rows of z / gamma per grid step


def _detect_num_cores():
    """2-wide 'parallel' leading grid axis only on multi-TensorCore chips (v7x);
    on single-TC generations it would just double grid-step overhead."""
    try:
        info = pltpu.get_tpu_info()
        for attr in ("num_cores", "core_count", "tensorcore_count", "num_tensorcores"):
            n = getattr(info, attr, None)
            if isinstance(n, int) and 1 <= n <= 8:
                return n
    except Exception:
        pass
    try:
        kind = jax.devices()[0].device_kind.lower()
        if "v7" in kind or "7x" in kind:
            return 2
    except Exception:
        pass
    return 1


NUM_CORES = _detect_num_cores()
_DIM_SEMANTICS = ("parallel", "arbitrary")


def _cdiv(a, b):
    return -(-a // b)


def _round_up(a, b):
    return _cdiv(a, b) * b


def _tile_rows(total_rows, max_rows):
    """Row tile (multiple of 8) and per-core step count; no padding of inputs."""
    per_core = _cdiv(total_rows, NUM_CORES)
    tile = max(8, min(max_rows, _round_up(per_core, 8)))
    n_steps = _cdiv(per_core, tile)
    return tile, n_steps


# ---------------------------------------------------------------- kernels ---

def _mse_kernel(x_ref, xh_ref, out_ref, acc_ref, *, n_valid, row_tile, n_steps, need_mask):
    """Sum of squared differences. acc is a (1, LANES) VMEM scratch; per-step
    row-reduce (VALU+XLU have slack) instead of a full-tile elementwise add."""
    c = pl.program_id(0)
    j = pl.program_id(1)

    @pl.when(j == 0)
    def _init():
        acc_ref[...] = jnp.zeros_like(acc_ref)

    d = xh_ref[...].astype(jnp.float32) - x_ref[...].astype(jnp.float32)
    if need_mask:
        row0 = (c * n_steps + j) * row_tile
        valid = (row0 + lax.broadcasted_iota(jnp.int32, (d.shape[0], 1), 0)) < n_valid
        d = jnp.where(valid, d, 0.0)          # mask garbage rows of partial/duplicate blocks
    acc_ref[...] += jnp.sum(d * d, axis=0, keepdims=True)

    @pl.when(j == pl.num_programs(1) - 1)
    def _done():
        out_ref[...] = jnp.zeros_like(out_ref) + jnp.sum(acc_ref[...])


def _stats_kernel(z_ref, g_ref, shift_ref, sg_ref, mom_ref,
                  *, n_valid, row_tile, n_steps, need_mask):
    """Accumulate sum(gamma) [1,K] and (z-shift)^T @ [gamma | gamma_k*(z-shift) ...]
    -> [D, K + K*D]; one MXU push per tile.  Casts to f32 happen here (native-width DMA)."""
    c = pl.program_id(0)
    j = pl.program_id(1)

    @pl.when(j == 0)
    def _init():
        sg_ref[...] = jnp.zeros_like(sg_ref)
        mom_ref[...] = jnp.zeros_like(mom_ref)

    z = z_ref[...].astype(jnp.float32) - shift_ref[...]     # centered for f32 stability
    g = g_ref[...].astype(jnp.float32)
    if need_mask:
        row0 = (c * n_steps + j) * row_tile
        valid = (row0 + lax.broadcasted_iota(jnp.int32, (z.shape[0], 1), 0)) < n_valid
        z = jnp.where(valid, z, 0.0)
        g = jnp.where(valid, g, 0.0)

    K = g.shape[1]
    # gamma-weighted copies of z along lanes, [T, K+K*D]; built from K tiny lane slices
    # (kept slice-based to avoid an in-kernel [T,K,D]->[T,K*D] minor-dim relayout).
    a = jnp.concatenate([g] + [g[:, k:k + 1] * z for k in range(K)], axis=1)

    sg_ref[...] += jnp.sum(g, axis=0, keepdims=True)                          # [1, K]
    # Contract over rows directly (no materialized [D, T] transpose relayout).
    mom_ref[...] += lax.dot_general(z, a, dimension_numbers=(((0,), (0,)), ((), ())),
                                    preferred_element_type=jnp.float32)       # [D, K+K*D]


def _energy_kernel(z_ref, lcat_ref, off_ref, sel_ref, coef_ref, out_ref, acc_ref,
                   *, n_valid, row_tile, n_steps, need_mask):
    """Per-sample GMM energy sum. q_nk = ||W_k (z_n - mu_k)||^2 with cov_k = L_k L_k^T,
    W_k = L_k^{-1}; one matmul for all k, group-sum via a 0/1 selection matmul,
    one batched exp over [T, K]."""
    c = pl.program_id(0)
    j = pl.program_id(1)

    @pl.when(j == 0)
    def _init():
        acc_ref[...] = jnp.zeros_like(acc_ref)

    z = z_ref[...].astype(jnp.float32)                                               # [T, D]
    y = jnp.dot(z, lcat_ref[...], preferred_element_type=jnp.float32) - off_ref[...]  # [T, K*D]
    q = jnp.dot(y * y, sel_ref[...], preferred_element_type=jnp.float32)              # [T, K]
    # TODO(synk): with D=8/K=4 these tiles are lane-sparse (<=32/128 lanes); a lane-dense
    # repack of z would raise MXU/VPU/EUP utilization if the latent pass ever dominates.
    s = jnp.sum(jnp.exp(-0.5 * q) * coef_ref[...], axis=-1, keepdims=True)             # [T, 1]
    e = -jnp.log(s + 1e-12)                                                            # [T, 1]
    if need_mask:
        row0 = (c * n_steps + j) * row_tile
        rid = row0 + lax.broadcasted_iota(jnp.int32, e.shape, 0)
        e = jnp.where(rid < n_valid, e, 0.0)
    acc_ref[...] += e

    @pl.when(j == pl.num_programs(1) - 1)
    def _done():
        out_ref[...] = jnp.zeros_like(out_ref) + jnp.sum(acc_ref[...])


# --------------------------------------------------------------- wrappers ---

def mse_sum_pallas(x, x_hat):
    """Sum of squared differences over all elements; no full-array pad copies."""
    n_el = x.size
    rows = n_el // _MSE_LANES
    rem = n_el - rows * _MSE_LANES
    xf = x.reshape(-1)
    xhf = x_hat.reshape(-1)

    tail = jnp.float32(0.0)
    if rem:
        # Tiny (<1024 elem) unaligned remainder handled in plain JAX instead of padding
        # (and re-copying) the whole input.
        dt = (xhf[rows * _MSE_LANES:].astype(jnp.float32)
              - xf[rows * _MSE_LANES:].astype(jnp.float32))
        tail = jnp.sum(dt * dt)
    if rows == 0:
        return tail

    x2d = (xf if rem == 0 else xf[: rows * _MSE_LANES]).reshape(rows, _MSE_LANES)
    xh2d = (xhf if rem == 0 else xhf[: rows * _MSE_LANES]).reshape(rows, _MSE_LANES)

    tile, n_steps = _tile_rows(rows, _MSE_MAX_ROWS)
    last_block = _cdiv(rows, tile) - 1
    need_mask = NUM_CORES * n_steps * tile > rows
    idx = lambda c, s: (jnp.minimum(c * n_steps + s, last_block), 0)

    kernel = functools.partial(_mse_kernel, n_valid=rows, row_tile=tile,
                               n_steps=n_steps, need_mask=need_mask)
    partial_out = pl.pallas_call(
        kernel,
        out_shape=jax.ShapeDtypeStruct((NUM_CORES, 1, 1), jnp.float32),
        grid_spec=pltpu.PrefetchScalarGridSpec(
            num_scalar_prefetch=0,
            grid=(NUM_CORES, n_steps),
            in_specs=[
                pl.BlockSpec((tile, _MSE_LANES), idx),
                pl.BlockSpec((tile, _MSE_LANES), idx),
            ],
            out_specs=pl.BlockSpec((None, 1, 1), lambda c, s: (c, 0, 0)),
            scratch_shapes=[pltpu.VMEM((1, _MSE_LANES), jnp.float32)],
        ),
        compiler_params=pltpu.CompilerParams(
            dimension_semantics=_DIM_SEMANTICS,
            vmem_limit_bytes=32 * 1024 * 1024,   # explicit: near v5e's 16 MiB default otherwise
        ),
    )(x2d, xh2d)
    return tail + jnp.sum(partial_out)


def gmm_stats_pallas(z, gamma, shift):
    """One streaming pass over z/gamma -> sum_g [K], centered sum(gamma*(z-shift)) [K,D],
    centered second moments M [K,D,D]."""
    N, D = z.shape
    K = gamma.shape[1]
    tile, n_steps = _tile_rows(N, _Z_MAX_ROWS)
    last_block = _cdiv(N, tile) - 1
    need_mask = NUM_CORES * n_steps * tile > N
    idx = lambda c, s: (jnp.minimum(c * n_steps + s, last_block), 0)

    kernel = functools.partial(_stats_kernel, n_valid=N, row_tile=tile,
                               n_steps=n_steps, need_mask=need_mask)
    sg, mom = pl.pallas_call(
        kernel,
        out_shape=(jax.ShapeDtypeStruct((NUM_CORES, 1, K), jnp.float32),
                   jax.ShapeDtypeStruct((NUM_CORES, D, K + K * D), jnp.float32)),
        grid_spec=pltpu.PrefetchScalarGridSpec(
            num_scalar_prefetch=0,
            grid=(NUM_CORES, n_steps),
            in_specs=[
                pl.BlockSpec((tile, D), idx),
                pl.BlockSpec((tile, K), idx),
                pl.BlockSpec((1, D), lambda c, s: (0, 0)),
            ],
            out_specs=[
                pl.BlockSpec((None, 1, K), lambda c, s: (c, 0, 0)),
                pl.BlockSpec((None, D, K + K * D), lambda c, s: (c, 0, 0)),
            ],
        ),
        compiler_params=pltpu.CompilerParams(dimension_semantics=_DIM_SEMANTICS),
    )(z, gamma, shift)

    sum_g = jnp.sum(sg, axis=0)[0]                               # [K]
    stats = jnp.sum(mom, axis=0)                                 # [D, K+K*D]
    sum_zg = stats[:, :K].T                                      # [K, D] (centered)
    second = stats[:, K:].reshape(D, K, D).transpose(1, 0, 2)    # [K, D, D] (centered)
    return sum_g, sum_zg, second


def energy_sum_pallas(z, lcat, off, sel, coef):
    """Sum over samples of -log(sum_k coef_k * exp(-0.5 * ||W_k(z - mu_k)||^2) + eps)."""
    N, D = z.shape
    KD = lcat.shape[1]
    K = coef.shape[-1]
    tile, n_steps = _tile_rows(N, _Z_MAX_ROWS)
    last_block = _cdiv(N, tile) - 1
    need_mask = NUM_CORES * n_steps * tile > N
    idx = lambda c, s: (jnp.minimum(c * n_steps + s, last_block), 0)

    kernel = functools.partial(_energy_kernel, n_valid=N, row_tile=tile,
                               n_steps=n_steps, need_mask=need_mask)
    partial_out = pl.pallas_call(
        kernel,
        out_shape=jax.ShapeDtypeStruct((NUM_CORES, 1, 1), jnp.float32),
        grid_spec=pltpu.PrefetchScalarGridSpec(
            num_scalar_prefetch=0,
            grid=(NUM_CORES, n_steps),
            in_specs=[
                pl.BlockSpec((tile, D), idx),
                pl.BlockSpec((D, KD), lambda c, s: (0, 0)),
                pl.BlockSpec((1, KD), lambda c, s: (0, 0)),
                pl.BlockSpec((KD, K), lambda c, s: (0, 0)),
                pl.BlockSpec((1, K), lambda c, s: (0, 0)),
            ],
            out_specs=pl.BlockSpec((None, 1, 1), lambda c, s: (c, 0, 0)),
            scratch_shapes=[pltpu.VMEM((tile, 1), jnp.float32)],
        ),
        compiler_params=pltpu.CompilerParams(dimension_semantics=_DIM_SEMANTICS),
    )(z, lcat, off, sel, coef)
    return jnp.sum(partial_out)


# --------------------------------------------------------------- GMM loss ---

def gmm_loss(x, x_hat, z, gamma, lambda_energy, lambda_cov):
    eps = 1e-12
    B, H, W, D = z.shape
    K = gamma.shape[-1]
    N = B * H * W

    # ---- reconstruction MSE (mean over all elements) ----
    reconst_loss = mse_sum_pallas(x, x_hat) / x.size

    # ---- GMM statistics in a single streaming pass (native dtype; cast in-kernel) ----
    zf = z.reshape(N, D)
    gf = gamma.reshape(N, K)
    # Shift trick: center moments around a cheap global mean of z (f32 stability).
    shift = jnp.mean(zf.astype(jnp.float32), axis=0, keepdims=True)        # [1, D]

    sum_g, sum_zg_c, second_c = gmm_stats_pallas(zf, gf, shift)
    phi = sum_g / N                                                        # [K]
    c_k = sum_zg_c / sum_g[:, None]                                        # [K, D] (matches ref: no eps)
    mu = shift + c_k                                                       # [K, D]
    cov = second_c / sum_g[:, None, None] - c_k[:, :, None] * c_k[:, None, :]  # [K, D, D]

    # ---- small KxDxD linear algebra in plain JAX (glue) ----
    # TODO(synk): batched Cholesky / triangular solve have no Pallas linalg primitive.
    cov_k = cov + eps * jnp.eye(D, dtype=jnp.float32)[None]
    chol = jnp.linalg.cholesky(cov_k)                                      # cov_k = L L^T
    diag = jnp.diagonal(chol, axis1=-2, axis2=-1)                          # [K, D]
    # Reference: det_cov_k = prod(diag(cholesky(2*pi*cov_k))); keep its log to avoid overflow.
    log_det_cov = 0.5 * D * math.log(2.0 * math.pi) + jnp.sum(jnp.log(diag), axis=-1)
    coef = (phi * jnp.exp(-0.5 * log_det_cov)).reshape(1, K)               # phi / sqrt(det_cov)
    cov_diag = jnp.sum(1.0 / jnp.diagonal(cov_k, axis1=-2, axis2=-1))      # scalar

    # Inverse Cholesky factor via triangular solve (no explicit inverse): W_k = L_k^{-1}.
    eye = jnp.eye(D, dtype=jnp.float32)
    w = jax.vmap(lambda L: jax.scipy.linalg.solve_triangular(L, eye, lower=True))(chol)  # [K,D,D]
    lcat = jnp.transpose(w, (2, 0, 1)).reshape(D, K * D)                   # lcat[d, k*D+e] = W_k[e,d]
    off = jnp.einsum('kd,ked->ke', mu, w).reshape(1, K * D)                # mu_k mapped through W_k
    sel = jnp.repeat(jnp.eye(K, dtype=jnp.float32), D, axis=0)             # [K*D, K] group-sum matrix

    # ---- sample energy (mean over samples) ----
    sample_energy = energy_sum_pallas(zf, lcat, off, sel, coef) / N

    return reconst_loss + lambda_energy * sample_energy + lambda_cov * cov_diag


# ------------------------------------------------------------------- main ---

if __name__ == "__main__":
    # deterministic "parameters" of GMMLoss (non-trainable buffers in the module)
    lambda_energy = 0.1
    lambda_cov = 0.005
    n_gmm = 4

    key = jax.random.PRNGKey(0)
    k1, k2, k3, k4 = jax.random.split(key, 4)

    B, C, H, W = 2, 4, 16, 16
    D, K = 8, n_gmm

    x = jax.random.normal(k1, (B, C, H, W), jnp.float32)          # NCHW
    x_hat = x + 0.1 * jax.random.normal(k2, (B, C, H, W), jnp.float32)
    z = jax.random.normal(k3, (B, H, W, D), jnp.float32)
    gamma = jax.nn.softmax(
        jax.random.normal(k4, (B, H, W, K), jnp.float32), axis=-1)

    loss_fn = jax.jit(functools.partial(gmm_loss,
                                        lambda_energy=lambda_energy,
                                        lambda_cov=lambda_cov))
    loss = jax.block_until_ready(loss_fn(x, x_hat, z, gamma))
    assert bool(jnp.isfinite(loss))
    print("KERNEL_OK")
</pallas_src>

<mosaic_0001>
module attributes {stable_mosaic.version = 11 : i64} {
  func.func @_stats_kernel(%arg0: i32, %arg1: i32, %arg2: memref<512x8xf32, #tpu.memory_space<vmem>>, %arg3: memref<512x4xf32, #tpu.memory_space<vmem>>, %arg4: memref<1x8xf32, #tpu.memory_space<vmem>>, %arg5: memref<1x1x4xf32, #tpu.memory_space<vmem>>, %arg6: memref<1x8x36xf32, #tpu.memory_space<vmem>>) attributes {dimension_semantics = [#tpu.dimension_semantics<parallel>, #tpu.dimension_semantics<arbitrary>], iteration_bounds = array<i64: 1, 1>, scalar_prefetch = 0 : i64, scratch_operands = 0 : i64, tpu.core_type = #tpu.core_type<tc>, window_params = [{transform_indices = @transform_0, window_bounds = array<i64: 512, 8>}, {transform_indices = @transform_1, window_bounds = array<i64: 512, 4>}, {pipeline_mode = #tpu.pipeline_mode<synchronous>, transform_indices = @transform_2, window_bounds = array<i64: 1, 8>}, {transform_indices = @transform_3, window_bounds = array<i64: 1, 1, 4>}, {transform_indices = @transform_4, window_bounds = array<i64: 1, 8, 36>}]} {
    %c0_i32 = arith.constant 0 : i32
    %0 = arith.cmpi eq, %arg1, %c0_i32 : i32
    %1 = arith.extui %0 : i1 to i32
    %c0_i32_0 = arith.constant 0 : i32
    %2 = arith.cmpi ne, %1, %c0_i32_0 : i32
    scf.if %2 {
      %cst_19 = arith.constant 0.000000e+00 : f32
      %36 = vector.broadcast %cst_19 : f32 to vector<1x4xf32>
      %c0_20 = arith.constant 0 : index
      %c0_21 = arith.constant 0 : index
      %c0_22 = arith.constant 0 : index
      %37 = vector.load %arg5[%c0_20, %c0_21, %c0_22] : memref<1x1x4xf32, #tpu.memory_space<vmem>>, vector<1x1x4xf32>
      %38 = vector.shape_cast %37 : vector<1x1x4xf32> to vector<1x4xf32>
      %39 = vector.shape_cast %36 : vector<1x4xf32> to vector<1x1x4xf32>
      tpu.vector_store %arg5[%c0_20, %c0_21, %c0_22], %39 {strides = array<i32>} : memref<1x1x4xf32, #tpu.memory_space<vmem>>, vector<1x1x4xf32>,
      %cst_23 = arith.constant 0.000000e+00 : f32
      %40 = vector.broadcast %cst_23 : f32 to vector<8x36xf32>
      %c0_24 = arith.constant 0 : index
      %c0_25 = arith.constant 0 : index
      %c0_26 = arith.constant 0 : index
      %41 = vector.load %arg6[%c0_24, %c0_25, %c0_26] : memref<1x8x36xf32, #tpu.memory_space<vmem>>, vector<1x8x36xf32>
      %42 = vector.shape_cast %41 : vector<1x8x36xf32> to vector<8x36xf32>
      %43 = vector.shape_cast %40 : vector<8x36xf32> to vector<1x8x36xf32>
      tpu.vector_store %arg6[%c0_24, %c0_25, %c0_26], %43 {strides = array<i32>} : memref<1x8x36xf32, #tpu.memory_space<vmem>>, vector<1x8x36xf32>,
    } else {
    }
    %c0 = arith.constant 0 : index
    %c0_1 = arith.constant 0 : index
    %3 = vector.load %arg2[%c0, %c0_1] : memref<512x8xf32, #tpu.memory_space<vmem>>, vector<512x8xf32>
    %c0_2 = arith.constant 0 : index
    %c0_3 = arith.constant 0 : index
    %4 = vector.load %arg4[%c0_2, %c0_3] : memref<1x8xf32, #tpu.memory_space<vmem>>, vector<1x8xf32>
    %5 = vector.broadcast %4 : vector<1x8xf32> to vector<512x8xf32>
    %6 = arith.subf %3, %5 : vector<512x8xf32>
    %c0_4 = arith.constant 0 : index
    %c0_5 = arith.constant 0 : index
    %7 = vector.load %arg3[%c0_4, %c0_5] : memref<512x4xf32, #tpu.memory_space<vmem>>, vector<512x4xf32>
    %8 = vector.extract_strided_slice %7 {offsets = [0, 0], sizes = [512, 1], strides = [1, 1]} : vector<512x4xf32> to vector<512x1xf32>
    %9 = vector.broadcast %8 : vector<512x1xf32> to vector<512x8xf32>
    %10 = arith.mulf %9, %6 : vector<512x8xf32>
    %11 = vector.extract_strided_slice %7 {offsets = [0, 1], sizes = [512, 1], strides = [1, 1]} : vector<512x4xf32> to vector<512x1xf32>
    %12 = vector.broadcast %11 : vector<512x1xf32> to vector<512x8xf32>
    %13 = arith.mulf %12, %6 : vector<512x8xf32>
    %14 = vector.extract_strided_slice %7 {offsets = [0, 2], sizes = [512, 1], strides = [1, 1]} : vector<512x4xf32> to vector<512x1xf32>
    %15 = vector.broadcast %14 : vector<512x1xf32> to vector<512x8xf32>
    %16 = arith.mulf %15, %6 : vector<512x8xf32>
    %17 = vector.extract_strided_slice %7 {offsets = [0, 3], sizes = [512, 1], strides = [1, 1]} : vector<512x4xf32> to vector<512x1xf32>
    %18 = vector.broadcast %17 : vector<512x1xf32> to vector<512x8xf32>
    %19 = arith.mulf %18, %6 : vector<512x8xf32>
    %20 = tpu.concatenate %7, %10, %13, %16, %19 in 1 : vector<512x4xf32>, vector<512x8xf32>, vector<512x8xf32>, vector<512x8xf32>, vector<512x8xf32> -> vector<512x36xf32>
    %c0_6 = arith.constant 0 : index
    %c0_7 = arith.constant 0 : index
    %c0_8 = arith.constant 0 : index
    %21 = vector.load %arg5[%c0_6, %c0_7, %c0_8] : memref<1x1x4xf32, #tpu.memory_space<vmem>>, vector<1x1x4xf32>
    %22 = vector.shape_cast %21 : vector<1x1x4xf32> to vector<1x4xf32>
    %cst = arith.constant dense<0.000000e+00> : vector<4xf32>
    %23 = vector.multi_reduction <add>, %7, %cst [0] : vector<512x4xf32> to vector<4xf32>
    %24 = vector.shape_cast %23 : vector<4xf32> to vector<1x4xf32>
    %25 = arith.addf %22, %24 : vector<1x4xf32>
    %c0_9 = arith.constant 0 : index
    %c0_10 = arith.constant 0 : index
    %c0_11 = arith.constant 0 : index
    %26 = vector.load %arg5[%c0_9, %c0_10, %c0_11] : memref<1x1x4xf32, #tpu.memory_space<vmem>>, vector<1x1x4xf32>
    %27 = vector.shape_cast %26 : vector<1x1x4xf32> to vector<1x4xf32>
    %28 = vector.shape_cast %25 : vector<1x4xf32> to vector<1x1x4xf32>
    tpu.vector_store %arg5[%c0_9, %c0_10, %c0_11], %28 {strides = array<i32>} : memref<1x1x4xf32, #tpu.memory_space<vmem>>, vector<1x1x4xf32>,
    %c0_12 = arith.constant 0 : index
    %c0_13 = arith.constant 0 : index
    %c0_14 = arith.constant 0 : index
    %29 = vector.load %arg6[%c0_12, %c0_13, %c0_14] : memref<1x8x36xf32, #tpu.memory_space<vmem>>, vector<1x8x36xf32>
    %30 = vector.shape_cast %29 : vector<1x8x36xf32> to vector<8x36xf32>
    %cst_15 = arith.constant dense<0.000000e+00> : vector<8x36xf32>
    %31 = tpu.matmul %6, %20, %cst_15 {dimension_numbers = #tpu.dot_dimension_numbers<[0], [0], [1], [1], [0, 1, 1, 1], [], []>} : vector<512x8xf32>, vector<512x36xf32>, vector<8x36xf32> -> vector<8x36xf32>
    %32 = arith.addf %30, %31 : vector<8x36xf32>
    %c0_16 = arith.constant 0 : index
    %c0_17 = arith.constant 0 : index
    %c0_18 = arith.constant 0 : index
    %33 = vector.load %arg6[%c0_16, %c0_17, %c0_18] : memref<1x8x36xf32, #tpu.memory_space<vmem>>, vector<1x8x36xf32>
    %34 = vector.shape_cast %33 : vector<1x8x36xf32> to vector<8x36xf32>
    %35 = vector.shape_cast %32 : vector<8x36xf32> to vector<1x8x36xf32>
    tpu.vector_store %arg6[%c0_16, %c0_17, %c0_18], %35 {strides = array<i32>} : memref<1x8x36xf32, #tpu.memory_space<vmem>>, vector<1x8x36xf32>,
    return
  }
  func.func @transform_0(%arg0: i32, %arg1: i32) -> (i32, i32) {
    %c1_i32 = arith.constant 1 : i32
    %0 = arith.muli %arg0, %c1_i32 : i32
    %1 = arith.addi %0, %arg1 : i32
    %c0_i32 = arith.constant 0 : i32
    %2 = arith.minsi %1, %c0_i32 : i32
    %c0_i32_0 = arith.constant 0 : i32
    %c0_i32_1 = arith.constant 0 : i32
    return %2, %c0_i32_0 : i32, i32
  }
  func.func @transform_1(%arg0: i32, %arg1: i32) -> (i32, i32) {
    %c1_i32 = arith.constant 1 : i32
    %0 = arith.muli %arg0, %c1_i32 : i32
    %1 = arith.addi %0, %arg1 : i32
    %c0_i32 = arith.constant 0 : i32
    %2 = arith.minsi %1, %c0_i32 : i32
    %c0_i32_0 = arith.constant 0 : i32
    %c0_i32_1 = arith.constant 0 : i32
    return %2, %c0_i32_0 : i32, i32
  }
  func.func @transform_2(%arg0: i32, %arg1: i32) -> (i32, i32) {
    %c0_i32 = arith.constant 0 : i32
    %c0_i32_0 = arith.constant 0 : i32
    %c0_i32_1 = arith.constant 0 : i32
    return %c0_i32, %c0_i32_0 : i32, i32
  }
  func.func @transform_3(%arg0: i32, %arg1: i32) -> (i32, i32, i32) {
    %c0_i32 = arith.constant 0 : i32
    %c0_i32_0 = arith.constant 0 : i32
    %c0_i32_1 = arith.constant 0 : i32
    return %arg0, %c0_i32, %c0_i32_0 : i32, i32, i32
  }
  func.func @transform_4(%arg0: i32, %arg1: i32) -> (i32, i32, i32) {
    %c0_i32 = arith.constant 0 : i32
    %c0_i32_0 = arith.constant 0 : i32
    %c0_i32_1 = arith.constant 0 : i32
    return %arg0, %c0_i32, %c0_i32_0 : i32, i32, i32
  }
}

module attributes {stable_mosaic.version = 11 : i64} {
  func.func @_mse_kernel(%arg0: i32, %arg1: i32, %arg2: memref<8x1024xf32, #tpu.memory_space<vmem>>, %arg3: memref<8x1024xf32, #tpu.memory_space<vmem>>, %arg4: memref<1x1x1xf32, #tpu.memory_space<vmem>>, %arg5: memref<1x1024xf32, #tpu.memory_space<vmem>>) attributes {dimension_semantics = [#tpu.dimension_semantics<parallel>, #tpu.dimension_semantics<arbitrary>], iteration_bounds = array<i64: 1, 1>, scalar_prefetch = 0 : i64, scratch_operands = 1 : i64, tpu.core_type = #tpu.core_type<tc>, window_params = [{transform_indices = @transform_0, window_bounds = array<i64: 8, 1024>}, {transform_indices = @transform_1, window_bounds = array<i64: 8, 1024>}, {transform_indices = @transform_2, window_bounds = array<i64: 1, 1, 1>}]} {
    %c0_i32 = arith.constant 0 : i32
    %0 = arith.cmpi eq, %arg1, %c0_i32 : i32
    %1 = arith.extui %0 : i1 to i32
    %c0_i32_0 = arith.constant 0 : i32
    %2 = arith.cmpi ne, %1, %c0_i32_0 : i32
    scf.if %2 {
      %cst_11 = arith.constant 0.000000e+00 : f32
      %27 = vector.broadcast %cst_11 : f32 to vector<1x1024xf32>
      %c0_12 = arith.constant 0 : index
      %c0_13 = arith.constant 0 : index
      %28 = vector.load %arg5[%c0_12, %c0_13] : memref<1x1024xf32, #tpu.memory_space<vmem>>, vector<1x1024xf32>
      tpu.vector_store %arg5[%c0_12, %c0_13], %27 {strides = array<i32>} : memref<1x1024xf32, #tpu.memory_space<vmem>>, vector<1x1024xf32>,
    } else {
    }
    %c0 = arith.constant 0 : index
    %c0_1 = arith.constant 0 : index
    %3 = vector.load %arg3[%c0, %c0_1] : memref<8x1024xf32, #tpu.memory_space<vmem>>, vector<8x1024xf32>
    %c0_2 = arith.constant 0 : index
    %c0_3 = arith.constant 0 : index
    %4 = vector.load %arg2[%c0_2, %c0_3] : memref<8x1024xf32, #tpu.memory_space<vmem>>, vector<8x1024xf32>
    %5 = arith.subf %3, %4 : vector<8x1024xf32>
    %c1_i32 = arith.constant 1 : i32
    %6 = arith.muli %arg0, %c1_i32 : i32
    %7 = arith.addi %6, %arg1 : i32
    %c8_i32 = arith.constant 8 : i32
    %8 = arith.muli %7, %c8_i32 : i32
    %9 = tpu.iota {dimensions = array<i32: 0>} : vector<8x1xi32>
    %10 = vector.broadcast %8 : i32 to vector<8x1xi32>
    %11 = arith.addi %10, %9 : vector<8x1xi32>
    %c2_i32 = arith.constant 2 : i32
    %12 = vector.broadcast %c2_i32 : i32 to vector<8x1xi32>
    %13 = arith.cmpi slt, %11, %12 : vector<8x1xi32>
    %cst = arith.constant 0.000000e+00 : f32
    %14 = vector.shape_cast %13 : vector<8x1xi1> to vector<8x1xi1>
    %15 = vector.broadcast %14 : vector<8x1xi1> to vector<8x1024xi1>
    %16 = vector.broadcast %cst : f32 to vector<8x1024xf32>
    %17 = arith.select %15, %5, %16 : vector<8x1024xi1>, vector<8x1024xf32>
    %c0_4 = arith.constant 0 : index
    %c0_5 = arith.constant 0 : index
    %18 = vector.load %arg5[%c0_4, %c0_5] : memref<1x1024xf32, #tpu.memory_space<vmem>>, vector<1x1024xf32>
    %19 = arith.mulf %17, %17 : vector<8x1024xf32>
    %cst_6 = arith.constant dense<0.000000e+00> : vector<1024xf32>
    %20 = vector.multi_reduction <add>, %19, %cst_6 [0] : vector<8x1024xf32> to vector<1024xf32>
    %21 = vector.shape_cast %20 : vector<1024xf32> to vector<1x1024xf32>
    %22 = arith.addf %18, %21 : vector<1x1024xf32>
    %c0_7 = arith.constant 0 : index
    %c0_8 = arith.constant 0 : index
    %23 = vector.load %arg5[%c0_7, %c0_8] : memref<1x1024xf32, #tpu.memory_space<vmem>>, vector<1x1024xf32>
    tpu.vector_store %arg5[%c0_7, %c0_8], %22 {strides = array<i32>} : memref<1x1024xf32, #tpu.memory_space<vmem>>, vector<1x1024xf32>,
    %c0_i32_9 = arith.constant 0 : i32
    %24 = arith.cmpi eq, %arg1, %c0_i32_9 : i32
    %25 = arith.extui %24 : i1 to i32
    %c0_i32_10 = arith.constant 0 : i32
    %26 = arith.cmpi ne, %25, %c0_i32_10 : i32
    scf.if %26 {
      %cst_11 = arith.constant 0.000000e+00 : f32
      %27 = vector.broadcast %cst_11 : f32 to vector<1x1xf32>
      %c0_12 = arith.constant 0 : index
      %c0_13 = arith.constant 0 : index
      %28 = vector.load %arg5[%c0_12, %c0_13] : memref<1x1024xf32, #tpu.memory_space<vmem>>, vector<1x1024xf32>
      %29 = vector.shape_cast %28 : vector<1x1024xf32> to vector<1x1x1024xf32>
      %cst_14 = arith.constant dense<0.000000e+00> : vector<1xf32>
      %30 = vector.multi_reduction <add>, %29, %cst_14 [1, 2] : vector<1x1x1024xf32> to vector<1xf32>
      %31 = vector.shape_cast %30 : vector<1xf32> to vector<1x1x1xf32>
      %32 = vector.extract %31[0, 0, 0] : f32 from vector<1x1x1xf32>
      %33 = vector.broadcast %32 : f32 to vector<1x1xf32>
      %34 = arith.addf %27, %33 : vector<1x1xf32>
      %c0_15 = arith.constant 0 : index
      %c0_16 = arith.constant 0 : index
      %c0_17 = arith.constant 0 : index
      %35 = vector.load %arg4[%c0_15, %c0_16, %c0_17] : memref<1x1x1xf32, #tpu.memory_space<vmem>>, vector<1x1x1xf32>
      %36 = vector.shape_cast %35 : vector<1x1x1xf32> to vector<1x1xf32>
      %37 = vector.shape_cast %34 : vector<1x1xf32> to vector<1x1x1xf32>
      tpu.vector_store %arg4[%c0_15, %c0_16, %c0_17], %37 {strides = array<i32>} : memref<1x1x1xf32, #tpu.memory_space<vmem>>, vector<1x1x1xf32>,
    } else {
    }
    return
  }
  func.func @transform_0(%arg0: i32, %arg1: i32) -> (i32, i32) {
    %c1_i32 = arith.constant 1 : i32
    %0 = arith.muli %arg0, %c1_i32 : i32
    %1 = arith.addi %0, %arg1 : i32
    %c0_i32 = arith.constant 0 : i32
    %2 = arith.minsi %1, %c0_i32 : i32
    %c0_i32_0 = arith.constant 0 : i32
    %c0_i32_1 = arith.constant 0 : i32
    return %2, %c0_i32_0 : i32, i32
  }
  func.func @transform_1(%arg0: i32, %arg1: i32) -> (i32, i32) {
    %c1_i32 = arith.constant 1 : i32
    %0 = arith.muli %arg0, %c1_i32 : i32
    %1 = arith.addi %0, %arg1 : i32
    %c0_i32 = arith.constant 0 : i32
    %2 = arith.minsi %1, %c0_i32 : i32
    %c0_i32_0 = arith.constant 0 : i32
    %c0_i32_1 = arith.constant 0 : i32
    return %2, %c0_i32_0 : i32, i32
  }
  func.func @transform_2(%arg0: i32, %arg1: i32) -> (i32, i32, i32) {
    %c0_i32 = arith.constant 0 : i32
    %c0_i32_0 = arith.constant 0 : i32
    %c0_i32_1 = arith.constant 0 : i32
    return %arg0, %c0_i32, %c0_i32_0 : i32, i32, i32
  }
}

module attributes {stable_mosaic.version = 11 : i64} {
  func.func @_energy_kernel(%arg0: i32, %arg1: i32, %arg2: memref<512x8xf32, #tpu.memory_space<vmem>>, %arg3: memref<8x32xf32, #tpu.memory_space<vmem>>, %arg4: memref<1x32xf32, #tpu.memory_space<vmem>>, %arg5: memref<32x4xf32, #tpu.memory_space<vmem>>, %arg6: memref<1x4xf32, #tpu.memory_space<vmem>>, %arg7: memref<1x1x1xf32, #tpu.memory_space<vmem>>, %arg8: memref<512x1xf32, #tpu.memory_space<vmem>>) attributes {dimension_semantics = [#tpu.dimension_semantics<parallel>, #tpu.dimension_semantics<arbitrary>], iteration_bounds = array<i64: 1, 1>, scalar_prefetch = 0 : i64, scratch_operands = 1 : i64, tpu.core_type = #tpu.core_type<tc>, window_params = [{transform_indices = @transform_0, window_bounds = array<i64: 512, 8>}, {pipeline_mode = #tpu.pipeline_mode<synchronous>, transform_indices = @transform_1, window_bounds = array<i64: 8, 32>}, {pipeline_mode = #tpu.pipeline_mode<synchronous>, transform_indices = @transform_2, window_bounds = array<i64: 1, 32>}, {pipeline_mode = #tpu.pipeline_mode<synchronous>, transform_indices = @transform_3, window_bounds = array<i64: 32, 4>}, {pipeline_mode = #tpu.pipeline_mode<synchronous>, transform_indices = @transform_4, window_bounds = array<i64: 1, 4>}, {transform_indices = @transform_5, window_bounds = array<i64: 1, 1, 1>}]} {
    %c0_i32 = arith.constant 0 : i32
    %0 = arith.cmpi eq, %arg1, %c0_i32 : i32
    %1 = arith.extui %0 : i1 to i32
    %c0_i32_0 = arith.constant 0 : i32
    %2 = arith.cmpi ne, %1, %c0_i32_0 : i32
    scf.if %2 {
      %cst_21 = arith.constant 0.000000e+00 : f32
      %31 = vector.broadcast %cst_21 : f32 to vector<512x1xf32>
      %c0_22 = arith.constant 0 : index
      %c0_23 = arith.constant 0 : index
      %32 = vector.load %arg8[%c0_22, %c0_23] : memref<512x1xf32, #tpu.memory_space<vmem>>, vector<512x1xf32>
      tpu.vector_store %arg8[%c0_22, %c0_23], %31 {strides = array<i32>} : memref<512x1xf32, #tpu.memory_space<vmem>>, vector<512x1xf32>,
    } else {
    }
    %c0 = arith.constant 0 : index
    %c0_1 = arith.constant 0 : index
    %3 = vector.load %arg2[%c0, %c0_1] : memref<512x8xf32, #tpu.memory_space<vmem>>, vector<512x8xf32>
    %c0_2 = arith.constant 0 : index
    %c0_3 = arith.constant 0 : index
    %4 = vector.load %arg3[%c0_2, %c0_3] : memref<8x32xf32, #tpu.memory_space<vmem>>, vector<8x32xf32>
    %cst = arith.constant dense<0.000000e+00> : vector<512x32xf32>
    %5 = tpu.matmul %3, %4, %cst {dimension_numbers = #tpu.dot_dimension_numbers<[1], [0], [0], [1], [0, 0, 1, 1], [], []>} : vector<512x8xf32>, vector<8x32xf32>, vector<512x32xf32> -> vector<512x32xf32>
    %c0_4 = arith.constant 0 : index
    %c0_5 = arith.constant 0 : index
    %6 = vector.load %arg4[%c0_4, %c0_5] : memref<1x32xf32, #tpu.memory_space<vmem>>, vector<1x32xf32>
    %7 = vector.broadcast %6 : vector<1x32xf32> to vector<512x32xf32>
    %8 = arith.subf %5, %7 : vector<512x32xf32>
    %9 = arith.mulf %8, %8 : vector<512x32xf32>
    %c0_6 = arith.constant 0 : index
    %c0_7 = arith.constant 0 : index
    %10 = vector.load %arg5[%c0_6, %c0_7] : memref<32x4xf32, #tpu.memory_space<vmem>>, vector<32x4xf32>
    %cst_8 = arith.constant dense<0.000000e+00> : vector<512x4xf32>
    %11 = tpu.matmul %9, %10, %cst_8 {dimension_numbers = #tpu.dot_dimension_numbers<[1], [0], [0], [1], [0, 0, 1, 1], [], []>} : vector<512x32xf32>, vector<32x4xf32>, vector<512x4xf32> -> vector<512x4xf32>
    %cst_9 = arith.constant -5.000000e-01 : f32
    %12 = vector.broadcast %cst_9 : f32 to vector<512x4xf32>
    %13 = arith.mulf %12, %11 : vector<512x4xf32>
    %14 = math.exp %13 : vector<512x4xf32>
    %c0_10 = arith.constant 0 : index
    %c0_11 = arith.constant 0 : index
    %15 = vector.load %arg6[%c0_10, %c0_11] : memref<1x4xf32, #tpu.memory_space<vmem>>, vector<1x4xf32>
    %16 = vector.broadcast %15 : vector<1x4xf32> to vector<512x4xf32>
    %17 = arith.mulf %14, %16 : vector<512x4xf32>
    %cst_12 = arith.constant dense<0.000000e+00> : vector<512xf32>
    %18 = vector.multi_reduction <add>, %17, %cst_12 [1] : vector<512x4xf32> to vector<512xf32>
    %19 = vector.shape_cast %18 : vector<512xf32> to vector<512x1xf32>
    %cst_13 = arith.constant 9.99999996E-13 : f32
    %20 = vector.broadcast %cst_13 : f32 to vector<512x1xf32>
    %21 = arith.addf %19, %20 : vector<512x1xf32>
    %22 = math.log %21 : vector<512x1xf32>
    %cst_14 = arith.constant 0.000000e+00 : f32
    %23 = vector.broadcast %cst_14 : f32 to vector<512x1xf32>
    %24 = arith.subf %23, %22 : vector<512x1xf32>
    %c0_15 = arith.constant 0 : index
    %c0_16 = arith.constant 0 : index
    %25 = vector.load %arg8[%c0_15, %c0_16] : memref<512x1xf32, #tpu.memory_space<vmem>>, vector<512x1xf32>
    %26 = arith.addf %25, %24 : vector<512x1xf32>
    %c0_17 = arith.constant 0 : index
    %c0_18 = arith.constant 0 : index
    %27 = vector.load %arg8[%c0_17, %c0_18] : memref<512x1xf32, #tpu.memory_space<vmem>>, vector<512x1xf32>
    tpu.vector_store %arg8[%c0_17, %c0_18], %26 {strides = array<i32>} : memref<512x1xf32, #tpu.memory_space<vmem>>, vector<512x1xf32>,
    %c0_i32_19 = arith.constant 0 : i32
    %28 = arith.cmpi eq, %arg1, %c0_i32_19 : i32
    %29 = arith.extui %28 : i1 to i32
    %c0_i32_20 = arith.constant 0 : i32
    %30 = arith.cmpi ne, %29, %c0_i32_20 : i32
    scf.if %30 {
      %cst_21 = arith.constant 0.000000e+00 : f32
      %31 = vector.broadcast %cst_21 : f32 to vector<1x1xf32>
      %c0_22 = arith.constant 0 : index
      %c0_23 = arith.constant 0 : index
      %32 = vector.load %arg8[%c0_22, %c0_23] : memref<512x1xf32, #tpu.memory_space<vmem>>, vector<512x1xf32>
      %33 = vector.shape_cast %32 : vector<512x1xf32> to vector<1x512x1xf32>
      %cst_24 = arith.constant dense<0.000000e+00> : vector<1xf32>
      %34 = vector.multi_reduction <add>, %33, %cst_24 [1, 2] : vector<1x512x1xf32> to vector<1xf32>
      %35 = vector.shape_cast %34 : vector<1xf32> to vector<1x1x1xf32>
      %36 = vector.extract %35[0, 0, 0] : f32 from vector<1x1x1xf32>
      %37 = vector.broadcast %36 : f32 to vector<1x1xf32>
      %38 = arith.addf %31, %37 : vector<1x1xf32>
      %c0_25 = arith.constant 0 : index
      %c0_26 = arith.constant 0 : index
      %c0_27 = arith.constant 0 : index
      %39 = vector.load %arg7[%c0_25, %c0_26, %c0_27] : memref<1x1x1xf32, #tpu.memory_space<vmem>>, vector<1x1x1xf32>
      %40 = vector.shape_cast %39 : vector<1x1x1xf32> to vector<1x1xf32>
      %41 = vector.shape_cast %38 : vector<1x1xf32> to vector<1x1x1xf32>
      tpu.vector_store %arg7[%c0_25, %c0_26, %c0_27], %41 {strides = array<i32>} : memref<1x1x1xf32, #tpu.memory_space<vmem>>, vector<1x1x1xf32>,
    } else {
    }
    return
  }
  func.func @transform_0(%arg0: i32, %arg1: i32) -> (i32, i32) {
    %c1_i32 = arith.constant 1 : i32
    %0 = arith.muli %arg0, %c1_i32 : i32
    %1 = arith.addi %0, %arg1 : i32
    %c0_i32 = arith.constant 0 : i32
    %2 = arith.minsi %1, %c0_i32 : i32
    %c0_i32_0 = arith.constant 0 : i32
    %c0_i32_1 = arith.constant 0 : i32
    return %2, %c0_i32_0 : i32, i32
  }
  func.func @transform_1(%arg0: i32, %arg1: i32) -> (i32, i32) {
    %c0_i32 = arith.constant 0 : i32
    %c0_i32_0 = arith.constant 0 : i32
    %c0_i32_1 = arith.constant 0 : i32
    return %c0_i32, %c0_i32_0 : i32, i32
  }
  func.func @transform_2(%arg0: i32, %arg1: i32) -> (i32, i32) {
    %c0_i32 = arith.constant 0 : i32
    %c0_i32_0 = arith.constant 0 : i32
    %c0_i32_1 = arith.constant 0 : i32
    return %c0_i32, %c0_i32_0 : i32, i32
  }
  func.func @transform_3(%arg0: i32, %arg1: i32) -> (i32, i32) {
    %c0_i32 = arith.constant 0 : i32
    %c0_i32_0 = arith.constant 0 : i32
    %c0_i32_1 = arith.constant 0 : i32
    return %c0_i32, %c0_i32_0 : i32, i32
  }
  func.func @transform_4(%arg0: i32, %arg1: i32) -> (i32, i32) {
    %c0_i32 = arith.constant 0 : i32
    %c0_i32_0 = arith.constant 0 : i32
    %c0_i32_1 = arith.constant 0 : i32
    return %c0_i32, %c0_i32_0 : i32, i32
  }
  func.func @transform_5(%arg0: i32, %arg1: i32) -> (i32, i32, i32) {
    %c0_i32 = arith.constant 0 : i32
    %c0_i32_0 = arith.constant 0 : i32
    %c0_i32_1 = arith.constant 0 : i32
    return %arg0, %c0_i32, %c0_i32_0 : i32, i32, i32
  }
}

</mosaic_0001>

<llo_original>
// kernel: custom-call.4
$region0: #{custom-call.4}
  %s0 = inlined_call_operand.vmem [shape: f32[4,8,8], index: 0, kind: input, shape index: {}]
  %s1 = inlined_call_operand.vmem [shape: f32[4,8,8], index: 1, kind: output, shape index: {}]
  $region1: #{custom-call.4} parent=0
    #allocation0 [shape = 'u8[8192]{0}', space=vmem, size = 0x2000, scoped, tag = 'operand span for operand 0']
    #allocation1 [shape = 'u8[8192]{0}', space=vmem, size = 0x2000, scoped, tag = 'operand span for operand 1']
    loop: start=0, step=1, limit=6
    $region2: #{custom-call.4} parent=1 // loop_pre_header
      _
    $region3: #{custom-call.4} parent=1 // loop_header
      %s3 = sphi 0, %s7
      %p4 = scmp.ge.s32.totalorder %s3, 6
      %s10 = sphi 0, %s29
      %s11 = sphi 0, %s25
      %s12 = sphi 0, %s21
      %s13 = sphi 0, %s10
      %s14 = sphi 0, %s11
      %s15 = sphi 0, %s12
      %s16 = sphi 0, %s13
      %s17 = sphi 0, %s14
      %s18 = sphi 0, %s15
    $region4: #{custom-call.4} parent=1 // loop_header_branch
      %6 = sbr.rel (%p4) target = $region8
    $region5: #{custom-call.4} parent=1 // loop_body
      %s8 = ssub.s32 %s3, 1
      %s9 = ssub.s32 %s3, 2
      %s19 = sadd.s32 1, %s12
      %p20 = scmp.ge.s32.totalorder %s19, 1
      %s21 = scalar_select %p20, 0, %s19
      %s22 = sadd.s32 1, %s11
      %s23 = scalar_select %p20, %s22, %s11
      %p24 = scmp.ge.s32.totalorder %s23, 1
      %s25 = scalar_select %p24, 0, %s23
      %s26 = sadd.s32 1, %s10
      %s27 = scalar_select %p24, %s26, %s10
      %p28 = scmp.ge.s32.totalorder %s27, 4
      %s29 = scalar_select %p28, 0, %s27
      %p30 = scmp.le.s32.totalorder 1, %s3
      %p31 = scmp.lt.s32.totalorder %s3, 5
      %p32 = pnand %p30, %p31
      %p33 = pneg %p32
      // Predicated region
      $region9: #{custom-call.4} parent=5 // pred_check
        _
      $region10: #{custom-call.4} parent=5 // pred_check_branch
        %35 = sbr.rel (%p32) target = $region12
      $region11: #{custom-call.4} parent=5 // pred_region
        %s36 = ssub.s32 %s3, 1
      $region12: #{custom-call.4} parent=5 // pred_fallthru
        _
      %p37 = scmp.lt.s32.totalorder %s3, 4
      // Predicated region
      $region13: #{custom-call.4} parent=5 // pred_check
        %p38 = pneg %p37
      $region14: #{custom-call.4} parent=5 // pred_check_branch
        %40 = sbr.rel (%p38) target = $region16
      $region15: #{custom-call.4} parent=5 // pred_region
        %s41 = sand.u32 %s3, 1
        %s42 = sand.u32 %s3, 1
        %s43 = smul.addr %s42, 8
        %s44 = scalar_lea.vmem [#allocation0], %s43
        %s45 = sadd.s32 %s12, %s11
        %s46 = sadd.s32 %s45, %s10
        %s47 = smul.addr %s46, 8
        %s48 = scalar_lea.vmem %s0, %s47
        // Predicated region
        $region17: #{custom-call.4} parent=15 // pred_check
          _
        $region18: #{custom-call.4} parent=15 // pred_check_branch
          %50 = sbr.rel (0) target = $region20
        $region19: #{custom-call.4} parent=15 // pred_region
          // Predicated region
          $region21: #{custom-call.4} parent=19 // pred_check
            _
          $region22: #{custom-call.4} parent=19 // pred_check_branch
            %52 = sbr.rel (0) target = $region24
          $region23: #{custom-call.4} parent=19 // pred_region
            // Predicated region
            $region36: #{custom-call.4} parent=23 // pred_check
              _
            $region37: #{custom-call.4} parent=23 // pred_check_branch
              %67 = sbr.rel (0) target = $region39
            $region38: #{custom-call.4} parent=23 // pred_region
              loop: start=0, step=1, limit=1
              $region40: #{custom-call.4} parent=38 // loop_pre_header
                _
              $region41: #{custom-call.4} parent=38 // loop_header
                %s69 = sphi 0, %s73
                %p70 = scmp.ge.s32.totalorder %s69, 1
                %s74 = sphi %s48, %s48
                %s75 = sphi %s44, %s44
              $region42: #{custom-call.4} parent=38 // loop_header_branch
                %72 = sbr.rel (%p70) target = $region46
              $region43: #{custom-call.4} parent=38 // loop_body
                %v76 = vld [vmem:[%s74] sm:$0xff]
                %77 = vst [vmem:[%s75] sm:$0xff] %v76
              $region44: #{custom-call.4} parent=38 // loop_footer
                %s73 = sadd.s32 1, %s69
              $region45: #{custom-call.4} parent=38 // loop_footer_branch
                %68 = sbr.rel target = $region41
              $region46: #{custom-call.4} parent=38 // loop_exit
                _
            $region39: #{custom-call.4} parent=23 // pred_fallthru
              _
            // Predicated region
            $region47: #{custom-call.4} parent=23 // pred_check
              _
            $region48: #{custom-call.4} parent=23 // pred_check_branch
              %79 = sbr.rel target = $region50
            $region49: #{custom-call.4} parent=23 // pred_region
              _
            $region50: #{custom-call.4} parent=23 // pred_fallthru
              _
          $region24: #{custom-call.4} parent=19 // pred_fallthru
            _
          // Predicated region
          $region25: #{custom-call.4} parent=19 // pred_check
            _
          $region26: #{custom-call.4} parent=19 // pred_check_branch
            %54 = sbr.rel target = $region28
          $region27: #{custom-call.4} parent=19 // pred_region
            loop: start=0, step=1, limit=1
            $region29: #{custom-call.4} parent=27 // loop_pre_header
              _
            $region30: #{custom-call.4} parent=27 // loop_header
              %s57 = sphi 0, %s61
              %p58 = scmp.ge.s32.totalorder %s57, 1
              %s62 = sphi %s48, %s48
              %s63 = sphi %s44, %s44
            $region31: #{custom-call.4} parent=27 // loop_header_branch
              %60 = sbr.rel (%p58) target = $region35
            $region32: #{custom-call.4} parent=27 // loop_body
              %v64 = vld [vmem:[%s62] sm:$0xff]
              %65 = vst [vmem:[%s63] sm:$0xff] %v64
            $region33: #{custom-call.4} parent=27 // loop_footer
              %s61 = sadd.s32 1, %s57
            $region34: #{custom-call.4} parent=27 // loop_footer_branch
              %56 = sbr.rel target = $region30
            $region35: #{custom-call.4} parent=27 // loop_exit
              _
          $region28: #{custom-call.4} parent=19 // pred_fallthru
            _
        $region20: #{custom-call.4} parent=15 // pred_fallthru
          _
        %80 = vnop
      $region16: #{custom-call.4} parent=5 // pred_fallthru
        _
      %p81 = scmp.le.s32.totalorder 1, %s3
      %p82 = scmp.lt.s32.totalorder %s3, 5
      %p83 = pnand %p81, %p82
      %p84 = pneg %p83
      // Predicated region
      $region51: #{custom-call.4} parent=5 // pred_check
        _
      $region52: #{custom-call.4} parent=5 // pred_check_branch
        %86 = sbr.rel (%p83) target = $region54
      $region53: #{custom-call.4} parent=5 // pred_region
        %s87 = ssub.s32 %s3, 1
        %s88 = sand.u32 %s8, 1
        %s89 = sand.u32 %s8, 1
        %s90 = smul.addr %s89, 8
        %s91 = scalar_lea.vmem [#allocation0], %s90
        %s92 = sand.u32 %s8, 1
        %s93 = sand.u32 %s8, 1
        %s94 = smul.addr %s93, 8
        %s95 = scalar_lea.vmem [#allocation0], %s94
        %s96 = sand.u32 %s8, 1
        %s97 = sand.u32 %s8, 1
        %s98 = smul.addr %s97, 8
        %s99 = scalar_lea.vmem [#allocation1], %s98
        %100 = vst [vmem:[%s99] sm:$0xff] 0.0
        %vm101 = vcmask 7168
        %v102 = vld [vmem:[%s99] ss:$0 sm:$0xff]
        %v103 = vld [vmem:[%s91] ss:$0 sm:$0xff]
        %v104 = vmul.f32 %v102, %v102
        %105 = vadd.xlane.f32.xlu0 %v104
        %v106 = vpop.xlane.xlu0 %105
        %v107 = vsub.f32 %v103, %v106
        %v108 = vrsqrt.pop %v107
        %v109 = vld [vmem:[%s91] sm:$0xff]
        %v110 = vld [vmem:[%s99] sm:$0xff]
        %v111 = vmul.f32 %v110, %v102
        %112 = vadd.xlane.f32.xlu0 %v111
        %v113 = vpop.xlane.xlu0 %112
        %v114 = vsub.f32 %v109, %v113
        %v115 = vmul.f32 %v114, %v108
        %v116 = vsel %vm101, %v115, 0.0
        %v117 = vadd.f32 %v110, %v116
        %118 = vst [vmem:[%s99] sm:$0xff] %v117
        %vm119 = vcmask 15368
        %s120 = scalar_lea.vmem %s99, 1 [#allocation1]
        %v121 = vld [vmem:[%s120] ss:$0 sm:$0xff]
        %s122 = scalar_lea.vmem %s91, 1 [#allocation0]
        %v123 = vld [vmem:[%s122] ss:$0 sm:$0xff]
        %v124 = vmul.f32 %v121, %v121
        %125 = vadd.xlane.f32.xlu0 %v124
        %v126 = vpop.xlane.xlu0 %125
        %v127 = vsub.f32 %v123, %v126
        %v128 = vrsqrt.pop %v127
        %v129 = vld [vmem:[%s91] sm:$0xff]
        %v130 = vld [vmem:[%s99] sm:$0xff]
        %v131 = vmul.f32 %v130, %v121
        %132 = vadd.xlane.f32.xlu0 %v131
        %v133 = vpop.xlane.xlu0 %132
        %v134 = vsub.f32 %v129, %v133
        %v135 = vmul.f32 %v134, %v128
        %vm136 = vcmask 1047553
        %vm137 = vmand %vm119, %vm136
        %v138 = vsel %vm137, %v135, 0.0
        %v139 = vadd.f32 %v130, %v138
        %140 = vst [vmem:[%s99] sm:$0xff] %v139
        %vm141 = vcmask 23568
        %s142 = scalar_lea.vmem %s99, 2 [#allocation1]
        %v143 = vld [vmem:[%s142] ss:$0 sm:$0xff]
        %s144 = scalar_lea.vmem %s91, 2 [#allocation0]
        %v145 = vld [vmem:[%s144] ss:$0 sm:$0xff]
        %v146 = vmul.f32 %v143, %v143
        %147 = vadd.xlane.f32.xlu0 %v146
        %v148 = vpop.xlane.xlu0 %147
        %v149 = vsub.f32 %v145, %v148
        %v150 = vrsqrt.pop %v149
        %v151 = vld [vmem:[%s91] sm:$0xff]
        %v152 = vld [vmem:[%s99] sm:$0xff]
        %v153 = vmul.f32 %v152, %v143
        %154 = vadd.xlane.f32.xlu0 %v153
        %v155 = vpop.xlane.xlu0 %154
        %v156 = vsub.f32 %v151, %v155
        %v157 = vmul.f32 %v156, %v150
        %vm158 = vcmask 1047554
        %vm159 = vmand %vm141, %vm158
        %v160 = vsel %vm159, %v157, 0.0
        %v161 = vadd.f32 %v152, %v160
        %162 = vst [vmem:[%s99] sm:$0xff] %v161
        %vm163 = vcmask 31768
        %s164 = scalar_lea.vmem %s99, 3 [#allocation1]
        %v165 = vld [vmem:[%s164] ss:$0 sm:$0xff]
        %s166 = scalar_lea.vmem %s91, 3 [#allocation0]
        %v167 = vld [vmem:[%s166] ss:$0 sm:$0xff]
        %v168 = vmul.f32 %v165, %v165
        %169 = vadd.xlane.f32.xlu0 %v168
        %v170 = vpop.xlane.xlu0 %169
        %v171 = vsub.f32 %v167, %v170
        %v172 = vrsqrt.pop %v171
        %v173 = vld [vmem:[%s91] sm:$0xff]
        %v174 = vld [vmem:[%s99] sm:$0xff]
        %v175 = vmul.f32 %v174, %v165
        %176 = vadd.xlane.f32.xlu0 %v175
        %v177 = vpop.xlane.xlu0 %176
        %v178 = vsub.f32 %v173, %v177
        %v179 = vmul.f32 %v178, %v172
        %vm180 = vcmask 1047555
        %vm181 = vmand %vm163, %vm180
        %v182 = vsel %vm181, %v179, 0.0
        %v183 = vadd.f32 %v174, %v182
        %184 = vst [vmem:[%s99] sm:$0xff] %v183
        %vm185 = vcmask 39968
        %s186 = scalar_lea.vmem %s99, 4 [#allocation1]
        %v187 = vld [vmem:[%s186] ss:$0 sm:$0xff]
        %s188 = scalar_lea.vmem %s91, 4 [#allocation0]
        %v189 = vld [vmem:[%s188] ss:$0 sm:$0xff]
        %v190 = vmul.f32 %v187, %v187
        %191 = vadd.xlane.f32.xlu0 %v190
        %v192 = vpop.xlane.xlu0 %191
        %v193 = vsub.f32 %v189, %v192
        %v194 = vrsqrt.pop %v193
        %v195 = vld [vmem:[%s91] sm:$0xff]
        %v196 = vld [vmem:[%s99] sm:$0xff]
        %v197 = vmul.f32 %v196, %v187
        %198 = vadd.xlane.f32.xlu0 %v197
        %v199 = vpop.xlane.xlu0 %198
        %v200 = vsub.f32 %v195, %v199
        %v201 = vmul.f32 %v200, %v194
        %vm202 = vcmask 1047556
        %vm203 = vmand %vm185, %vm202
        %v204 = vsel %vm203, %v201, 0.0
        %v205 = vadd.f32 %v196, %v204
        %206 = vst [vmem:[%s99] sm:$0xff] %v205
        %vm207 = vcmask 48168
        %s208 = scalar_lea.vmem %s99, 5 [#allocation1]
        %v209 = vld [vmem:[%s208] ss:$0 sm:$0xff]
        %s210 = scalar_lea.vmem %s91, 5 [#allocation0]
        %v211 = vld [vmem:[%s210] ss:$0 sm:$0xff]
        %v212 = vmul.f32 %v209, %v209
        %213 = vadd.xlane.f32.xlu0 %v212
        %v214 = vpop.xlane.xlu0 %213
        %v215 = vsub.f32 %v211, %v214
        %v216 = vrsqrt.pop %v215
        %v217 = vld [vmem:[%s91] sm:$0xff]
        %v218 = vld [vmem:[%s99] sm:$0xff]
        %v219 = vmul.f32 %v218, %v209
        %220 = vadd.xlane.f32.xlu0 %v219
        %v221 = vpop.xlane.xlu0 %220
        %v222 = vsub.f32 %v217, %v221
        %v223 = vmul.f32 %v222, %v216
        %vm224 = vcmask 1047557
        %vm225 = vmand %vm207, %vm224
        %v226 = vsel %vm225, %v223, 0.0
        %v227 = vadd.f32 %v218, %v226
        %228 = vst [vmem:[%s99] sm:$0xff] %v227
        %vm229 = vcmask 56368
        %s230 = scalar_lea.vmem %s99, 6 [#allocation1]
        %v231 = vld [vmem:[%s230] ss:$0 sm:$0xff]
        %s232 = scalar_lea.vmem %s91, 6 [#allocation0]
        %v233 = vld [vmem:[%s232] ss:$0 sm:$0xff]
        %v234 = vmul.f32 %v231, %v231
        %235 = vadd.xlane.f32.xlu0 %v234
        %v236 = vpop.xlane.xlu0 %235
        %v237 = vsub.f32 %v233, %v236
        %v238 = vrsqrt.pop %v237
        %v239 = vld [vmem:[%s91] sm:$0xff]
        %v240 = vld [vmem:[%s99] sm:$0xff]
        %v241 = vmul.f32 %v240, %v231
        %242 = vadd.xlane.f32.xlu0 %v241
        %v243 = vpop.xlane.xlu0 %242
        %v244 = vsub.f32 %v239, %v243
        %v245 = vmul.f32 %v244, %v238
        %vm246 = vcmask 1047558
        %vm247 = vmand %vm229, %vm246
        %v248 = vsel %vm247, %v245, 0.0
        %v249 = vadd.f32 %v240, %v248
        %250 = vst [vmem:[%s99] sm:$0xff] %v249
        %vm251 = vcmask 64568
        %s252 = scalar_lea.vmem %s99, 7 [#allocation1]
        %v253 = vld [vmem:[%s252] ss:$0 sm:$0xff]
        %s254 = scalar_lea.vmem %s91, 7 [#allocation0]
        %v255 = vld [vmem:[%s254] ss:$0 sm:$0xff]
        %v256 = vmul.f32 %v253, %v253
        %257 = vadd.xlane.f32.xlu0 %v256
        %v258 = vpop.xlane.xlu0 %257
        %v259 = vsub.f32 %v255, %v258
        %v260 = vrsqrt.pop %v259
        %v261 = vld [vmem:[%s91] sm:$0xff]
        %v262 = vld [vmem:[%s99] sm:$0xff]
        %v263 = vmul.f32 %v262, %v253
        %264 = vadd.xlane.f32.xlu0 %v263
        %v265 = vpop.xlane.xlu0 %264
        %v266 = vsub.f32 %v261, %v265
        %v267 = vmul.f32 %v266, %v260
        %vm268 = vcmask 1047559
        %vm269 = vmand %vm251, %vm268
        %v270 = vsel %vm269, %v267, 0.0
        %v271 = vadd.f32 %v262, %v270
        %272 = vst [vmem:[%s99] sm:$0xff] %v271
        %s273 = sand.u32 %s8, 1
        %s274 = sand.u32 %s8, 1
        %s275 = smul.addr %s274, 8
        %s276 = scalar_lea.vmem [#allocation1], %s275
        %s277 = sadd.s32 %s15, %s14
        %s278 = sadd.s32 %s277, %s13
        %s279 = smul.addr %s278, 8
        %s280 = scalar_lea.vmem %s1, %s279
        // Predicated region
        $region55: #{custom-call.4} parent=53 // pred_check
          _
        $region56: #{custom-call.4} parent=53 // pred_check_branch
          %282 = sbr.rel (0) target = $region58
        $region57: #{custom-call.4} parent=53 // pred_region
          // Predicated region
          $region59: #{custom-call.4} parent=57 // pred_check
            _
          $region60: #{custom-call.4} parent=57 // pred_check_branch
            %284 = sbr.rel (0) target = $region62
          $region61: #{custom-call.4} parent=57 // pred_region
            // Predicated region
            $region74: #{custom-call.4} parent=61 // pred_check
              _
            $region75: #{custom-call.4} parent=61 // pred_check_branch
              %299 = sbr.rel (0) target = $region77
            $region76: #{custom-call.4} parent=61 // pred_region
              loop: start=0, step=1, limit=1
              $region78: #{custom-call.4} parent=76 // loop_pre_header
                _
              $region79: #{custom-call.4} parent=76 // loop_header
                %s301 = sphi 0, %s305
                %p302 = scmp.ge.s32.totalorder %s301, 1
                %s306 = sphi %s276, %s276
                %s307 = sphi %s280, %s280
              $region80: #{custom-call.4} parent=76 // loop_header_branch
                %304 = sbr.rel (%p302) target = $region84
              $region81: #{custom-call.4} parent=76 // loop_body
                %v308 = vld [vmem:[%s306] sm:$0xff]
                %309 = vst [vmem:[%s307] sm:$0xff] %v308
              $region82: #{custom-call.4} parent=76 // loop_footer
                %s305 = sadd.s32 1, %s301
              $region83: #{custom-call.4} parent=76 // loop_footer_branch
                %300 = sbr.rel target = $region79
              $region84: #{custom-call.4} parent=76 // loop_exit
                _
            $region77: #{custom-call.4} parent=61 // pred_fallthru
              _
            // Predicated region
            $region85: #{custom-call.4} parent=61 // pred_check
              _
            $region86: #{custom-call.4} parent=61 // pred_check_branch
              %311 = sbr.rel target = $region88
            $region87: #{custom-call.4} parent=61 // pred_region
              _
            $region88: #{custom-call.4} parent=61 // pred_fallthru
              _
          $region62: #{custom-call.4} parent=57 // pred_fallthru
            _
          // Predicated region
          $region63: #{custom-call.4} parent=57 // pred_check
            _
          $region64: #{custom-call.4} parent=57 // pred_check_branch
            %286 = sbr.rel target = $region66
          $region65: #{custom-call.4} parent=57 // pred_region
            loop: start=0, step=1, limit=1
            $region67: #{custom-call.4} parent=65 // loop_pre_header
              _
            $region68: #{custom-call.4} parent=65 // loop_header
              %s289 = sphi 0, %s293
              %p290 = scmp.ge.s32.totalorder %s289, 1
              %s294 = sphi %s276, %s276
              %s295 = sphi %s280, %s280
            $region69: #{custom-call.4} parent=65 // loop_header_branch
              %292 = sbr.rel (%p290) target = $region73
            $region70: #{custom-call.4} parent=65 // loop_body
              %v296 = vld [vmem:[%s294] sm:$0xff]
              %297 = vst [vmem:[%s295] sm:$0xff] %v296
            $region71: #{custom-call.4} parent=65 // loop_footer
              %s293 = sadd.s32 1, %s289
            $region72: #{custom-call.4} parent=65 // loop_footer_branch
              %288 = sbr.rel target = $region68
            $region73: #{custom-call.4} parent=65 // loop_exit
              _
          $region66: #{custom-call.4} parent=57 // pred_fallthru
            _
        $region58: #{custom-call.4} parent=53 // pred_fallthru
          _
        %312 = vnop
      $region54: #{custom-call.4} parent=5 // pred_fallthru
        _
      %p313 = scmp.le.s32.totalorder 2, %s3
      // Predicated region
      $region89: #{custom-call.4} parent=5 // pred_check
        %p314 = pneg %p313
      $region90: #{custom-call.4} parent=5 // pred_check_branch
        %316 = sbr.rel (%p314) target = $region92
      $region91: #{custom-call.4} parent=5 // pred_region
        %s317 = ssub.s32 %s3, 2
        %s318 = sand.u32 %s9, 1
        %s319 = sand.u32 %s9, 1
        %s320 = smul.addr %s319, 8
        %s321 = scalar_lea.vmem [#allocation1], %s320
      $region92: #{custom-call.4} parent=5 // pred_fallthru
        _
    $region6: #{custom-call.4} parent=1 // loop_footer
      %s7 = sadd.s32 1, %s3
    $region7: #{custom-call.4} parent=1 // loop_footer_branch
      %2 = sbr.rel target = $region3
    $region8: #{custom-call.4} parent=1 // loop_exit
      _

// kernel: custom-call.5
$region0: #{custom-call.5}
  %s0 = inlined_call_operand.vmem [shape: f32[4,1,8,8], index: 0, kind: input, shape index: {}]
  %s1 = inlined_call_operand.vmem [shape: f32[4,1,8,8], index: 1, kind: output, shape index: {}]
  $region1: #{custom-call.5} parent=0
    #allocation0 [shape = 'u8[8192]{0}', space=vmem, size = 0x2000, scoped, tag = 'operand span for operand 0']
    #allocation1 [shape = 'u8[8192]{0}', space=vmem, size = 0x2000, scoped, tag = 'operand span for operand 1']
    loop: start=0, step=1, limit=6
    $region2: #{custom-call.5} parent=1 // loop_pre_header
      _
    $region3: #{custom-call.5} parent=1 // loop_header
      %s3 = sphi 0, %s7
      %p4 = scmp.ge.s32.totalorder %s3, 6
      %s10 = sphi 0, %s36
      %s11 = sphi 0, %s32
      %s12 = sphi 0, %s28
      %s13 = sphi 0, %s24
      %s14 = sphi 0, %s10
      %s15 = sphi 0, %s11
      %s16 = sphi 0, %s12
      %s17 = sphi 0, %s13
      %s18 = sphi 0, %s14
      %s19 = sphi 0, %s15
      %s20 = sphi 0, %s16
      %s21 = sphi 0, %s17
    $region4: #{custom-call.5} parent=1 // loop_header_branch
      %6 = sbr.rel (%p4) target = $region8
    $region5: #{custom-call.5} parent=1 // loop_body
      %s8 = ssub.s32 %s3, 1
      %s9 = ssub.s32 %s3, 2
      %s22 = sadd.s32 1, %s13
      %p23 = scmp.ge.s32.totalorder %s22, 1
      %s24 = scalar_select %p23, 0, %s22
      %s25 = sadd.s32 1, %s12
      %s26 = scalar_select %p23, %s25, %s12
      %p27 = scmp.ge.s32.totalorder %s26, 1
      %s28 = scalar_select %p27, 0, %s26
      %s29 = sadd.s32 1, %s11
      %s30 = scalar_select %p27, %s29, %s11
      %p31 = scmp.ge.s32.totalorder %s30, 1
      %s32 = scalar_select %p31, 0, %s30
      %s33 = sadd.s32 1, %s10
      %s34 = scalar_select %p31, %s33, %s10
      %p35 = scmp.ge.s32.totalorder %s34, 4
      %s36 = scalar_select %p35, 0, %s34
      %p37 = scmp.le.s32.totalorder 1, %s3
      %p38 = scmp.lt.s32.totalorder %s3, 5
      %p39 = pnand %p37, %p38
      %p40 = pneg %p39
      // Predicated region
      $region9: #{custom-call.5} parent=5 // pred_check
        _
      $region10: #{custom-call.5} parent=5 // pred_check_branch
        %42 = sbr.rel (%p39) target = $region12
      $region11: #{custom-call.5} parent=5 // pred_region
        %s43 = ssub.s32 %s3, 1
      $region12: #{custom-call.5} parent=5 // pred_fallthru
        _
      %p44 = scmp.lt.s32.totalorder %s3, 4
      // Predicated region
      $region13: #{custom-call.5} parent=5 // pred_check
        %p45 = pneg %p44
      $region14: #{custom-call.5} parent=5 // pred_check_branch
        %47 = sbr.rel (%p45) target = $region16
      $region15: #{custom-call.5} parent=5 // pred_region
        %s48 = sand.u32 %s3, 1
        %s49 = sand.u32 %s3, 1
        %s50 = smul.addr %s49, 8
        %s51 = scalar_lea.vmem [#allocation0], %s50
        %s52 = sadd.s32 %s13, %s12
        %s53 = sadd.s32 %s52, %s11
        %s54 = sadd.s32 %s53, %s10
        %s55 = smul.addr %s54, 8
        %s56 = scalar_lea.vmem %s0, %s55
        // Predicated region
        $region17: #{custom-call.5} parent=15 // pred_check
          _
        $region18: #{custom-call.5} parent=15 // pred_check_branch
          %58 = sbr.rel (0) target = $region20
        $region19: #{custom-call.5} parent=15 // pred_region
          // Predicated region
          $region21: #{custom-call.5} parent=19 // pred_check
            _
          $region22: #{custom-call.5} parent=19 // pred_check_branch
            %60 = sbr.rel (0) target = $region24
          $region23: #{custom-call.5} parent=19 // pred_region
            // Predicated region
            $region36: #{custom-call.5} parent=23 // pred_check
              _
            $region37: #{custom-call.5} parent=23 // pred_check_branch
              %75 = sbr.rel (0) target = $region39
            $region38: #{custom-call.5} parent=23 // pred_region
              loop: start=0, step=1, limit=1
              $region40: #{custom-call.5} parent=38 // loop_pre_header
                _
              $region41: #{custom-call.5} parent=38 // loop_header
                %s77 = sphi 0, %s81
                %p78 = scmp.ge.s32.totalorder %s77, 1
                %s82 = sphi %s56, %s56
                %s83 = sphi %s51, %s51
              $region42: #{custom-call.5} parent=38 // loop_header_branch
                %80 = sbr.rel (%p78) target = $region46
              $region43: #{custom-call.5} parent=38 // loop_body
                %v84 = vld [vmem:[%s82] sm:$0xff]
                %85 = vst [vmem:[%s83] sm:$0xff] %v84
              $region44: #{custom-call.5} parent=38 // loop_footer
                %s81 = sadd.s32 1, %s77
              $region45: #{custom-call.5} parent=38 // loop_footer_branch
                %76 = sbr.rel target = $region41
              $region46: #{custom-call.5} parent=38 // loop_exit
                _
            $region39: #{custom-call.5} parent=23 // pred_fallthru
              _
            // Predicated region
            $region47: #{custom-call.5} parent=23 // pred_check
              _
            $region48: #{custom-call.5} parent=23 // pred_check_branch
              %87 = sbr.rel target = $region50
            $region49: #{custom-call.5} parent=23 // pred_region
              _
            $region50: #{custom-call.5} parent=23 // pred_fallthru
              _
          $region24: #{custom-call.5} parent=19 // pred_fallthru
            _
          // Predicated region
          $region25: #{custom-call.5} parent=19 // pred_check
            _
          $region26: #{custom-call.5} parent=19 // pred_check_branch
            %62 = sbr.rel target = $region28
          $region27: #{custom-call.5} parent=19 // pred_region
            loop: start=0, step=1, limit=1
            $region29: #{custom-call.5} parent=27 // loop_pre_header
              _
            $region30: #{custom-call.5} parent=27 // loop_header
              %s65 = sphi 0, %s69
              %p66 = scmp.ge.s32.totalorder %s65, 1
              %s70 = sphi %s56, %s56
              %s71 = sphi %s51, %s51
            $region31: #{custom-call.5} parent=27 // loop_header_branch
              %68 = sbr.rel (%p66) target = $region35
            $region32: #{custom-call.5} parent=27 // loop_body
              %v72 = vld [vmem:[%s70] sm:$0xff]
              %73 = vst [vmem:[%s71] sm:$0xff] %v72
            $region33: #{custom-call.5} parent=27 // loop_footer
              %s69 = sadd.s32 1, %s65
            $region34: #{custom-call.5} parent=27 // loop_footer_branch
              %64 = sbr.rel target = $region30
            $region35: #{custom-call.5} parent=27 // loop_exit
              _
          $region28: #{custom-call.5} parent=19 // pred_fallthru
            _
        $region20: #{custom-call.5} parent=15 // pred_fallthru
          _
        %88 = vnop
      $region16: #{custom-call.5} parent=5 // pred_fallthru
        _
      %p89 = scmp.le.s32.totalorder 1, %s3
      %p90 = scmp.lt.s32.totalorder %s3, 5
      %p91 = pnand %p89, %p90
      %p92 = pneg %p91
      // Predicated region
      $region51: #{custom-call.5} parent=5 // pred_check
        _
      $region52: #{custom-call.5} parent=5 // pred_check_branch
        %94 = sbr.rel (%p91) target = $region54
      $region53: #{custom-call.5} parent=5 // pred_region
        #allocation2 [shape = 'f32[8,8]{1,0}', space=vmem, size = 0x1000, scoped, tag = 'rescaled input a']
        %s95 = ssub.s32 %s3, 1
        %s96 = sand.u32 %s8, 1
        %s97 = sand.u32 %s8, 1
        %s98 = smul.addr %s97, 8
        %s99 = scalar_lea.vmem [#allocation0], %s98
        %s100 = sand.u32 %s8, 1
        %s101 = sand.u32 %s8, 1
        %s102 = smul.addr %s101, 8
        %s103 = scalar_lea.vmem [#allocation0], %s102
        %s104 = sand.u32 %s8, 1
        %s105 = sand.u32 %s8, 1
        %s106 = smul.addr %s105, 8
        %s107 = scalar_lea.vmem [#allocation1], %s106
        %v108 = vlaneseq
        %v109 = vand.u32 %v108, 127
        %vm110 = vcmp.lt.s32.totalorder %v109, 8
        %v111 = vlaneseq
        %v112 = vshrl.u32 %v111, 7
        %vm114 = vcmp.eq.s32.totalorder %v112, %v109
        %v115 = vld [vmem:[%s99] sm:$0xff]
        %v116 = vsel %vm114, %v115, 0.0
        %117 = vadd.xlane.f32.xlu0 %v116
        %v118 = vpop.xlane.xlu0 %117
        %vm119 = vcmp.ge.s32.totalorder %v112, %v109
        %vm120 = vmand %vm119, %vm110
        %v121 = vsel %vm120, %v115, 0.0
        %v122 = vrcp.pop %v118
        %v123 = vmul.f32 %v121, %v122
        %124 = vst [vmem:[#allocation2] sm:$0xff] %v123
        %v125 = vlaneseq
        %v126 = vand.u32 %v125, 127
        %v127 = vlaneseq
        %v128 = vshrl.u32 %v127, 7
        %vm130 = vcmp.eq.s32.totalorder %v126, %v128
        %v131 = vlaneseq
        %v132 = vand.u32 %v131, 127
        %vm133 = vcmp.eq.s32.totalorder %v132, 0
        %v134 = vsel %vm133, 1.0, -1.0
        %v135 = vsel %vm130, %v134, 0.0
        %s136 = scalar_lea.vmem [#allocation2], 1
        %v137 = vld [vmem:[%s136] ss:$0 sm:$0xff]
        %v138 = vxor.u32 %v137, 2147483648
        %v139 = vlaneseq
        %v140 = vand.u32 %v139, 127
        %vm141 = vcmp.eq.s32.totalorder %v140, 1
        %v142 = vmul.f32 %v138, %v135
        %143 = vadd.xlane.f32.xlu0 %v142
        %v144 = vpop.xlane.xlu0 %143
        %v145 = vsel %vm141, %v144, %v135
        %s146 = scalar_lea.vmem [#allocation2], 2
        %v147 = vld [vmem:[%s146] ss:$0 sm:$0xff]
        %v148 = vxor.u32 %v147, 2147483648
        %v149 = vlaneseq
        %v150 = vand.u32 %v149, 127
        %vm151 = vcmp.eq.s32.totalorder %v150, 2
        %v152 = vmul.f32 %v148, %v145
        %153 = vadd.xlane.f32.xlu0 %v152
        %v154 = vpop.xlane.xlu0 %153
        %v155 = vsel %vm151, %v154, %v145
        %s156 = scalar_lea.vmem [#allocation2], 3
        %v157 = vld [vmem:[%s156] ss:$0 sm:$0xff]
        %v158 = vxor.u32 %v157, 2147483648
        %v159 = vlaneseq
        %v160 = vand.u32 %v159, 127
        %vm161 = vcmp.eq.s32.totalorder %v160, 3
        %v162 = vmul.f32 %v158, %v155
        %163 = vadd.xlane.f32.xlu0 %v162
        %v164 = vpop.xlane.xlu0 %163
        %v165 = vsel %vm161, %v164, %v155
        %s166 = scalar_lea.vmem [#allocation2], 4
        %v167 = vld [vmem:[%s166] ss:$0 sm:$0xff]
        %v168 = vxor.u32 %v167, 2147483648
        %v169 = vlaneseq
        %v170 = vand.u32 %v169, 127
        %vm171 = vcmp.eq.s32.totalorder %v170, 4
        %v172 = vmul.f32 %v168, %v165
        %173 = vadd.xlane.f32.xlu0 %v172
        %v174 = vpop.xlane.xlu0 %173
        %v175 = vsel %vm171, %v174, %v165
        %s176 = scalar_lea.vmem [#allocation2], 5
        %v177 = vld [vmem:[%s176] ss:$0 sm:$0xff]
        %v178 = vxor.u32 %v177, 2147483648
        %v179 = vlaneseq
        %v180 = vand.u32 %v179, 127
        %vm181 = vcmp.eq.s32.totalorder %v180, 5
        %v182 = vmul.f32 %v178, %v175
        %183 = vadd.xlane.f32.xlu0 %v182
        %v184 = vpop.xlane.xlu0 %183
        %v185 = vsel %vm181, %v184, %v175
        %s186 = scalar_lea.vmem [#allocation2], 6
        %v187 = vld [vmem:[%s186] ss:$0 sm:$0xff]
        %v188 = vxor.u32 %v187, 2147483648
        %v189 = vlaneseq
        %v190 = vand.u32 %v189, 127
        %vm191 = vcmp.eq.s32.totalorder %v190, 6
        %v192 = vmul.f32 %v188, %v185
        %193 = vadd.xlane.f32.xlu0 %v192
        %v194 = vpop.xlane.xlu0 %193
        %v195 = vsel %vm191, %v194, %v185
        %s196 = scalar_lea.vmem [#allocation2], 7
        %v197 = vld [vmem:[%s196] ss:$0 sm:$0xff]
        %v198 = vxor.u32 %v197, 2147483648
        %v199 = vlaneseq
        %v200 = vand.u32 %v199, 127
        %vm201 = vcmp.eq.s32.totalorder %v200, 7
        %v202 = vmul.f32 %v198, %v195
        %203 = vadd.xlane.f32.xlu0 %v202
        %v204 = vpop.xlane.xlu0 %203
        %v205 = vsel %vm201, %v204, %v195
        %v206 = vrcp.pop %v118
        %v207 = vmul.f32 %v205, %v206
        %vm208 = vweird.f32 %v118
        %v209 = vsel %vm208, %v205, %v207
        %210 = vst [vmem:[%s107] sm:$0xff] %v209
        %s211 = sand.u32 %s8, 1
        %s212 = sand.u32 %s8, 1
        %s213 = smul.addr %s212, 8
        %s214 = scalar_lea.vmem [#allocation1], %s213
        %s215 = sadd.s32 %s17, %s16
        %s216 = sadd.s32 %s215, %s15
        %s217 = sadd.s32 %s216, %s14
        %s218 = smul.addr %s217, 8
        %s219 = scalar_lea.vmem %s1, %s218
        // Predicated region
        $region55: #{custom-call.5} parent=53 // pred_check
          _
        $region56: #{custom-call.5} parent=53 // pred_check_branch
          %221 = sbr.rel (0) target = $region58
        $region57: #{custom-call.5} parent=53 // pred_region
          // Predicated region
          $region59: #{custom-call.5} parent=57 // pred_check
            _
          $region60: #{custom-call.5} parent=57 // pred_check_branch
            %223 = sbr.rel (0) target = $region62
          $region61: #{custom-call.5} parent=57 // pred_region
            // Predicated region
            $region74: #{custom-call.5} parent=61 // pred_check
              _
            $region75: #{custom-call.5} parent=61 // pred_check_branch
              %238 = sbr.rel (0) target = $region77
            $region76: #{custom-call.5} parent=61 // pred_region
              loop: start=0, step=1, limit=1
              $region78: #{custom-call.5} parent=76 // loop_pre_header
                _
              $region79: #{custom-call.5} parent=76 // loop_header
                %s240 = sphi 0, %s244
                %p241 = scmp.ge.s32.totalorder %s240, 1
                %s245 = sphi %s214, %s214
                %s246 = sphi %s219, %s219
              $region80: #{custom-call.5} parent=76 // loop_header_branch
                %243 = sbr.rel (%p241) target = $region84
              $region81: #{custom-call.5} parent=76 // loop_body
                %v247 = vld [vmem:[%s245] sm:$0xff]
                %248 = vst [vmem:[%s246] sm:$0xff] %v247
              $region82: #{custom-call.5} parent=76 // loop_footer
                %s244 = sadd.s32 1, %s240
              $region83: #{custom-call.5} parent=76 // loop_footer_branch
                %239 = sbr.rel target = $region79
              $region84: #{custom-call.5} parent=76 // loop_exit
                _
            $region77: #{custom-call.5} parent=61 // pred_fallthru
              _
            // Predicated region
            $region85: #{custom-call.5} parent=61 // pred_check
              _
            $region86: #{custom-call.5} parent=61 // pred_check_branch
              %250 = sbr.rel target = $region88
            $region87: #{custom-call.5} parent=61 // pred_region
              _
            $region88: #{custom-call.5} parent=61 // pred_fallthru
              _
          $region62: #{custom-call.5} parent=57 // pred_fallthru
            _
          // Predicated region
          $region63: #{custom-call.5} parent=57 // pred_check
            _
          $region64: #{custom-call.5} parent=57 // pred_check_branch
            %225 = sbr.rel target = $region66
          $region65: #{custom-call.5} parent=57 // pred_region
            loop: start=0, step=1, limit=1
            $region67: #{custom-call.5} parent=65 // loop_pre_header
              _
            $region68: #{custom-call.5} parent=65 // loop_header
              %s228 = sphi 0, %s232
              %p229 = scmp.ge.s32.totalorder %s228, 1
              %s233 = sphi %s214, %s214
              %s234 = sphi %s219, %s219
            $region69: #{custom-call.5} parent=65 // loop_header_branch
              %231 = sbr.rel (%p229) target = $region73
            $region70: #{custom-call.5} parent=65 // loop_body
              %v235 = vld [vmem:[%s233] sm:$0xff]
              %236 = vst [vmem:[%s234] sm:$0xff] %v235
            $region71: #{custom-call.5} parent=65 // loop_footer
              %s232 = sadd.s32 1, %s228
            $region72: #{custom-call.5} parent=65 // loop_footer_branch
              %227 = sbr.rel target = $region68
            $region73: #{custom-call.5} parent=65 // loop_exit
              _
          $region66: #{custom-call.5} parent=57 // pred_fallthru
            _
        $region58: #{custom-call.5} parent=53 // pred_fallthru
          _
        %251 = vnop
      $region54: #{custom-call.5} parent=5 // pred_fallthru
        _
      %p252 = scmp.le.s32.totalorder 2, %s3
      // Predicated region
      $region89: #{custom-call.5} parent=5 // pred_check
        %p253 = pneg %p252
      $region90: #{custom-call.5} parent=5 // pred_check_branch
        %255 = sbr.rel (%p253) target = $region92
      $region91: #{custom-call.5} parent=5 // pred_region
        %s256 = ssub.s32 %s3, 2
        %s257 = sand.u32 %s9, 1
        %s258 = sand.u32 %s9, 1
        %s259 = smul.addr %s258, 8
        %s260 = scalar_lea.vmem [#allocation1], %s259
      $region92: #{custom-call.5} parent=5 // pred_fallthru
        _
    $region6: #{custom-call.5} parent=1 // loop_footer
      %s7 = sadd.s32 1, %s3
    $region7: #{custom-call.5} parent=1 // loop_footer_branch
      %2 = sbr.rel target = $region3
    $region8: #{custom-call.5} parent=1 // loop_exit
      _

// kernel: gmm_loss.3
$region0: #{gmm_loss.3}
  #allocation0 [shape = 'u32[]', space=smem, size = 0x4, offset = 0x4, fixed_abs, tag = 'smem constant byte address 0x4 - core index']
  #allocation1 [shape = 'u32[144,128]{1,0:T(1,128)}', space=vmem, size = 0x12000, scoped, tag = 'internal scratch']
  #allocation2 [shape = 'f32[1,1024]{1,0:T(1,128)}', space=vmem, size = 0x1000, scoped, tag = 'scratch operand']
  %s0 = inlined_call_operand.vmem [shape: f32[2,1024], index: 0, kind: input, shape index: {}]
  %s1 = inlined_call_operand.vmem [shape: f32[2,1024], index: 1, kind: input, shape index: {}]
  %s2 = inlined_call_operand.hbm [shape: f32[1,1,1], index: 2, kind: output, shape index: {}]
  %s3 = sld [smem:[#allocation0]]
  $region26: #{gmm_loss.3} parent=0
    _
  %s5 = ssub.s32 1, %s3
  %s6 = scalar_select 0, %s5, %s3
  $region1: #{gmm_loss.3} parent=0
    #allocation3 [shape = 'u8[512]{0}', space=vmem, size = 0x400, scoped, tag = 'output window, operand 0, single buffered']
    #allocation4 [shape = 's32[1]{0}', space=sflag, size = 0x4, scoped, tag = 'scoped memory for gmm_loss.3']
    %7 = vsyncpa [#allocation4], 0
    // Predicated region
    $region2: #{gmm_loss.3} parent=1 // pred_check
      _
    $region3: #{gmm_loss.3} parent=1 // pred_check_branch
      %9 = sbr.rel (0) target = $region5
    $region4: #{gmm_loss.3} parent=1 // pred_region
      %s10 = sadd.s32 0, 0
      %p11 = scmp.lt.s32.totalorder %s10, 0
      %s12 = scalar_select %p11, %s10, 0
      %s13 = smul.u32 4, %s12
      %s14 = ssub.s32 1, %s13
      %s15 = smul.u32 32, %s14
      %s16 = smul.u32 %s15, 8
      %p17 = scmp.lt.s32.totalorder %s13, 0
      %s18 = scalar_select %p17, %s13, 0
      %s19 = smul.addr %s18, 8
      %s20 = smul.addr %s19, 2
      %s21 = scalar_lea.vmem %s0, %s20
      %s22 = sadd.s32 0, 0
      %p23 = scmp.lt.s32.totalorder %s22, 0
      %s24 = scalar_select %p23, %s22, 0
      %s25 = smul.u32 4, %s24
      %s26 = ssub.s32 1, %s25
      %s27 = smul.u32 32, %s26
      %s28 = smul.u32 %s27, 8
    $region5: #{gmm_loss.3} parent=1 // pred_fallthru
      _
    // Predicated region
    $region6: #{gmm_loss.3} parent=1 // pred_check
      _
    $region7: #{gmm_loss.3} parent=1 // pred_check_branch
      %30 = sbr.rel (0) target = $region9
    $region8: #{gmm_loss.3} parent=1 // pred_region
      %s31 = sadd.s32 0, 0
      %p32 = scmp.lt.s32.totalorder %s31, 0
      %s33 = scalar_select %p32, %s31, 0
      %s34 = smul.u32 4, %s33
      %s35 = ssub.s32 1, %s34
      %s36 = smul.u32 32, %s35
      %s37 = smul.u32 %s36, 8
      %p38 = scmp.lt.s32.totalorder %s34, 0
      %s39 = scalar_select %p38, %s34, 0
      %s40 = smul.addr %s39, 8
      %s41 = smul.addr %s40, 2
      %s42 = scalar_lea.vmem %s1, %s41
      %s43 = sadd.s32 0, 0
      %p44 = scmp.lt.s32.totalorder %s43, 0
      %s45 = scalar_select %p44, %s43, 0
      %s46 = smul.u32 4, %s45
      %s47 = ssub.s32 1, %s46
      %s48 = smul.u32 32, %s47
      %s49 = smul.u32 %s48, 8
    $region9: #{gmm_loss.3} parent=1 // pred_fallthru
      _
    %s50 = sadd.s32 0, 0
    %p51 = scmp.lt.s32.totalorder %s50, 0
    %s52 = scalar_select %p51, %s50, 0
    %s53 = smul.u32 4, %s52
    %s54 = ssub.s32 1, %s53
    %s55 = smul.u32 32, %s54
    %s56 = smul.u32 %s55, 8
    %p57 = scmp.lt.s32.totalorder %s53, 0
    %s58 = scalar_select %p57, %s53, 0
    %s59 = smul.addr %s58, 8
    %s60 = smul.addr %s59, 2
    %s61 = scalar_lea.vmem %s0, %s60
    %s62 = sadd.s32 0, 0
    %p63 = scmp.lt.s32.totalorder %s62, 0
    %s64 = scalar_select %p63, %s62, 0
    %s65 = smul.u32 4, %s64
    %s66 = ssub.s32 1, %s65
    %s67 = smul.u32 32, %s66
    %s68 = smul.u32 %s67, 8
    %p69 = scmp.lt.s32.totalorder %s65, 0
    %s70 = scalar_select %p69, %s65, 0
    %s71 = smul.addr %s70, 8
    %s72 = smul.addr %s71, 2
    %s73 = scalar_lea.vmem %s1, %s72
    %s74 = sadd.s32 0, 0
    %p75 = scmp.lt.s32.totalorder %s74, 0
    %s76 = scalar_select %p75, %s74, 0
    %s77 = smul.u32 4, %s76
    %s78 = ssub.s32 1, %s77
    %s79 = smul.u32 32, %s78
    %s80 = smul.u32 %s79, 8
    %p81 = scmp.lt.s32.totalorder %s77, 0
    %s82 = scalar_select %p81, %s77, 0
    %s83 = smul.addr %s82, 8
    %s84 = smul.addr %s83, 2
    %s85 = scalar_lea.vmem %s0, %s84
    %s86 = sadd.s32 0, 0
    %p87 = scmp.lt.s32.totalorder %s86, 0
    %s88 = scalar_select %p87, %s86, 0
    %s89 = smul.u32 4, %s88
    %s90 = ssub.s32 1, %s89
    %s91 = smul.u32 32, %s90
    %s92 = smul.u32 %s91, 8
    %s93 = sadd.s32 0, 0
    %p94 = scmp.lt.s32.totalorder %s93, 0
    %s95 = scalar_select %p94, %s93, 0
    %s96 = smul.u32 4, %s95
    %s97 = ssub.s32 1, %s96
    %s98 = smul.u32 32, %s97
    %s99 = smul.u32 %s98, 8
    %p100 = scmp.lt.s32.totalorder %s96, 0
    %s101 = scalar_select %p100, %s96, 0
    %s102 = smul.addr %s101, 8
    %s103 = smul.addr %s102, 2
    %s104 = scalar_lea.vmem %s1, %s103
    %s105 = sadd.s32 0, 0
    %p106 = scmp.lt.s32.totalorder %s105, 0
    %s107 = scalar_select %p106, %s105, 0
    %s108 = smul.u32 4, %s107
    %s109 = ssub.s32 1, %s108
    %s110 = smul.u32 32, %s109
    %s111 = smul.u32 %s110, 8
    %p112 = scmp.eq.s32.totalorder 0, 0
    // Predicated region
    $region10: #{gmm_loss.3} parent=1 // pred_check
      %p113 = pneg %p112
    $region11: #{gmm_loss.3} parent=1 // pred_check_branch
      %115 = sbr.rel (%p113) target = $region13
    $region12: #{gmm_loss.3} parent=1 // pred_region
      %116 = vst [vmem:[#allocation2] sm:$0xff] 0.0
    $region13: #{gmm_loss.3} parent=1 // pred_fallthru
      _
    %v117 = vld [vmem:[%s104] sm:$0xff]
    %v118 = vld [vmem:[%s104 + $0x8] sm:$0xff]
    %v119 = vld [vmem:[%s104 + $0x10] sm:$0xff]
    %v120 = vld [vmem:[%s104 + $0x18] sm:$0xff]
    %v121 = vld [vmem:[%s104 + $0x20] sm:$0xff]
    %v122 = vld [vmem:[%s104 + $0x28] sm:$0xff]
    %v123 = vld [vmem:[%s104 + $0x30] sm:$0xff]
    %v124 = vld [vmem:[%s104 + $0x38] sm:$0xff]
    %v125 = vld [vmem:[%s85] sm:$0xff]
    %v126 = vld [vmem:[%s85 + $0x8] sm:$0xff]
    %v127 = vld [vmem:[%s85 + $0x10] sm:$0xff]
    %v128 = vld [vmem:[%s85 + $0x18] sm:$0xff]
    %v129 = vld [vmem:[%s85 + $0x20] sm:$0xff]
    %v130 = vld [vmem:[%s85 + $0x28] sm:$0xff]
    %v131 = vld [vmem:[%s85 + $0x30] sm:$0xff]
    %v132 = vld [vmem:[%s85 + $0x38] sm:$0xff]
    %v133 = vsub.f32 %v117, %v125
    %v134 = vsub.f32 %v118, %v126
    %v135 = vsub.f32 %v119, %v127
    %v136 = vsub.f32 %v120, %v128
    %v137 = vsub.f32 %v121, %v129
    %v138 = vsub.f32 %v122, %v130
    %v139 = vsub.f32 %v123, %v131
    %v140 = vsub.f32 %v124, %v132
    %s141 = sadd.s32 0, 0
    %s142 = smul.u32 %s141, 8
    %v143 = vlaneseq
    %v144 = vshrl.u32 %v143, 7
    %v145 = vstv %s142
    %v146 = vadd.s32 %v145, %v144
    %vm147 = vcmp.lt.s32.totalorder %v146, 2
    %v148 = vsel %vm147, 1, 0
    %vm149 = vcmp.eq.s32.totalorder %v148, 1
    %v158 = vcombine.low %v133, %v135
    %v159 = vcombine.high %v133, %v135
    %v160 = vcombine.low %v137, %v139
    %v161 = vcombine.high %v137, %v139
    %v163 = vunpack.c.l.s4 1983009808
    %v164 = vunpack.c.0.s8 %v163
    %v165 = vlaneseq
    %v166 = vshrl.u32 %v165, 7
    %v167 = vsub.s32 %v164, %v166
    %v168 = vrot.slane %v158, %v167
    %v170 = vunpack.c.l.s4 1983009808
    %v171 = vunpack.c.0.s8 %v170
    %v172 = vlaneseq
    %v173 = vshrl.u32 %v172, 7
    %v174 = vsub.s32 %v171, %v173
    %v175 = vrot.slane %v159, %v174
    %v177 = vunpack.c.l.s4 1983009808
    %v178 = vunpack.c.0.s8 %v177
    %v179 = vlaneseq
    %v180 = vshrl.u32 %v179, 7
    %v181 = vsub.s32 %v178, %v180
    %v182 = vrot.slane %v160, %v181
    %v184 = vunpack.c.l.s4 1983009808
    %v185 = vunpack.c.0.s8 %v184
    %v186 = vlaneseq
    %v187 = vshrl.u32 %v186, 7
    %v188 = vsub.s32 %v185, %v187
    %v189 = vrot.slane %v161, %v188
    %v190 = vcombine.low %v168, %v182
    %v191 = vcombine.high %v168, %v182
    %v192 = vcombine.low %v175, %v189
    %v193 = vcombine.high %v175, %v189
    %v194 = vcombine.low %v134, %v136
    %v195 = vcombine.high %v134, %v136
    %v196 = vcombine.low %v138, %v140
    %v197 = vcombine.high %v138, %v140
    %v199 = vunpack.c.l.s4 1983009808
    %v200 = vunpack.c.0.s8 %v199
    %v201 = vlaneseq
    %v202 = vshrl.u32 %v201, 7
    %v203 = vsub.s32 %v200, %v202
    %v204 = vrot.slane %v194, %v203
    %v206 = vunpack.c.l.s4 1983009808
    %v207 = vunpack.c.0.s8 %v206
    %v208 = vlaneseq
    %v209 = vshrl.u32 %v208, 7
    %v210 = vsub.s32 %v207, %v209
    %v211 = vrot.slane %v195, %v210
    %v213 = vunpack.c.l.s4 1983009808
    %v214 = vunpack.c.0.s8 %v213
    %v215 = vlaneseq
    %v216 = vshrl.u32 %v215, 7
    %v217 = vsub.s32 %v214, %v216
    %v218 = vrot.slane %v196, %v217
    %v220 = vunpack.c.l.s4 1983009808
    %v221 = vunpack.c.0.s8 %v220
    %v222 = vlaneseq
    %v223 = vshrl.u32 %v222, 7
    %v224 = vsub.s32 %v221, %v223
    %v225 = vrot.slane %v197, %v224
    %v226 = vcombine.low %v204, %v218
    %v227 = vcombine.high %v204, %v218
    %v228 = vcombine.low %v211, %v225
    %v229 = vcombine.high %v211, %v225
    %v238 = vsel %vm149, %v190, 0.0
    %v239 = vsel %vm149, %v191, 0.0
    %v240 = vsel %vm149, %v192, 0.0
    %v241 = vsel %vm149, %v193, 0.0
    %v242 = vsel %vm149, %v226, 0.0
    %v243 = vsel %vm149, %v227, 0.0
    %v244 = vsel %vm149, %v228, 0.0
    %v245 = vsel %vm149, %v229, 0.0
    %v246 = vld [vmem:[#allocation2] sm:$0xff]
    %v247 = vmul.f32 %v238, %v238
    %v248 = vmul.f32 %v239, %v239
    %v249 = vmul.f32 %v240, %v240
    %v250 = vmul.f32 %v241, %v241
    %v251 = vmul.f32 %v242, %v242
    %v252 = vmul.f32 %v243, %v243
    %v253 = vmul.f32 %v244, %v244
    %v254 = vmul.f32 %v245, %v245
    %v255 = vrot.slane %v247, 4
    %v256 = vadd.f32 %v247, %v255
    %v257 = vrot.slane %v256, 2
    %v258 = vadd.f32 %v256, %v257
    %v259 = vrot.slane %v258, 1
    %v260 = vadd.f32 %v258, %v259
    %v261 = vrot.slane %v248, 4
    %v262 = vadd.f32 %v248, %v261
    %v263 = vrot.slane %v262, 2
    %v264 = vadd.f32 %v262, %v263
    %v265 = vrot.slane %v264, 1
    %v266 = vadd.f32 %v264, %v265
    %v267 = vrot.slane %v249, 4
    %v268 = vadd.f32 %v249, %v267
    %v269 = vrot.slane %v268, 2
    %v270 = vadd.f32 %v268, %v269
    %v271 = vrot.slane %v270, 1
    %v272 = vadd.f32 %v270, %v271
    %v273 = vrot.slane %v250, 4
    %v274 = vadd.f32 %v250, %v273
    %v275 = vrot.slane %v274, 2
    %v276 = vadd.f32 %v274, %v275
    %v277 = vrot.slane %v276, 1
    %v278 = vadd.f32 %v276, %v277
    %v279 = vrot.slane %v251, 4
    %v280 = vadd.f32 %v251, %v279
    %v281 = vrot.slane %v280, 2
    %v282 = vadd.f32 %v280, %v281
    %v283 = vrot.slane %v282, 1
    %v284 = vadd.f32 %v282, %v283
    %v285 = vrot.slane %v252, 4
    %v286 = vadd.f32 %v252, %v285
    %v287 = vrot.slane %v286, 2
    %v288 = vadd.f32 %v286, %v287
    %v289 = vrot.slane %v288, 1
    %v290 = vadd.f32 %v288, %v289
    %v291 = vrot.slane %v253, 4
    %v292 = vadd.f32 %v253, %v291
    %v293 = vrot.slane %v292, 2
    %v294 = vadd.f32 %v292, %v293
    %v295 = vrot.slane %v294, 1
    %v296 = vadd.f32 %v294, %v295
    %v297 = vrot.slane %v254, 4
    %v298 = vadd.f32 %v254, %v297
    %v299 = vrot.slane %v298, 2
    %v300 = vadd.f32 %v298, %v299
    %v301 = vrot.slane %v300, 1
    %v302 = vadd.f32 %v300, %v301
    %v311 = vcombine.low %v260, %v266
    %v312 = vcombine.low %v272, %v278
    %v313 = vcombine.low %v284, %v290
    %v314 = vcombine.low %v296, %v302
    %v316 = vunpack.c.l.s4 1966171168
    %v317 = vunpack.c.0.s8 %v316
    %v318 = vlaneseq
    %v319 = vshrl.u32 %v318, 7
    %v320 = vsub.s32 %v317, %v319
    %v321 = vrot.slane %v311, %v320
    %v323 = vunpack.c.l.s4 1966171168
    %v324 = vunpack.c.0.s8 %v323
    %v325 = vlaneseq
    %v326 = vshrl.u32 %v325, 7
    %v327 = vsub.s32 %v324, %v326
    %v328 = vrot.slane %v312, %v327
    %v330 = vunpack.c.l.s4 1966171168
    %v331 = vunpack.c.0.s8 %v330
    %v332 = vlaneseq
    %v333 = vshrl.u32 %v332, 7
    %v334 = vsub.s32 %v331, %v333
    %v335 = vrot.slane %v313, %v334
    %v337 = vunpack.c.l.s4 1966171168
    %v338 = vunpack.c.0.s8 %v337
    %v339 = vlaneseq
    %v340 = vshrl.u32 %v339, 7
    %v341 = vsub.s32 %v338, %v340
    %v342 = vrot.slane %v314, %v341
    %v343 = vcombine.low %v321, %v328
    %v344 = vcombine.low %v335, %v342
    %v346 = vunpack.c.l.s4 1966171168
    %v347 = vunpack.c.0.s8 %v346
    %v348 = vlaneseq
    %v349 = vshrl.u32 %v348, 7
    %v350 = vsub.s32 %v347, %v349
    %v351 = vrot.slane %v343, %v350
    %v353 = vunpack.c.l.s4 1966171168
    %v354 = vunpack.c.0.s8 %v353
    %v355 = vlaneseq
    %v356 = vshrl.u32 %v355, 7
    %v357 = vsub.s32 %v354, %v356
    %v358 = vrot.slane %v344, %v357
    %v359 = vcombine.low %v351, %v358
    %v361 = vadd.f32 %v246, %v359
    %362 = vst [vmem:[#allocation2] sm:$0xff] %v361
    // Predicated region
    $region14: #{gmm_loss.3} parent=1 // pred_check
      %p363 = pneg %p112
    $region15: #{gmm_loss.3} parent=1 // pred_check_branch
      %365 = sbr.rel (%p363) target = $region17
    $region16: #{gmm_loss.3} parent=1 // pred_region
      %v366 = vld [vmem:[#allocation2] sm:$0xff]
      %v368 = vlaneseq
      %v369 = vshrl.u32 %v368, 7
      %v370 = vsub.s32 0, %v369
      %v371 = vrot.slane %v366, %v370
      %v372 = vlaneseq
      %v373 = vshrl.u32 %v372, 7
      %v374 = vsub.s32 1, %v373
      %v375 = vrot.slane %v366, %v374
      %v376 = vlaneseq
      %v377 = vshrl.u32 %v376, 7
      %v378 = vsub.s32 2, %v377
      %v379 = vrot.slane %v366, %v378
      %v380 = vlaneseq
      %v381 = vshrl.u32 %v380, 7
      %v382 = vsub.s32 3, %v381
      %v383 = vrot.slane %v366, %v382
      %v384 = vlaneseq
      %v385 = vshrl.u32 %v384, 7
      %v386 = vsub.s32 4, %v385
      %v387 = vrot.slane %v366, %v386
      %v388 = vlaneseq
      %v389 = vshrl.u32 %v388, 7
      %v390 = vsub.s32 5, %v389
      %v391 = vrot.slane %v366, %v390
      %v392 = vlaneseq
      %v393 = vshrl.u32 %v392, 7
      %v394 = vsub.s32 6, %v393
      %v395 = vrot.slane %v366, %v394
      %v396 = vlaneseq
      %v397 = vshrl.u32 %v396, 7
      %v398 = vsub.s32 7, %v397
      %v399 = vrot.slane %v366, %v398
      %vm408 = vcmask 1040384
      %v409 = vsel %vm408, %v371, 0.0
      %v410 = vsel %vm408, %v375, 0.0
      %v411 = vadd.f32 %v409, %v410
      %v412 = vsel %vm408, %v379, 0.0
      %v413 = vadd.f32 %v411, %v412
      %v414 = vsel %vm408, %v383, 0.0
      %v415 = vadd.f32 %v413, %v414
      %v416 = vsel %vm408, %v387, 0.0
      %v417 = vadd.f32 %v415, %v416
      %v418 = vsel %vm408, %v391, 0.0
      %v419 = vadd.f32 %v417, %v418
      %v420 = vsel %vm408, %v395, 0.0
      %v421 = vadd.f32 %v419, %v420
      %v422 = vsel %vm408, %v399, 0.0
      %v423 = vadd.f32 %v421, %v422
      %424 = vadd.xlane.f32.xlu0 %v423
      %v425 = vpop.xlane.xlu0 %424
      %v426 = vrot.slane %v425, 4
      %v427 = vadd.f32 %v425, %v426
      %v428 = vrot.slane %v427, 2
      %v429 = vadd.f32 %v427, %v428
      %v430 = vrot.slane %v429, 1
      %v431 = vadd.f32 %v429, %v430
      %s432 = vtos %v431
      %v433 = vstv %s432
      %v434 = vadd.f32 %v433, 0.0
      %vm435 = vcmask 0
      %436 = vst.msk [vmem:[#allocation3] sm:$0x1] %vm435, %v434
    $region17: #{gmm_loss.3} parent=1 // pred_fallthru
      _
    // Predicated region
    $region18: #{gmm_loss.3} parent=1 // pred_check
      _
    $region19: #{gmm_loss.3} parent=1 // pred_check_branch
      %438 = sbr.rel (0) target = $region21
    $region20: #{gmm_loss.3} parent=1 // pred_region
      %s440 = ssub.s32 16, 16
      %441 = vsyncadd [#allocation4], %s440
      %s443 = sshll.u32 [#allocation3], 4
      %s444 = int_to_ptr.vmem [resolvable:$true] %s443
      %446 = dma.vmem_to_hbm [thread:$0]  %s444, 16, %s2, [#allocation4]
    $region21: #{gmm_loss.3} parent=1 // pred_fallthru
      _
    // Predicated region
    $region22: #{gmm_loss.3} parent=1 // pred_check
      _
    $region23: #{gmm_loss.3} parent=1 // pred_check_branch
      %448 = sbr.rel (0) target = $region25
    $region24: #{gmm_loss.3} parent=1 // pred_region
      %449 = dma.done [#allocation4], 16
    $region25: #{gmm_loss.3} parent=1 // pred_fallthru
      _
    %450 = vsyncpa [#allocation4], 1

// kernel: gmm_loss.4
$region0: #{gmm_loss.4}
  #allocation0 [shape = 'u32[]', space=smem, size = 0x4, offset = 0x4, fixed_abs, tag = 'smem constant byte address 0x4 - core index']
  #allocation1 [shape = 'u32[144,128]{1,0:T(1,128)}', space=vmem, size = 0x12000, scoped, tag = 'internal scratch']
  %s0 = inlined_call_operand.vmem [shape: f32[512,8], index: 0, kind: input, shape index: {}]
  %s1 = inlined_call_operand.vmem [shape: f32[512,4], index: 1, kind: input, shape index: {}]
  %s2 = inlined_call_operand.vmem [shape: f32[1,8], index: 2, kind: input, shape index: {}]
  %s3 = inlined_call_operand.vmem [shape: f32[1,1,4], index: 3, kind: output, shape index: {0}]
  %s4 = inlined_call_operand.vmem [shape: f32[1,8,36], index: 4, kind: output, shape index: {1}]
  %5 = xla_tuple %s3, %s4
  %s6 = sld [smem:[#allocation0]]
  $region34: #{gmm_loss.4} parent=0
    _
  %s8 = ssub.s32 1, %s6
  %s9 = scalar_select 0, %s8, %s6
  // Predicated region
  $region2: #{gmm_loss.4} parent=0 // pred_check
    _
  $region3: #{gmm_loss.4} parent=0 // pred_check_branch
    %11 = sbr.rel (0) target = $region5
  $region4: #{gmm_loss.4} parent=0 // pred_region
    %s12 = sadd.s32 0, 0
    %p13 = scmp.lt.s32.totalorder %s12, 0
    %s14 = scalar_select %p13, %s12, 0
    %s15 = smul.u32 64, %s14
    %p16 = scmp.lt.s32.totalorder %s15, 63
    %s17 = scalar_select %p16, %s15, 63
    %s18 = smul.addr %s17, 8
    %s19 = scalar_lea.vmem %s0, %s18
    %s20 = sadd.s32 0, 0
    %p21 = scmp.lt.s32.totalorder %s20, 0
    %s22 = scalar_select %p21, %s20, 0
    %s23 = smul.u32 64, %s22
  $region5: #{gmm_loss.4} parent=0 // pred_fallthru
    _
  // Predicated region
  $region6: #{gmm_loss.4} parent=0 // pred_check
    _
  $region7: #{gmm_loss.4} parent=0 // pred_check_branch
    %25 = sbr.rel (0) target = $region9
  $region8: #{gmm_loss.4} parent=0 // pred_region
    %s26 = sadd.s32 0, 0
    %p27 = scmp.lt.s32.totalorder %s26, 0
    %s28 = scalar_select %p27, %s26, 0
    %s29 = smul.u32 64, %s28
    %p30 = scmp.lt.s32.totalorder %s29, 63
    %s31 = scalar_select %p30, %s29, 63
    %s32 = smul.addr %s31, 8
    %s33 = scalar_lea.vmem %s1, %s32
    %s34 = sadd.s32 0, 0
    %p35 = scmp.lt.s32.totalorder %s34, 0
    %s36 = scalar_select %p35, %s34, 0
    %s37 = smul.u32 64, %s36
  $region9: #{gmm_loss.4} parent=0 // pred_fallthru
    _
  // Predicated region
  $region10: #{gmm_loss.4} parent=0 // pred_check
    _
  $region11: #{gmm_loss.4} parent=0 // pred_check_branch
    %39 = sbr.rel (0) target = $region13
  $region12: #{gmm_loss.4} parent=0 // pred_region
    _
  $region13: #{gmm_loss.4} parent=0 // pred_fallthru
    _
  %s40 = sadd.s32 0, 0
  %p41 = scmp.lt.s32.totalorder %s40, 0
  %s42 = scalar_select %p41, %s40, 0
  %s43 = smul.u32 64, %s42
  %p44 = scmp.lt.s32.totalorder %s43, 63
  %s45 = scalar_select %p44, %s43, 63
  %s46 = smul.addr %s45, 8
  %s47 = scalar_lea.vmem %s0, %s46
  %s48 = sadd.s32 0, 0
  %p49 = scmp.lt.s32.totalorder %s48, 0
  %s50 = scalar_select %p49, %s48, 0
  %s51 = smul.u32 64, %s50
  %p52 = scmp.lt.s32.totalorder %s51, 63
  %s53 = scalar_select %p52, %s51, 63
  %s54 = smul.addr %s53, 8
  %s55 = scalar_lea.vmem %s1, %s54
  %s56 = sadd.s32 0, 0
  %p57 = scmp.lt.s32.totalorder %s56, 0
  %s58 = scalar_select %p57, %s56, 0
  %s59 = smul.u32 64, %s58
  %p60 = scmp.lt.s32.totalorder %s59, 63
  %s61 = scalar_select %p60, %s59, 63
  %s62 = smul.addr %s61, 8
  %s63 = scalar_lea.vmem %s0, %s62
  %s64 = sadd.s32 0, 0
  %p65 = scmp.lt.s32.totalorder %s64, 0
  %s66 = scalar_select %p65, %s64, 0
  %s67 = smul.u32 64, %s66
  %s68 = sadd.s32 0, 0
  %p69 = scmp.lt.s32.totalorder %s68, 0
  %s70 = scalar_select %p69, %s68, 0
  %s71 = smul.u32 64, %s70
  %p72 = scmp.lt.s32.totalorder %s71, 63
  %s73 = scalar_select %p72, %s71, 63
  %s74 = smul.addr %s73, 8
  %s75 = scalar_lea.vmem %s1, %s74
  %s76 = sadd.s32 0, 0
  %p77 = scmp.lt.s32.totalorder %s76, 0
  %s78 = scalar_select %p77, %s76, 0
  %s79 = smul.u32 64, %s78
  %p80 = scmp.eq.s32.totalorder 0, 0
  // Predicated region
  $region14: #{gmm_loss.4} parent=0 // pred_check
    %p81 = pneg %p80
  $region15: #{gmm_loss.4} parent=0 // pred_check_branch
    %83 = sbr.rel (%p81) target = $region17
  $region16: #{gmm_loss.4} parent=0 // pred_region
    %vm84 = vcmask 24576
    %85 = vst.msk [vmem:[%s3] sm:$0x1] %vm84, 0.0
    %vm86 = vcmask 293888
    %87 = vst.msk [vmem:[%s4] sm:$0xff] %vm86, 0.0
  $region17: #{gmm_loss.4} parent=0 // pred_fallthru
    _
  %v88 = vld [vmem:[%s63] sm:$0xff]
  %v89 = vld [vmem:[%s63 + $0x8] sm:$0xff]
  %v90 = vld [vmem:[%s63 + $0x10] sm:$0xff]
  %v91 = vld [vmem:[%s63 + $0x18] sm:$0xff]
  %v92 = vld [vmem:[%s63 + $0x20] sm:$0xff]
  %v93 = vld [vmem:[%s63 + $0x28] sm:$0xff]
  %v94 = vld [vmem:[%s63 + $0x30] sm:$0xff]
  %v95 = vld [vmem:[%s63 + $0x38] sm:$0xff]
  %v96 = vld [vmem:[%s63 + $0x40] sm:$0xff]
  %v97 = vld [vmem:[%s63 + $0x48] sm:$0xff]
  %v98 = vld [vmem:[%s63 + $0x50] sm:$0xff]
  %v99 = vld [vmem:[%s63 + $0x58] sm:$0xff]
  %v100 = vld [vmem:[%s63 + $0x60] sm:$0xff]
  %v101 = vld [vmem:[%s63 + $0x68] sm:$0xff]
  %v102 = vld [vmem:[%s63 + $0x70] sm:$0xff]
  %v103 = vld [vmem:[%s63 + $0x78] sm:$0xff]
  %v104 = vld [vmem:[%s63 + $0x80] sm:$0xff]
  %v105 = vld [vmem:[%s63 + $0x88] sm:$0xff]
  %v106 = vld [vmem:[%s63 + $0x90] sm:$0xff]
  %v107 = vld [vmem:[%s63 + $0x98] sm:$0xff]
  %v108 = vld [vmem:[%s63 + $0xa0] sm:$0xff]
  %v109 = vld [vmem:[%s63 + $0xa8] sm:$0xff]
  %v110 = vld [vmem:[%s63 + $0xb0] sm:$0xff]
  %v111 = vld [vmem:[%s63 + $0xb8] sm:$0xff]
  %v112 = vld [vmem:[%s63 + $0xc0] sm:$0xff]
  %v113 = vld [vmem:[%s63 + $0xc8] sm:$0xff]
  %v114 = vld [vmem:[%s63 + $0xd0] sm:$0xff]
  %v115 = vld [vmem:[%s63 + $0xd8] sm:$0xff]
  %v116 = vld [vmem:[%s63 + $0xe0] sm:$0xff]
  %v117 = vld [vmem:[%s63 + $0xe8] sm:$0xff]
  %v118 = vld [vmem:[%s63 + $0xf0] sm:$0xff]
  %v119 = vld [vmem:[%s63 + $0xf8] sm:$0xff]
  %v120 = vld [vmem:[%s63 + $0x100] sm:$0xff]
  %v121 = vld [vmem:[%s63 + $0x108] sm:$0xff]
  %v122 = vld [vmem:[%s63 + $0x110] sm:$0xff]
  %v123 = vld [vmem:[%s63 + $0x118] sm:$0xff]
  %v124 = vld [vmem:[%s63 + $0x120] sm:$0xff]
  %v125 = vld [vmem:[%s63 + $0x128] sm:$0xff]
  %v126 = vld [vmem:[%s63 + $0x130] sm:$0xff]
  %v127 = vld [vmem:[%s63 + $0x138] sm:$0xff]
  %v128 = vld [vmem:[%s63 + $0x140] sm:$0xff]
  %v129 = vld [vmem:[%s63 + $0x148] sm:$0xff]
  %v130 = vld [vmem:[%s63 + $0x150] sm:$0xff]
  %v131 = vld [vmem:[%s63 + $0x158] sm:$0xff]
  %v132 = vld [vmem:[%s63 + $0x160] sm:$0xff]
  %v133 = vld [vmem:[%s63 + $0x168] sm:$0xff]
  %v134 = vld [vmem:[%s63 + $0x170] sm:$0xff]
  %v135 = vld [vmem:[%s63 + $0x178] sm:$0xff]
  %v136 = vld [vmem:[%s63 + $0x180] sm:$0xff]
  %v137 = vld [vmem:[%s63 + $0x188] sm:$0xff]
  %v138 = vld [vmem:[%s63 + $0x190] sm:$0xff]
  %v139 = vld [vmem:[%s63 + $0x198] sm:$0xff]
  %v140 = vld [vmem:[%s63 + $0x1a0] sm:$0xff]
  %v141 = vld [vmem:[%s63 + $0x1a8] sm:$0xff]
  %v142 = vld [vmem:[%s63 + $0x1b0] sm:$0xff]
  %v143 = vld [vmem:[%s63 + $0x1b8] sm:$0xff]
  %v144 = vld [vmem:[%s63 + $0x1c0] sm:$0xff]
  %v145 = vld [vmem:[%s63 + $0x1c8] sm:$0xff]
  %v146 = vld [vmem:[%s63 + $0x1d0] sm:$0xff]
  %v147 = vld [vmem:[%s63 + $0x1d8] sm:$0xff]
  %v148 = vld [vmem:[%s63 + $0x1e0] sm:$0xff]
  %v149 = vld [vmem:[%s63 + $0x1e8] sm:$0xff]
  %v150 = vld [vmem:[%s63 + $0x1f0] sm:$0xff]
  %v151 = vld [vmem:[%s63 + $0x1f8] sm:$0xff]
  %v152 = vld [vmem:[%s2] sm:$0x1]
  %v154 = vlaneseq
  %v155 = vshrl.u32 %v154, 7
  %v156 = vsub.s32 0, %v155
  %v157 = vrot.slane %v152, %v156
  %v159 = vsub.f32 %v88, %v157
  %v160 = vsub.f32 %v89, %v157
  %v161 = vsub.f32 %v90, %v157
  %v162 = vsub.f32 %v91, %v157
  %v163 = vsub.f32 %v92, %v157
  %v164 = vsub.f32 %v93, %v157
  %v165 = vsub.f32 %v94, %v157
  %v166 = vsub.f32 %v95, %v157
  %v167 = vsub.f32 %v96, %v157
  %v168 = vsub.f32 %v97, %v157
  %v169 = vsub.f32 %v98, %v157
  %v170 = vsub.f32 %v99, %v157
  %v171 = vsub.f32 %v100, %v157
  %v172 = vsub.f32 %v101, %v157
  %v173 = vsub.f32 %v102, %v157
  %v174 = vsub.f32 %v103, %v157
  %v175 = vsub.f32 %v104, %v157
  %v176 = vsub.f32 %v105, %v157
  %v177 = vsub.f32 %v106, %v157
  %v178 = vsub.f32 %v107, %v157
  %v179 = vsub.f32 %v108, %v157
  %v180 = vsub.f32 %v109, %v157
  %v181 = vsub.f32 %v110, %v157
  %v182 = vsub.f32 %v111, %v157
  %v183 = vsub.f32 %v112, %v157
  %v184 = vsub.f32 %v113, %v157
  %v185 = vsub.f32 %v114, %v157
  %v186 = vsub.f32 %v115, %v157
  %v187 = vsub.f32 %v116, %v157
  %v188 = vsub.f32 %v117, %v157
  %v189 = vsub.f32 %v118, %v157
  %v190 = vsub.f32 %v119, %v157
  %v191 = vsub.f32 %v120, %v157
  %v192 = vsub.f32 %v121, %v157
  %v193 = vsub.f32 %v122, %v157
  %v194 = vsub.f32 %v123, %v157
  %v195 = vsub.f32 %v124, %v157
  %v196 = vsub.f32 %v125, %v157
  %v197 = vsub.f32 %v126, %v157
  %v198 = vsub.f32 %v127, %v157
  %v199 = vsub.f32 %v128, %v157
  %v200 = vsub.f32 %v129, %v157
  %v201 = vsub.f32 %v130, %v157
  %v202 = vsub.f32 %v131, %v157
  %v203 = vsub.f32 %v132, %v157
  %v204 = vsub.f32 %v133, %v157
  %v205 = vsub.f32 %v134, %v157
  %v206 = vsub.f32 %v135, %v157
  %v207 = vsub.f32 %v136, %v157
  %v208 = vsub.f32 %v137, %v157
  %v209 = vsub.f32 %v138, %v157
  %v210 = vsub.f32 %v139, %v157
  %v211 = vsub.f32 %v140, %v157
  %v212 = vsub.f32 %v141, %v157
  %v213 = vsub.f32 %v142, %v157
  %v214 = vsub.f32 %v143, %v157
  %v215 = vsub.f32 %v144, %v157
  %v216 = vsub.f32 %v145, %v157
  %v217 = vsub.f32 %v146, %v157
  %v218 = vsub.f32 %v147, %v157
  %v219 = vsub.f32 %v148, %v157
  %v220 = vsub.f32 %v149, %v157
  %v221 = vsub.f32 %v150, %v157
  %v222 = vsub.f32 %v151, %v157
  %v223 = vld [vmem:[%s75] sm:$0xff]
  %v224 = vld [vmem:[%s75 + $0x8] sm:$0xff]
  %v225 = vld [vmem:[%s75 + $0x10] sm:$0xff]
  %v226 = vld [vmem:[%s75 + $0x18] sm:$0xff]
  %v227 = vld [vmem:[%s75 + $0x20] sm:$0xff]
  %v228 = vld [vmem:[%s75 + $0x28] sm:$0xff]
  %v229 = vld [vmem:[%s75 + $0x30] sm:$0xff]
  %v230 = vld [vmem:[%s75 + $0x38] sm:$0xff]
  %v231 = vld [vmem:[%s75 + $0x40] sm:$0xff]
  %v232 = vld [vmem:[%s75 + $0x48] sm:$0xff]
  %v233 = vld [vmem:[%s75 + $0x50] sm:$0xff]
  %v234 = vld [vmem:[%s75 + $0x58] sm:$0xff]
  %v235 = vld [vmem:[%s75 + $0x60] sm:$0xff]
  %v236 = vld [vmem:[%s75 + $0x68] sm:$0xff]
  %v237 = vld [vmem:[%s75 + $0x70] sm:$0xff]
  %v238 = vld [vmem:[%s75 + $0x78] sm:$0xff]
  %v239 = vld [vmem:[%s75 + $0x80] sm:$0xff]
  %v240 = vld [vmem:[%s75 + $0x88] sm:$0xff]
  %v241 = vld [vmem:[%s75 + $0x90] sm:$0xff]
  %v242 = vld [vmem:[%s75 + $0x98] sm:$0xff]
  %v243 = vld [vmem:[%s75 + $0xa0] sm:$0xff]
  %v244 = vld [vmem:[%s75 + $0xa8] sm:$0xff]
  %v245 = vld [vmem:[%s75 + $0xb0] sm:$0xff]
  %v246 = vld [vmem:[%s75 + $0xb8] sm:$0xff]
  %v247 = vld [vmem:[%s75 + $0xc0] sm:$0xff]
  %v248 = vld [vmem:[%s75 + $0xc8] sm:$0xff]
  %v249 = vld [vmem:[%s75 + $0xd0] sm:$0xff]
  %v250 = vld [vmem:[%s75 + $0xd8] sm:$0xff]
  %v251 = vld [vmem:[%s75 + $0xe0] sm:$0xff]
  %v252 = vld [vmem:[%s75 + $0xe8] sm:$0xff]
  %v253 = vld [vmem:[%s75 + $0xf0] sm:$0xff]
  %v254 = vld [vmem:[%s75 + $0xf8] sm:$0xff]
  %v255 = vld [vmem:[%s75 + $0x100] sm:$0xff]
  %v256 = vld [vmem:[%s75 + $0x108] sm:$0xff]
  %v257 = vld [vmem:[%s75 + $0x110] sm:$0xff]
  %v258 = vld [vmem:[%s75 + $0x118] sm:$0xff]
  %v259 = vld [vmem:[%s75 + $0x120] sm:$0xff]
  %v260 = vld [vmem:[%s75 + $0x128] sm:$0xff]
  %v261 = vld [vmem:[%s75 + $0x130] sm:$0xff]
  %v262 = vld [vmem:[%s75 + $0x138] sm:$0xff]
  %v263 = vld [vmem:[%s75 + $0x140] sm:$0xff]
  %v264 = vld [vmem:[%s75 + $0x148] sm:$0xff]
  %v265 = vld [vmem:[%s75 + $0x150] sm:$0xff]
  %v266 = vld [vmem:[%s75 + $0x158] sm:$0xff]
  %v267 = vld [vmem:[%s75 + $0x160] sm:$0xff]
  %v268 = vld [vmem:[%s75 + $0x168] sm:$0xff]
  %v269 = vld [vmem:[%s75 + $0x170] sm:$0xff]
  %v270 = vld [vmem:[%s75 + $0x178] sm:$0xff]
  %v271 = vld [vmem:[%s75 + $0x180] sm:$0xff]
  %v272 = vld [vmem:[%s75 + $0x188] sm:$0xff]
  %v273 = vld [vmem:[%s75 + $0x190] sm:$0xff]
  %v274 = vld [vmem:[%s75 + $0x198] sm:$0xff]
  %v275 = vld [vmem:[%s75 + $0x1a0] sm:$0xff]
  %v276 = vld [vmem:[%s75 + $0x1a8] sm:$0xff]
  %v277 = vld [vmem:[%s75 + $0x1b0] sm:$0xff]
  %v278 = vld [vmem:[%s75 + $0x1b8] sm:$0xff]
  %v279 = vld [vmem:[%s75 + $0x1c0] sm:$0xff]
  %v280 = vld [vmem:[%s75 + $0x1c8] sm:$0xff]
  %v281 = vld [vmem:[%s75 + $0x1d0] sm:$0xff]
  %v282 = vld [vmem:[%s75 + $0x1d8] sm:$0xff]
  %v283 = vld [vmem:[%s75 + $0x1e0] sm:$0xff]
  %v284 = vld [vmem:[%s75 + $0x1e8] sm:$0xff]
  %v285 = vld [vmem:[%s75 + $0x1f0] sm:$0xff]
  %v286 = vld [vmem:[%s75 + $0x1f8] sm:$0xff]
  %288 = vset.pattern.permute.xlu0 0
  %289 = vperm.xlu0 %288, %v223
  %v290 = vpop.permute.xlu0 %289
  %293 = vset.pattern.permute.xlu0 0
  %294 = vperm.xlu0 %293, %v224
  %v295 = vpop.permute.xlu0 %294
  %298 = vset.pattern.permute.xlu0 0
  %299 = vperm.xlu0 %298, %v225
  %v300 = vpop.permute.xlu0 %299
  %303 = vset.pattern.permute.xlu0 0
  %304 = vperm.xlu0 %303, %v226
  %v305 = vpop.permute.xlu0 %304
  %308 = vset.pattern.permute.xlu0 0
  %309 = vperm.xlu0 %308, %v227
  %v310 = vpop.permute.xlu0 %309
  %313 = vset.pattern.permute.xlu0 0
  %314 = vperm.xlu0 %313, %v228
  %v315 = vpop.permute.xlu0 %314
  %318 = vset.pattern.permute.xlu0 0
  %319 = vperm.xlu0 %318, %v229
  %v320 = vpop.permute.xlu0 %319
  %323 = vset.pattern.permute.xlu0 0
  %324 = vperm.xlu0 %323, %v230
  %v325 = vpop.permute.xlu0 %324
  %328 = vset.pattern.permute.xlu0 0
  %329 = vperm.xlu0 %328, %v231
  %v330 = vpop.permute.xlu0 %329
  %333 = vset.pattern.permute.xlu0 0
  %334 = vperm.xlu0 %333, %v232
  %v335 = vpop.permute.xlu0 %334
  %338 = vset.pattern.permute.xlu0 0
  %339 = vperm.xlu0 %338, %v233
  %v340 = vpop.permute.xlu0 %339
  %343 = vset.pattern.permute.xlu0 0
  %344 = vperm.xlu0 %343, %v234
  %v345 = vpop.permute.xlu0 %344
  %348 = vset.pattern.permute.xlu0 0
  %349 = vperm.xlu0 %348, %v235
  %v350 = vpop.permute.xlu0 %349
  %353 = vset.pattern.permute.xlu0 0
  %354 = vperm.xlu0 %353, %v236
  %v355 = vpop.permute.xlu0 %354
  %358 = vset.pattern.permute.xlu0 0
  %359 = vperm.xlu0 %358, %v237
  %v360 = vpop.permute.xlu0 %359
  %363 = vset.pattern.permute.xlu0 0
  %364 = vperm.xlu0 %363, %v238
  %v365 = vpop.permute.xlu0 %364
  %368 = vset.pattern.permute.xlu0 0
  %369 = vperm.xlu0 %368, %v239
  %v370 = vpop.permute.xlu0 %369
  %373 = vset.pattern.permute.xlu0 0
  %374 = vperm.xlu0 %373, %v240
  %v375 = vpop.permute.xlu0 %374
  %378 = vset.pattern.permute.xlu0 0
  %379 = vperm.xlu0 %378, %v241
  %v380 = vpop.permute.xlu0 %379
  %383 = vset.pattern.permute.xlu0 0
  %384 = vperm.xlu0 %383, %v242
  %v385 = vpop.permute.xlu0 %384
  %388 = vset.pattern.permute.xlu0 0
  %389 = vperm.xlu0 %388, %v243
  %v390 = vpop.permute.xlu0 %389
  %393 = vset.pattern.permute.xlu0 0
  %394 = vperm.xlu0 %393, %v244
  %v395 = vpop.permute.xlu0 %394
  %398 = vset.pattern.permute.xlu0 0
  %399 = vperm.xlu0 %398, %v245
  %v400 = vpop.permute.xlu0 %399
  %403 = vset.pattern.permute.xlu0 0
  %404 = vperm.xlu0 %403, %v246
  %v405 = vpop.permute.xlu0 %404
  %408 = vset.pattern.permute.xlu0 0
  %409 = vperm.xlu0 %408, %v247
  %v410 = vpop.permute.xlu0 %409
  %413 = vset.pattern.permute.xlu0 0
  %414 = vperm.xlu0 %413, %v248
  %v415 = vpop.permute.xlu0 %414
  %418 = vset.pattern.permute.xlu0 0
  %419 = vperm.xlu0 %418, %v249
  %v420 = vpop.permute.xlu0 %419
  %423 = vset.pattern.permute.xlu0 0
  %424 = vperm.xlu0 %423, %v250
  %v425 = vpop.permute.xlu0 %424
  %428 = vset.pattern.permute.xlu0 0
  %429 = vperm.xlu0 %428, %v251
  %v430 = vpop.permute.xlu0 %429
  %433 = vset.pattern.permute.xlu0 0
  %434 = vperm.xlu0 %433, %v252
  %v435 = vpop.permute.xlu0 %434
  %438 = vset.pattern.permute.xlu0 0
  %439 = vperm.xlu0 %438, %v253
  %v440 = vpop.permute.xlu0 %439
  %443 = vset.pattern.permute.xlu0 0
  %444 = vperm.xlu0 %443, %v254
  %v445 = vpop.permute.xlu0 %444
  %448 = vset.pattern.permute.xlu0 0
  %449 = vperm.xlu0 %448, %v255
  %v450 = vpop.permute.xlu0 %449
  %453 = vset.pattern.permute.xlu0 0
  %454 = vperm.xlu0 %453, %v256
  %v455 = vpop.permute.xlu0 %454
  %458 = vset.pattern.permute.xlu0 0
  %459 = vperm.xlu0 %458, %v257
  %v460 = vpop.permute.xlu0 %459
  %463 = vset.pattern.permute.xlu0 0
  %464 = vperm.xlu0 %463, %v258
  %v465 = vpop.permute.xlu0 %464
  %468 = vset.pattern.permute.xlu0 0
  %469 = vperm.xlu0 %468, %v259
  %v470 = vpop.permute.xlu0 %469
  %473 = vset.pattern.permute.xlu0 0
  %474 = vperm.xlu0 %473, %v260
  %v475 = vpop.permute.xlu0 %474
  %478 = vset.pattern.permute.xlu0 0
  %479 = vperm.xlu0 %478, %v261
  %v480 = vpop.permute.xlu0 %479
  %483 = vset.pattern.permute.xlu0 0
  %484 = vperm.xlu0 %483, %v262
  %v485 = vpop.permute.xlu0 %484
  %488 = vset.pattern.permute.xlu0 0
  %489 = vperm.xlu0 %488, %v263
  %v490 = vpop.permute.xlu0 %489
  %493 = vset.pattern.permute.xlu0 0
  %494 = vperm.xlu0 %493, %v264
  %v495 = vpop.permute.xlu0 %494
  %498 = vset.pattern.permute.xlu0 0
  %499 = vperm.xlu0 %498, %v265
  %v500 = vpop.permute.xlu0 %499
  %503 = vset.pattern.permute.xlu0 0
  %504 = vperm.xlu0 %503, %v266
  %v505 = vpop.permute.xlu0 %504
  %508 = vset.pattern.permute.xlu0 0
  %509 = vperm.xlu0 %508, %v267
  %v510 = vpop.permute.xlu0 %509
  %513 = vset.pattern.permute.xlu0 0
  %514 = vperm.xlu0 %513, %v268
  %v515 = vpop.permute.xlu0 %514
  %518 = vset.pattern.permute.xlu0 0
  %519 = vperm.xlu0 %518, %v269
  %v520 = vpop.permute.xlu0 %519
  %523 = vset.pattern.permute.xlu0 0
  %524 = vperm.xlu0 %523, %v270
  %v525 = vpop.permute.xlu0 %524
  %528 = vset.pattern.permute.xlu0 0
  %529 = vperm.xlu0 %528, %v271
  %v530 = vpop.permute.xlu0 %529
  %533 = vset.pattern.permute.xlu0 0
  %534 = vperm.xlu0 %533, %v272
  %v535 = vpop.permute.xlu0 %534
  %538 = vset.pattern.permute.xlu0 0
  %539 = vperm.xlu0 %538, %v273
  %v540 = vpop.permute.xlu0 %539
  %543 = vset.pattern.permute.xlu0 0
  %544 = vperm.xlu0 %543, %v274
  %v545 = vpop.permute.xlu0 %544
  %548 = vset.pattern.permute.xlu0 0
  %549 = vperm.xlu0 %548, %v275
  %v550 = vpop.permute.xlu0 %549
  %553 = vset.pattern.permute.xlu0 0
  %554 = vperm.xlu0 %553, %v276
  %v555 = vpop.permute.xlu0 %554
  %558 = vset.pattern.permute.xlu0 0
  %559 = vperm.xlu0 %558, %v277
  %v560 = vpop.permute.xlu0 %559
  %563 = vset.pattern.permute.xlu0 0
  %564 = vperm.xlu0 %563, %v278
  %v565 = vpop.permute.xlu0 %564
  %568 = vset.pattern.permute.xlu0 0
  %569 = vperm.xlu0 %568, %v279
  %v570 = vpop.permute.xlu0 %569
  %573 = vset.pattern.permute.xlu0 0
  %574 = vperm.xlu0 %573, %v280
  %v575 = vpop.permute.xlu0 %574
  %578 = vset.pattern.permute.xlu0 0
  %579 = vperm.xlu0 %578, %v281
  %v580 = vpop.permute.xlu0 %579
  %583 = vset.pattern.permute.xlu0 0
  %584 = vperm.xlu0 %583, %v282
  %v585 = vpop.permute.xlu0 %584
  %588 = vset.pattern.permute.xlu0 0
  %589 = vperm.xlu0 %588, %v283
  %v590 = vpop.permute.xlu0 %589
  %593 = vset.pattern.permute.xlu0 0
  %594 = vperm.xlu0 %593, %v284
  %v595 = vpop.permute.xlu0 %594
  %598 = vset.pattern.permute.xlu0 0
  %599 = vperm.xlu0 %598, %v285
  %v600 = vpop.permute.xlu0 %599
  %603 = vset.pattern.permute.xlu0 0
  %604 = vperm.xlu0 %603, %v286
  %v605 = vpop.permute.xlu0 %604
  %v607 = vmul.f32 %v290, %v159
  %v608 = vmul.f32 %v295, %v160
  %v609 = vmul.f32 %v300, %v161
  %v610 = vmul.f32 %v305, %v162
  %v611 = vmul.f32 %v310, %v163
  %v612 = vmul.f32 %v315, %v164
  %v613 = vmul.f32 %v320, %v165
  %v614 = vmul.f32 %v325, %v166
  %v615 = vmul.f32 %v330, %v167
  %v616 = vmul.f32 %v335, %v168
  %v617 = vmul.f32 %v340, %v169
  %v618 = vmul.f32 %v345, %v170
  %v619 = vmul.f32 %v350, %v171
  %v620 = vmul.f32 %v355, %v172
  %v621 = vmul.f32 %v360, %v173
  %v622 = vmul.f32 %v365, %v174
  %v623 = vmul.f32 %v370, %v175
  %v624 = vmul.f32 %v375, %v176
  %v625 = vmul.f32 %v380, %v177
  %v626 = vmul.f32 %v385, %v178
  %v627 = vmul.f32 %v390, %v179
  %v628 = vmul.f32 %v395, %v180
  %v629 = vmul.f32 %v400, %v181
  %v630 = vmul.f32 %v405, %v182
  %v631 = vmul.f32 %v410, %v183
  %v632 = vmul.f32 %v415, %v184
  %v633 = vmul.f32 %v420, %v185
  %v634 = vmul.f32 %v425, %v186
  %v635 = vmul.f32 %v430, %v187
  %v636 = vmul.f32 %v435, %v188
  %v637 = vmul.f32 %v440, %v189
  %v638 = vmul.f32 %v445, %v190
  %v639 = vmul.f32 %v450, %v191
  %v640 = vmul.f32 %v455, %v192
  %v641 = vmul.f32 %v460, %v193
  %v642 = vmul.f32 %v465, %v194
  %v643 = vmul.f32 %v470, %v195
  %v644 = vmul.f32 %v475, %v196
  %v645 = vmul.f32 %v480, %v197
  %v646 = vmul.f32 %v485, %v198
  %v647 = vmul.f32 %v490, %v199
  %v648 = vmul.f32 %v495, %v200
  %v649 = vmul.f32 %v500, %v201
  %v650 = vmul.f32 %v505, %v202
  %v651 = vmul.f32 %v510, %v203
  %v652 = vmul.f32 %v515, %v204
  %v653 = vmul.f32 %v520, %v205
  %v654 = vmul.f32 %v525, %v206
  %v655 = vmul.f32 %v530, %v207
  %v656 = vmul.f32 %v535, %v208
  %v657 = vmul.f32 %v540, %v209
  %v658 = vmul.f32 %v545, %v210
  %v659 = vmul.f32 %v550, %v211
  %v660 = vmul.f32 %v555, %v212
  %v661 = vmul.f32 %v560, %v213
  %v662 = vmul.f32 %v565, %v214
  %v663 = vmul.f32 %v570, %v215
  %v664 = vmul.f32 %v575, %v216
  %v665 = vmul.f32 %v580, %v217
  %v666 = vmul.f32 %v585, %v218
  %v667 = vmul.f32 %v590, %v219
  %v668 = vmul.f32 %v595, %v220
  %v669 = vmul.f32 %v600, %v221
  %v670 = vmul.f32 %v605, %v222
  %671 = vset.pattern.permute.xlu0 1
  %672 = vperm.xlu0 %671, %v223
  %v673 = vpop.permute.xlu0 %672
  %675 = vset.pattern.permute.xlu0 1
  %676 = vperm.xlu0 %675, %v224
  %v677 = vpop.permute.xlu0 %676
  %679 = vset.pattern.permute.xlu0 1
  %680 = vperm.xlu0 %679, %v225
  %v681 = vpop.permute.xlu0 %680
  %683 = vset.pattern.permute.xlu0 1
  %684 = vperm.xlu0 %683, %v226
  %v685 = vpop.permute.xlu0 %684
  %687 = vset.pattern.permute.xlu0 1
  %688 = vperm.xlu0 %687, %v227
  %v689 = vpop.permute.xlu0 %688
  %691 = vset.pattern.permute.xlu0 1
  %692 = vperm.xlu0 %691, %v228
  %v693 = vpop.permute.xlu0 %692
  %695 = vset.pattern.permute.xlu0 1
  %696 = vperm.xlu0 %695, %v229
  %v697 = vpop.permute.xlu0 %696
  %699 = vset.pattern.permute.xlu0 1
  %700 = vperm.xlu0 %699, %v230
  %v701 = vpop.permute.xlu0 %700
  %703 = vset.pattern.permute.xlu0 1
  %704 = vperm.xlu0 %703, %v231
  %v705 = vpop.permute.xlu0 %704
  %707 = vset.pattern.permute.xlu0 1
  %708 = vperm.xlu0 %707, %v232
  %v709 = vpop.permute.xlu0 %708
  %711 = vset.pattern.permute.xlu0 1
  %712 = vperm.xlu0 %711, %v233
  %v713 = vpop.permute.xlu0 %712
  %715 = vset.pattern.permute.xlu0 1
  %716 = vperm.xlu0 %715, %v234
  %v717 = vpop.permute.xlu0 %716
  %719 = vset.pattern.permute.xlu0 1
  %720 = vperm.xlu0 %719, %v235
  %v721 = vpop.permute.xlu0 %720
  %723 = vset.pattern.permute.xlu0 1
  %724 = vperm.xlu0 %723, %v236
  %v725 = vpop.permute.xlu0 %724
  %727 = vset.pattern.permute.xlu0 1
  %728 = vperm.xlu0 %727, %v237
  %v729 = vpop.permute.xlu0 %728
  %731 = vset.pattern.permute.xlu0 1
  %732 = vperm.xlu0 %731, %v238
  %v733 = vpop.permute.xlu0 %732
  %735 = vset.pattern.permute.xlu0 1
  %736 = vperm.xlu0 %735, %v239
  %v737 = vpop.permute.xlu0 %736
  %739 = vset.pattern.permute.xlu0 1
  %740 = vperm.xlu0 %739, %v240
  %v741 = vpop.permute.xlu0 %740
  %743 = vset.pattern.permute.xlu0 1
  %744 = vperm.xlu0 %743, %v241
  %v745 = vpop.permute.xlu0 %744
  %747 = vset.pattern.permute.xlu0 1
  %748 = vperm.xlu0 %747, %v242
  %v749 = vpop.permute.xlu0 %748
  %751 = vset.pattern.permute.xlu0 1
  %752 = vperm.xlu0 %751, %v243
  %v753 = vpop.permute.xlu0 %752
  %755 = vset.pattern.permute.xlu0 1
  %756 = vperm.xlu0 %755, %v244
  %v757 = vpop.permute.xlu0 %756
  %759 = vset.pattern.permute.xlu0 1
  %760 = vperm.xlu0 %759, %v245
  %v761 = vpop.permute.xlu0 %760
  %763 = vset.pattern.permute.xlu0 1
  %764 = vperm.xlu0 %763, %v246
  %v765 = vpop.permute.xlu0 %764
  %767 = vset.pattern.permute.xlu0 1
  %768 = vperm.xlu0 %767, %v247
  %v769 = vpop.permute.xlu0 %768
  %771 = vset.pattern.permute.xlu0 1
  %772 = vperm.xlu0 %771, %v248
  %v773 = vpop.permute.xlu0 %772
  %775 = vset.pattern.permute.xlu0 1
  %776 = vperm.xlu0 %775, %v249
  %v777 = vpop.permute.xlu0 %776
  %779 = vset.pattern.permute.xlu0 1
  %780 = vperm.xlu0 %779, %v250
  %v781 = vpop.permute.xlu0 %780
  %783 = vset.pattern.permute.xlu0 1
  %784 = vperm.xlu0 %783, %v251
  %v785 = vpop.permute.xlu0 %784
  %787 = vset.pattern.permute.xlu0 1
  %788 = vperm.xlu0 %787, %v252
  %v789 = vpop.permute.xlu0 %788
  %791 = vset.pattern.permute.xlu0 1
  %792 = vperm.xlu0 %791, %v253
  %v793 = vpop.permute.xlu0 %792
  %795 = vset.pattern.permute.xlu0 1
  %796 = vperm.xlu0 %795, %v254
  %v797 = vpop.permute.xlu0 %796
  %799 = vset.pattern.permute.xlu0 1
  %800 = vperm.xlu0 %799, %v255
  %v801 = vpop.permute.xlu0 %800
  %803 = vset.pattern.permute.xlu0 1
  %804 = vperm.xlu0 %803, %v256
  %v805 = vpop.permute.xlu0 %804
  %807 = vset.pattern.permute.xlu0 1
  %808 = vperm.xlu0 %807, %v257
  %v809 = vpop.permute.xlu0 %808
  %811 = vset.pattern.permute.xlu0 1
  %812 = vperm.xlu0 %811, %v258
  %v813 = vpop.permute.xlu0 %812
  %815 = vset.pattern.permute.xlu0 1
  %816 = vperm.xlu0 %815, %v259
  %v817 = vpop.permute.xlu0 %816
  %819 = vset.pattern.permute.xlu0 1
  %820 = vperm.xlu0 %819, %v260
  %v821 = vpop.permute.xlu0 %820
  %823 = vset.pattern.permute.xlu0 1
  %824 = vperm.xlu0 %823, %v261
  %v825 = vpop.permute.xlu0 %824
  %827 = vset.pattern.permute.xlu0 1
  %828 = vperm.xlu0 %827, %v262
  %v829 = vpop.permute.xlu0 %828
  %831 = vset.pattern.permute.xlu0 1
  %832 = vperm.xlu0 %831, %v263
  %v833 = vpop.permute.xlu0 %832
  %835 = vset.pattern.permute.xlu0 1
  %836 = vperm.xlu0 %835, %v264
  %v837 = vpop.permute.xlu0 %836
  %839 = vset.pattern.permute.xlu0 1
  %840 = vperm.xlu0 %839, %v265
  %v841 = vpop.permute.xlu0 %840
  %843 = vset.pattern.permute.xlu0 1
  %844 = vperm.xlu0 %843, %v266
  %v845 = vpop.permute.xlu0 %844
  %847 = vset.pattern.permute.xlu0 1
  %848 = vperm.xlu0 %847, %v267
  %v849 = vpop.permute.xlu0 %848
  %851 = vset.pattern.permute.xlu0 1
  %852 = vperm.xlu0 %851, %v268
  %v853 = vpop.permute.xlu0 %852
  %855 = vset.pattern.permute.xlu0 1
  %856 = vperm.xlu0 %855, %v269
  %v857 = vpop.permute.xlu0 %856
  %859 = vset.pattern.permute.xlu0 1
  %860 = vperm.xlu0 %859, %v270
  %v861 = vpop.permute.xlu0 %860
  %863 = vset.pattern.permute.xlu0 1
  %864 = vperm.xlu0 %863, %v271
  %v865 = vpop.permute.xlu0 %864
  %867 = vset.pattern.permute.xlu0 1
  %868 = vperm.xlu0 %867, %v272
  %v869 = vpop.permute.xlu0 %868
  %871 = vset.pattern.permute.xlu0 1
  %872 = vperm.xlu0 %871, %v273
  %v873 = vpop.permute.xlu0 %872
  %875 = vset.pattern.permute.xlu0 1
  %876 = vperm.xlu0 %875, %v274
  %v877 = vpop.permute.xlu0 %876
  %879 = vset.pattern.permute.xlu0 1
  %880 = vperm.xlu0 %879, %v275
  %v881 = vpop.permute.xlu0 %880
  %883 = vset.pattern.permute.xlu0 1
  %884 = vperm.xlu0 %883, %v276
  %v885 = vpop.permute.xlu0 %884
  %887 = vset.pattern.permute.xlu0 1
  %888 = vperm.xlu0 %887, %v277
  %v889 = vpop.permute.xlu0 %888
  %891 = vset.pattern.permute.xlu0 1
  %892 = vperm.xlu0 %891, %v278
  %v893 = vpop.permute.xlu0 %892
  %895 = vset.pattern.permute.xlu0 1
  %896 = vperm.xlu0 %895, %v279
  %v897 = vpop.permute.xlu0 %896
  %899 = vset.pattern.permute.xlu0 1
  %900 = vperm.xlu0 %899, %v280
  %v901 = vpop.permute.xlu0 %900
  %903 = vset.pattern.permute.xlu0 1
  %904 = vperm.xlu0 %903, %v281
  %v905 = vpop.permute.xlu0 %904
  %907 = vset.pattern.permute.xlu0 1
  %908 = vperm.xlu0 %907, %v282
  %v909 = vpop.permute.xlu0 %908
  %911 = vset.pattern.permute.xlu0 1
  %912 = vperm.xlu0 %911, %v283
  %v913 = vpop.permute.xlu0 %912
  %915 = vset.pattern.permute.xlu0 1
  %916 = vperm.xlu0 %915, %v284
  %v917 = vpop.permute.xlu0 %916
  %919 = vset.pattern.permute.xlu0 1
  %920 = vperm.xlu0 %919, %v285
  %v921 = vpop.permute.xlu0 %920
  %923 = vset.pattern.permute.xlu0 1
  %924 = vperm.xlu0 %923, %v286
  %v925 = vpop.permute.xlu0 %924
  %v927 = vmul.f32 %v673, %v159
  %v928 = vmul.f32 %v677, %v160
  %v929 = vmul.f32 %v681, %v161
  %v930 = vmul.f32 %v685, %v162
  %v931 = vmul.f32 %v689, %v163
  %v932 = vmul.f32 %v693, %v164
  %v933 = vmul.f32 %v697, %v165
  %v934 = vmul.f32 %v701, %v166
  %v935 = vmul.f32 %v705, %v167
  %v936 = vmul.f32 %v709, %v168
  %v937 = vmul.f32 %v713, %v169
  %v938 = vmul.f32 %v717, %v170
  %v939 = vmul.f32 %v721, %v171
  %v940 = vmul.f32 %v725, %v172
  %v941 = vmul.f32 %v729, %v173
  %v942 = vmul.f32 %v733, %v174
  %v943 = vmul.f32 %v737, %v175
  %v944 = vmul.f32 %v741, %v176
  %v945 = vmul.f32 %v745, %v177
  %v946 = vmul.f32 %v749, %v178
  %v947 = vmul.f32 %v753, %v179
  %v948 = vmul.f32 %v757, %v180
  %v949 = vmul.f32 %v761, %v181
  %v950 = vmul.f32 %v765, %v182
  %v951 = vmul.f32 %v769, %v183
  %v952 = vmul.f32 %v773, %v184
  %v953 = vmul.f32 %v777, %v185
  %v954 = vmul.f32 %v781, %v186
  %v955 = vmul.f32 %v785, %v187
  %v956 = vmul.f32 %v789, %v188
  %v957 = vmul.f32 %v793, %v189
  %v958 = vmul.f32 %v797, %v190
  %v959 = vmul.f32 %v801, %v191
  %v960 = vmul.f32 %v805, %v192
  %v961 = vmul.f32 %v809, %v193
  %v962 = vmul.f32 %v813, %v194
  %v963 = vmul.f32 %v817, %v195
  %v964 = vmul.f32 %v821, %v196
  %v965 = vmul.f32 %v825, %v197
  %v966 = vmul.f32 %v829, %v198
  %v967 = vmul.f32 %v833, %v199
  %v968 = vmul.f32 %v837, %v200
  %v969 = vmul.f32 %v841, %v201
  %v970 = vmul.f32 %v845, %v202
  %v971 = vmul.f32 %v849, %v203
  %v972 = vmul.f32 %v853, %v204
  %v973 = vmul.f32 %v857, %v205
  %v974 = vmul.f32 %v861, %v206
  %v975 = vmul.f32 %v865, %v207
  %v976 = vmul.f32 %v869, %v208
  %v977 = vmul.f32 %v873, %v209
  %v978 = vmul.f32 %v877, %v210
  %v979 = vmul.f32 %v881, %v211
  %v980 = vmul.f32 %v885, %v212
  %v981 = vmul.f32 %v889, %v213
  %v982 = vmul.f32 %v893, %v214
  %v983 = vmul.f32 %v897, %v215
  %v984 = vmul.f32 %v901, %v216
  %v985 = vmul.f32 %v905, %v217
  %v986 = vmul.f32 %v909, %v218
  %v987 = vmul.f32 %v913, %v219
  %v988 = vmul.f32 %v917, %v220
  %v989 = vmul.f32 %v921, %v221
  %v990 = vmul.f32 %v925, %v222
  %991 = vset.pattern.permute.xlu0 2
  %992 = vperm.xlu0 %991, %v223
  %v993 = vpop.permute.xlu0 %992
  %995 = vset.pattern.permute.xlu0 2
  %996 = vperm.xlu0 %995, %v224
  %v997 = vpop.permute.xlu0 %996
  %999 = vset.pattern.permute.xlu0 2
  %1000 = vperm.xlu0 %999, %v225
  %v1001 = vpop.permute.xlu0 %1000
  %1003 = vset.pattern.permute.xlu0 2
  %1004 = vperm.xlu0 %1003, %v226
  %v1005 = vpop.permute.xlu0 %1004
  %1007 = vset.pattern.permute.xlu0 2
  %1008 = vperm.xlu0 %1007, %v227
  %v1009 = vpop.permute.xlu0 %1008
  %1011 = vset.pattern.permute.xlu0 2
  %1012 = vperm.xlu0 %1011, %v228
  %v1013 = vpop.permute.xlu0 %1012
  %1015 = vset.pattern.permute.xlu0 2
  %1016 = vperm.xlu0 %1015, %v229
  %v1017 = vpop.permute.xlu0 %1016
  %1019 = vset.pattern.permute.xlu0 2
  %1020 = vperm.xlu0 %1019, %v230
  %v1021 = vpop.permute.xlu0 %1020
  %1023 = vset.pattern.permute.xlu0 2
  %1024 = vperm.xlu0 %1023, %v231
  %v1025 = vpop.permute.xlu0 %1024
  %1027 = vset.pattern.permute.xlu0 2
  %1028 = vperm.xlu0 %1027, %v232
  %v1029 = vpop.permute.xlu0 %1028
  %1031 = vset.pattern.permute.xlu0 2
  %1032 = vperm.xlu0 %1031, %v233
  %v1033 = vpop.permute.xlu0 %1032
  %1035 = vset.pattern.permute.xlu0 2
  %1036 = vperm.xlu0 %1035, %v234
  %v1037 = vpop.permute.xlu0 %1036
  %1039 = vset.pattern.permute.xlu0 2
  %1040 = vperm.xlu0 %1039, %v235
  %v1041 = vpop.permute.xlu0 %1040
  %1043 = vset.pattern.permute.xlu0 2
  %1044 = vperm.xlu0 %1043, %v236
  %v1045 = vpop.permute.xlu0 %1044
  %1047 = vset.pattern.permute.xlu0 2
  %1048 = vperm.xlu0 %1047, %v237
  %v1049 = vpop.permute.xlu0 %1048
  %1051 = vset.pattern.permute.xlu0 2
  %1052 = vperm.xlu0 %1051, %v238
  %v1053 = vpop.permute.xlu0 %1052
  %1055 = vset.pattern.permute.xlu0 2
  %1056 = vperm.xlu0 %1055, %v239
  %v1057 = vpop.permute.xlu0 %1056
  %1059 = vset.pattern.permute.xlu0 2
  %1060 = vperm.xlu0 %1059, %v240
  %v1061 = vpop.permute.xlu0 %1060
  %1063 = vset.pattern.permute.xlu0 2
  %1064 = vperm.xlu0 %1063, %v241
  %v1065 = vpop.permute.xlu0 %1064
  %1067 = vset.pattern.permute.xlu0 2
  %1068 = vperm.xlu0 %1067, %v242
  %v1069 = vpop.permute.xlu0 %1068
  %1071 = vset.pattern.permute.xlu0 2
  %1072 = vperm.xlu0 %1071, %v243
  %v1073 = vpop.permute.xlu0 %1072
  %1075 = vset.pattern.permute.xlu0 2
  %1076 = vperm.xlu0 %1075, %v244
  %v1077 = vpop.permute.xlu0 %1076
  %1079 = vset.pattern.permute.xlu0 2
  %1080 = vperm.xlu0 %1079, %v245
  %v1081 = vpop.permute.xlu0 %1080
  %1083 = vset.pattern.permute.xlu0 2
  %1084 = vperm.xlu0 %1083, %v246
  %v1085 = vpop.permute.xlu0 %1084
  %1087 = vset.pattern.permute.xlu0 2
  %1088 = vperm.xlu0 %1087, %v247
  %v1089 = vpop.permute.xlu0 %1088
  %1091 = vset.pattern.permute.xlu0 2
  %1092 = vperm.xlu0 %1091, %v248
  %v1093 = vpop.permute.xlu0 %1092
  %1095 = vset.pattern.permute.xlu0 2
  %1096 = vperm.xlu0 %1095, %v249
  %v1097 = vpop.permute.xlu0 %1096
  %1099 = vset.pattern.permute.xlu0 2
  %1100 = vperm.xlu0 %1099, %v250
  %v1101 = vpop.permute.xlu0 %1100
  %1103 = vset.pattern.permute.xlu0 2
  %1104 = vperm.xlu0 %1103, %v251
  %v1105 = vpop.permute.xlu0 %1104
  %1107 = vset.pattern.permute.xlu0 2
  %1108 = vperm.xlu0 %1107, %v252
  %v1109 = vpop.permute.xlu0 %1108
  %1111 = vset.pattern.permute.xlu0 2
  %1112 = vperm.xlu0 %1111, %v253
  %v1113 = vpop.permute.xlu0 %1112
  %1115 = vset.pattern.permute.xlu0 2
  %1116 = vperm.xlu0 %1115, %v254
  %v1117 = vpop.permute.xlu0 %1116
  %1119 = vset.pattern.permute.xlu0 2
  %1120 = vperm.xlu0 %1119, %v255
  %v1121 = vpop.permute.xlu0 %1120
  %1123 = vset.pattern.permute.xlu0 2
  %1124 = vperm.xlu0 %1123, %v256
  %v1125 = vpop.permute.xlu0 %1124
  %1127 = vset.pattern.permute.xlu0 2
  %1128 = vperm.xlu0 %1127, %v257
  %v1129 = vpop.permute.xlu0 %1128
  %1131 = vset.pattern.permute.xlu0 2
  %1132 = vperm.xlu0 %1131, %v258
  %v1133 = vpop.permute.xlu0 %1132
  %1135 = vset.pattern.permute.xlu0 2
  %1136 = vperm.xlu0 %1135, %v259
  %v1137 = vpop.permute.xlu0 %1136
  %1139 = vset.pattern.permute.xlu0 2
  %1140 = vperm.xlu0 %1139, %v260
  %v1141 = vpop.permute.xlu0 %1140
  %1143 = vset.pattern.permute.xlu0 2
  %1144 = vperm.xlu0 %1143, %v261
  %v1145 = vpop.permute.xlu0 %1144
  %1147 = vset.pattern.permute.xlu0 2
  %1148 = vperm.xlu0 %1147, %v262
  %v1149 = vpop.permute.xlu0 %1148
  %1151 = vset.pattern.permute.xlu0 2
  %1152 = vperm.xlu0 %1151, %v263
  %v1153 = vpop.permute.xlu0 %1152
  %1155 = vset.pattern.permute.xlu0 2
  %1156 = vperm.xlu0 %1155, %v264
  %v1157 = vpop.permute.xlu0 %1156
  %1159 = vset.pattern.permute.xlu0 2
  %1160 = vperm.xlu0 %1159, %v265
  %v1161 = vpop.permute.xlu0 %1160
  %1163 = vset.pattern.permute.xlu0 2
  %1164 = vperm.xlu0 %1163, %v266
  %v1165 = vpop.permute.xlu0 %1164
  %1167 = vset.pattern.permute.xlu0 2
  %1168 = vperm.xlu0 %1167, %v267
  %v1169 = vpop.permute.xlu0 %1168
  %1171 = vset.pattern.permute.xlu0 2
  %1172 = vperm.xlu0 %1171, %v268
  %v1173 = vpop.permute.xlu0 %1172
  %1175 = vset.pattern.permute.xlu0 2
  %1176 = vperm.xlu0 %1175, %v269
  %v1177 = vpop.permute.xlu0 %1176
  %1179 = vset.pattern.permute.xlu0 2
  %1180 = vperm.xlu0 %1179, %v270
  %v1181 = vpop.permute.xlu0 %1180
  %1183 = vset.pattern.permute.xlu0 2
  %1184 = vperm.xlu0 %1183, %v271
  %v1185 = vpop.permute.xlu0 %1184
  %1187 = vset.pattern.permute.xlu0 2
  %1188 = vperm.xlu0 %1187, %v272
  %v1189 = vpop.permute.xlu0 %1188
  %1191 = vset.pattern.permute.xlu0 2
  %1192 = vperm.xlu0 %1191, %v273
  %v1193 = vpop.permute.xlu0 %1192
  %1195 = vset.pattern.permute.xlu0 2
  %1196 = vperm.xlu0 %1195, %v274
  %v1197 = vpop.permute.xlu0 %1196
  %1199 = vset.pattern.permute.xlu0 2
  %1200 = vperm.xlu0 %1199, %v275
  %v1201 = vpop.permute.xlu0 %1200
  %1203 = vset.pattern.permute.xlu0 2
  %1204 = vperm.xlu0 %1203, %v276
  %v1205 = vpop.permute.xlu0 %1204
  %1207 = vset.pattern.permute.xlu0 2
  %1208 = vperm.xlu0 %1207, %v277
  %v1209 = vpop.permute.xlu0 %1208
  %1211 = vset.pattern.permute.xlu0 2
  %1212 = vperm.xlu0 %1211, %v278
  %v1213 = vpop.permute.xlu0 %1212
  %1215 = vset.pattern.permute.xlu0 2
  %1216 = vperm.xlu0 %1215, %v279
  %v1217 = vpop.permute.xlu0 %1216
  %1219 = vset.pattern.permute.xlu0 2
  %1220 = vperm.xlu0 %1219, %v280
  %v1221 = vpop.permute.xlu0 %1220
  %1223 = vset.pattern.permute.xlu0 2
  %1224 = vperm.xlu0 %1223, %v281
  %v1225 = vpop.permute.xlu0 %1224
  %1227 = vset.pattern.permute.xlu0 2
  %1228 = vperm.xlu0 %1227, %v282
  %v1229 = vpop.permute.xlu0 %1228
  %1231 = vset.pattern.permute.xlu0 2
  %1232 = vperm.xlu0 %1231, %v283
  %v1233 = vpop.permute.xlu0 %1232
  %1235 = vset.pattern.permute.xlu0 2
  %1236 = vperm.xlu0 %1235, %v284
  %v1237 = vpop.permute.xlu0 %1236
  %1239 = vset.pattern.permute.xlu0 2
  %1240 = vperm.xlu0 %1239, %v285
  %v1241 = vpop.permute.xlu0 %1240
  %1243 = vset.pattern.permute.xlu0 2
  %1244 = vperm.xlu0 %1243, %v286
  %v1245 = vpop.permute.xlu0 %1244
  %v1247 = vmul.f32 %v993, %v159
  %v1248 = vmul.f32 %v997, %v160
  %v1249 = vmul.f32 %v1001, %v161
  %v1250 = vmul.f32 %v1005, %v162
  %v1251 = vmul.f32 %v1009, %v163
  %v1252 = vmul.f32 %v1013, %v164
  %v1253 = vmul.f32 %v1017, %v165
  %v1254 = vmul.f32 %v1021, %v166
  %v1255 = vmul.f32 %v1025, %v167
  %v1256 = vmul.f32 %v1029, %v168
  %v1257 = vmul.f32 %v1033, %v169
  %v1258 = vmul.f32 %v1037, %v170
  %v1259 = vmul.f32 %v1041, %v171
  %v1260 = vmul.f32 %v1045, %v172
  %v1261 = vmul.f32 %v1049, %v173
  %v1262 = vmul.f32 %v1053, %v174
  %v1263 = vmul.f32 %v1057, %v175
  %v1264 = vmul.f32 %v1061, %v176
  %v1265 = vmul.f32 %v1065, %v177
  %v1266 = vmul.f32 %v1069, %v178
  %v1267 = vmul.f32 %v1073, %v179
  %v1268 = vmul.f32 %v1077, %v180
  %v1269 = vmul.f32 %v1081, %v181
  %v1270 = vmul.f32 %v1085, %v182
  %v1271 = vmul.f32 %v1089, %v183
  %v1272 = vmul.f32 %v1093, %v184
  %v1273 = vmul.f32 %v1097, %v185
  %v1274 = vmul.f32 %v1101, %v186
  %v1275 = vmul.f32 %v1105, %v187
  %v1276 = vmul.f32 %v1109, %v188
  %v1277 = vmul.f32 %v1113, %v189
  %v1278 = vmul.f32 %v1117, %v190
  %v1279 = vmul.f32 %v1121, %v191
  %v1280 = vmul.f32 %v1125, %v192
  %v1281 = vmul.f32 %v1129, %v193
  %v1282 = vmul.f32 %v1133, %v194
  %v1283 = vmul.f32 %v1137, %v195
  %v1284 = vmul.f32 %v1141, %v196
  %v1285 = vmul.f32 %v1145, %v197
  %v1286 = vmul.f32 %v1149, %v198
  %v1287 = vmul.f32 %v1153, %v199
  %v1288 = vmul.f32 %v1157, %v200
  %v1289 = vmul.f32 %v1161, %v201
  %v1290 = vmul.f32 %v1165, %v202
  %v1291 = vmul.f32 %v1169, %v203
  %v1292 = vmul.f32 %v1173, %v204
  %v1293 = vmul.f32 %v1177, %v205
  %v1294 = vmul.f32 %v1181, %v206
  %v1295 = vmul.f32 %v1185, %v207
  %v1296 = vmul.f32 %v1189, %v208
  %v1297 = vmul.f32 %v1193, %v209
  %v1298 = vmul.f32 %v1197, %v210
  %v1299 = vmul.f32 %v1201, %v211
  %v1300 = vmul.f32 %v1205, %v212
  %v1301 = vmul.f32 %v1209, %v213
  %v1302 = vmul.f32 %v1213, %v214
  %v1303 = vmul.f32 %v1217, %v215
  %v1304 = vmul.f32 %v1221, %v216
  %v1305 = vmul.f32 %v1225, %v217
  %v1306 = vmul.f32 %v1229, %v218
  %v1307 = vmul.f32 %v1233, %v219
  %v1308 = vmul.f32 %v1237, %v220
  %v1309 = vmul.f32 %v1241, %v221
  %v1310 = vmul.f32 %v1245, %v222
  %1311 = vset.pattern.permute.xlu0 3
  %1312 = vperm.xlu0 %1311, %v223
  %v1313 = vpop.permute.xlu0 %1312
  %1315 = vset.pattern.permute.xlu0 3
  %1316 = vperm.xlu0 %1315, %v224
  %v1317 = vpop.permute.xlu0 %1316
  %1319 = vset.pattern.permute.xlu0 3
  %1320 = vperm.xlu0 %1319, %v225
  %v1321 = vpop.permute.xlu0 %1320
  %1323 = vset.pattern.permute.xlu0 3
  %1324 = vperm.xlu0 %1323, %v226
  %v1325 = vpop.permute.xlu0 %1324
  %1327 = vset.pattern.permute.xlu0 3
  %1328 = vperm.xlu0 %1327, %v227
  %v1329 = vpop.permute.xlu0 %1328
  %1331 = vset.pattern.permute.xlu0 3
  %1332 = vperm.xlu0 %1331, %v228
  %v1333 = vpop.permute.xlu0 %1332
  %1335 = vset.pattern.permute.xlu0 3
  %1336 = vperm.xlu0 %1335, %v229
  %v1337 = vpop.permute.xlu0 %1336
  %1339 = vset.pattern.permute.xlu0 3
  %1340 = vperm.xlu0 %1339, %v230
  %v1341 = vpop.permute.xlu0 %1340
  %1343 = vset.pattern.permute.xlu0 3
  %1344 = vperm.xlu0 %1343, %v231
  %v1345 = vpop.permute.xlu0 %1344
  %1347 = vset.pattern.permute.xlu0 3
  %1348 = vperm.xlu0 %1347, %v232
  %v1349 = vpop.permute.xlu0 %1348
  %1351 = vset.pattern.permute.xlu0 3
  %1352 = vperm.xlu0 %1351, %v233
  %v1353 = vpop.permute.xlu0 %1352
  %1355 = vset.pattern.permute.xlu0 3
  %1356 = vperm.xlu0 %1355, %v234
  %v1357 = vpop.permute.xlu0 %1356
  %1359 = vset.pattern.permute.xlu0 3
  %1360 = vperm.xlu0 %1359, %v235
  %v1361 = vpop.permute.xlu0 %1360
  %1363 = vset.pattern.permute.xlu0 3
  %1364 = vperm.xlu0 %1363, %v236
  %v1365 = vpop.permute.xlu0 %1364
  %1367 = vset.pattern.permute.xlu0 3
  %1368 = vperm.xlu0 %1367, %v237
  %v1369 = vpop.permute.xlu0 %1368
  %1371 = vset.pattern.permute.xlu0 3
  %1372 = vperm.xlu0 %1371, %v238
  %v1373 = vpop.permute.xlu0 %1372
  %1375 = vset.pattern.permute.xlu0 3
  %1376 = vperm.xlu0 %1375, %v239
  %v1377 = vpop.permute.xlu0 %1376
  %1379 = vset.pattern.permute.xlu0 3
  %1380 = vperm.xlu0 %1379, %v240
  %v1381 = vpop.permute.xlu0 %1380
  %1383 = vset.pattern.permute.xlu0 3
  %1384 = vperm.xlu0 %1383, %v241
  %v1385 = vpop.permute.xlu0 %1384
  %1387 = vset.pattern.permute.xlu0 3
  %1388 = vperm.xlu0 %1387, %v242
  %v1389 = vpop.permute.xlu0 %1388
  %1391 = vset.pattern.permute.xlu0 3
  %1392 = vperm.xlu0 %1391, %v243
  %v1393 = vpop.permute.xlu0 %1392
  %1395 = vset.pattern.permute.xlu0 3
  %1396 = vperm.xlu0 %1395, %v244
  %v1397 = vpop.permute.xlu0 %1396
  %1399 = vset.pattern.permute.xlu0 3
  %1400 = vperm.xlu0 %1399, %v245
  %v1401 = vpop.permute.xlu0 %1400
  %1403 = vset.pattern.permute.xlu0 3
  %1404 = vperm.xlu0 %1403, %v246
  %v1405 = vpop.permute.xlu0 %1404
  %1407 = vset.pattern.permute.xlu0 3
  %1408 = vperm.xlu0 %1407, %v247
  %v1409 = vpop.permute.xlu0 %1408
  %1411 = vset.pattern.permute.xlu0 3
  %1412 = vperm.xlu0 %1411, %v248
  %v1413 = vpop.permute.xlu0 %1412
  %1415 = vset.pattern.permute.xlu0 3
  %1416 = vperm.xlu0 %1415, %v249
  %v1417 = vpop.permute.xlu0 %1416
  %1419 = vset.pattern.permute.xlu0 3
  %1420 = vperm.xlu0 %1419, %v250
  %v1421 = vpop.permute.xlu0 %1420
  %1423 = vset.pattern.permute.xlu0 3
  %1424 = vperm.xlu0 %1423, %v251
  %v1425 = vpop.permute.xlu0 %1424
  %1427 = vset.pattern.permute.xlu0 3
  %1428 = vperm.xlu0 %1427, %v252
  %v1429 = vpop.permute.xlu0 %1428
  %1431 = vset.pattern.permute.xlu0 3
  %1432 = vperm.xlu0 %1431, %v253
  %v1433 = vpop.permute.xlu0 %1432
  %1435 = vset.pattern.permute.xlu0 3
  %1436 = vperm.xlu0 %1435, %v254
  %v1437 = vpop.permute.xlu0 %1436
  %1439 = vset.pattern.permute.xlu0 3
  %1440 = vperm.xlu0 %1439, %v255
  %v1441 = vpop.permute.xlu0 %1440
  %1443 = vset.pattern.permute.xlu0 3
  %1444 = vperm.xlu0 %1443, %v256
  %v1445 = vpop.permute.xlu0 %1444
  %1447 = vset.pattern.permute.xlu0 3
  %1448 = vperm.xlu0 %1447, %v257
  %v1449 = vpop.permute.xlu0 %1448
  %1451 = vset.pattern.permute.xlu0 3
  %1452 = vperm.xlu0 %1451, %v258
  %v1453 = vpop.permute.xlu0 %1452
  %1455 = vset.pattern.permute.xlu0 3
  %1456 = vperm.xlu0 %1455, %v259
  %v1457 = vpop.permute.xlu0 %1456
  %1459 = vset.pattern.permute.xlu0 3
  %1460 = vperm.xlu0 %1459, %v260
  %v1461 = vpop.permute.xlu0 %1460
  %1463 = vset.pattern.permute.xlu0 3
  %1464 = vperm.xlu0 %1463, %v261
  %v1465 = vpop.permute.xlu0 %1464
  %1467 = vset.pattern.permute.xlu0 3
  %1468 = vperm.xlu0 %1467, %v262
  %v1469 = vpop.permute.xlu0 %1468
  %1471 = vset.pattern.permute.xlu0 3
  %1472 = vperm.xlu0 %1471, %v263
  %v1473 = vpop.permute.xlu0 %1472
  %1475 = vset.pattern.permute.xlu0 3
  %1476 = vperm.xlu0 %1475, %v264
  %v1477 = vpop.permute.xlu0 %1476
  %1479 = vset.pattern.permute.xlu0 3
  %1480 = vperm.xlu0 %1479, %v265
  %v1481 = vpop.permute.xlu0 %1480
  %1483 = vset.pattern.permute.xlu0 3
  %1484 = vperm.xlu0 %1483, %v266
  %v1485 = vpop.permute.xlu0 %1484
  %1487 = vset.pattern.permute.xlu0 3
  %1488 = vperm.xlu0 %1487, %v267
  %v1489 = vpop.permute.xlu0 %1488
  %1491 = vset.pattern.permute.xlu0 3
  %1492 = vperm.xlu0 %1491, %v268
  %v1493 = vpop.permute.xlu0 %1492
  %1495 = vset.pattern.permute.xlu0 3
  %1496 = vperm.xlu0 %1495, %v269
  %v1497 = vpop.permute.xlu0 %1496
  %1499 = vset.pattern.permute.xlu0 3
  %1500 = vperm.xlu0 %1499, %v270
  %v1501 = vpop.permute.xlu0 %1500
  %1503 = vset.pattern.permute.xlu0 3
  %1504 = vperm.xlu0 %1503, %v271
  %v1505 = vpop.permute.xlu0 %1504
  %1507 = vset.pattern.permute.xlu0 3
  %1508 = vperm.xlu0 %1507, %v272
  %v1509 = vpop.permute.xlu0 %1508
  %1511 = vset.pattern.permute.xlu0 3
  %1512 = vperm.xlu0 %1511, %v273
  %v1513 = vpop.permute.xlu0 %1512
  %1515 = vset.pattern.permute.xlu0 3
  %1516 = vperm.xlu0 %1515, %v274
  %v1517 = vpop.permute.xlu0 %1516
  %1519 = vset.pattern.permute.xlu0 3
  %1520 = vperm.xlu0 %1519, %v275
  %v1521 = vpop.permute.xlu0 %1520
  %1523 = vset.pattern.permute.xlu0 3
  %1524 = vperm.xlu0 %1523, %v276
  %v1525 = vpop.permute.xlu0 %1524
  %1527 = vset.pattern.permute.xlu0 3
  %1528 = vperm.xlu0 %1527, %v277
  %v1529 = vpop.permute.xlu0 %1528
  %1531 = vset.pattern.permute.xlu0 3
  %1532 = vperm.xlu0 %1531, %v278
  %v1533 = vpop.permute.xlu0 %1532
  %1535 = vset.pattern.permute.xlu0 3
  %1536 = vperm.xlu0 %1535, %v279
  %v1537 = vpop.permute.xlu0 %1536
  %1539 = vset.pattern.permute.xlu0 3
  %1540 = vperm.xlu0 %1539, %v280
  %v1541 = vpop.permute.xlu0 %1540
  %1543 = vset.pattern.permute.xlu0 3
  %1544 = vperm.xlu0 %1543, %v281
  %v1545 = vpop.permute.xlu0 %1544
  %1547 = vset.pattern.permute.xlu0 3
  %1548 = vperm.xlu0 %1547, %v282
  %v1549 = vpop.permute.xlu0 %1548
  %1551 = vset.pattern.permute.xlu0 3
  %1552 = vperm.xlu0 %1551, %v283
  %v1553 = vpop.permute.xlu0 %1552
  %1555 = vset.pattern.permute.xlu0 3
  %1556 = vperm.xlu0 %1555, %v284
  %v1557 = vpop.permute.xlu0 %1556
  %1559 = vset.pattern.permute.xlu0 3
  %1560 = vperm.xlu0 %1559, %v285
  %v1561 = vpop.permute.xlu0 %1560
  %1563 = vset.pattern.permute.xlu0 3
  %1564 = vperm.xlu0 %1563, %v286
  %v1565 = vpop.permute.xlu0 %1564
  %v1567 = vmul.f32 %v1313, %v159
  %v1568 = vmul.f32 %v1317, %v160
  %v1569 = vmul.f32 %v1321, %v161
  %v1570 = vmul.f32 %v1325, %v162
  %v1571 = vmul.f32 %v1329, %v163
  %v1572 = vmul.f32 %v1333, %v164
  %v1573 = vmul.f32 %v1337, %v165
  %v1574 = vmul.f32 %v1341, %v166
  %v1575 = vmul.f32 %v1345, %v167
  %v1576 = vmul.f32 %v1349, %v168
  %v1577 = vmul.f32 %v1353, %v169
  %v1578 = vmul.f32 %v1357, %v170
  %v1579 = vmul.f32 %v1361, %v171
  %v1580 = vmul.f32 %v1365, %v172
  %v1581 = vmul.f32 %v1369, %v173
  %v1582 = vmul.f32 %v1373, %v174
  %v1583 = vmul.f32 %v1377, %v175
  %v1584 = vmul.f32 %v1381, %v176
  %v1585 = vmul.f32 %v1385, %v177
  %v1586 = vmul.f32 %v1389, %v178
  %v1587 = vmul.f32 %v1393, %v179
  %v1588 = vmul.f32 %v1397, %v180
  %v1589 = vmul.f32 %v1401, %v181
  %v1590 = vmul.f32 %v1405, %v182
  %v1591 = vmul.f32 %v1409, %v183
  %v1592 = vmul.f32 %v1413, %v184
  %v1593 = vmul.f32 %v1417, %v185
  %v1594 = vmul.f32 %v1421, %v186
  %v1595 = vmul.f32 %v1425, %v187
  %v1596 = vmul.f32 %v1429, %v188
  %v1597 = vmul.f32 %v1433, %v189
  %v1598 = vmul.f32 %v1437, %v190
  %v1599 = vmul.f32 %v1441, %v191
  %v1600 = vmul.f32 %v1445, %v192
  %v1601 = vmul.f32 %v1449, %v193
  %v1602 = vmul.f32 %v1453, %v194
  %v1603 = vmul.f32 %v1457, %v195
  %v1604 = vmul.f32 %v1461, %v196
  %v1605 = vmul.f32 %v1465, %v197
  %v1606 = vmul.f32 %v1469, %v198
  %v1607 = vmul.f32 %v1473, %v199
  %v1608 = vmul.f32 %v1477, %v200
  %v1609 = vmul.f32 %v1481, %v201
  %v1610 = vmul.f32 %v1485, %v202
  %v1611 = vmul.f32 %v1489, %v203
  %v1612 = vmul.f32 %v1493, %v204
  %v1613 = vmul.f32 %v1497, %v205
  %v1614 = vmul.f32 %v1501, %v206
  %v1615 = vmul.f32 %v1505, %v207
  %v1616 = vmul.f32 %v1509, %v208
  %v1617 = vmul.f32 %v1513, %v209
  %v1618 = vmul.f32 %v1517, %v210
  %v1619 = vmul.f32 %v1521, %v211
  %v1620 = vmul.f32 %v1525, %v212
  %v1621 = vmul.f32 %v1529, %v213
  %v1622 = vmul.f32 %v1533, %v214
  %v1623 = vmul.f32 %v1537, %v215
  %v1624 = vmul.f32 %v1541, %v216
  %v1625 = vmul.f32 %v1545, %v217
  %v1626 = vmul.f32 %v1549, %v218
  %v1627 = vmul.f32 %v1553, %v219
  %v1628 = vmul.f32 %v1557, %v220
  %v1629 = vmul.f32 %v1561, %v221
  %v1630 = vmul.f32 %v1565, %v222
  %1695 = vrot.lane.b32.xlu0 %v607, 4
  %v1696 = vpop.permute.xlu0 %1695
  %1697 = vrot.lane.b32.xlu0 %v608, 4
  %v1698 = vpop.permute.xlu0 %1697
  %1699 = vrot.lane.b32.xlu0 %v609, 4
  %v1700 = vpop.permute.xlu0 %1699
  %1701 = vrot.lane.b32.xlu0 %v610, 4
  %v1702 = vpop.permute.xlu0 %1701
  %1703 = vrot.lane.b32.xlu0 %v611, 4
  %v1704 = vpop.permute.xlu0 %1703
  %1705 = vrot.lane.b32.xlu0 %v612, 4
  %v1706 = vpop.permute.xlu0 %1705
  %1707 = vrot.lane.b32.xlu0 %v613, 4
  %v1708 = vpop.permute.xlu0 %1707
  %1709 = vrot.lane.b32.xlu0 %v614, 4
  %v1710 = vpop.permute.xlu0 %1709
  %1711 = vrot.lane.b32.xlu0 %v615, 4
  %v1712 = vpop.permute.xlu0 %1711
  %1713 = vrot.lane.b32.xlu0 %v616, 4
  %v1714 = vpop.permute.xlu0 %1713
  %1715 = vrot.lane.b32.xlu0 %v617, 4
  %v1716 = vpop.permute.xlu0 %1715
  %1717 = vrot.lane.b32.xlu0 %v618, 4
  %v1718 = vpop.permute.xlu0 %1717
  %1719 = vrot.lane.b32.xlu0 %v619, 4
  %v1720 = vpop.permute.xlu0 %1719
  %1721 = vrot.lane.b32.xlu0 %v620, 4
  %v1722 = vpop.permute.xlu0 %1721
  %1723 = vrot.lane.b32.xlu0 %v621, 4
  %v1724 = vpop.permute.xlu0 %1723
  %1725 = vrot.lane.b32.xlu0 %v622, 4
  %v1726 = vpop.permute.xlu0 %1725
  %1727 = vrot.lane.b32.xlu0 %v623, 4
  %v1728 = vpop.permute.xlu0 %1727
  %1729 = vrot.lane.b32.xlu0 %v624, 4
  %v1730 = vpop.permute.xlu0 %1729
  %1731 = vrot.lane.b32.xlu0 %v625, 4
  %v1732 = vpop.permute.xlu0 %1731
  %1733 = vrot.lane.b32.xlu0 %v626, 4
  %v1734 = vpop.permute.xlu0 %1733
  %1735 = vrot.lane.b32.xlu0 %v627, 4
  %v1736 = vpop.permute.xlu0 %1735
  %1737 = vrot.lane.b32.xlu0 %v628, 4
  %v1738 = vpop.permute.xlu0 %1737
  %1739 = vrot.lane.b32.xlu0 %v629, 4
  %v1740 = vpop.permute.xlu0 %1739
  %1741 = vrot.lane.b32.xlu0 %v630, 4
  %v1742 = vpop.permute.xlu0 %1741
  %1743 = vrot.lane.b32.xlu0 %v631, 4
  %v1744 = vpop.permute.xlu0 %1743
  %1745 = vrot.lane.b32.xlu0 %v632, 4
  %v1746 = vpop.permute.xlu0 %1745
  %1747 = vrot.lane.b32.xlu0 %v633, 4
  %v1748 = vpop.permute.xlu0 %1747
  %1749 = vrot.lane.b32.xlu0 %v634, 4
  %v1750 = vpop.permute.xlu0 %1749
  %1751 = vrot.lane.b32.xlu0 %v635, 4
  %v1752 = vpop.permute.xlu0 %1751
  %1753 = vrot.lane.b32.xlu0 %v636, 4
  %v1754 = vpop.permute.xlu0 %1753
  %1755 = vrot.lane.b32.xlu0 %v637, 4
  %v1756 = vpop.permute.xlu0 %1755
  %1757 = vrot.lane.b32.xlu0 %v638, 4
  %v1758 = vpop.permute.xlu0 %1757
  %1759 = vrot.lane.b32.xlu0 %v639, 4
  %v1760 = vpop.permute.xlu0 %1759
  %1761 = vrot.lane.b32.xlu0 %v640, 4
  %v1762 = vpop.permute.xlu0 %1761
  %1763 = vrot.lane.b32.xlu0 %v641, 4
  %v1764 = vpop.permute.xlu0 %1763
  %1765 = vrot.lane.b32.xlu0 %v642, 4
  %v1766 = vpop.permute.xlu0 %1765
  %1767 = vrot.lane.b32.xlu0 %v643, 4
  %v1768 = vpop.permute.xlu0 %1767
  %1769 = vrot.lane.b32.xlu0 %v644, 4
  %v1770 = vpop.permute.xlu0 %1769
  %1771 = vrot.lane.b32.xlu0 %v645, 4
  %v1772 = vpop.permute.xlu0 %1771
  %1773 = vrot.lane.b32.xlu0 %v646, 4
  %v1774 = vpop.permute.xlu0 %1773
  %1775 = vrot.lane.b32.xlu0 %v647, 4
  %v1776 = vpop.permute.xlu0 %1775
  %1777 = vrot.lane.b32.xlu0 %v648, 4
  %v1778 = vpop.permute.xlu0 %1777
  %1779 = vrot.lane.b32.xlu0 %v649, 4
  %v1780 = vpop.permute.xlu0 %1779
  %1781 = vrot.lane.b32.xlu0 %v650, 4
  %v1782 = vpop.permute.xlu0 %1781
  %1783 = vrot.lane.b32.xlu0 %v651, 4
  %v1784 = vpop.permute.xlu0 %1783
  %1785 = vrot.lane.b32.xlu0 %v652, 4
  %v1786 = vpop.permute.xlu0 %1785
  %1787 = vrot.lane.b32.xlu0 %v653, 4
  %v1788 = vpop.permute.xlu0 %1787
  %1789 = vrot.lane.b32.xlu0 %v654, 4
  %v1790 = vpop.permute.xlu0 %1789
  %1791 = vrot.lane.b32.xlu0 %v655, 4
  %v1792 = vpop.permute.xlu0 %1791
  %1793 = vrot.lane.b32.xlu0 %v656, 4
  %v1794 = vpop.permute.xlu0 %1793
  %1795 = vrot.lane.b32.xlu0 %v657, 4
  %v1796 = vpop.permute.xlu0 %1795
  %1797 = vrot.lane.b32.xlu0 %v658, 4
  %v1798 = vpop.permute.xlu0 %1797
  %1799 = vrot.lane.b32.xlu0 %v659, 4
  %v1800 = vpop.permute.xlu0 %1799
  %1801 = vrot.lane.b32.xlu0 %v660, 4
  %v1802 = vpop.permute.xlu0 %1801
  %1803 = vrot.lane.b32.xlu0 %v661, 4
  %v1804 = vpop.permute.xlu0 %1803
  %1805 = vrot.lane.b32.xlu0 %v662, 4
  %v1806 = vpop.permute.xlu0 %1805
  %1807 = vrot.lane.b32.xlu0 %v663, 4
  %v1808 = vpop.permute.xlu0 %1807
  %1809 = vrot.lane.b32.xlu0 %v664, 4
  %v1810 = vpop.permute.xlu0 %1809
  %1811 = vrot.lane.b32.xlu0 %v665, 4
  %v1812 = vpop.permute.xlu0 %1811
  %1813 = vrot.lane.b32.xlu0 %v666, 4
  %v1814 = vpop.permute.xlu0 %1813
  %1815 = vrot.lane.b32.xlu0 %v667, 4
  %v1816 = vpop.permute.xlu0 %1815
  %1817 = vrot.lane.b32.xlu0 %v668, 4
  %v1818 = vpop.permute.xlu0 %1817
  %1819 = vrot.lane.b32.xlu0 %v669, 4
  %v1820 = vpop.permute.xlu0 %1819
  %1821 = vrot.lane.b32.xlu0 %v670, 4
  %v1822 = vpop.permute.xlu0 %1821
  %1951 = vrot.lane.b32.xlu0 %v927, 12
  %v1952 = vpop.permute.xlu0 %1951
  %1953 = vrot.lane.b32.xlu0 %v928, 12
  %v1954 = vpop.permute.xlu0 %1953
  %1955 = vrot.lane.b32.xlu0 %v929, 12
  %v1956 = vpop.permute.xlu0 %1955
  %1957 = vrot.lane.b32.xlu0 %v930, 12
  %v1958 = vpop.permute.xlu0 %1957
  %1959 = vrot.lane.b32.xlu0 %v931, 12
  %v1960 = vpop.permute.xlu0 %1959
  %1961 = vrot.lane.b32.xlu0 %v932, 12
  %v1962 = vpop.permute.xlu0 %1961
  %1963 = vrot.lane.b32.xlu0 %v933, 12
  %v1964 = vpop.permute.xlu0 %1963
  %1965 = vrot.lane.b32.xlu0 %v934, 12
  %v1966 = vpop.permute.xlu0 %1965
  %1967 = vrot.lane.b32.xlu0 %v935, 12
  %v1968 = vpop.permute.xlu0 %1967
  %1969 = vrot.lane.b32.xlu0 %v936, 12
  %v1970 = vpop.permute.xlu0 %1969
  %1971 = vrot.lane.b32.xlu0 %v937, 12
  %v1972 = vpop.permute.xlu0 %1971
  %1973 = vrot.lane.b32.xlu0 %v938, 12
  %v1974 = vpop.permute.xlu0 %1973
  %1975 = vrot.lane.b32.xlu0 %v939, 12
  %v1976 = vpop.permute.xlu0 %1975
  %1977 = vrot.lane.b32.xlu0 %v940, 12
  %v1978 = vpop.permute.xlu0 %1977
  %1979 = vrot.lane.b32.xlu0 %v941, 12
  %v1980 = vpop.permute.xlu0 %1979
  %1981 = vrot.lane.b32.xlu0 %v942, 12
  %v1982 = vpop.permute.xlu0 %1981
  %1983 = vrot.lane.b32.xlu0 %v943, 12
  %v1984 = vpop.permute.xlu0 %1983
  %1985 = vrot.lane.b32.xlu0 %v944, 12
  %v1986 = vpop.permute.xlu0 %1985
  %1987 = vrot.lane.b32.xlu0 %v945, 12
  %v1988 = vpop.permute.xlu0 %1987
  %1989 = vrot.lane.b32.xlu0 %v946, 12
  %v1990 = vpop.permute.xlu0 %1989
  %1991 = vrot.lane.b32.xlu0 %v947, 12
  %v1992 = vpop.permute.xlu0 %1991
  %1993 = vrot.lane.b32.xlu0 %v948, 12
  %v1994 = vpop.permute.xlu0 %1993
  %1995 = vrot.lane.b32.xlu0 %v949, 12
  %v1996 = vpop.permute.xlu0 %1995
  %1997 = vrot.lane.b32.xlu0 %v950, 12
  %v1998 = vpop.permute.xlu0 %1997
  %1999 = vrot.lane.b32.xlu0 %v951, 12
  %v2000 = vpop.permute.xlu0 %1999
  %2001 = vrot.lane.b32.xlu0 %v952, 12
  %v2002 = vpop.permute.xlu0 %2001
  %2003 = vrot.lane.b32.xlu0 %v953, 12
  %v2004 = vpop.permute.xlu0 %2003
  %2005 = vrot.lane.b32.xlu0 %v954, 12
  %v2006 = vpop.permute.xlu0 %2005
  %2007 = vrot.lane.b32.xlu0 %v955, 12
  %v2008 = vpop.permute.xlu0 %2007
  %2009 = vrot.lane.b32.xlu0 %v956, 12
  %v2010 = vpop.permute.xlu0 %2009
  %2011 = vrot.lane.b32.xlu0 %v957, 12
  %v2012 = vpop.permute.xlu0 %2011
  %2013 = vrot.lane.b32.xlu0 %v958, 12
  %v2014 = vpop.permute.xlu0 %2013
  %2015 = vrot.lane.b32.xlu0 %v959, 12
  %v2016 = vpop.permute.xlu0 %2015
  %2017 = vrot.lane.b32.xlu0 %v960, 12
  %v2018 = vpop.permute.xlu0 %2017
  %2019 = vrot.lane.b32.xlu0 %v961, 12
  %v2020 = vpop.permute.xlu0 %2019
  %2021 = vrot.lane.b32.xlu0 %v962, 12
  %v2022 = vpop.permute.xlu0 %2021
  %2023 = vrot.lane.b32.xlu0 %v963, 12
  %v2024 = vpop.permute.xlu0 %2023
  %2025 = vrot.lane.b32.xlu0 %v964, 12
  %v2026 = vpop.permute.xlu0 %2025
  %2027 = vrot.lane.b32.xlu0 %v965, 12
  %v2028 = vpop.permute.xlu0 %2027
  %2029 = vrot.lane.b32.xlu0 %v966, 12
  %v2030 = vpop.permute.xlu0 %2029
  %2031 = vrot.lane.b32.xlu0 %v967, 12
  %v2032 = vpop.permute.xlu0 %2031
  %2033 = vrot.lane.b32.xlu0 %v968, 12
  %v2034 = vpop.permute.xlu0 %2033
  %2035 = vrot.lane.b32.xlu0 %v969, 12
  %v2036 = vpop.permute.xlu0 %2035
  %2037 = vrot.lane.b32.xlu0 %v970, 12
  %v2038 = vpop.permute.xlu0 %2037
  %2039 = vrot.lane.b32.xlu0 %v971, 12
  %v2040 = vpop.permute.xlu0 %2039
  %2041 = vrot.lane.b32.xlu0 %v972, 12
  %v2042 = vpop.permute.xlu0 %2041
  %2043 = vrot.lane.b32.xlu0 %v973, 12
  %v2044 = vpop.permute.xlu0 %2043
  %2045 = vrot.lane.b32.xlu0 %v974, 12
  %v2046 = vpop.permute.xlu0 %2045
  %2047 = vrot.lane.b32.xlu0 %v975, 12
  %v2048 = vpop.permute.xlu0 %2047
  %2049 = vrot.lane.b32.xlu0 %v976, 12
  %v2050 = vpop.permute.xlu0 %2049
  %2051 = vrot.lane.b32.xlu0 %v977, 12
  %v2052 = vpop.permute.xlu0 %2051
  %2053 = vrot.lane.b32.xlu0 %v978, 12
  %v2054 = vpop.permute.xlu0 %2053
  %2055 = vrot.lane.b32.xlu0 %v979, 12
  %v2056 = vpop.permute.xlu0 %2055
  %2057 = vrot.lane.b32.xlu0 %v980, 12
  %v2058 = vpop.permute.xlu0 %2057
  %2059 = vrot.lane.b32.xlu0 %v981, 12
  %v2060 = vpop.permute.xlu0 %2059
  %2061 = vrot.lane.b32.xlu0 %v982, 12
  %v2062 = vpop.permute.xlu0 %2061
  %2063 = vrot.lane.b32.xlu0 %v983, 12
  %v2064 = vpop.permute.xlu0 %2063
  %2065 = vrot.lane.b32.xlu0 %v984, 12
  %v2066 = vpop.permute.xlu0 %2065
  %2067 = vrot.lane.b32.xlu0 %v985, 12
  %v2068 = vpop.permute.xlu0 %2067
  %2069 = vrot.lane.b32.xlu0 %v986, 12
  %v2070 = vpop.permute.xlu0 %2069
  %2071 = vrot.lane.b32.xlu0 %v987, 12
  %v2072 = vpop.permute.xlu0 %2071
  %2073 = vrot.lane.b32.xlu0 %v988, 12
  %v2074 = vpop.permute.xlu0 %2073
  %2075 = vrot.lane.b32.xlu0 %v989, 12
  %v2076 = vpop.permute.xlu0 %2075
  %2077 = vrot.lane.b32.xlu0 %v990, 12
  %v2078 = vpop.permute.xlu0 %2077
  %2207 = vrot.lane.b32.xlu0 %v1247, 20
  %v2208 = vpop.permute.xlu0 %2207
  %2209 = vrot.lane.b32.xlu0 %v1248, 20
  %v2210 = vpop.permute.xlu0 %2209
  %2211 = vrot.lane.b32.xlu0 %v1249, 20
  %v2212 = vpop.permute.xlu0 %2211
  %2213 = vrot.lane.b32.xlu0 %v1250, 20
  %v2214 = vpop.permute.xlu0 %2213
  %2215 = vrot.lane.b32.xlu0 %v1251, 20
  %v2216 = vpop.permute.xlu0 %2215
  %2217 = vrot.lane.b32.xlu0 %v1252, 20
  %v2218 = vpop.permute.xlu0 %2217
  %2219 = vrot.lane.b32.xlu0 %v1253, 20
  %v2220 = vpop.permute.xlu0 %2219
  %2221 = vrot.lane.b32.xlu0 %v1254, 20
  %v2222 = vpop.permute.xlu0 %2221
  %2223 = vrot.lane.b32.xlu0 %v1255, 20
  %v2224 = vpop.permute.xlu0 %2223
  %2225 = vrot.lane.b32.xlu0 %v1256, 20
  %v2226 = vpop.permute.xlu0 %2225
  %2227 = vrot.lane.b32.xlu0 %v1257, 20
  %v2228 = vpop.permute.xlu0 %2227
  %2229 = vrot.lane.b32.xlu0 %v1258, 20
  %v2230 = vpop.permute.xlu0 %2229
  %2231 = vrot.lane.b32.xlu0 %v1259, 20
  %v2232 = vpop.permute.xlu0 %2231
  %2233 = vrot.lane.b32.xlu0 %v1260, 20
  %v2234 = vpop.permute.xlu0 %2233
  %2235 = vrot.lane.b32.xlu0 %v1261, 20
  %v2236 = vpop.permute.xlu0 %2235
  %2237 = vrot.lane.b32.xlu0 %v1262, 20
  %v2238 = vpop.permute.xlu0 %2237
  %2239 = vrot.lane.b32.xlu0 %v1263, 20
  %v2240 = vpop.permute.xlu0 %2239
  %2241 = vrot.lane.b32.xlu0 %v1264, 20
  %v2242 = vpop.permute.xlu0 %2241
  %2243 = vrot.lane.b32.xlu0 %v1265, 20
  %v2244 = vpop.permute.xlu0 %2243
  %2245 = vrot.lane.b32.xlu0 %v1266, 20
  %v2246 = vpop.permute.xlu0 %2245
  %2247 = vrot.lane.b32.xlu0 %v1267, 20
  %v2248 = vpop.permute.xlu0 %2247
  %2249 = vrot.lane.b32.xlu0 %v1268, 20
  %v2250 = vpop.permute.xlu0 %2249
  %2251 = vrot.lane.b32.xlu0 %v1269, 20
  %v2252 = vpop.permute.xlu0 %2251
  %2253 = vrot.lane.b32.xlu0 %v1270, 20
  %v2254 = vpop.permute.xlu0 %2253
  %2255 = vrot.lane.b32.xlu0 %v1271, 20
  %v2256 = vpop.permute.xlu0 %2255
  %2257 = vrot.lane.b32.xlu0 %v1272, 20
  %v2258 = vpop.permute.xlu0 %2257
  %2259 = vrot.lane.b32.xlu0 %v1273, 20
  %v2260 = vpop.permute.xlu0 %2259
  %2261 = vrot.lane.b32.xlu0 %v1274, 20
  %v2262 = vpop.permute.xlu0 %2261
  %2263 = vrot.lane.b32.xlu0 %v1275, 20
  %v2264 = vpop.permute.xlu0 %2263
  %2265 = vrot.lane.b32.xlu0 %v1276, 20
  %v2266 = vpop.permute.xlu0 %2265
  %2267 = vrot.lane.b32.xlu0 %v1277, 20
  %v2268 = vpop.permute.xlu0 %2267
  %2269 = vrot.lane.b32.xlu0 %v1278, 20
  %v2270 = vpop.permute.xlu0 %2269
  %2271 = vrot.lane.b32.xlu0 %v1279, 20
  %v2272 = vpop.permute.xlu0 %2271
  %2273 = vrot.lane.b32.xlu0 %v1280, 20
  %v2274 = vpop.permute.xlu0 %2273
  %2275 = vrot.lane.b32.xlu0 %v1281, 20
  %v2276 = vpop.permute.xlu0 %2275
  %2277 = vrot.lane.b32.xlu0 %v1282, 20
  %v2278 = vpop.permute.xlu0 %2277
  %2279 = vrot.lane.b32.xlu0 %v1283, 20
  %v2280 = vpop.permute.xlu0 %2279
  %2281 = vrot.lane.b32.xlu0 %v1284, 20
  %v2282 = vpop.permute.xlu0 %2281
  %2283 = vrot.lane.b32.xlu0 %v1285, 20
  %v2284 = vpop.permute.xlu0 %2283
  %2285 = vrot.lane.b32.xlu0 %v1286, 20
  %v2286 = vpop.permute.xlu0 %2285
  %2287 = vrot.lane.b32.xlu0 %v1287, 20
  %v2288 = vpop.permute.xlu0 %2287
  %2289 = vrot.lane.b32.xlu0 %v1288, 20
  %v2290 = vpop.permute.xlu0 %2289
  %2291 = vrot.lane.b32.xlu0 %v1289, 20
  %v2292 = vpop.permute.xlu0 %2291
  %2293 = vrot.lane.b32.xlu0 %v1290, 20
  %v2294 = vpop.permute.xlu0 %2293
  %2295 = vrot.lane.b32.xlu0 %v1291, 20
  %v2296 = vpop.permute.xlu0 %2295
  %2297 = vrot.lane.b32.xlu0 %v1292, 20
  %v2298 = vpop.permute.xlu0 %2297
  %2299 = vrot.lane.b32.xlu0 %v1293, 20
  %v2300 = vpop.permute.xlu0 %2299
  %2301 = vrot.lane.b32.xlu0 %v1294, 20
  %v2302 = vpop.permute.xlu0 %2301
  %2303 = vrot.lane.b32.xlu0 %v1295, 20
  %v2304 = vpop.permute.xlu0 %2303
  %2305 = vrot.lane.b32.xlu0 %v1296, 20
  %v2306 = vpop.permute.xlu0 %2305
  %2307 = vrot.lane.b32.xlu0 %v1297, 20
  %v2308 = vpop.permute.xlu0 %2307
  %2309 = vrot.lane.b32.xlu0 %v1298, 20
  %v2310 = vpop.permute.xlu0 %2309
  %2311 = vrot.lane.b32.xlu0 %v1299, 20
  %v2312 = vpop.permute.xlu0 %2311
  %2313 = vrot.lane.b32.xlu0 %v1300, 20
  %v2314 = vpop.permute.xlu0 %2313
  %2315 = vrot.lane.b32.xlu0 %v1301, 20
  %v2316 = vpop.permute.xlu0 %2315
  %2317 = vrot.lane.b32.xlu0 %v1302, 20
  %v2318 = vpop.permute.xlu0 %2317
  %2319 = vrot.lane.b32.xlu0 %v1303, 20
  %v2320 = vpop.permute.xlu0 %2319
  %2321 = vrot.lane.b32.xlu0 %v1304, 20
  %v2322 = vpop.permute.xlu0 %2321
  %2323 = vrot.lane.b32.xlu0 %v1305, 20
  %v2324 = vpop.permute.xlu0 %2323
  %2325 = vrot.lane.b32.xlu0 %v1306, 20
  %v2326 = vpop.permute.xlu0 %2325
  %2327 = vrot.lane.b32.xlu0 %v1307, 20
  %v2328 = vpop.permute.xlu0 %2327
  %2329 = vrot.lane.b32.xlu0 %v1308, 20
  %v2330 = vpop.permute.xlu0 %2329
  %2331 = vrot.lane.b32.xlu0 %v1309, 20
  %v2332 = vpop.permute.xlu0 %2331
  %2333 = vrot.lane.b32.xlu0 %v1310, 20
  %v2334 = vpop.permute.xlu0 %2333
  %2463 = vrot.lane.b32.xlu0 %v1567, 28
  %v2464 = vpop.permute.xlu0 %2463
  %2465 = vrot.lane.b32.xlu0 %v1568, 28
  %v2466 = vpop.permute.xlu0 %2465
  %2467 = vrot.lane.b32.xlu0 %v1569, 28
  %v2468 = vpop.permute.xlu0 %2467
  %2469 = vrot.lane.b32.xlu0 %v1570, 28
  %v2470 = vpop.permute.xlu0 %2469
  %2471 = vrot.lane.b32.xlu0 %v1571, 28
  %v2472 = vpop.permute.xlu0 %2471
  %2473 = vrot.lane.b32.xlu0 %v1572, 28
  %v2474 = vpop.permute.xlu0 %2473
  %2475 = vrot.lane.b32.xlu0 %v1573, 28
  %v2476 = vpop.permute.xlu0 %2475
  %2477 = vrot.lane.b32.xlu0 %v1574, 28
  %v2478 = vpop.permute.xlu0 %2477
  %2479 = vrot.lane.b32.xlu0 %v1575, 28
  %v2480 = vpop.permute.xlu0 %2479
  %2481 = vrot.lane.b32.xlu0 %v1576, 28
  %v2482 = vpop.permute.xlu0 %2481
  %2483 = vrot.lane.b32.xlu0 %v1577, 28
  %v2484 = vpop.permute.xlu0 %2483
  %2485 = vrot.lane.b32.xlu0 %v1578, 28
  %v2486 = vpop.permute.xlu0 %2485
  %2487 = vrot.lane.b32.xlu0 %v1579, 28
  %v2488 = vpop.permute.xlu0 %2487
  %2489 = vrot.lane.b32.xlu0 %v1580, 28
  %v2490 = vpop.permute.xlu0 %2489
  %2491 = vrot.lane.b32.xlu0 %v1581, 28
  %v2492 = vpop.permute.xlu0 %2491
  %2493 = vrot.lane.b32.xlu0 %v1582, 28
  %v2494 = vpop.permute.xlu0 %2493
  %2495 = vrot.lane.b32.xlu0 %v1583, 28
  %v2496 = vpop.permute.xlu0 %2495
  %2497 = vrot.lane.b32.xlu0 %v1584, 28
  %v2498 = vpop.permute.xlu0 %2497
  %2499 = vrot.lane.b32.xlu0 %v1585, 28
  %v2500 = vpop.permute.xlu0 %2499
  %2501 = vrot.lane.b32.xlu0 %v1586, 28
  %v2502 = vpop.permute.xlu0 %2501
  %2503 = vrot.lane.b32.xlu0 %v1587, 28
  %v2504 = vpop.permute.xlu0 %2503
  %2505 = vrot.lane.b32.xlu0 %v1588, 28
  %v2506 = vpop.permute.xlu0 %2505
  %2507 = vrot.lane.b32.xlu0 %v1589, 28
  %v2508 = vpop.permute.xlu0 %2507
  %2509 = vrot.lane.b32.xlu0 %v1590, 28
  %v2510 = vpop.permute.xlu0 %2509
  %2511 = vrot.lane.b32.xlu0 %v1591, 28
  %v2512 = vpop.permute.xlu0 %2511
  %2513 = vrot.lane.b32.xlu0 %v1592, 28
  %v2514 = vpop.permute.xlu0 %2513
  %2515 = vrot.lane.b32.xlu0 %v1593, 28
  %v2516 = vpop.permute.xlu0 %2515
  %2517 = vrot.lane.b32.xlu0 %v1594, 28
  %v2518 = vpop.permute.xlu0 %2517
  %2519 = vrot.lane.b32.xlu0 %v1595, 28
  %v2520 = vpop.permute.xlu0 %2519
  %2521 = vrot.lane.b32.xlu0 %v1596, 28
  %v2522 = vpop.permute.xlu0 %2521
  %2523 = vrot.lane.b32.xlu0 %v1597, 28
  %v2524 = vpop.permute.xlu0 %2523
  %2525 = vrot.lane.b32.xlu0 %v1598, 28
  %v2526 = vpop.permute.xlu0 %2525
  %2527 = vrot.lane.b32.xlu0 %v1599, 28
  %v2528 = vpop.permute.xlu0 %2527
  %2529 = vrot.lane.b32.xlu0 %v1600, 28
  %v2530 = vpop.permute.xlu0 %2529
  %2531 = vrot.lane.b32.xlu0 %v1601, 28
  %v2532 = vpop.permute.xlu0 %2531
  %2533 = vrot.lane.b32.xlu0 %v1602, 28
  %v2534 = vpop.permute.xlu0 %2533
  %2535 = vrot.lane.b32.xlu0 %v1603, 28
  %v2536 = vpop.permute.xlu0 %2535
  %2537 = vrot.lane.b32.xlu0 %v1604, 28
  %v2538 = vpop.permute.xlu0 %2537
  %2539 = vrot.lane.b32.xlu0 %v1605, 28
  %v2540 = vpop.permute.xlu0 %2539
  %2541 = vrot.lane.b32.xlu0 %v1606, 28
  %v2542 = vpop.permute.xlu0 %2541
  %2543 = vrot.lane.b32.xlu0 %v1607, 28
  %v2544 = vpop.permute.xlu0 %2543
  %2545 = vrot.lane.b32.xlu0 %v1608, 28
  %v2546 = vpop.permute.xlu0 %2545
  %2547 = vrot.lane.b32.xlu0 %v1609, 28
  %v2548 = vpop.permute.xlu0 %2547
  %2549 = vrot.lane.b32.xlu0 %v1610, 28
  %v2550 = vpop.permute.xlu0 %2549
  %2551 = vrot.lane.b32.xlu0 %v1611, 28
  %v2552 = vpop.permute.xlu0 %2551
  %2553 = vrot.lane.b32.xlu0 %v1612, 28
  %v2554 = vpop.permute.xlu0 %2553
  %2555 = vrot.lane.b32.xlu0 %v1613, 28
  %v2556 = vpop.permute.xlu0 %2555
  %2557 = vrot.lane.b32.xlu0 %v1614, 28
  %v2558 = vpop.permute.xlu0 %2557
  %2559 = vrot.lane.b32.xlu0 %v1615, 28
  %v2560 = vpop.permute.xlu0 %2559
  %2561 = vrot.lane.b32.xlu0 %v1616, 28
  %v2562 = vpop.permute.xlu0 %2561
  %2563 = vrot.lane.b32.xlu0 %v1617, 28
  %v2564 = vpop.permute.xlu0 %2563
  %2565 = vrot.lane.b32.xlu0 %v1618, 28
  %v2566 = vpop.permute.xlu0 %2565
  %2567 = vrot.lane.b32.xlu0 %v1619, 28
  %v2568 = vpop.permute.xlu0 %2567
  %2569 = vrot.lane.b32.xlu0 %v1620, 28
  %v2570 = vpop.permute.xlu0 %2569
  %2571 = vrot.lane.b32.xlu0 %v1621, 28
  %v2572 = vpop.permute.xlu0 %2571
  %2573 = vrot.lane.b32.xlu0 %v1622, 28
  %v2574 = vpop.permute.xlu0 %2573
  %2575 = vrot.lane.b32.xlu0 %v1623, 28
  %v2576 = vpop.permute.xlu0 %2575
  %2577 = vrot.lane.b32.xlu0 %v1624, 28
  %v2578 = vpop.permute.xlu0 %2577
  %2579 = vrot.lane.b32.xlu0 %v1625, 28
  %v2580 = vpop.permute.xlu0 %2579
  %2581 = vrot.lane.b32.xlu0 %v1626, 28
  %v2582 = vpop.permute.xlu0 %2581
  %2583 = vrot.lane.b32.xlu0 %v1627, 28
  %v2584 = vpop.permute.xlu0 %2583
  %2585 = vrot.lane.b32.xlu0 %v1628, 28
  %v2586 = vpop.permute.xlu0 %2585
  %2587 = vrot.lane.b32.xlu0 %v1629, 28
  %v2588 = vpop.permute.xlu0 %2587
  %2589 = vrot.lane.b32.xlu0 %v1630, 28
  %v2590 = vpop.permute.xlu0 %2589
  %vm2655 = vcmask 31744
  %v2656 = vsel %vm2655, %v223, %v1696
  %v2657 = vsel %vm2655, %v224, %v1698
  %v2658 = vsel %vm2655, %v225, %v1700
  %v2659 = vsel %vm2655, %v226, %v1702
  %v2660 = vsel %vm2655, %v227, %v1704
  %v2661 = vsel %vm2655, %v228, %v1706
  %v2662 = vsel %vm2655, %v229, %v1708
  %v2663 = vsel %vm2655, %v230, %v1710
  %v2664 = vsel %vm2655, %v231, %v1712
  %v2665 = vsel %vm2655, %v232, %v1714
  %v2666 = vsel %vm2655, %v233, %v1716
  %v2667 = vsel %vm2655, %v234, %v1718
  %v2668 = vsel %vm2655, %v235, %v1720
  %v2669 = vsel %vm2655, %v236, %v1722
  %v2670 = vsel %vm2655, %v237, %v1724
  %v2671 = vsel %vm2655, %v238, %v1726
  %v2672 = vsel %vm2655, %v239, %v1728
  %v2673 = vsel %vm2655, %v240, %v1730
  %v2674 = vsel %vm2655, %v241, %v1732
  %v2675 = vsel %vm2655, %v242, %v1734
  %v2676 = vsel %vm2655, %v243, %v1736
  %v2677 = vsel %vm2655, %v244, %v1738
  %v2678 = vsel %vm2655, %v245, %v1740
  %v2679 = vsel %vm2655, %v246, %v1742
  %v2680 = vsel %vm2655, %v247, %v1744
  %v2681 = vsel %vm2655, %v248, %v1746
  %v2682 = vsel %vm2655, %v249, %v1748
  %v2683 = vsel %vm2655, %v250, %v1750
  %v2684 = vsel %vm2655, %v251, %v1752
  %v2685 = vsel %vm2655, %v252, %v1754
  %v2686 = vsel %vm2655, %v253, %v1756
  %v2687 = vsel %vm2655, %v254, %v1758
  %v2688 = vsel %vm2655, %v255, %v1760
  %v2689 = vsel %vm2655, %v256, %v1762
  %v2690 = vsel %vm2655, %v257, %v1764
  %v2691 = vsel %vm2655, %v258, %v1766
  %v2692 = vsel %vm2655, %v259, %v1768
  %v2693 = vsel %vm2655, %v260, %v1770
  %v2694 = vsel %vm2655, %v261, %v1772
  %v2695 = vsel %vm2655, %v262, %v1774
  %v2696 = vsel %vm2655, %v263, %v1776
  %v2697 = vsel %vm2655, %v264, %v1778
  %v2698 = vsel %vm2655, %v265, %v1780
  %v2699 = vsel %vm2655, %v266, %v1782
  %v2700 = vsel %vm2655, %v267, %v1784
  %v2701 = vsel %vm2655, %v268, %v1786
  %v2702 = vsel %vm2655, %v269, %v1788
  %v2703 = vsel %vm2655, %v270, %v1790
  %v2704 = vsel %vm2655, %v271, %v1792
  %v2705 = vsel %vm2655, %v272, %v1794
  %v2706 = vsel %vm2655, %v273, %v1796
  %v2707 = vsel %vm2655, %v274, %v1798
  %v2708 = vsel %vm2655, %v275, %v1800
  %v2709 = vsel %vm2655, %v276, %v1802
  %v2710 = vsel %vm2655, %v277, %v1804
  %v2711 = vsel %vm2655, %v278, %v1806
  %v2712 = vsel %vm2655, %v279, %v1808
  %v2713 = vsel %vm2655, %v280, %v1810
  %v2714 = vsel %vm2655, %v281, %v1812
  %v2715 = vsel %vm2655, %v282, %v1814
  %v2716 = vsel %vm2655, %v283, %v1816
  %v2717 = vsel %vm2655, %v284, %v1818
  %v2718 = vsel %vm2655, %v285, %v1820
  %v2719 = vsel %vm2655, %v286, %v1822
  %vm2720 = vcmask 97280
  %v2721 = vsel %vm2720, %v2656, %v1952
  %v2722 = vsel %vm2720, %v2657, %v1954
  %v2723 = vsel %vm2720, %v2658, %v1956
  %v2724 = vsel %vm2720, %v2659, %v1958
  %v2725 = vsel %vm2720, %v2660, %v1960
  %v2726 = vsel %vm2720, %v2661, %v1962
  %v2727 = vsel %vm2720, %v2662, %v1964
  %v2728 = vsel %vm2720, %v2663, %v1966
  %v2729 = vsel %vm2720, %v2664, %v1968
  %v2730 = vsel %vm2720, %v2665, %v1970
  %v2731 = vsel %vm2720, %v2666, %v1972
  %v2732 = vsel %vm2720, %v2667, %v1974
  %v2733 = vsel %vm2720, %v2668, %v1976
  %v2734 = vsel %vm2720, %v2669, %v1978
  %v2735 = vsel %vm2720, %v2670, %v1980
  %v2736 = vsel %vm2720, %v2671, %v1982
  %v2737 = vsel %vm2720, %v2672, %v1984
  %v2738 = vsel %vm2720, %v2673, %v1986
  %v2739 = vsel %vm2720, %v2674, %v1988
  %v2740 = vsel %vm2720, %v2675, %v1990
  %v2741 = vsel %vm2720, %v2676, %v1992
  %v2742 = vsel %vm2720, %v2677, %v1994
  %v2743 = vsel %vm2720, %v2678, %v1996
  %v2744 = vsel %vm2720, %v2679, %v1998
  %v2745 = vsel %vm2720, %v2680, %v2000
  %v2746 = vsel %vm2720, %v2681, %v2002
  %v2747 = vsel %vm2720, %v2682, %v2004
  %v2748 = vsel %vm2720, %v2683, %v2006
  %v2749 = vsel %vm2720, %v2684, %v2008
  %v2750 = vsel %vm2720, %v2685, %v2010
  %v2751 = vsel %vm2720, %v2686, %v2012
  %v2752 = vsel %vm2720, %v2687, %v2014
  %v2753 = vsel %vm2720, %v2688, %v2016
  %v2754 = vsel %vm2720, %v2689, %v2018
  %v2755 = vsel %vm2720, %v2690, %v2020
  %v2756 = vsel %vm2720, %v2691, %v2022
  %v2757 = vsel %vm2720, %v2692, %v2024
  %v2758 = vsel %vm2720, %v2693, %v2026
  %v2759 = vsel %vm2720, %v2694, %v2028
  %v2760 = vsel %vm2720, %v2695, %v2030
  %v2761 = vsel %vm2720, %v2696, %v2032
  %v2762 = vsel %vm2720, %v2697, %v2034
  %v2763 = vsel %vm2720, %v2698, %v2036
  %v2764 = vsel %vm2720, %v2699, %v2038
  %v2765 = vsel %vm2720, %v2700, %v2040
  %v2766 = vsel %vm2720, %v2701, %v2042
  %v2767 = vsel %vm2720, %v2702, %v2044
  %v2768 = vsel %vm2720, %v2703, %v2046
  %v2769 = vsel %vm2720, %v2704, %v2048
  %v2770 = vsel %vm2720, %v2705, %v2050
  %v2771 = vsel %vm2720, %v2706, %v2052
  %v2772 = vsel %vm2720, %v2707, %v2054
  %v2773 = vsel %vm2720, %v2708, %v2056
  %v2774 = vsel %vm2720, %v2709, %v2058
  %v2775 = vsel %vm2720, %v2710, %v2060
  %v2776 = vsel %vm2720, %v2711, %v2062
  %v2777 = vsel %vm2720, %v2712, %v2064
  %v2778 = vsel %vm2720, %v2713, %v2066
  %v2779 = vsel %vm2720, %v2714, %v2068
  %v2780 = vsel %vm2720, %v2715, %v2070
  %v2781 = vsel %vm2720, %v2716, %v2072
  %v2782 = vsel %vm2720, %v2717, %v2074
  %v2783 = vsel %vm2720, %v2718, %v2076
  %v2784 = vsel %vm2720, %v2719, %v2078
  %vm2785 = vcmask 162816
  %v2786 = vsel %vm2785, %v2721, %v2208
  %v2787 = vsel %vm2785, %v2722, %v2210
  %v2788 = vsel %vm2785, %v2723, %v2212
  %v2789 = vsel %vm2785, %v2724, %v2214
  %v2790 = vsel %vm2785, %v2725, %v2216
  %v2791 = vsel %vm2785, %v2726, %v2218
  %v2792 = vsel %vm2785, %v2727, %v2220
  %v2793 = vsel %vm2785, %v2728, %v2222
  %v2794 = vsel %vm2785, %v2729, %v2224
  %v2795 = vsel %vm2785, %v2730, %v2226
  %v2796 = vsel %vm2785, %v2731, %v2228
  %v2797 = vsel %vm2785, %v2732, %v2230
  %v2798 = vsel %vm2785, %v2733, %v2232
  %v2799 = vsel %vm2785, %v2734, %v2234
  %v2800 = vsel %vm2785, %v2735, %v2236
  %v2801 = vsel %vm2785, %v2736, %v2238
  %v2802 = vsel %vm2785, %v2737, %v2240
  %v2803 = vsel %vm2785, %v2738, %v2242
  %v2804 = vsel %vm2785, %v2739, %v2244
  %v2805 = vsel %vm2785, %v2740, %v2246
  %v2806 = vsel %vm2785, %v2741, %v2248
  %v2807 = vsel %vm2785, %v2742, %v2250
  %v2808 = vsel %vm2785, %v2743, %v2252
  %v2809 = vsel %vm2785, %v2744, %v2254
  %v2810 = vsel %vm2785, %v2745, %v2256
  %v2811 = vsel %vm2785, %v2746, %v2258
  %v2812 = vsel %vm2785, %v2747, %v2260
  %v2813 = vsel %vm2785, %v2748, %v2262
  %v2814 = vsel %vm2785, %v2749, %v2264
  %v2815 = vsel %vm2785, %v2750, %v2266
  %v2816 = vsel %vm2785, %v2751, %v2268
  %v2817 = vsel %vm2785, %v2752, %v2270
  %v2818 = vsel %vm2785, %v2753, %v2272
  %v2819 = vsel %vm2785, %v2754, %v2274
  %v2820 = vsel %vm2785, %v2755, %v2276
  %v2821 = vsel %vm2785, %v2756, %v2278
  %v2822 = vsel %vm2785, %v2757, %v2280
  %v2823 = vsel %vm2785, %v2758, %v2282
  %v2824 = vsel %vm2785, %v2759, %v2284
  %v2825 = vsel %vm2785, %v2760, %v2286
  %v2826 = vsel %vm2785, %v2761, %v2288
  %v2827 = vsel %vm2785, %v2762, %v2290
  %v2828 = vsel %vm2785, %v2763, %v2292
  %v2829 = vsel %vm2785, %v2764, %v2294
  %v2830 = vsel %vm2785, %v2765, %v2296
  %v2831 = vsel %vm2785, %v2766, %v2298
  %v2832 = vsel %vm2785, %v2767, %v2300
  %v2833 = vsel %vm2785, %v2768, %v2302
  %v2834 = vsel %vm2785, %v2769, %v2304
  %v2835 = vsel %vm2785, %v2770, %v2306
  %v2836 = vsel %vm2785, %v2771, %v2308
  %v2837 = vsel %vm2785, %v2772, %v2310
  %v2838 = vsel %vm2785, %v2773, %v2312
  %v2839 = vsel %vm2785, %v2774, %v2314
  %v2840 = vsel %vm2785, %v2775, %v2316
  %v2841 = vsel %vm2785, %v2776, %v2318
  %v2842 = vsel %vm2785, %v2777, %v2320
  %v2843 = vsel %vm2785, %v2778, %v2322
  %v2844 = vsel %vm2785, %v2779, %v2324
  %v2845 = vsel %vm2785, %v2780, %v2326
  %v2846 = vsel %vm2785, %v2781, %v2328
  %v2847 = vsel %vm2785, %v2782, %v2330
  %v2848 = vsel %vm2785, %v2783, %v2332
  %v2849 = vsel %vm2785, %v2784, %v2334
  %vm2850 = vcmask 228352
  %v2851 = vsel %vm2850, %v2786, %v2464
  %v2852 = vsel %vm2850, %v2787, %v2466
  %v2853 = vsel %vm2850, %v2788, %v2468
  %v2854 = vsel %vm2850, %v2789, %v2470
  %v2855 = vsel %vm2850, %v2790, %v2472
  %v2856 = vsel %vm2850, %v2791, %v2474
  %v2857 = vsel %vm2850, %v2792, %v2476
  %v2858 = vsel %vm2850, %v2793, %v2478
  %v2859 = vsel %vm2850, %v2794, %v2480
  %v2860 = vsel %vm2850, %v2795, %v2482
  %v2861 = vsel %vm2850, %v2796, %v2484
  %v2862 = vsel %vm2850, %v2797, %v2486
  %v2863 = vsel %vm2850, %v2798, %v2488
  %v2864 = vsel %vm2850, %v2799, %v2490
  %v2865 = vsel %vm2850, %v2800, %v2492
  %v2866 = vsel %vm2850, %v2801, %v2494
  %v2867 = vsel %vm2850, %v2802, %v2496
  %v2868 = vsel %vm2850, %v2803, %v2498
  %v2869 = vsel %vm2850, %v2804, %v2500
  %v2870 = vsel %vm2850, %v2805, %v2502
  %v2871 = vsel %vm2850, %v2806, %v2504
  %v2872 = vsel %vm2850, %v2807, %v2506
  %v2873 = vsel %vm2850, %v2808, %v2508
  %v2874 = vsel %vm2850, %v2809, %v2510
  %v2875 = vsel %vm2850, %v2810, %v2512
  %v2876 = vsel %vm2850, %v2811, %v2514
  %v2877 = vsel %vm2850, %v2812, %v2516
  %v2878 = vsel %vm2850, %v2813, %v2518
  %v2879 = vsel %vm2850, %v2814, %v2520
  %v2880 = vsel %vm2850, %v2815, %v2522
  %v2881 = vsel %vm2850, %v2816, %v2524
  %v2882 = vsel %vm2850, %v2817, %v2526
  %v2883 = vsel %vm2850, %v2818, %v2528
  %v2884 = vsel %vm2850, %v2819, %v2530
  %v2885 = vsel %vm2850, %v2820, %v2532
  %v2886 = vsel %vm2850, %v2821, %v2534
  %v2887 = vsel %vm2850, %v2822, %v2536
  %v2888 = vsel %vm2850, %v2823, %v2538
  %v2889 = vsel %vm2850, %v2824, %v2540
  %v2890 = vsel %vm2850, %v2825, %v2542
  %v2891 = vsel %vm2850, %v2826, %v2544
  %v2892 = vsel %vm2850, %v2827, %v2546
  %v2893 = vsel %vm2850, %v2828, %v2548
  %v2894 = vsel %vm2850, %v2829, %v2550
  %v2895 = vsel %vm2850, %v2830, %v2552
  %v2896 = vsel %vm2850, %v2831, %v2554
  %v2897 = vsel %vm2850, %v2832, %v2556
  %v2898 = vsel %vm2850, %v2833, %v2558
  %v2899 = vsel %vm2850, %v2834, %v2560
  %v2900 = vsel %vm2850, %v2835, %v2562
  %v2901 = vsel %vm2850, %v2836, %v2564
  %v2902 = vsel %vm2850, %v2837, %v2566
  %v2903 = vsel %vm2850, %v2838, %v2568
  %v2904 = vsel %vm2850, %v2839, %v2570
  %v2905 = vsel %vm2850, %v2840, %v2572
  %v2906 = vsel %vm2850, %v2841, %v2574
  %v2907 = vsel %vm2850, %v2842, %v2576
  %v2908 = vsel %vm2850, %v2843, %v2578
  %v2909 = vsel %vm2850, %v2844, %v2580
  %v2910 = vsel %vm2850, %v2845, %v2582
  %v2911 = vsel %vm2850, %v2846, %v2584
  %v2912 = vsel %vm2850, %v2847, %v2586
  %v2913 = vsel %vm2850, %v2848, %v2588
  %v2914 = vsel %vm2850, %v2849, %v2590
  %v2915 = vld [vmem:[%s3] sm:$0x1]
  %v2916 = vsel %vm2655, %v223, 0.0
  %v2917 = vsel %vm2655, %v224, 0.0
  %v2918 = vadd.f32 %v2916, %v2917
  %v2919 = vsel %vm2655, %v225, 0.0
  %v2920 = vadd.f32 %v2918, %v2919
  %v2921 = vsel %vm2655, %v226, 0.0
  %v2922 = vadd.f32 %v2920, %v2921
  %v2923 = vsel %vm2655, %v227, 0.0
  %v2924 = vadd.f32 %v2922, %v2923
  %v2925 = vsel %vm2655, %v228, 0.0
  %v2926 = vadd.f32 %v2924, %v2925
  %v2927 = vsel %vm2655, %v229, 0.0
  %v2928 = vadd.f32 %v2926, %v2927
  %v2929 = vsel %vm2655, %v230, 0.0
  %v2930 = vadd.f32 %v2928, %v2929
  %v2931 = vsel %vm2655, %v231, 0.0
  %v2932 = vadd.f32 %v2930, %v2931
  %v2933 = vsel %vm2655, %v232, 0.0
  %v2934 = vadd.f32 %v2932, %v2933
  %v2935 = vsel %vm2655, %v233, 0.0
  %v2936 = vadd.f32 %v2934, %v2935
  %v2937 = vsel %vm2655, %v234, 0.0
  %v2938 = vadd.f32 %v2936, %v2937
  %v2939 = vsel %vm2655, %v235, 0.0
  %v2940 = vadd.f32 %v2938, %v2939
  %v2941 = vsel %vm2655, %v236, 0.0
  %v2942 = vadd.f32 %v2940, %v2941
  %v2943 = vsel %vm2655, %v237, 0.0
  %v2944 = vadd.f32 %v2942, %v2943
  %v2945 = vsel %vm2655, %v238, 0.0
  %v2946 = vadd.f32 %v2944, %v2945
  %v2947 = vsel %vm2655, %v239, 0.0
  %v2948 = vadd.f32 %v2946, %v2947
  %v2949 = vsel %vm2655, %v240, 0.0
  %v2950 = vadd.f32 %v2948, %v2949
  %v2951 = vsel %vm2655, %v241, 0.0
  %v2952 = vadd.f32 %v2950, %v2951
  %v2953 = vsel %vm2655, %v242, 0.0
  %v2954 = vadd.f32 %v2952, %v2953
  %v2955 = vsel %vm2655, %v243, 0.0
  %v2956 = vadd.f32 %v2954, %v2955
  %v2957 = vsel %vm2655, %v244, 0.0
  %v2958 = vadd.f32 %v2956, %v2957
  %v2959 = vsel %vm2655, %v245, 0.0
  %v2960 = vadd.f32 %v2958, %v2959
  %v2961 = vsel %vm2655, %v246, 0.0
  %v2962 = vadd.f32 %v2960, %v2961
  %v2963 = vsel %vm2655, %v247, 0.0
  %v2964 = vadd.f32 %v2962, %v2963
  %v2965 = vsel %vm2655, %v248, 0.0
  %v2966 = vadd.f32 %v2964, %v2965
  %v2967 = vsel %vm2655, %v249, 0.0
  %v2968 = vadd.f32 %v2966, %v2967
  %v2969 = vsel %vm2655, %v250, 0.0
  %v2970 = vadd.f32 %v2968, %v2969
  %v2971 = vsel %vm2655, %v251, 0.0
  %v2972 = vadd.f32 %v2970, %v2971
  %v2973 = vsel %vm2655, %v252, 0.0
  %v2974 = vadd.f32 %v2972, %v2973
  %v2975 = vsel %vm2655, %v253, 0.0
  %v2976 = vadd.f32 %v2974, %v2975
  %v2977 = vsel %vm2655, %v254, 0.0
  %v2978 = vadd.f32 %v2976, %v2977
  %v2979 = vsel %vm2655, %v255, 0.0
  %v2980 = vadd.f32 %v2978, %v2979
  %v2981 = vsel %vm2655, %v256, 0.0
  %v2982 = vadd.f32 %v2980, %v2981
  %v2983 = vsel %vm2655, %v257, 0.0
  %v2984 = vadd.f32 %v2982, %v2983
  %v2985 = vsel %vm2655, %v258, 0.0
  %v2986 = vadd.f32 %v2984, %v2985
  %v2987 = vsel %vm2655, %v259, 0.0
  %v2988 = vadd.f32 %v2986, %v2987
  %v2989 = vsel %vm2655, %v260, 0.0
  %v2990 = vadd.f32 %v2988, %v2989
  %v2991 = vsel %vm2655, %v261, 0.0
  %v2992 = vadd.f32 %v2990, %v2991
  %v2993 = vsel %vm2655, %v262, 0.0
  %v2994 = vadd.f32 %v2992, %v2993
  %v2995 = vsel %vm2655, %v263, 0.0
  %v2996 = vadd.f32 %v2994, %v2995
  %v2997 = vsel %vm2655, %v264, 0.0
  %v2998 = vadd.f32 %v2996, %v2997
  %v2999 = vsel %vm2655, %v265, 0.0
  %v3000 = vadd.f32 %v2998, %v2999
  %v3001 = vsel %vm2655, %v266, 0.0
  %v3002 = vadd.f32 %v3000, %v3001
  %v3003 = vsel %vm2655, %v267, 0.0
  %v3004 = vadd.f32 %v3002, %v3003
  %v3005 = vsel %vm2655, %v268, 0.0
  %v3006 = vadd.f32 %v3004, %v3005
  %v3007 = vsel %vm2655, %v269, 0.0
  %v3008 = vadd.f32 %v3006, %v3007
  %v3009 = vsel %vm2655, %v270, 0.0
  %v3010 = vadd.f32 %v3008, %v3009
  %v3011 = vsel %vm2655, %v271, 0.0
  %v3012 = vadd.f32 %v3010, %v3011
  %v3013 = vsel %vm2655, %v272, 0.0
  %v3014 = vadd.f32 %v3012, %v3013
  %v3015 = vsel %vm2655, %v273, 0.0
  %v3016 = vadd.f32 %v3014, %v3015
  %v3017 = vsel %vm2655, %v274, 0.0
  %v3018 = vadd.f32 %v3016, %v3017
  %v3019 = vsel %vm2655, %v275, 0.0
  %v3020 = vadd.f32 %v3018, %v3019
  %v3021 = vsel %vm2655, %v276, 0.0
  %v3022 = vadd.f32 %v3020, %v3021
  %v3023 = vsel %vm2655, %v277, 0.0
  %v3024 = vadd.f32 %v3022, %v3023
  %v3025 = vsel %vm2655, %v278, 0.0
  %v3026 = vadd.f32 %v3024, %v3025
  %v3027 = vsel %vm2655, %v279, 0.0
  %v3028 = vadd.f32 %v3026, %v3027
  %v3029 = vsel %vm2655, %v280, 0.0
  %v3030 = vadd.f32 %v3028, %v3029
  %v3031 = vsel %vm2655, %v281, 0.0
  %v3032 = vadd.f32 %v3030, %v3031
  %v3033 = vsel %vm2655, %v282, 0.0
  %v3034 = vadd.f32 %v3032, %v3033
  %v3035 = vsel %vm2655, %v283, 0.0
  %v3036 = vadd.f32 %v3034, %v3035
  %v3037 = vsel %vm2655, %v284, 0.0
  %v3038 = vadd.f32 %v3036, %v3037
  %v3039 = vsel %vm2655, %v285, 0.0
  %v3040 = vadd.f32 %v3038, %v3039
  %v3041 = vsel %vm2655, %v286, 0.0
  %v3042 = vadd.f32 %v3040, %v3041
  %v3043 = vrot.slane %v3042, 4
  %v3044 = vadd.f32 %v3042, %v3043
  %v3045 = vrot.slane %v3044, 2
  %v3046 = vadd.f32 %v3044, %v3045
  %v3047 = vrot.slane %v3046, 1
  %v3048 = vadd.f32 %v3046, %v3047
  %v3049 = vadd.f32 %v2915, %v3048
  %vm3050 = vcmask 24576
  %3051 = vst.msk [vmem:[%s3] sm:$0x1] %vm3050, %v3049
  %v3052 = vld [vmem:[%s4] sm:$0xff]
  %3053 = vxpose.xlu0.b32.start [1/16] %v159, 128
  %3054 = vxpose.xlu0.b32.cont [2/16] %v160, 128
  %3055 = vxpose.xlu0.b32.cont [3/16] %v161, 128
  %3056 = vxpose.xlu0.b32.cont [4/16] %v162, 128
  %3057 = vxpose.xlu0.b32.cont [5/16] %v163, 128
  %3058 = vxpose.xlu0.b32.cont [6/16] %v164, 128
  %3059 = vxpose.xlu0.b32.cont [7/16] %v165, 128
  %3060 = vxpose.xlu0.b32.cont [8/16] %v166, 128
  %3061 = vxpose.xlu0.b32.cont [9/16] %v167, 128
  %3062 = vxpose.xlu0.b32.cont [10/16] %v168, 128
  %3063 = vxpose.xlu0.b32.cont [11/16] %v169, 128
  %3064 = vxpose.xlu0.b32.cont [12/16] %v170, 128
  %3065 = vxpose.xlu0.b32.cont [13/16] %v171, 128
  %3066 = vxpose.xlu0.b32.cont [14/16] %v172, 128
  %3067 = vxpose.xlu0.b32.cont [15/16] %v173, 128
  %3068 = vxpose.xlu0.b32.end [16/16] %v174, 128
  %v3069 = vpop.trf.xlu0
  %v3070 = vpop.trf.xlu0
  %v3071 = vpop.trf.xlu0
  %v3072 = vpop.trf.xlu0
  %v3073 = vpop.trf.xlu0
  %v3074 = vpop.trf.xlu0
  %v3075 = vpop.trf.xlu0
  %v3076 = vpop.trf.xlu0
  %v3077 = vpop.trf.xlu0
  %v3078 = vpop.trf.xlu0
  %v3079 = vpop.trf.xlu0
  %v3080 = vpop.trf.xlu0
  %v3081 = vpop.trf.xlu0
  %v3082 = vpop.trf.xlu0
  %v3083 = vpop.trf.xlu0
  %v3084 = vpop.trf.xlu0
  %3085 = vxpose.xlu0.b32.start [1/16] %v175, 128
  %3086 = vxpose.xlu0.b32.cont [2/16] %v176, 128
  %3087 = vxpose.xlu0.b32.cont [3/16] %v177, 128
  %3088 = vxpose.xlu0.b32.cont [4/16] %v178, 128
  %3089 = vxpose.xlu0.b32.cont [5/16] %v179, 128
  %3090 = vxpose.xlu0.b32.cont [6/16] %v180, 128
  %3091 = vxpose.xlu0.b32.cont [7/16] %v181, 128
  %3092 = vxpose.xlu0.b32.cont [8/16] %v182, 128
  %3093 = vxpose.xlu0.b32.cont [9/16] %v183, 128
  %3094 = vxpose.xlu0.b32.cont [10/16] %v184, 128
  %3095 = vxpose.xlu0.b32.cont [11/16] %v185, 128
  %3096 = vxpose.xlu0.b32.cont [12/16] %v186, 128
  %3097 = vxpose.xlu0.b32.cont [13/16] %v187, 128
  %3098 = vxpose.xlu0.b32.cont [14/16] %v188, 128
  %3099 = vxpose.xlu0.b32.cont [15/16] %v189, 128
  %3100 = vxpose.xlu0.b32.end [16/16] %v190, 128
  %v3101 = vpop.trf.xlu0
  %v3102 = vpop.trf.xlu0
  %v3103 = vpop.trf.xlu0
  %v3104 = vpop.trf.xlu0
  %v3105 = vpop.trf.xlu0
  %v3106 = vpop.trf.xlu0
  %v3107 = vpop.trf.xlu0
  %v3108 = vpop.trf.xlu0
  %v3109 = vpop.trf.xlu0
  %v3110 = vpop.trf.xlu0
  %v3111 = vpop.trf.xlu0
  %v3112 = vpop.trf.xlu0
  %v3113 = vpop.trf.xlu0
  %v3114 = vpop.trf.xlu0
  %v3115 = vpop.trf.xlu0
  %v3116 = vpop.trf.xlu0
  %3117 = vxpose.xlu0.b32.start [1/16] %v191, 128
  %3118 = vxpose.xlu0.b32.cont [2/16] %v192, 128
  %3119 = vxpose.xlu0.b32.cont [3/16] %v193, 128
  %3120 = vxpose.xlu0.b32.cont [4/16] %v194, 128
  %3121 = vxpose.xlu0.b32.cont [5/16] %v195, 128
  %3122 = vxpose.xlu0.b32.cont [6/16] %v196, 128
  %3123 = vxpose.xlu0.b32.cont [7/16] %v197, 128
  %3124 = vxpose.xlu0.b32.cont [8/16] %v198, 128
  %3125 = vxpose.xlu0.b32.cont [9/16] %v199, 128
  %3126 = vxpose.xlu0.b32.cont [10/16] %v200, 128
  %3127 = vxpose.xlu0.b32.cont [11/16] %v201, 128
  %3128 = vxpose.xlu0.b32.cont [12/16] %v202, 128
  %3129 = vxpose.xlu0.b32.cont [13/16] %v203, 128
  %3130 = vxpose.xlu0.b32.cont [14/16] %v204, 128
  %3131 = vxpose.xlu0.b32.cont [15/16] %v205, 128
  %3132 = vxpose.xlu0.b32.end [16/16] %v206, 128
  %v3133 = vpop.trf.xlu0
  %v3134 = vpop.trf.xlu0
  %v3135 = vpop.trf.xlu0
  %v3136 = vpop.trf.xlu0
  %v3137 = vpop.trf.xlu0
  %v3138 = vpop.trf.xlu0
  %v3139 = vpop.trf.xlu0
  %v3140 = vpop.trf.xlu0
  %v3141 = vpop.trf.xlu0
  %v3142 = vpop.trf.xlu0
  %v3143 = vpop.trf.xlu0
  %v3144 = vpop.trf.xlu0
  %v3145 = vpop.trf.xlu0
  %v3146 = vpop.trf.xlu0
  %v3147 = vpop.trf.xlu0
  %v3148 = vpop.trf.xlu0
  %3149 = vxpose.xlu0.b32.start [1/16] %v207, 128
  %3150 = vxpose.xlu0.b32.cont [2/16] %v208, 128
  %3151 = vxpose.xlu0.b32.cont [3/16] %v209, 128
  %3152 = vxpose.xlu0.b32.cont [4/16] %v210, 128
  %3153 = vxpose.xlu0.b32.cont [5/16] %v211, 128
  %3154 = vxpose.xlu0.b32.cont [6/16] %v212, 128
  %3155 = vxpose.xlu0.b32.cont [7/16] %v213, 128
  %3156 = vxpose.xlu0.b32.cont [8/16] %v214, 128
  %3157 = vxpose.xlu0.b32.cont [9/16] %v215, 128
  %3158 = vxpose.xlu0.b32.cont [10/16] %v216, 128
  %3159 = vxpose.xlu0.b32.cont [11/16] %v217, 128
  %3160 = vxpose.xlu0.b32.cont [12/16] %v218, 128
  %3161 = vxpose.xlu0.b32.cont [13/16] %v219, 128
  %3162 = vxpose.xlu0.b32.cont [14/16] %v220, 128
  %3163 = vxpose.xlu0.b32.cont [15/16] %v221, 128
  %3164 = vxpose.xlu0.b32.end [16/16] %v222, 128
  %v3165 = vpop.trf.xlu0
  %v3166 = vpop.trf.xlu0
  %v3167 = vpop.trf.xlu0
  %v3168 = vpop.trf.xlu0
  %v3169 = vpop.trf.xlu0
  %v3170 = vpop.trf.xlu0
  %v3171 = vpop.trf.xlu0
  %v3172 = vpop.trf.xlu0
  %v3173 = vpop.trf.xlu0
  %v3174 = vpop.trf.xlu0
  %v3175 = vpop.trf.xlu0
  %v3176 = vpop.trf.xlu0
  %v3177 = vpop.trf.xlu0
  %v3178 = vpop.trf.xlu0
  %v3179 = vpop.trf.xlu0
  %v3180 = vpop.trf.xlu0
  %3181 = vmatprep.subr.mxu0 0.0
  %3182 = vmatpush1.msra.mxu0 %v2851
  %3183 = vmatprep.subr.mxu0 0.0
  %3184 = vmatpush1.msra.mxu0 %v2852
  %3185 = vmatprep.subr.mxu0 0.0
  %3186 = vmatpush1.msra.mxu0 %v2853
  %3187 = vmatprep.subr.mxu0 0.0
  %3188 = vmatpush1.msra.mxu0 %v2854
  %3189 = vmatprep.subr.mxu0 0.0
  %3190 = vmatpush1.msra.mxu0 %v2855
  %3191 = vmatprep.subr.mxu0 0.0
  %3192 = vmatpush1.msra.mxu0 %v2856
  %3193 = vmatprep.subr.mxu0 0.0
  %3194 = vmatpush1.msra.mxu0 %v2857
  %3195 = vmatprep.subr.mxu0 0.0
  %3196 = vmatpush1.msra.mxu0 %v2858
  %3197 = vmatprep.subr.mxu0 0.0
  %3198 = vmatpush1.msra.mxu0 %v2859
  %3199 = vmatprep.subr.mxu0 0.0
  %3200 = vmatpush1.msra.mxu0 %v2860
  %3201 = vmatprep.subr.mxu0 0.0
  %3202 = vmatpush1.msra.mxu0 %v2861
  %3203 = vmatprep.subr.mxu0 0.0
  %3204 = vmatpush1.msra.mxu0 %v2862
  %3205 = vmatprep.subr.mxu0 0.0
  %3206 = vmatpush1.msra.mxu0 %v2863
  %3207 = vmatprep.subr.mxu0 0.0
  %3208 = vmatpush1.msra.mxu0 %v2864
  %3209 = vmatprep.subr.mxu0 0.0
  %3210 = vmatpush1.msra.mxu0 %v2865
  %3211 = vmatprep.subr.mxu0 0.0
  %3212 = vmatpush1.msra.mxu0 %v2866
  %3213 = vmatprep.subr.mxu0 0.0
  %3214 = vmatpush1.msra.mxu0 %v2867
  %3215 = vmatprep.subr.mxu0 0.0
  %3216 = vmatpush1.msra.mxu0 %v2868
  %3217 = vmatprep.subr.mxu0 0.0
  %3218 = vmatpush1.msra.mxu0 %v2869
  %3219 = vmatprep.subr.mxu0 0.0
  %3220 = vmatpush1.msra.mxu0 %v2870
  %3221 = vmatprep.subr.mxu0 0.0
  %3222 = vmatpush1.msra.mxu0 %v2871
  %3223 = vmatprep.subr.mxu0 0.0
  %3224 = vmatpush1.msra.mxu0 %v2872
  %3225 = vmatprep.subr.mxu0 0.0
  %3226 = vmatpush1.msra.mxu0 %v2873
  %3227 = vmatprep.subr.mxu0 0.0
  %3228 = vmatpush1.msra.mxu0 %v2874
  %3229 = vmatprep.subr.mxu0 0.0
  %3230 = vmatpush1.msra.mxu0 %v2875
  %3231 = vmatprep.subr.mxu0 0.0
  %3232 = vmatpush1.msra.mxu0 %v2876
  %3233 = vmatprep.subr.mxu0 0.0
  %3234 = vmatpush1.msra.mxu0 %v2877
  %3235 = vmatprep.subr.mxu0 0.0
  %3236 = vmatpush1.msra.mxu0 %v2878
  %3237 = vmatprep.subr.mxu0 0.0
  %3238 = vmatpush1.msra.mxu0 %v2879
  %3239 = vmatprep.subr.mxu0 0.0
  %3240 = vmatpush1.msra.mxu0 %v2880
  %3241 = vmatprep.subr.mxu0 0.0
  %3242 = vmatpush1.msra.mxu0 %v2881
  %3243 = vmatprep.subr.mxu0 0.0
  %3244 = vmatpush1.msra.mxu0 %v2882
  %3245 = vmatprep.mubr.f32.mxu0 %v3101
  %3246 = vmatmul.mubr.f32.gmra.mrb[0].mxu0 %v3069
  %v3247 = vpop.f32.mrb[0].mxu0
  %v3248 = vadd.f32 0.0, %v3247
  %v3249 = vpop.f32.mrb[0].mxu0
  %3250 = vdwg.mxu0
  %3251 = vmatprep.subr.mxu0 0.0
  %3252 = vmatpush1.msra.mxu0 %v2883
  %3253 = vmatprep.subr.mxu0 0.0
  %3254 = vmatpush1.msra.mxu0 %v2884
  %3255 = vmatprep.subr.mxu0 0.0
  %3256 = vmatpush1.msra.mxu0 %v2885
  %3257 = vmatprep.subr.mxu0 0.0
  %3258 = vmatpush1.msra.mxu0 %v2886
  %3259 = vmatprep.subr.mxu0 0.0
  %3260 = vmatpush1.msra.mxu0 %v2887
  %3261 = vmatprep.subr.mxu0 0.0
  %3262 = vmatpush1.msra.mxu0 %v2888
  %3263 = vmatprep.subr.mxu0 0.0
  %3264 = vmatpush1.msra.mxu0 %v2889
  %3265 = vmatprep.subr.mxu0 0.0
  %3266 = vmatpush1.msra.mxu0 %v2890
  %3267 = vmatprep.subr.mxu0 0.0
  %3268 = vmatpush1.msra.mxu0 %v2891
  %3269 = vmatprep.subr.mxu0 0.0
  %3270 = vmatpush1.msra.mxu0 %v2892
  %3271 = vmatprep.subr.mxu0 0.0
  %3272 = vmatpush1.msra.mxu0 %v2893
  %3273 = vmatprep.subr.mxu0 0.0
  %3274 = vmatpush1.msra.mxu0 %v2894
  %3275 = vmatprep.subr.mxu0 0.0
  %3276 = vmatpush1.msra.mxu0 %v2895
  %3277 = vmatprep.subr.mxu0 0.0
  %3278 = vmatpush1.msra.mxu0 %v2896
  %3279 = vmatprep.subr.mxu0 0.0
  %3280 = vmatpush1.msra.mxu0 %v2897
  %3281 = vmatprep.subr.mxu0 0.0
  %3282 = vmatpush1.msra.mxu0 %v2898
  %3283 = vmatprep.subr.mxu0 0.0
  %3284 = vmatpush1.msra.mxu0 %v2899
  %3285 = vmatprep.subr.mxu0 0.0
  %3286 = vmatpush1.msra.mxu0 %v2900
  %3287 = vmatprep.subr.mxu0 0.0
  %3288 = vmatpush1.msra.mxu0 %v2901
  %3289 = vmatprep.subr.mxu0 0.0
  %3290 = vmatpush1.msra.mxu0 %v2902
  %3291 = vmatprep.subr.mxu0 0.0
  %3292 = vmatpush1.msra.mxu0 %v2903
  %3293 = vmatprep.subr.mxu0 0.0
  %3294 = vmatpush1.msra.mxu0 %v2904
  %3295 = vmatprep.subr.mxu0 0.0
  %3296 = vmatpush1.msra.mxu0 %v2905
  %3297 = vmatprep.subr.mxu0 0.0
  %3298 = vmatpush1.msra.mxu0 %v2906
  %3299 = vmatprep.subr.mxu0 0.0
  %3300 = vmatpush1.msra.mxu0 %v2907
  %3301 = vmatprep.subr.mxu0 0.0
  %3302 = vmatpush1.msra.mxu0 %v2908
  %3303 = vmatprep.subr.mxu0 0.0
  %3304 = vmatpush1.msra.mxu0 %v2909
  %3305 = vmatprep.subr.mxu0 0.0
  %3306 = vmatpush1.msra.mxu0 %v2910
  %3307 = vmatprep.subr.mxu0 0.0
  %3308 = vmatpush1.msra.mxu0 %v2911
  %3309 = vmatprep.subr.mxu0 0.0
  %3310 = vmatpush1.msra.mxu0 %v2912
  %3311 = vmatprep.subr.mxu0 0.0
  %3312 = vmatpush1.msra.mxu0 %v2913
  %3313 = vmatprep.subr.mxu0 0.0
  %3314 = vmatpush1.msra.mxu0 %v2914
  %3315 = vmatprep.mubr.f32.mxu0 %v3165
  %3316 = vmatmul.mubr.f32.gmra.mrb[0].mxu0 %v3133
  %v3317 = vpop.f32.mrb[0].mxu0
  %v3318 = vadd.f32 %v3248, %v3317
  %v3319 = vpop.f32.mrb[0].mxu0
  %3320 = vdwg.mxu0
  %v3321 = vadd.f32 %v3052, %v3318
  %vm3322 = vcmask 293888
  %3323 = vst.msk [vmem:[%s4] sm:$0xff] %vm3322, %v3321
  // Predicated region
  $region18: #{gmm_loss.4} parent=0 // pred_check
    _
  $region19: #{gmm_loss.4} parent=0 // pred_check_branch
    %3325 = sbr.rel (0) target = $region21
  $region20: #{gmm_loss.4} parent=0 // pred_region
    _
  $region21: #{gmm_loss.4} parent=0 // pred_fallthru
    _
  // Predicated region
  $region22: #{gmm_loss.4} parent=0 // pred_check
    _
  $region23: #{gmm_loss.4} parent=0 // pred_check_branch
    %3327 = sbr.rel (0) target = $region25
  $region24: #{gmm_loss.4} parent=0 // pred_region
    _
  $region25: #{gmm_loss.4} parent=0 // pred_fallthru
    _
  // Predicated region
  $region26: #{gmm_loss.4} parent=0 // pred_check
    _
  $region27: #{gmm_loss.4} parent=0 // pred_check_branch
    %3329 = sbr.rel (0) target = $region29
  $region28: #{gmm_loss.4} parent=0 // pred_region
    _
  $region29: #{gmm_loss.4} parent=0 // pred_fallthru
    _
  // Predicated region
  $region30: #{gmm_loss.4} parent=0 // pred_check
    _
  $region31: #{gmm_loss.4} parent=0 // pred_check_branch
    %3331 = sbr.rel (0) target = $region33
  $region32: #{gmm_loss.4} parent=0 // pred_region
    _
  $region33: #{gmm_loss.4} parent=0 // pred_fallthru
    _

// kernel: gmm_loss.5
$region0: #{gmm_loss.5}
  #allocation0 [shape = 'u32[]', space=smem, size = 0x4, offset = 0x4, fixed_abs, tag = 'smem constant byte address 0x4 - core index']
  #allocation1 [shape = 'u32[144,128]{1,0:T(1,128)}', space=vmem, size = 0x12000, scoped, tag = 'internal scratch']
  #allocation2 [shape = 'f32[512,1]{1,0:T(8,128)}', space=vmem, size = 0x40000, scoped, tag = 'scratch operand']
  %s0 = inlined_call_operand.vmem [shape: f32[512,8], index: 0, kind: input, shape index: {}]
  %s1 = inlined_call_operand.vmem [shape: f32[8,32], index: 1, kind: input, shape index: {}]
  %s2 = inlined_call_operand.vmem [shape: f32[1,32], index: 2, kind: input, shape index: {}]
  %s3 = inlined_call_operand.vmem [shape: f32[32,4], index: 3, kind: input, shape index: {}]
  %s4 = inlined_call_operand.vmem [shape: f32[1,4], index: 4, kind: input, shape index: {}]
  %s5 = inlined_call_operand.hbm [shape: f32[1,1,1], index: 5, kind: output, shape index: {}]
  %s6 = sld [smem:[#allocation0]]
  $region38: #{gmm_loss.5} parent=0
    _
  %s8 = ssub.s32 1, %s6
  %s9 = scalar_select 0, %s8, %s6
  $region1: #{gmm_loss.5} parent=0
    #allocation3 [shape = 'u8[512]{0}', space=vmem, size = 0x400, scoped, tag = 'output window, operand 0, single buffered']
    #allocation4 [shape = 's32[1]{0}', space=sflag, size = 0x4, scoped, tag = 'scoped memory for gmm_loss.5']
    %10 = vsyncpa [#allocation4], 0
    // Predicated region
    $region2: #{gmm_loss.5} parent=1 // pred_check
      _
    $region3: #{gmm_loss.5} parent=1 // pred_check_branch
      %12 = sbr.rel (0) target = $region5
    $region4: #{gmm_loss.5} parent=1 // pred_region
      %s13 = sadd.s32 0, 0
      %p14 = scmp.lt.s32.totalorder %s13, 0
      %s15 = scalar_select %p14, %s13, 0
      %s16 = smul.u32 64, %s15
      %p17 = scmp.lt.s32.totalorder %s16, 63
      %s18 = scalar_select %p17, %s16, 63
      %s19 = smul.addr %s18, 8
      %s20 = scalar_lea.vmem %s0, %s19
      %s21 = sadd.s32 0, 0
      %p22 = scmp.lt.s32.totalorder %s21, 0
      %s23 = scalar_select %p22, %s21, 0
      %s24 = smul.u32 64, %s23
    $region5: #{gmm_loss.5} parent=1 // pred_fallthru
      _
    // Predicated region
    $region6: #{gmm_loss.5} parent=1 // pred_check
      _
    $region7: #{gmm_loss.5} parent=1 // pred_check_branch
      %26 = sbr.rel (0) target = $region9
    $region8: #{gmm_loss.5} parent=1 // pred_region
      _
    $region9: #{gmm_loss.5} parent=1 // pred_fallthru
      _
    // Predicated region
    $region10: #{gmm_loss.5} parent=1 // pred_check
      _
    $region11: #{gmm_loss.5} parent=1 // pred_check_branch
      %28 = sbr.rel (0) target = $region13
    $region12: #{gmm_loss.5} parent=1 // pred_region
      _
    $region13: #{gmm_loss.5} parent=1 // pred_fallthru
      _
    // Predicated region
    $region14: #{gmm_loss.5} parent=1 // pred_check
      _
    $region15: #{gmm_loss.5} parent=1 // pred_check_branch
      %30 = sbr.rel (0) target = $region17
    $region16: #{gmm_loss.5} parent=1 // pred_region
      _
    $region17: #{gmm_loss.5} parent=1 // pred_fallthru
      _
    // Predicated region
    $region18: #{gmm_loss.5} parent=1 // pred_check
      _
    $region19: #{gmm_loss.5} parent=1 // pred_check_branch
      %32 = sbr.rel (0) target = $region21
    $region20: #{gmm_loss.5} parent=1 // pred_region
      _
    $region21: #{gmm_loss.5} parent=1 // pred_fallthru
      _
    %s33 = sadd.s32 0, 0
    %p34 = scmp.lt.s32.totalorder %s33, 0
    %s35 = scalar_select %p34, %s33, 0
    %s36 = smul.u32 64, %s35
    %p37 = scmp.lt.s32.totalorder %s36, 63
    %s38 = scalar_select %p37, %s36, 63
    %s39 = smul.addr %s38, 8
    %s40 = scalar_lea.vmem %s0, %s39
    %s41 = sadd.s32 0, 0
    %p42 = scmp.lt.s32.totalorder %s41, 0
    %s43 = scalar_select %p42, %s41, 0
    %s44 = smul.u32 64, %s43
    %p45 = scmp.lt.s32.totalorder %s44, 63
    %s46 = scalar_select %p45, %s44, 63
    %s47 = smul.addr %s46, 8
    %s48 = scalar_lea.vmem %s0, %s47
    %s49 = sadd.s32 0, 0
    %p50 = scmp.lt.s32.totalorder %s49, 0
    %s51 = scalar_select %p50, %s49, 0
    %s52 = smul.u32 64, %s51
    %p53 = scmp.eq.s32.totalorder 0, 0
    // Predicated region
    $region22: #{gmm_loss.5} parent=1 // pred_check
      %p54 = pneg %p53
    $region23: #{gmm_loss.5} parent=1 // pred_check_branch
      %56 = sbr.rel (%p54) target = $region25
    $region24: #{gmm_loss.5} parent=1 // pred_region
      %vm57 = vcmask 7168
      %58 = vst.msk [vmem:[#allocation2] sm:$0xff] %vm57, 0.0
      %59 = vst.msk [vmem:[#allocation2 + $0x8] sm:$0xff] %vm57, 0.0
      %60 = vst.msk [vmem:[#allocation2 + $0x10] sm:$0xff] %vm57, 0.0
      %61 = vst.msk [vmem:[#allocation2 + $0x18] sm:$0xff] %vm57, 0.0
      %62 = vst.msk [vmem:[#allocation2 + $0x20] sm:$0xff] %vm57, 0.0
      %63 = vst.msk [vmem:[#allocation2 + $0x28] sm:$0xff] %vm57, 0.0
      %64 = vst.msk [vmem:[#allocation2 + $0x30] sm:$0xff] %vm57, 0.0
      %65 = vst.msk [vmem:[#allocation2 + $0x38] sm:$0xff] %vm57, 0.0
      %66 = vst.msk [vmem:[#allocation2 + $0x40] sm:$0xff] %vm57, 0.0
      %67 = vst.msk [vmem:[#allocation2 + $0x48] sm:$0xff] %vm57, 0.0
      %68 = vst.msk [vmem:[#allocation2 + $0x50] sm:$0xff] %vm57, 0.0
      %69 = vst.msk [vmem:[#allocation2 + $0x58] sm:$0xff] %vm57, 0.0
      %70 = vst.msk [vmem:[#allocation2 + $0x60] sm:$0xff] %vm57, 0.0
      %71 = vst.msk [vmem:[#allocation2 + $0x68] sm:$0xff] %vm57, 0.0
      %72 = vst.msk [vmem:[#allocation2 + $0x70] sm:$0xff] %vm57, 0.0
      %73 = vst.msk [vmem:[#allocation2 + $0x78] sm:$0xff] %vm57, 0.0
      %74 = vst.msk [vmem:[#allocation2 + $0x80] sm:$0xff] %vm57, 0.0
      %75 = vst.msk [vmem:[#allocation2 + $0x88] sm:$0xff] %vm57, 0.0
      %76 = vst.msk [vmem:[#allocation2 + $0x90] sm:$0xff] %vm57, 0.0
      %77 = vst.msk [vmem:[#allocation2 + $0x98] sm:$0xff] %vm57, 0.0
      %78 = vst.msk [vmem:[#allocation2 + $0xa0] sm:$0xff] %vm57, 0.0
      %79 = vst.msk [vmem:[#allocation2 + $0xa8] sm:$0xff] %vm57, 0.0
      %80 = vst.msk [vmem:[#allocation2 + $0xb0] sm:$0xff] %vm57, 0.0
      %81 = vst.msk [vmem:[#allocation2 + $0xb8] sm:$0xff] %vm57, 0.0
      %82 = vst.msk [vmem:[#allocation2 + $0xc0] sm:$0xff] %vm57, 0.0
      %83 = vst.msk [vmem:[#allocation2 + $0xc8] sm:$0xff] %vm57, 0.0
      %84 = vst.msk [vmem:[#allocation2 + $0xd0] sm:$0xff] %vm57, 0.0
      %85 = vst.msk [vmem:[#allocation2 + $0xd8] sm:$0xff] %vm57, 0.0
      %86 = vst.msk [vmem:[#allocation2 + $0xe0] sm:$0xff] %vm57, 0.0
      %87 = vst.msk [vmem:[#allocation2 + $0xe8] sm:$0xff] %vm57, 0.0
      %88 = vst.msk [vmem:[#allocation2 + $0xf0] sm:$0xff] %vm57, 0.0
      %89 = vst.msk [vmem:[#allocation2 + $0xf8] sm:$0xff] %vm57, 0.0
      %90 = vst.msk [vmem:[#allocation2 + $0x100] sm:$0xff] %vm57, 0.0
      %91 = vst.msk [vmem:[#allocation2 + $0x108] sm:$0xff] %vm57, 0.0
      %92 = vst.msk [vmem:[#allocation2 + $0x110] sm:$0xff] %vm57, 0.0
      %93 = vst.msk [vmem:[#allocation2 + $0x118] sm:$0xff] %vm57, 0.0
      %94 = vst.msk [vmem:[#allocation2 + $0x120] sm:$0xff] %vm57, 0.0
      %95 = vst.msk [vmem:[#allocation2 + $0x128] sm:$0xff] %vm57, 0.0
      %96 = vst.msk [vmem:[#allocation2 + $0x130] sm:$0xff] %vm57, 0.0
      %97 = vst.msk [vmem:[#allocation2 + $0x138] sm:$0xff] %vm57, 0.0
      %98 = vst.msk [vmem:[#allocation2 + $0x140] sm:$0xff] %vm57, 0.0
      %99 = vst.msk [vmem:[#allocation2 + $0x148] sm:$0xff] %vm57, 0.0
      %100 = vst.msk [vmem:[#allocation2 + $0x150] sm:$0xff] %vm57, 0.0
      %101 = vst.msk [vmem:[#allocation2 + $0x158] sm:$0xff] %vm57, 0.0
      %102 = vst.msk [vmem:[#allocation2 + $0x160] sm:$0xff] %vm57, 0.0
      %103 = vst.msk [vmem:[#allocation2 + $0x168] sm:$0xff] %vm57, 0.0
      %104 = vst.msk [vmem:[#allocation2 + $0x170] sm:$0xff] %vm57, 0.0
      %105 = vst.msk [vmem:[#allocation2 + $0x178] sm:$0xff] %vm57, 0.0
      %106 = vst.msk [vmem:[#allocation2 + $0x180] sm:$0xff] %vm57, 0.0
      %107 = vst.msk [vmem:[#allocation2 + $0x188] sm:$0xff] %vm57, 0.0
      %108 = vst.msk [vmem:[#allocation2 + $0x190] sm:$0xff] %vm57, 0.0
      %109 = vst.msk [vmem:[#allocation2 + $0x198] sm:$0xff] %vm57, 0.0
      %110 = vst.msk [vmem:[#allocation2 + $0x1a0] sm:$0xff] %vm57, 0.0
      %111 = vst.msk [vmem:[#allocation2 + $0x1a8] sm:$0xff] %vm57, 0.0
      %112 = vst.msk [vmem:[#allocation2 + $0x1b0] sm:$0xff] %vm57, 0.0
      %113 = vst.msk [vmem:[#allocation2 + $0x1b8] sm:$0xff] %vm57, 0.0
      %114 = vst.msk [vmem:[#allocation2 + $0x1c0] sm:$0xff] %vm57, 0.0
      %115 = vst.msk [vmem:[#allocation2 + $0x1c8] sm:$0xff] %vm57, 0.0
      %116 = vst.msk [vmem:[#allocation2 + $0x1d0] sm:$0xff] %vm57, 0.0
      %117 = vst.msk [vmem:[#allocation2 + $0x1d8] sm:$0xff] %vm57, 0.0
      %118 = vst.msk [vmem:[#allocation2 + $0x1e0] sm:$0xff] %vm57, 0.0
      %119 = vst.msk [vmem:[#allocation2 + $0x1e8] sm:$0xff] %vm57, 0.0
      %120 = vst.msk [vmem:[#allocation2 + $0x1f0] sm:$0xff] %vm57, 0.0
      %121 = vst.msk [vmem:[#allocation2 + $0x1f8] sm:$0xff] %vm57, 0.0
    $region25: #{gmm_loss.5} parent=1 // pred_fallthru
      _
    %v122 = vld [vmem:[%s48] sm:$0xff]
    %v123 = vld [vmem:[%s48 + $0x8] sm:$0xff]
    %v124 = vld [vmem:[%s48 + $0x10] sm:$0xff]
    %v125 = vld [vmem:[%s48 + $0x18] sm:$0xff]
    %v126 = vld [vmem:[%s48 + $0x20] sm:$0xff]
    %v127 = vld [vmem:[%s48 + $0x28] sm:$0xff]
    %v128 = vld [vmem:[%s48 + $0x30] sm:$0xff]
    %v129 = vld [vmem:[%s48 + $0x38] sm:$0xff]
    %v130 = vld [vmem:[%s48 + $0x40] sm:$0xff]
    %v131 = vld [vmem:[%s48 + $0x48] sm:$0xff]
    %v132 = vld [vmem:[%s48 + $0x50] sm:$0xff]
    %v133 = vld [vmem:[%s48 + $0x58] sm:$0xff]
    %v134 = vld [vmem:[%s48 + $0x60] sm:$0xff]
    %v135 = vld [vmem:[%s48 + $0x68] sm:$0xff]
    %v136 = vld [vmem:[%s48 + $0x70] sm:$0xff]
    %v137 = vld [vmem:[%s48 + $0x78] sm:$0xff]
    %v138 = vld [vmem:[%s48 + $0x80] sm:$0xff]
    %v139 = vld [vmem:[%s48 + $0x88] sm:$0xff]
    %v140 = vld [vmem:[%s48 + $0x90] sm:$0xff]
    %v141 = vld [vmem:[%s48 + $0x98] sm:$0xff]
    %v142 = vld [vmem:[%s48 + $0xa0] sm:$0xff]
    %v143 = vld [vmem:[%s48 + $0xa8] sm:$0xff]
    %v144 = vld [vmem:[%s48 + $0xb0] sm:$0xff]
    %v145 = vld [vmem:[%s48 + $0xb8] sm:$0xff]
    %v146 = vld [vmem:[%s48 + $0xc0] sm:$0xff]
    %v147 = vld [vmem:[%s48 + $0xc8] sm:$0xff]
    %v148 = vld [vmem:[%s48 + $0xd0] sm:$0xff]
    %v149 = vld [vmem:[%s48 + $0xd8] sm:$0xff]
    %v150 = vld [vmem:[%s48 + $0xe0] sm:$0xff]
    %v151 = vld [vmem:[%s48 + $0xe8] sm:$0xff]
    %v152 = vld [vmem:[%s48 + $0xf0] sm:$0xff]
    %v153 = vld [vmem:[%s48 + $0xf8] sm:$0xff]
    %v154 = vld [vmem:[%s48 + $0x100] sm:$0xff]
    %v155 = vld [vmem:[%s48 + $0x108] sm:$0xff]
    %v156 = vld [vmem:[%s48 + $0x110] sm:$0xff]
    %v157 = vld [vmem:[%s48 + $0x118] sm:$0xff]
    %v158 = vld [vmem:[%s48 + $0x120] sm:$0xff]
    %v159 = vld [vmem:[%s48 + $0x128] sm:$0xff]
    %v160 = vld [vmem:[%s48 + $0x130] sm:$0xff]
    %v161 = vld [vmem:[%s48 + $0x138] sm:$0xff]
    %v162 = vld [vmem:[%s48 + $0x140] sm:$0xff]
    %v163 = vld [vmem:[%s48 + $0x148] sm:$0xff]
    %v164 = vld [vmem:[%s48 + $0x150] sm:$0xff]
    %v165 = vld [vmem:[%s48 + $0x158] sm:$0xff]
    %v166 = vld [vmem:[%s48 + $0x160] sm:$0xff]
    %v167 = vld [vmem:[%s48 + $0x168] sm:$0xff]
    %v168 = vld [vmem:[%s48 + $0x170] sm:$0xff]
    %v169 = vld [vmem:[%s48 + $0x178] sm:$0xff]
    %v170 = vld [vmem:[%s48 + $0x180] sm:$0xff]
    %v171 = vld [vmem:[%s48 + $0x188] sm:$0xff]
    %v172 = vld [vmem:[%s48 + $0x190] sm:$0xff]
    %v173 = vld [vmem:[%s48 + $0x198] sm:$0xff]
    %v174 = vld [vmem:[%s48 + $0x1a0] sm:$0xff]
    %v175 = vld [vmem:[%s48 + $0x1a8] sm:$0xff]
    %v176 = vld [vmem:[%s48 + $0x1b0] sm:$0xff]
    %v177 = vld [vmem:[%s48 + $0x1b8] sm:$0xff]
    %v178 = vld [vmem:[%s48 + $0x1c0] sm:$0xff]
    %v179 = vld [vmem:[%s48 + $0x1c8] sm:$0xff]
    %v180 = vld [vmem:[%s48 + $0x1d0] sm:$0xff]
    %v181 = vld [vmem:[%s48 + $0x1d8] sm:$0xff]
    %v182 = vld [vmem:[%s48 + $0x1e0] sm:$0xff]
    %v183 = vld [vmem:[%s48 + $0x1e8] sm:$0xff]
    %v184 = vld [vmem:[%s48 + $0x1f0] sm:$0xff]
    %v185 = vld [vmem:[%s48 + $0x1f8] sm:$0xff]
    %v186 = vld [vmem:[%s1] sm:$0xff]
    %vm187 = vcmask 64512
    %v189 = vsel %vm187, %v122, 0
    %v192 = vsel %vm187, %v123, 0
    %v195 = vsel %vm187, %v124, 0
    %v198 = vsel %vm187, %v125, 0
    %v201 = vsel %vm187, %v126, 0
    %v204 = vsel %vm187, %v127, 0
    %v207 = vsel %vm187, %v128, 0
    %v210 = vsel %vm187, %v129, 0
    %v213 = vsel %vm187, %v130, 0
    %v216 = vsel %vm187, %v131, 0
    %v219 = vsel %vm187, %v132, 0
    %v222 = vsel %vm187, %v133, 0
    %v225 = vsel %vm187, %v134, 0
    %v228 = vsel %vm187, %v135, 0
    %v231 = vsel %vm187, %v136, 0
    %v234 = vsel %vm187, %v137, 0
    %v237 = vsel %vm187, %v138, 0
    %v240 = vsel %vm187, %v139, 0
    %v243 = vsel %vm187, %v140, 0
    %v246 = vsel %vm187, %v141, 0
    %v249 = vsel %vm187, %v142, 0
    %v252 = vsel %vm187, %v143, 0
    %v255 = vsel %vm187, %v144, 0
    %v258 = vsel %vm187, %v145, 0
    %v261 = vsel %vm187, %v146, 0
    %v264 = vsel %vm187, %v147, 0
    %v267 = vsel %vm187, %v148, 0
    %v270 = vsel %vm187, %v149, 0
    %v273 = vsel %vm187, %v150, 0
    %v276 = vsel %vm187, %v151, 0
    %v279 = vsel %vm187, %v152, 0
    %v282 = vsel %vm187, %v153, 0
    %v285 = vsel %vm187, %v154, 0
    %v288 = vsel %vm187, %v155, 0
    %v291 = vsel %vm187, %v156, 0
    %v294 = vsel %vm187, %v157, 0
    %v297 = vsel %vm187, %v158, 0
    %v300 = vsel %vm187, %v159, 0
    %v303 = vsel %vm187, %v160, 0
    %v306 = vsel %vm187, %v161, 0
    %v309 = vsel %vm187, %v162, 0
    %v312 = vsel %vm187, %v163, 0
    %v315 = vsel %vm187, %v164, 0
    %v318 = vsel %vm187, %v165, 0
    %v321 = vsel %vm187, %v166, 0
    %v324 = vsel %vm187, %v167, 0
    %v327 = vsel %vm187, %v168, 0
    %v330 = vsel %vm187, %v169, 0
    %v333 = vsel %vm187, %v170, 0
    %v336 = vsel %vm187, %v171, 0
    %v339 = vsel %vm187, %v172, 0
    %v342 = vsel %vm187, %v173, 0
    %v345 = vsel %vm187, %v174, 0
    %v348 = vsel %vm187, %v175, 0
    %v351 = vsel %vm187, %v176, 0
    %v354 = vsel %vm187, %v177, 0
    %v357 = vsel %vm187, %v178, 0
    %v360 = vsel %vm187, %v179, 0
    %v363 = vsel %vm187, %v180, 0
    %v366 = vsel %vm187, %v181, 0
    %v369 = vsel %vm187, %v182, 0
    %v372 = vsel %vm187, %v183, 0
    %v375 = vsel %vm187, %v184, 0
    %v378 = vsel %vm187, %v185, 0
    %380 = vmatprep.subr.mxu0 0.0
    %381 = vmatpush1.msra.mxu0 %v186
    %382 = vmatprep.subr.mxu0 0.0
    %383 = vmatpush1.msra.mxu0 0.0
    %384 = vmatprep.subr.mxu0 0.0
    %385 = vmatpush1.msra.mxu0 0.0
    %386 = vmatprep.subr.mxu0 0.0
    %387 = vmatpush1.msra.mxu0 0.0
    %388 = vmatprep.subr.mxu0 0.0
    %389 = vmatpush1.msra.mxu0 0.0
    %390 = vmatprep.subr.mxu0 0.0
    %391 = vmatpush1.msra.mxu0 0.0
    %392 = vmatprep.subr.mxu0 0.0
    %393 = vmatpush1.msra.mxu0 0.0
    %394 = vmatprep.subr.mxu0 0.0
    %395 = vmatpush1.msra.mxu0 0.0
    %396 = vmatprep.subr.mxu0 0.0
    %397 = vmatpush1.msra.mxu0 0.0
    %398 = vmatprep.subr.mxu0 0.0
    %399 = vmatpush1.msra.mxu0 0.0
    %400 = vmatprep.subr.mxu0 0.0
    %401 = vmatpush1.msra.mxu0 0.0
    %402 = vmatprep.subr.mxu0 0.0
    %403 = vmatpush1.msra.mxu0 0.0
    %404 = vmatprep.subr.mxu0 0.0
    %405 = vmatpush1.msra.mxu0 0.0
    %406 = vmatprep.subr.mxu0 0.0
    %407 = vmatpush1.msra.mxu0 0.0
    %408 = vmatprep.subr.mxu0 0.0
    %409 = vmatpush1.msra.mxu0 0.0
    %410 = vmatprep.subr.mxu0 0.0
    %411 = vmatpush1.msra.mxu0 0.0
    %412 = vmatprep.subr.mxu0 0.0
    %413 = vmatpush1.msra.mxu0 0.0
    %414 = vmatprep.subr.mxu0 0.0
    %415 = vmatpush1.msra.mxu0 0.0
    %416 = vmatprep.subr.mxu0 0.0
    %417 = vmatpush1.msra.mxu0 0.0
    %418 = vmatprep.subr.mxu0 0.0
    %419 = vmatpush1.msra.mxu0 0.0
    %420 = vmatprep.subr.mxu0 0.0
    %421 = vmatpush1.msra.mxu0 0.0
    %422 = vmatprep.subr.mxu0 0.0
    %423 = vmatpush1.msra.mxu0 0.0
    %424 = vmatprep.subr.mxu0 0.0
    %425 = vmatpush1.msra.mxu0 0.0
    %426 = vmatprep.subr.mxu0 0.0
    %427 = vmatpush1.msra.mxu0 0.0
    %428 = vmatprep.subr.mxu0 0.0
    %429 = vmatpush1.msra.mxu0 0.0
    %430 = vmatprep.subr.mxu0 0.0
    %431 = vmatpush1.msra.mxu0 0.0
    %432 = vmatprep.subr.mxu0 0.0
    %433 = vmatpush1.msra.mxu0 0.0
    %434 = vmatprep.subr.mxu0 0.0
    %435 = vmatpush1.msra.mxu0 0.0
    %436 = vmatprep.subr.mxu0 0.0
    %437 = vmatpush1.msra.mxu0 0.0
    %438 = vmatprep.subr.mxu0 0.0
    %439 = vmatpush1.msra.mxu0 0.0
    %440 = vmatprep.subr.mxu0 0.0
    %441 = vmatpush1.msra.mxu0 0.0
    %442 = vmatprep.subr.mxu0 0.0
    %443 = vmatpush1.msra.mxu0 0.0
    %444 = vmatprep.mubr.f32.mxu0 0.0
    %445 = vmatmul.mubr.f32.gmra.mrb[0].mxu0 %v189
    %v446 = vpop.f32.mrb[0].mxu0
    %v447 = vadd.f32 0.0, %v446
    %v448 = vpop.f32.mrb[0].mxu0
    %449 = vmatprep.mubr.f32.mxu0 0.0
    %450 = vmatmul.mubr.f32.gmra.mrb[0].mxu0 %v192
    %v451 = vpop.f32.mrb[0].mxu0
    %v452 = vadd.f32 0.0, %v451
    %v453 = vpop.f32.mrb[0].mxu0
    %454 = vmatprep.mubr.f32.mxu0 0.0
    %455 = vmatmul.mubr.f32.gmra.mrb[0].mxu0 %v195
    %v456 = vpop.f32.mrb[0].mxu0
    %v457 = vadd.f32 0.0, %v456
    %v458 = vpop.f32.mrb[0].mxu0
    %459 = vmatprep.mubr.f32.mxu0 0.0
    %460 = vmatmul.mubr.f32.gmra.mrb[0].mxu0 %v198
    %v461 = vpop.f32.mrb[0].mxu0
    %v462 = vadd.f32 0.0, %v461
    %v463 = vpop.f32.mrb[0].mxu0
    %464 = vmatprep.mubr.f32.mxu0 0.0
    %465 = vmatmul.mubr.f32.gmra.mrb[0].mxu0 %v201
    %v466 = vpop.f32.mrb[0].mxu0
    %v467 = vadd.f32 0.0, %v466
    %v468 = vpop.f32.mrb[0].mxu0
    %469 = vmatprep.mubr.f32.mxu0 0.0
    %470 = vmatmul.mubr.f32.gmra.mrb[0].mxu0 %v204
    %v471 = vpop.f32.mrb[0].mxu0
    %v472 = vadd.f32 0.0, %v471
    %v473 = vpop.f32.mrb[0].mxu0
    %474 = vmatprep.mubr.f32.mxu0 0.0
    %475 = vmatmul.mubr.f32.gmra.mrb[0].mxu0 %v207
    %v476 = vpop.f32.mrb[0].mxu0
    %v477 = vadd.f32 0.0, %v476
    %v478 = vpop.f32.mrb[0].mxu0
    %479 = vmatprep.mubr.f32.mxu0 0.0
    %480 = vmatmul.mubr.f32.gmra.mrb[0].mxu0 %v210
    %v481 = vpop.f32.mrb[0].mxu0
    %v482 = vadd.f32 0.0, %v481
    %v483 = vpop.f32.mrb[0].mxu0
    %484 = vmatprep.mubr.f32.mxu0 0.0
    %485 = vmatmul.mubr.f32.gmra.mrb[0].mxu0 %v213
    %v486 = vpop.f32.mrb[0].mxu0
    %v487 = vadd.f32 0.0, %v486
    %v488 = vpop.f32.mrb[0].mxu0
    %489 = vmatprep.mubr.f32.mxu0 0.0
    %490 = vmatmul.mubr.f32.gmra.mrb[0].mxu0 %v216
    %v491 = vpop.f32.mrb[0].mxu0
    %v492 = vadd.f32 0.0, %v491
    %v493 = vpop.f32.mrb[0].mxu0
    %494 = vmatprep.mubr.f32.mxu0 0.0
    %495 = vmatmul.mubr.f32.gmra.mrb[0].mxu0 %v219
    %v496 = vpop.f32.mrb[0].mxu0
    %v497 = vadd.f32 0.0, %v496
    %v498 = vpop.f32.mrb[0].mxu0
    %499 = vmatprep.mubr.f32.mxu0 0.0
    %500 = vmatmul.mubr.f32.gmra.mrb[0].mxu0 %v222
    %v501 = vpop.f32.mrb[0].mxu0
    %v502 = vadd.f32 0.0, %v501
    %v503 = vpop.f32.mrb[0].mxu0
    %504 = vmatprep.mubr.f32.mxu0 0.0
    %505 = vmatmul.mubr.f32.gmra.mrb[0].mxu0 %v225
    %v506 = vpop.f32.mrb[0].mxu0
    %v507 = vadd.f32 0.0, %v506
    %v508 = vpop.f32.mrb[0].mxu0
    %509 = vmatprep.mubr.f32.mxu0 0.0
    %510 = vmatmul.mubr.f32.gmra.mrb[0].mxu0 %v228
    %v511 = vpop.f32.mrb[0].mxu0
    %v512 = vadd.f32 0.0, %v511
    %v513 = vpop.f32.mrb[0].mxu0
    %514 = vmatprep.mubr.f32.mxu0 0.0
    %515 = vmatmul.mubr.f32.gmra.mrb[0].mxu0 %v231
    %v516 = vpop.f32.mrb[0].mxu0
    %v517 = vadd.f32 0.0, %v516
    %v518 = vpop.f32.mrb[0].mxu0
    %519 = vmatprep.mubr.f32.mxu0 0.0
    %520 = vmatmul.mubr.f32.gmra.mrb[0].mxu0 %v234
    %v521 = vpop.f32.mrb[0].mxu0
    %v522 = vadd.f32 0.0, %v521
    %v523 = vpop.f32.mrb[0].mxu0
    %524 = vmatprep.mubr.f32.mxu0 0.0
    %525 = vmatmul.mubr.f32.gmra.mrb[0].mxu0 %v237
    %v526 = vpop.f32.mrb[0].mxu0
    %v527 = vadd.f32 0.0, %v526
    %v528 = vpop.f32.mrb[0].mxu0
    %529 = vmatprep.mubr.f32.mxu0 0.0
    %530 = vmatmul.mubr.f32.gmra.mrb[0].mxu0 %v240
    %v531 = vpop.f32.mrb[0].mxu0
    %v532 = vadd.f32 0.0, %v531
    %v533 = vpop.f32.mrb[0].mxu0
    %534 = vmatprep.mubr.f32.mxu0 0.0
    %535 = vmatmul.mubr.f32.gmra.mrb[0].mxu0 %v243
    %v536 = vpop.f32.mrb[0].mxu0
    %v537 = vadd.f32 0.0, %v536
    %v538 = vpop.f32.mrb[0].mxu0
    %539 = vmatprep.mubr.f32.mxu0 0.0
    %540 = vmatmul.mubr.f32.gmra.mrb[0].mxu0 %v246
    %v541 = vpop.f32.mrb[0].mxu0
    %v542 = vadd.f32 0.0, %v541
    %v543 = vpop.f32.mrb[0].mxu0
    %544 = vmatprep.mubr.f32.mxu0 0.0
    %545 = vmatmul.mubr.f32.gmra.mrb[0].mxu0 %v249
    %v546 = vpop.f32.mrb[0].mxu0
    %v547 = vadd.f32 0.0, %v546
    %v548 = vpop.f32.mrb[0].mxu0
    %549 = vmatprep.mubr.f32.mxu0 0.0
    %550 = vmatmul.mubr.f32.gmra.mrb[0].mxu0 %v252
    %v551 = vpop.f32.mrb[0].mxu0
    %v552 = vadd.f32 0.0, %v551
    %v553 = vpop.f32.mrb[0].mxu0
    %554 = vmatprep.mubr.f32.mxu0 0.0
    %555 = vmatmul.mubr.f32.gmra.mrb[0].mxu0 %v255
    %v556 = vpop.f32.mrb[0].mxu0
    %v557 = vadd.f32 0.0, %v556
    %v558 = vpop.f32.mrb[0].mxu0
    %559 = vmatprep.mubr.f32.mxu0 0.0
    %560 = vmatmul.mubr.f32.gmra.mrb[0].mxu0 %v258
    %v561 = vpop.f32.mrb[0].mxu0
    %v562 = vadd.f32 0.0, %v561
    %v563 = vpop.f32.mrb[0].mxu0
    %564 = vmatprep.mubr.f32.mxu0 0.0
    %565 = vmatmul.mubr.f32.gmra.mrb[0].mxu0 %v261
    %v566 = vpop.f32.mrb[0].mxu0
    %v567 = vadd.f32 0.0, %v566
    %v568 = vpop.f32.mrb[0].mxu0
    %569 = vmatprep.mubr.f32.mxu0 0.0
    %570 = vmatmul.mubr.f32.gmra.mrb[0].mxu0 %v264
    %v571 = vpop.f32.mrb[0].mxu0
    %v572 = vadd.f32 0.0, %v571
    %v573 = vpop.f32.mrb[0].mxu0
    %574 = vmatprep.mubr.f32.mxu0 0.0
    %575 = vmatmul.mubr.f32.gmra.mrb[0].mxu0 %v267
    %v576 = vpop.f32.mrb[0].mxu0
    %v577 = vadd.f32 0.0, %v576
    %v578 = vpop.f32.mrb[0].mxu0
    %579 = vmatprep.mubr.f32.mxu0 0.0
    %580 = vmatmul.mubr.f32.gmra.mrb[0].mxu0 %v270
    %v581 = vpop.f32.mrb[0].mxu0
    %v582 = vadd.f32 0.0, %v581
    %v583 = vpop.f32.mrb[0].mxu0
    %584 = vmatprep.mubr.f32.mxu0 0.0
    %585 = vmatmul.mubr.f32.gmra.mrb[0].mxu0 %v273
    %v586 = vpop.f32.mrb[0].mxu0
    %v587 = vadd.f32 0.0, %v586
    %v588 = vpop.f32.mrb[0].mxu0
    %589 = vmatprep.mubr.f32.mxu0 0.0
    %590 = vmatmul.mubr.f32.gmra.mrb[0].mxu0 %v276
    %v591 = vpop.f32.mrb[0].mxu0
    %v592 = vadd.f32 0.0, %v591
    %v593 = vpop.f32.mrb[0].mxu0
    %594 = vmatprep.mubr.f32.mxu0 0.0
    %595 = vmatmul.mubr.f32.gmra.mrb[0].mxu0 %v279
    %v596 = vpop.f32.mrb[0].mxu0
    %v597 = vadd.f32 0.0, %v596
    %v598 = vpop.f32.mrb[0].mxu0
    %599 = vmatprep.mubr.f32.mxu0 0.0
    %600 = vmatmul.mubr.f32.gmra.mrb[0].mxu0 %v282
    %v601 = vpop.f32.mrb[0].mxu0
    %v602 = vadd.f32 0.0, %v601
    %v603 = vpop.f32.mrb[0].mxu0
    %604 = vmatprep.mubr.f32.mxu0 0.0
    %605 = vmatmul.mubr.f32.gmra.mrb[0].mxu0 %v285
    %v606 = vpop.f32.mrb[0].mxu0
    %v607 = vadd.f32 0.0, %v606
    %v608 = vpop.f32.mrb[0].mxu0
    %609 = vmatprep.mubr.f32.mxu0 0.0
    %610 = vmatmul.mubr.f32.gmra.mrb[0].mxu0 %v288
    %v611 = vpop.f32.mrb[0].mxu0
    %v612 = vadd.f32 0.0, %v611
    %v613 = vpop.f32.mrb[0].mxu0
    %614 = vmatprep.mubr.f32.mxu0 0.0
    %615 = vmatmul.mubr.f32.gmra.mrb[0].mxu0 %v291
    %v616 = vpop.f32.mrb[0].mxu0
    %v617 = vadd.f32 0.0, %v616
    %v618 = vpop.f32.mrb[0].mxu0
    %619 = vmatprep.mubr.f32.mxu0 0.0
    %620 = vmatmul.mubr.f32.gmra.mrb[0].mxu0 %v294
    %v621 = vpop.f32.mrb[0].mxu0
    %v622 = vadd.f32 0.0, %v621
    %v623 = vpop.f32.mrb[0].mxu0
    %624 = vmatprep.mubr.f32.mxu0 0.0
    %625 = vmatmul.mubr.f32.gmra.mrb[0].mxu0 %v297
    %v626 = vpop.f32.mrb[0].mxu0
    %v627 = vadd.f32 0.0, %v626
    %v628 = vpop.f32.mrb[0].mxu0
    %629 = vmatprep.mubr.f32.mxu0 0.0
    %630 = vmatmul.mubr.f32.gmra.mrb[0].mxu0 %v300
    %v631 = vpop.f32.mrb[0].mxu0
    %v632 = vadd.f32 0.0, %v631
    %v633 = vpop.f32.mrb[0].mxu0
    %634 = vmatprep.mubr.f32.mxu0 0.0
    %635 = vmatmul.mubr.f32.gmra.mrb[0].mxu0 %v303
    %v636 = vpop.f32.mrb[0].mxu0
    %v637 = vadd.f32 0.0, %v636
    %v638 = vpop.f32.mrb[0].mxu0
    %639 = vmatprep.mubr.f32.mxu0 0.0
    %640 = vmatmul.mubr.f32.gmra.mrb[0].mxu0 %v306
    %v641 = vpop.f32.mrb[0].mxu0
    %v642 = vadd.f32 0.0, %v641
    %v643 = vpop.f32.mrb[0].mxu0
    %644 = vmatprep.mubr.f32.mxu0 0.0
    %645 = vmatmul.mubr.f32.gmra.mrb[0].mxu0 %v309
    %v646 = vpop.f32.mrb[0].mxu0
    %v647 = vadd.f32 0.0, %v646
    %v648 = vpop.f32.mrb[0].mxu0
    %649 = vmatprep.mubr.f32.mxu0 0.0
    %650 = vmatmul.mubr.f32.gmra.mrb[0].mxu0 %v312
    %v651 = vpop.f32.mrb[0].mxu0
    %v652 = vadd.f32 0.0, %v651
    %v653 = vpop.f32.mrb[0].mxu0
    %654 = vmatprep.mubr.f32.mxu0 0.0
    %655 = vmatmul.mubr.f32.gmra.mrb[0].mxu0 %v315
    %v656 = vpop.f32.mrb[0].mxu0
    %v657 = vadd.f32 0.0, %v656
    %v658 = vpop.f32.mrb[0].mxu0
    %659 = vmatprep.mubr.f32.mxu0 0.0
    %660 = vmatmul.mubr.f32.gmra.mrb[0].mxu0 %v318
    %v661 = vpop.f32.mrb[0].mxu0
    %v662 = vadd.f32 0.0, %v661
    %v663 = vpop.f32.mrb[0].mxu0
    %664 = vmatprep.mubr.f32.mxu0 0.0
    %665 = vmatmul.mubr.f32.gmra.mrb[0].mxu0 %v321
    %v666 = vpop.f32.mrb[0].mxu0
    %v667 = vadd.f32 0.0, %v666
    %v668 = vpop.f32.mrb[0].mxu0
    %669 = vmatprep.mubr.f32.mxu0 0.0
    %670 = vmatmul.mubr.f32.gmra.mrb[0].mxu0 %v324
    %v671 = vpop.f32.mrb[0].mxu0
    %v672 = vadd.f32 0.0, %v671
    %v673 = vpop.f32.mrb[0].mxu0
    %674 = vmatprep.mubr.f32.mxu0 0.0
    %675 = vmatmul.mubr.f32.gmra.mrb[0].mxu0 %v327
    %v676 = vpop.f32.mrb[0].mxu0
    %v677 = vadd.f32 0.0, %v676
    %v678 = vpop.f32.mrb[0].mxu0
    %679 = vmatprep.mubr.f32.mxu0 0.0
    %680 = vmatmul.mubr.f32.gmra.mrb[0].mxu0 %v330
    %v681 = vpop.f32.mrb[0].mxu0
    %v682 = vadd.f32 0.0, %v681
    %v683 = vpop.f32.mrb[0].mxu0
    %684 = vmatprep.mubr.f32.mxu0 0.0
    %685 = vmatmul.mubr.f32.gmra.mrb[0].mxu0 %v333
    %v686 = vpop.f32.mrb[0].mxu0
    %v687 = vadd.f32 0.0, %v686
    %v688 = vpop.f32.mrb[0].mxu0
    %689 = vmatprep.mubr.f32.mxu0 0.0
    %690 = vmatmul.mubr.f32.gmra.mrb[0].mxu0 %v336
    %v691 = vpop.f32.mrb[0].mxu0
    %v692 = vadd.f32 0.0, %v691
    %v693 = vpop.f32.mrb[0].mxu0
    %694 = vmatprep.mubr.f32.mxu0 0.0
    %695 = vmatmul.mubr.f32.gmra.mrb[0].mxu0 %v339
    %v696 = vpop.f32.mrb[0].mxu0
    %v697 = vadd.f32 0.0, %v696
    %v698 = vpop.f32.mrb[0].mxu0
    %699 = vmatprep.mubr.f32.mxu0 0.0
    %700 = vmatmul.mubr.f32.gmra.mrb[0].mxu0 %v342
    %v701 = vpop.f32.mrb[0].mxu0
    %v702 = vadd.f32 0.0, %v701
    %v703 = vpop.f32.mrb[0].mxu0
    %704 = vmatprep.mubr.f32.mxu0 0.0
    %705 = vmatmul.mubr.f32.gmra.mrb[0].mxu0 %v345
    %v706 = vpop.f32.mrb[0].mxu0
    %v707 = vadd.f32 0.0, %v706
    %v708 = vpop.f32.mrb[0].mxu0
    %709 = vmatprep.mubr.f32.mxu0 0.0
    %710 = vmatmul.mubr.f32.gmra.mrb[0].mxu0 %v348
    %v711 = vpop.f32.mrb[0].mxu0
    %v712 = vadd.f32 0.0, %v711
    %v713 = vpop.f32.mrb[0].mxu0
    %714 = vmatprep.mubr.f32.mxu0 0.0
    %715 = vmatmul.mubr.f32.gmra.mrb[0].mxu0 %v351
    %v716 = vpop.f32.mrb[0].mxu0
    %v717 = vadd.f32 0.0, %v716
    %v718 = vpop.f32.mrb[0].mxu0
    %719 = vmatprep.mubr.f32.mxu0 0.0
    %720 = vmatmul.mubr.f32.gmra.mrb[0].mxu0 %v354
    %v721 = vpop.f32.mrb[0].mxu0
    %v722 = vadd.f32 0.0, %v721
    %v723 = vpop.f32.mrb[0].mxu0
    %724 = vmatprep.mubr.f32.mxu0 0.0
    %725 = vmatmul.mubr.f32.gmra.mrb[0].mxu0 %v357
    %v726 = vpop.f32.mrb[0].mxu0
    %v727 = vadd.f32 0.0, %v726
    %v728 = vpop.f32.mrb[0].mxu0
    %729 = vmatprep.mubr.f32.mxu0 0.0
    %730 = vmatmul.mubr.f32.gmra.mrb[0].mxu0 %v360
    %v731 = vpop.f32.mrb[0].mxu0
    %v732 = vadd.f32 0.0, %v731
    %v733 = vpop.f32.mrb[0].mxu0
    %734 = vmatprep.mubr.f32.mxu0 0.0
    %735 = vmatmul.mubr.f32.gmra.mrb[0].mxu0 %v363
    %v736 = vpop.f32.mrb[0].mxu0
    %v737 = vadd.f32 0.0, %v736
    %v738 = vpop.f32.mrb[0].mxu0
    %739 = vmatprep.mubr.f32.mxu0 0.0
    %740 = vmatmul.mubr.f32.gmra.mrb[0].mxu0 %v366
    %v741 = vpop.f32.mrb[0].mxu0
    %v742 = vadd.f32 0.0, %v741
    %v743 = vpop.f32.mrb[0].mxu0
    %744 = vmatprep.mubr.f32.mxu0 0.0
    %745 = vmatmul.mubr.f32.gmra.mrb[0].mxu0 %v369
    %v746 = vpop.f32.mrb[0].mxu0
    %v747 = vadd.f32 0.0, %v746
    %v748 = vpop.f32.mrb[0].mxu0
    %749 = vmatprep.mubr.f32.mxu0 0.0
    %750 = vmatmul.mubr.f32.gmra.mrb[0].mxu0 %v372
    %v751 = vpop.f32.mrb[0].mxu0
    %v752 = vadd.f32 0.0, %v751
    %v753 = vpop.f32.mrb[0].mxu0
    %754 = vmatprep.mubr.f32.mxu0 0.0
    %755 = vmatmul.mubr.f32.gmra.mrb[0].mxu0 %v375
    %v756 = vpop.f32.mrb[0].mxu0
    %v757 = vadd.f32 0.0, %v756
    %v758 = vpop.f32.mrb[0].mxu0
    %759 = vmatprep.mubr.f32.mxu0 0.0
    %760 = vmatmul.mubr.f32.gmra.mrb[0].mxu0 %v378
    %v761 = vpop.f32.mrb[0].mxu0
    %v762 = vadd.f32 0.0, %v761
    %v763 = vpop.f32.mrb[0].mxu0
    %764 = vdwg.mxu0
    %v765 = vld [vmem:[%s2] sm:$0x1]
    %v767 = vlaneseq
    %v768 = vshrl.u32 %v767, 7
    %v769 = vsub.s32 0, %v768
    %v770 = vrot.slane %v765, %v769
    %v772 = vsub.f32 %v447, %v770
    %v773 = vsub.f32 %v452, %v770
    %v774 = vsub.f32 %v457, %v770
    %v775 = vsub.f32 %v462, %v770
    %v776 = vsub.f32 %v467, %v770
    %v777 = vsub.f32 %v472, %v770
    %v778 = vsub.f32 %v477, %v770
    %v779 = vsub.f32 %v482, %v770
    %v780 = vsub.f32 %v487, %v770
    %v781 = vsub.f32 %v492, %v770
    %v782 = vsub.f32 %v497, %v770
    %v783 = vsub.f32 %v502, %v770
    %v784 = vsub.f32 %v507, %v770
    %v785 = vsub.f32 %v512, %v770
    %v786 = vsub.f32 %v517, %v770
    %v787 = vsub.f32 %v522, %v770
    %v788 = vsub.f32 %v527, %v770
    %v789 = vsub.f32 %v532, %v770
    %v790 = vsub.f32 %v537, %v770
    %v791 = vsub.f32 %v542, %v770
    %v792 = vsub.f32 %v547, %v770
    %v793 = vsub.f32 %v552, %v770
    %v794 = vsub.f32 %v557, %v770
    %v795 = vsub.f32 %v562, %v770
    %v796 = vsub.f32 %v567, %v770
    %v797 = vsub.f32 %v572, %v770
    %v798 = vsub.f32 %v577, %v770
    %v799 = vsub.f32 %v582, %v770
    %v800 = vsub.f32 %v587, %v770
    %v801 = vsub.f32 %v592, %v770
    %v802 = vsub.f32 %v597, %v770
    %v803 = vsub.f32 %v602, %v770
    %v804 = vsub.f32 %v607, %v770
    %v805 = vsub.f32 %v612, %v770
    %v806 = vsub.f32 %v617, %v770
    %v807 = vsub.f32 %v622, %v770
    %v808 = vsub.f32 %v627, %v770
    %v809 = vsub.f32 %v632, %v770
    %v810 = vsub.f32 %v637, %v770
    %v811 = vsub.f32 %v642, %v770
    %v812 = vsub.f32 %v647, %v770
    %v813 = vsub.f32 %v652, %v770
    %v814 = vsub.f32 %v657, %v770
    %v815 = vsub.f32 %v662, %v770
    %v816 = vsub.f32 %v667, %v770
    %v817 = vsub.f32 %v672, %v770
    %v818 = vsub.f32 %v677, %v770
    %v819 = vsub.f32 %v682, %v770
    %v820 = vsub.f32 %v687, %v770
    %v821 = vsub.f32 %v692, %v770
    %v822 = vsub.f32 %v697, %v770
    %v823 = vsub.f32 %v702, %v770
    %v824 = vsub.f32 %v707, %v770
    %v825 = vsub.f32 %v712, %v770
    %v826 = vsub.f32 %v717, %v770
    %v827 = vsub.f32 %v722, %v770
    %v828 = vsub.f32 %v727, %v770
    %v829 = vsub.f32 %v732, %v770
    %v830 = vsub.f32 %v737, %v770
    %v831 = vsub.f32 %v742, %v770
    %v832 = vsub.f32 %v747, %v770
    %v833 = vsub.f32 %v752, %v770
    %v834 = vsub.f32 %v757, %v770
    %v835 = vsub.f32 %v762, %v770
    %v836 = vmul.f32 %v772, %v772
    %v837 = vmul.f32 %v773, %v773
    %v838 = vmul.f32 %v774, %v774
    %v839 = vmul.f32 %v775, %v775
    %v840 = vmul.f32 %v776, %v776
    %v841 = vmul.f32 %v777, %v777
    %v842 = vmul.f32 %v778, %v778
    %v843 = vmul.f32 %v779, %v779
    %v844 = vmul.f32 %v780, %v780
    %v845 = vmul.f32 %v781, %v781
    %v846 = vmul.f32 %v782, %v782
    %v847 = vmul.f32 %v783, %v783
    %v848 = vmul.f32 %v784, %v784
    %v849 = vmul.f32 %v785, %v785
    %v850 = vmul.f32 %v786, %v786
    %v851 = vmul.f32 %v787, %v787
    %v852 = vmul.f32 %v788, %v788
    %v853 = vmul.f32 %v789, %v789
    %v854 = vmul.f32 %v790, %v790
    %v855 = vmul.f32 %v791, %v791
    %v856 = vmul.f32 %v792, %v792
    %v857 = vmul.f32 %v793, %v793
    %v858 = vmul.f32 %v794, %v794
    %v859 = vmul.f32 %v795, %v795
    %v860 = vmul.f32 %v796, %v796
    %v861 = vmul.f32 %v797, %v797
    %v862 = vmul.f32 %v798, %v798
    %v863 = vmul.f32 %v799, %v799
    %v864 = vmul.f32 %v800, %v800
    %v865 = vmul.f32 %v801, %v801
    %v866 = vmul.f32 %v802, %v802
    %v867 = vmul.f32 %v803, %v803
    %v868 = vmul.f32 %v804, %v804
    %v869 = vmul.f32 %v805, %v805
    %v870 = vmul.f32 %v806, %v806
    %v871 = vmul.f32 %v807, %v807
    %v872 = vmul.f32 %v808, %v808
    %v873 = vmul.f32 %v809, %v809
    %v874 = vmul.f32 %v810, %v810
    %v875 = vmul.f32 %v811, %v811
    %v876 = vmul.f32 %v812, %v812
    %v877 = vmul.f32 %v813, %v813
    %v878 = vmul.f32 %v814, %v814
    %v879 = vmul.f32 %v815, %v815
    %v880 = vmul.f32 %v816, %v816
    %v881 = vmul.f32 %v817, %v817
    %v882 = vmul.f32 %v818, %v818
    %v883 = vmul.f32 %v819, %v819
    %v884 = vmul.f32 %v820, %v820
    %v885 = vmul.f32 %v821, %v821
    %v886 = vmul.f32 %v822, %v822
    %v887 = vmul.f32 %v823, %v823
    %v888 = vmul.f32 %v824, %v824
    %v889 = vmul.f32 %v825, %v825
    %v890 = vmul.f32 %v826, %v826
    %v891 = vmul.f32 %v827, %v827
    %v892 = vmul.f32 %v828, %v828
    %v893 = vmul.f32 %v829, %v829
    %v894 = vmul.f32 %v830, %v830
    %v895 = vmul.f32 %v831, %v831
    %v896 = vmul.f32 %v832, %v832
    %v897 = vmul.f32 %v833, %v833
    %v898 = vmul.f32 %v834, %v834
    %v899 = vmul.f32 %v835, %v835
    %v900 = vld [vmem:[%s3] sm:$0xff]
    %v901 = vld [vmem:[%s3 + $0x8] sm:$0xff]
    %v902 = vld [vmem:[%s3 + $0x10] sm:$0xff]
    %v903 = vld [vmem:[%s3 + $0x18] sm:$0xff]
    %vm904 = vcmask 261120
    %v906 = vsel %vm904, %v836, 0
    %v909 = vsel %vm904, %v837, 0
    %v912 = vsel %vm904, %v838, 0
    %v915 = vsel %vm904, %v839, 0
    %v918 = vsel %vm904, %v840, 0
    %v921 = vsel %vm904, %v841, 0
    %v924 = vsel %vm904, %v842, 0
    %v927 = vsel %vm904, %v843, 0
    %v930 = vsel %vm904, %v844, 0
    %v933 = vsel %vm904, %v845, 0
    %v936 = vsel %vm904, %v846, 0
    %v939 = vsel %vm904, %v847, 0
    %v942 = vsel %vm904, %v848, 0
    %v945 = vsel %vm904, %v849, 0
    %v948 = vsel %vm904, %v850, 0
    %v951 = vsel %vm904, %v851, 0
    %v954 = vsel %vm904, %v852, 0
    %v957 = vsel %vm904, %v853, 0
    %v960 = vsel %vm904, %v854, 0
    %v963 = vsel %vm904, %v855, 0
    %v966 = vsel %vm904, %v856, 0
    %v969 = vsel %vm904, %v857, 0
    %v972 = vsel %vm904, %v858, 0
    %v975 = vsel %vm904, %v859, 0
    %v978 = vsel %vm904, %v860, 0
    %v981 = vsel %vm904, %v861, 0
    %v984 = vsel %vm904, %v862, 0
    %v987 = vsel %vm904, %v863, 0
    %v990 = vsel %vm904, %v864, 0
    %v993 = vsel %vm904, %v865, 0
    %v996 = vsel %vm904, %v866, 0
    %v999 = vsel %vm904, %v867, 0
    %v1002 = vsel %vm904, %v868, 0
    %v1005 = vsel %vm904, %v869, 0
    %v1008 = vsel %vm904, %v870, 0
    %v1011 = vsel %vm904, %v871, 0
    %v1014 = vsel %vm904, %v872, 0
    %v1017 = vsel %vm904, %v873, 0
    %v1020 = vsel %vm904, %v874, 0
    %v1023 = vsel %vm904, %v875, 0
    %v1026 = vsel %vm904, %v876, 0
    %v1029 = vsel %vm904, %v877, 0
    %v1032 = vsel %vm904, %v878, 0
    %v1035 = vsel %vm904, %v879, 0
    %v1038 = vsel %vm904, %v880, 0
    %v1041 = vsel %vm904, %v881, 0
    %v1044 = vsel %vm904, %v882, 0
    %v1047 = vsel %vm904, %v883, 0
    %v1050 = vsel %vm904, %v884, 0
    %v1053 = vsel %vm904, %v885, 0
    %v1056 = vsel %vm904, %v886, 0
    %v1059 = vsel %vm904, %v887, 0
    %v1062 = vsel %vm904, %v888, 0
    %v1065 = vsel %vm904, %v889, 0
    %v1068 = vsel %vm904, %v890, 0
    %v1071 = vsel %vm904, %v891, 0
    %v1074 = vsel %vm904, %v892, 0
    %v1077 = vsel %vm904, %v893, 0
    %v1080 = vsel %vm904, %v894, 0
    %v1083 = vsel %vm904, %v895, 0
    %v1086 = vsel %vm904, %v896, 0
    %v1089 = vsel %vm904, %v897, 0
    %v1092 = vsel %vm904, %v898, 0
    %v1095 = vsel %vm904, %v899, 0
    %1097 = vmatprep.subr.mxu0 0.0
    %1098 = vmatpush1.msra.mxu0 %v900
    %1099 = vmatprep.subr.mxu0 0.0
    %1100 = vmatpush1.msra.mxu0 %v901
    %1101 = vmatprep.subr.mxu0 0.0
    %1102 = vmatpush1.msra.mxu0 %v902
    %1103 = vmatprep.subr.mxu0 0.0
    %1104 = vmatpush1.msra.mxu0 %v903
    %1105 = vmatprep.subr.mxu0 0.0
    %1106 = vmatpush1.msra.mxu0 0.0
    %1107 = vmatprep.subr.mxu0 0.0
    %1108 = vmatpush1.msra.mxu0 0.0
    %1109 = vmatprep.subr.mxu0 0.0
    %1110 = vmatpush1.msra.mxu0 0.0
    %1111 = vmatprep.subr.mxu0 0.0
    %1112 = vmatpush1.msra.mxu0 0.0
    %1113 = vmatprep.subr.mxu0 0.0
    %1114 = vmatpush1.msra.mxu0 0.0
    %1115 = vmatprep.subr.mxu0 0.0
    %1116 = vmatpush1.msra.mxu0 0.0
    %1117 = vmatprep.subr.mxu0 0.0
    %1118 = vmatpush1.msra.mxu0 0.0
    %1119 = vmatprep.subr.mxu0 0.0
    %1120 = vmatpush1.msra.mxu0 0.0
    %1121 = vmatprep.subr.mxu0 0.0
    %1122 = vmatpush1.msra.mxu0 0.0
    %1123 = vmatprep.subr.mxu0 0.0
    %1124 = vmatpush1.msra.mxu0 0.0
    %1125 = vmatprep.subr.mxu0 0.0
    %1126 = vmatpush1.msra.mxu0 0.0
    %1127 = vmatprep.subr.mxu0 0.0
    %1128 = vmatpush1.msra.mxu0 0.0
    %1129 = vmatprep.subr.mxu0 0.0
    %1130 = vmatpush1.msra.mxu0 0.0
    %1131 = vmatprep.subr.mxu0 0.0
    %1132 = vmatpush1.msra.mxu0 0.0
    %1133 = vmatprep.subr.mxu0 0.0
    %1134 = vmatpush1.msra.mxu0 0.0
    %1135 = vmatprep.subr.mxu0 0.0
    %1136 = vmatpush1.msra.mxu0 0.0
    %1137 = vmatprep.subr.mxu0 0.0
    %1138 = vmatpush1.msra.mxu0 0.0
    %1139 = vmatprep.subr.mxu0 0.0
    %1140 = vmatpush1.msra.mxu0 0.0
    %1141 = vmatprep.subr.mxu0 0.0
    %1142 = vmatpush1.msra.mxu0 0.0
    %1143 = vmatprep.subr.mxu0 0.0
    %1144 = vmatpush1.msra.mxu0 0.0
    %1145 = vmatprep.subr.mxu0 0.0
    %1146 = vmatpush1.msra.mxu0 0.0
    %1147 = vmatprep.subr.mxu0 0.0
    %1148 = vmatpush1.msra.mxu0 0.0
    %1149 = vmatprep.subr.mxu0 0.0
    %1150 = vmatpush1.msra.mxu0 0.0
    %1151 = vmatprep.subr.mxu0 0.0
    %1152 = vmatpush1.msra.mxu0 0.0
    %1153 = vmatprep.subr.mxu0 0.0
    %1154 = vmatpush1.msra.mxu0 0.0
    %1155 = vmatprep.subr.mxu0 0.0
    %1156 = vmatpush1.msra.mxu0 0.0
    %1157 = vmatprep.subr.mxu0 0.0
    %1158 = vmatpush1.msra.mxu0 0.0
    %1159 = vmatprep.subr.mxu0 0.0
    %1160 = vmatpush1.msra.mxu0 0.0
    %1161 = vmatprep.mubr.f32.mxu0 0.0
    %1162 = vmatmul.mubr.f32.gmra.mrb[0].mxu0 %v906
    %v1163 = vpop.f32.mrb[0].mxu0
    %v1164 = vadd.f32 0.0, %v1163
    %v1165 = vpop.f32.mrb[0].mxu0
    %1166 = vmatprep.mubr.f32.mxu0 0.0
    %1167 = vmatmul.mubr.f32.gmra.mrb[0].mxu0 %v909
    %v1168 = vpop.f32.mrb[0].mxu0
    %v1169 = vadd.f32 0.0, %v1168
    %v1170 = vpop.f32.mrb[0].mxu0
    %1171 = vmatprep.mubr.f32.mxu0 0.0
    %1172 = vmatmul.mubr.f32.gmra.mrb[0].mxu0 %v912
    %v1173 = vpop.f32.mrb[0].mxu0
    %v1174 = vadd.f32 0.0, %v1173
    %v1175 = vpop.f32.mrb[0].mxu0
    %1176 = vmatprep.mubr.f32.mxu0 0.0
    %1177 = vmatmul.mubr.f32.gmra.mrb[0].mxu0 %v915
    %v1178 = vpop.f32.mrb[0].mxu0
    %v1179 = vadd.f32 0.0, %v1178
    %v1180 = vpop.f32.mrb[0].mxu0
    %1181 = vmatprep.mubr.f32.mxu0 0.0
    %1182 = vmatmul.mubr.f32.gmra.mrb[0].mxu0 %v918
    %v1183 = vpop.f32.mrb[0].mxu0
    %v1184 = vadd.f32 0.0, %v1183
    %v1185 = vpop.f32.mrb[0].mxu0
    %1186 = vmatprep.mubr.f32.mxu0 0.0
    %1187 = vmatmul.mubr.f32.gmra.mrb[0].mxu0 %v921
    %v1188 = vpop.f32.mrb[0].mxu0
    %v1189 = vadd.f32 0.0, %v1188
    %v1190 = vpop.f32.mrb[0].mxu0
    %1191 = vmatprep.mubr.f32.mxu0 0.0
    %1192 = vmatmul.mubr.f32.gmra.mrb[0].mxu0 %v924
    %v1193 = vpop.f32.mrb[0].mxu0
    %v1194 = vadd.f32 0.0, %v1193
    %v1195 = vpop.f32.mrb[0].mxu0
    %1196 = vmatprep.mubr.f32.mxu0 0.0
    %1197 = vmatmul.mubr.f32.gmra.mrb[0].mxu0 %v927
    %v1198 = vpop.f32.mrb[0].mxu0
    %v1199 = vadd.f32 0.0, %v1198
    %v1200 = vpop.f32.mrb[0].mxu0
    %1201 = vmatprep.mubr.f32.mxu0 0.0
    %1202 = vmatmul.mubr.f32.gmra.mrb[0].mxu0 %v930
    %v1203 = vpop.f32.mrb[0].mxu0
    %v1204 = vadd.f32 0.0, %v1203
    %v1205 = vpop.f32.mrb[0].mxu0
    %1206 = vmatprep.mubr.f32.mxu0 0.0
    %1207 = vmatmul.mubr.f32.gmra.mrb[0].mxu0 %v933
    %v1208 = vpop.f32.mrb[0].mxu0
    %v1209 = vadd.f32 0.0, %v1208
    %v1210 = vpop.f32.mrb[0].mxu0
    %1211 = vmatprep.mubr.f32.mxu0 0.0
    %1212 = vmatmul.mubr.f32.gmra.mrb[0].mxu0 %v936
    %v1213 = vpop.f32.mrb[0].mxu0
    %v1214 = vadd.f32 0.0, %v1213
    %v1215 = vpop.f32.mrb[0].mxu0
    %1216 = vmatprep.mubr.f32.mxu0 0.0
    %1217 = vmatmul.mubr.f32.gmra.mrb[0].mxu0 %v939
    %v1218 = vpop.f32.mrb[0].mxu0
    %v1219 = vadd.f32 0.0, %v1218
    %v1220 = vpop.f32.mrb[0].mxu0
    %1221 = vmatprep.mubr.f32.mxu0 0.0
    %1222 = vmatmul.mubr.f32.gmra.mrb[0].mxu0 %v942
    %v1223 = vpop.f32.mrb[0].mxu0
    %v1224 = vadd.f32 0.0, %v1223
    %v1225 = vpop.f32.mrb[0].mxu0
    %1226 = vmatprep.mubr.f32.mxu0 0.0
    %1227 = vmatmul.mubr.f32.gmra.mrb[0].mxu0 %v945
    %v1228 = vpop.f32.mrb[0].mxu0
    %v1229 = vadd.f32 0.0, %v1228
    %v1230 = vpop.f32.mrb[0].mxu0
    %1231 = vmatprep.mubr.f32.mxu0 0.0
    %1232 = vmatmul.mubr.f32.gmra.mrb[0].mxu0 %v948
    %v1233 = vpop.f32.mrb[0].mxu0
    %v1234 = vadd.f32 0.0, %v1233
    %v1235 = vpop.f32.mrb[0].mxu0
    %1236 = vmatprep.mubr.f32.mxu0 0.0
    %1237 = vmatmul.mubr.f32.gmra.mrb[0].mxu0 %v951
    %v1238 = vpop.f32.mrb[0].mxu0
    %v1239 = vadd.f32 0.0, %v1238
    %v1240 = vpop.f32.mrb[0].mxu0
    %1241 = vmatprep.mubr.f32.mxu0 0.0
    %1242 = vmatmul.mubr.f32.gmra.mrb[0].mxu0 %v954
    %v1243 = vpop.f32.mrb[0].mxu0
    %v1244 = vadd.f32 0.0, %v1243
    %v1245 = vpop.f32.mrb[0].mxu0
    %1246 = vmatprep.mubr.f32.mxu0 0.0
    %1247 = vmatmul.mubr.f32.gmra.mrb[0].mxu0 %v957
    %v1248 = vpop.f32.mrb[0].mxu0
    %v1249 = vadd.f32 0.0, %v1248
    %v1250 = vpop.f32.mrb[0].mxu0
    %1251 = vmatprep.mubr.f32.mxu0 0.0
    %1252 = vmatmul.mubr.f32.gmra.mrb[0].mxu0 %v960
    %v1253 = vpop.f32.mrb[0].mxu0
    %v1254 = vadd.f32 0.0, %v1253
    %v1255 = vpop.f32.mrb[0].mxu0
    %1256 = vmatprep.mubr.f32.mxu0 0.0
    %1257 = vmatmul.mubr.f32.gmra.mrb[0].mxu0 %v963
    %v1258 = vpop.f32.mrb[0].mxu0
    %v1259 = vadd.f32 0.0, %v1258
    %v1260 = vpop.f32.mrb[0].mxu0
    %1261 = vmatprep.mubr.f32.mxu0 0.0
    %1262 = vmatmul.mubr.f32.gmra.mrb[0].mxu0 %v966
    %v1263 = vpop.f32.mrb[0].mxu0
    %v1264 = vadd.f32 0.0, %v1263
    %v1265 = vpop.f32.mrb[0].mxu0
    %1266 = vmatprep.mubr.f32.mxu0 0.0
    %1267 = vmatmul.mubr.f32.gmra.mrb[0].mxu0 %v969
    %v1268 = vpop.f32.mrb[0].mxu0
    %v1269 = vadd.f32 0.0, %v1268
    %v1270 = vpop.f32.mrb[0].mxu0
    %1271 = vmatprep.mubr.f32.mxu0 0.0
    %1272 = vmatmul.mubr.f32.gmra.mrb[0].mxu0 %v972
    %v1273 = vpop.f32.mrb[0].mxu0
    %v1274 = vadd.f32 0.0, %v1273
    %v1275 = vpop.f32.mrb[0].mxu0
    %1276 = vmatprep.mubr.f32.mxu0 0.0
    %1277 = vmatmul.mubr.f32.gmra.mrb[0].mxu0 %v975
    %v1278 = vpop.f32.mrb[0].mxu0
    %v1279 = vadd.f32 0.0, %v1278
    %v1280 = vpop.f32.mrb[0].mxu0
    %1281 = vmatprep.mubr.f32.mxu0 0.0
    %1282 = vmatmul.mubr.f32.gmra.mrb[0].mxu0 %v978
    %v1283 = vpop.f32.mrb[0].mxu0
    %v1284 = vadd.f32 0.0, %v1283
    %v1285 = vpop.f32.mrb[0].mxu0
    %1286 = vmatprep.mubr.f32.mxu0 0.0
    %1287 = vmatmul.mubr.f32.gmra.mrb[0].mxu0 %v981
    %v1288 = vpop.f32.mrb[0].mxu0
    %v1289 = vadd.f32 0.0, %v1288
    %v1290 = vpop.f32.mrb[0].mxu0
    %1291 = vmatprep.mubr.f32.mxu0 0.0
    %1292 = vmatmul.mubr.f32.gmra.mrb[0].mxu0 %v984
    %v1293 = vpop.f32.mrb[0].mxu0
    %v1294 = vadd.f32 0.0, %v1293
    %v1295 = vpop.f32.mrb[0].mxu0
    %1296 = vmatprep.mubr.f32.mxu0 0.0
    %1297 = vmatmul.mubr.f32.gmra.mrb[0].mxu0 %v987
    %v1298 = vpop.f32.mrb[0].mxu0
    %v1299 = vadd.f32 0.0, %v1298
    %v1300 = vpop.f32.mrb[0].mxu0
    %1301 = vmatprep.mubr.f32.mxu0 0.0
    %1302 = vmatmul.mubr.f32.gmra.mrb[0].mxu0 %v990
    %v1303 = vpop.f32.mrb[0].mxu0
    %v1304 = vadd.f32 0.0, %v1303
    %v1305 = vpop.f32.mrb[0].mxu0
    %1306 = vmatprep.mubr.f32.mxu0 0.0
    %1307 = vmatmul.mubr.f32.gmra.mrb[0].mxu0 %v993
    %v1308 = vpop.f32.mrb[0].mxu0
    %v1309 = vadd.f32 0.0, %v1308
    %v1310 = vpop.f32.mrb[0].mxu0
    %1311 = vmatprep.mubr.f32.mxu0 0.0
    %1312 = vmatmul.mubr.f32.gmra.mrb[0].mxu0 %v996
    %v1313 = vpop.f32.mrb[0].mxu0
    %v1314 = vadd.f32 0.0, %v1313
    %v1315 = vpop.f32.mrb[0].mxu0
    %1316 = vmatprep.mubr.f32.mxu0 0.0
    %1317 = vmatmul.mubr.f32.gmra.mrb[0].mxu0 %v999
    %v1318 = vpop.f32.mrb[0].mxu0
    %v1319 = vadd.f32 0.0, %v1318
    %v1320 = vpop.f32.mrb[0].mxu0
    %1321 = vmatprep.mubr.f32.mxu0 0.0
    %1322 = vmatmul.mubr.f32.gmra.mrb[0].mxu0 %v1002
    %v1323 = vpop.f32.mrb[0].mxu0
    %v1324 = vadd.f32 0.0, %v1323
    %v1325 = vpop.f32.mrb[0].mxu0
    %1326 = vmatprep.mubr.f32.mxu0 0.0
    %1327 = vmatmul.mubr.f32.gmra.mrb[0].mxu0 %v1005
    %v1328 = vpop.f32.mrb[0].mxu0
    %v1329 = vadd.f32 0.0, %v1328
    %v1330 = vpop.f32.mrb[0].mxu0
    %1331 = vmatprep.mubr.f32.mxu0 0.0
    %1332 = vmatmul.mubr.f32.gmra.mrb[0].mxu0 %v1008
    %v1333 = vpop.f32.mrb[0].mxu0
    %v1334 = vadd.f32 0.0, %v1333
    %v1335 = vpop.f32.mrb[0].mxu0
    %1336 = vmatprep.mubr.f32.mxu0 0.0
    %1337 = vmatmul.mubr.f32.gmra.mrb[0].mxu0 %v1011
    %v1338 = vpop.f32.mrb[0].mxu0
    %v1339 = vadd.f32 0.0, %v1338
    %v1340 = vpop.f32.mrb[0].mxu0
    %1341 = vmatprep.mubr.f32.mxu0 0.0
    %1342 = vmatmul.mubr.f32.gmra.mrb[0].mxu0 %v1014
    %v1343 = vpop.f32.mrb[0].mxu0
    %v1344 = vadd.f32 0.0, %v1343
    %v1345 = vpop.f32.mrb[0].mxu0
    %1346 = vmatprep.mubr.f32.mxu0 0.0
    %1347 = vmatmul.mubr.f32.gmra.mrb[0].mxu0 %v1017
    %v1348 = vpop.f32.mrb[0].mxu0
    %v1349 = vadd.f32 0.0, %v1348
    %v1350 = vpop.f32.mrb[0].mxu0
    %1351 = vmatprep.mubr.f32.mxu0 0.0
    %1352 = vmatmul.mubr.f32.gmra.mrb[0].mxu0 %v1020
    %v1353 = vpop.f32.mrb[0].mxu0
    %v1354 = vadd.f32 0.0, %v1353
    %v1355 = vpop.f32.mrb[0].mxu0
    %1356 = vmatprep.mubr.f32.mxu0 0.0
    %1357 = vmatmul.mubr.f32.gmra.mrb[0].mxu0 %v1023
    %v1358 = vpop.f32.mrb[0].mxu0
    %v1359 = vadd.f32 0.0, %v1358
    %v1360 = vpop.f32.mrb[0].mxu0
    %1361 = vmatprep.mubr.f32.mxu0 0.0
    %1362 = vmatmul.mubr.f32.gmra.mrb[0].mxu0 %v1026
    %v1363 = vpop.f32.mrb[0].mxu0
    %v1364 = vadd.f32 0.0, %v1363
    %v1365 = vpop.f32.mrb[0].mxu0
    %1366 = vmatprep.mubr.f32.mxu0 0.0
    %1367 = vmatmul.mubr.f32.gmra.mrb[0].mxu0 %v1029
    %v1368 = vpop.f32.mrb[0].mxu0
    %v1369 = vadd.f32 0.0, %v1368
    %v1370 = vpop.f32.mrb[0].mxu0
    %1371 = vmatprep.mubr.f32.mxu0 0.0
    %1372 = vmatmul.mubr.f32.gmra.mrb[0].mxu0 %v1032
    %v1373 = vpop.f32.mrb[0].mxu0
    %v1374 = vadd.f32 0.0, %v1373
    %v1375 = vpop.f32.mrb[0].mxu0
    %1376 = vmatprep.mubr.f32.mxu0 0.0
    %1377 = vmatmul.mubr.f32.gmra.mrb[0].mxu0 %v1035
    %v1378 = vpop.f32.mrb[0].mxu0
    %v1379 = vadd.f32 0.0, %v1378
    %v1380 = vpop.f32.mrb[0].mxu0
    %1381 = vmatprep.mubr.f32.mxu0 0.0
    %1382 = vmatmul.mubr.f32.gmra.mrb[0].mxu0 %v1038
    %v1383 = vpop.f32.mrb[0].mxu0
    %v1384 = vadd.f32 0.0, %v1383
    %v1385 = vpop.f32.mrb[0].mxu0
    %1386 = vmatprep.mubr.f32.mxu0 0.0
    %1387 = vmatmul.mubr.f32.gmra.mrb[0].mxu0 %v1041
    %v1388 = vpop.f32.mrb[0].mxu0
    %v1389 = vadd.f32 0.0, %v1388
    %v1390 = vpop.f32.mrb[0].mxu0
    %1391 = vmatprep.mubr.f32.mxu0 0.0
    %1392 = vmatmul.mubr.f32.gmra.mrb[0].mxu0 %v1044
    %v1393 = vpop.f32.mrb[0].mxu0
    %v1394 = vadd.f32 0.0, %v1393
    %v1395 = vpop.f32.mrb[0].mxu0
    %1396 = vmatprep.mubr.f32.mxu0 0.0
    %1397 = vmatmul.mubr.f32.gmra.mrb[0].mxu0 %v1047
    %v1398 = vpop.f32.mrb[0].mxu0
    %v1399 = vadd.f32 0.0, %v1398
    %v1400 = vpop.f32.mrb[0].mxu0
    %1401 = vmatprep.mubr.f32.mxu0 0.0
    %1402 = vmatmul.mubr.f32.gmra.mrb[0].mxu0 %v1050
    %v1403 = vpop.f32.mrb[0].mxu0
    %v1404 = vadd.f32 0.0, %v1403
    %v1405 = vpop.f32.mrb[0].mxu0
    %1406 = vmatprep.mubr.f32.mxu0 0.0
    %1407 = vmatmul.mubr.f32.gmra.mrb[0].mxu0 %v1053
    %v1408 = vpop.f32.mrb[0].mxu0
    %v1409 = vadd.f32 0.0, %v1408
    %v1410 = vpop.f32.mrb[0].mxu0
    %1411 = vmatprep.mubr.f32.mxu0 0.0
    %1412 = vmatmul.mubr.f32.gmra.mrb[0].mxu0 %v1056
    %v1413 = vpop.f32.mrb[0].mxu0
    %v1414 = vadd.f32 0.0, %v1413
    %v1415 = vpop.f32.mrb[0].mxu0
    %1416 = vmatprep.mubr.f32.mxu0 0.0
    %1417 = vmatmul.mubr.f32.gmra.mrb[0].mxu0 %v1059
    %v1418 = vpop.f32.mrb[0].mxu0
    %v1419 = vadd.f32 0.0, %v1418
    %v1420 = vpop.f32.mrb[0].mxu0
    %1421 = vmatprep.mubr.f32.mxu0 0.0
    %1422 = vmatmul.mubr.f32.gmra.mrb[0].mxu0 %v1062
    %v1423 = vpop.f32.mrb[0].mxu0
    %v1424 = vadd.f32 0.0, %v1423
    %v1425 = vpop.f32.mrb[0].mxu0
    %1426 = vmatprep.mubr.f32.mxu0 0.0
    %1427 = vmatmul.mubr.f32.gmra.mrb[0].mxu0 %v1065
    %v1428 = vpop.f32.mrb[0].mxu0
    %v1429 = vadd.f32 0.0, %v1428
    %v1430 = vpop.f32.mrb[0].mxu0
    %1431 = vmatprep.mubr.f32.mxu0 0.0
    %1432 = vmatmul.mubr.f32.gmra.mrb[0].mxu0 %v1068
    %v1433 = vpop.f32.mrb[0].mxu0
    %v1434 = vadd.f32 0.0, %v1433
    %v1435 = vpop.f32.mrb[0].mxu0
    %1436 = vmatprep.mubr.f32.mxu0 0.0
    %1437 = vmatmul.mubr.f32.gmra.mrb[0].mxu0 %v1071
    %v1438 = vpop.f32.mrb[0].mxu0
    %v1439 = vadd.f32 0.0, %v1438
    %v1440 = vpop.f32.mrb[0].mxu0
    %1441 = vmatprep.mubr.f32.mxu0 0.0
    %1442 = vmatmul.mubr.f32.gmra.mrb[0].mxu0 %v1074
    %v1443 = vpop.f32.mrb[0].mxu0
    %v1444 = vadd.f32 0.0, %v1443
    %v1445 = vpop.f32.mrb[0].mxu0
    %1446 = vmatprep.mubr.f32.mxu0 0.0
    %1447 = vmatmul.mubr.f32.gmra.mrb[0].mxu0 %v1077
    %v1448 = vpop.f32.mrb[0].mxu0
    %v1449 = vadd.f32 0.0, %v1448
    %v1450 = vpop.f32.mrb[0].mxu0
    %1451 = vmatprep.mubr.f32.mxu0 0.0
    %1452 = vmatmul.mubr.f32.gmra.mrb[0].mxu0 %v1080
    %v1453 = vpop.f32.mrb[0].mxu0
    %v1454 = vadd.f32 0.0, %v1453
    %v1455 = vpop.f32.mrb[0].mxu0
    %1456 = vmatprep.mubr.f32.mxu0 0.0
    %1457 = vmatmul.mubr.f32.gmra.mrb[0].mxu0 %v1083
    %v1458 = vpop.f32.mrb[0].mxu0
    %v1459 = vadd.f32 0.0, %v1458
    %v1460 = vpop.f32.mrb[0].mxu0
    %1461 = vmatprep.mubr.f32.mxu0 0.0
    %1462 = vmatmul.mubr.f32.gmra.mrb[0].mxu0 %v1086
    %v1463 = vpop.f32.mrb[0].mxu0
    %v1464 = vadd.f32 0.0, %v1463
    %v1465 = vpop.f32.mrb[0].mxu0
    %1466 = vmatprep.mubr.f32.mxu0 0.0
    %1467 = vmatmul.mubr.f32.gmra.mrb[0].mxu0 %v1089
    %v1468 = vpop.f32.mrb[0].mxu0
    %v1469 = vadd.f32 0.0, %v1468
    %v1470 = vpop.f32.mrb[0].mxu0
    %1471 = vmatprep.mubr.f32.mxu0 0.0
    %1472 = vmatmul.mubr.f32.gmra.mrb[0].mxu0 %v1092
    %v1473 = vpop.f32.mrb[0].mxu0
    %v1474 = vadd.f32 0.0, %v1473
    %v1475 = vpop.f32.mrb[0].mxu0
    %1476 = vmatprep.mubr.f32.mxu0 0.0
    %1477 = vmatmul.mubr.f32.gmra.mrb[0].mxu0 %v1095
    %v1478 = vpop.f32.mrb[0].mxu0
    %v1479 = vadd.f32 0.0, %v1478
    %v1480 = vpop.f32.mrb[0].mxu0
    %1481 = vdwg.mxu0
    %v1482 = vmul.f32 %v1164, -0.5
    %v1483 = vmul.f32 %v1169, -0.5
    %v1484 = vmul.f32 %v1174, -0.5
    %v1485 = vmul.f32 %v1179, -0.5
    %v1486 = vmul.f32 %v1184, -0.5
    %v1487 = vmul.f32 %v1189, -0.5
    %v1488 = vmul.f32 %v1194, -0.5
    %v1489 = vmul.f32 %v1199, -0.5
    %v1490 = vmul.f32 %v1204, -0.5
    %v1491 = vmul.f32 %v1209, -0.5
    %v1492 = vmul.f32 %v1214, -0.5
    %v1493 = vmul.f32 %v1219, -0.5
    %v1494 = vmul.f32 %v1224, -0.5
    %v1495 = vmul.f32 %v1229, -0.5
    %v1496 = vmul.f32 %v1234, -0.5
    %v1497 = vmul.f32 %v1239, -0.5
    %v1498 = vmul.f32 %v1244, -0.5
    %v1499 = vmul.f32 %v1249, -0.5
    %v1500 = vmul.f32 %v1254, -0.5
    %v1501 = vmul.f32 %v1259, -0.5
    %v1502 = vmul.f32 %v1264, -0.5
    %v1503 = vmul.f32 %v1269, -0.5
    %v1504 = vmul.f32 %v1274, -0.5
    %v1505 = vmul.f32 %v1279, -0.5
    %v1506 = vmul.f32 %v1284, -0.5
    %v1507 = vmul.f32 %v1289, -0.5
    %v1508 = vmul.f32 %v1294, -0.5
    %v1509 = vmul.f32 %v1299, -0.5
    %v1510 = vmul.f32 %v1304, -0.5
    %v1511 = vmul.f32 %v1309, -0.5
    %v1512 = vmul.f32 %v1314, -0.5
    %v1513 = vmul.f32 %v1319, -0.5
    %v1514 = vmul.f32 %v1324, -0.5
    %v1515 = vmul.f32 %v1329, -0.5
    %v1516 = vmul.f32 %v1334, -0.5
    %v1517 = vmul.f32 %v1339, -0.5
    %v1518 = vmul.f32 %v1344, -0.5
    %v1519 = vmul.f32 %v1349, -0.5
    %v1520 = vmul.f32 %v1354, -0.5
    %v1521 = vmul.f32 %v1359, -0.5
    %v1522 = vmul.f32 %v1364, -0.5
    %v1523 = vmul.f32 %v1369, -0.5
    %v1524 = vmul.f32 %v1374, -0.5
    %v1525 = vmul.f32 %v1379, -0.5
    %v1526 = vmul.f32 %v1384, -0.5
    %v1527 = vmul.f32 %v1389, -0.5
    %v1528 = vmul.f32 %v1394, -0.5
    %v1529 = vmul.f32 %v1399, -0.5
    %v1530 = vmul.f32 %v1404, -0.5
    %v1531 = vmul.f32 %v1409, -0.5
    %v1532 = vmul.f32 %v1414, -0.5
    %v1533 = vmul.f32 %v1419, -0.5
    %v1534 = vmul.f32 %v1424, -0.5
    %v1535 = vmul.f32 %v1429, -0.5
    %v1536 = vmul.f32 %v1434, -0.5
    %v1537 = vmul.f32 %v1439, -0.5
    %v1538 = vmul.f32 %v1444, -0.5
    %v1539 = vmul.f32 %v1449, -0.5
    %v1540 = vmul.f32 %v1454, -0.5
    %v1541 = vmul.f32 %v1459, -0.5
    %v1542 = vmul.f32 %v1464, -0.5
    %v1543 = vmul.f32 %v1469, -0.5
    %v1544 = vmul.f32 %v1474, -0.5
    %v1545 = vmul.f32 %v1479, -0.5
    %v1546 = vmul.f32 %v1482, 1.442695
    %v1547 = vpow.pop %v1546
    %v1548 = vmul.f32 %v1483, 1.442695
    %v1549 = vpow.pop %v1548
    %v1550 = vmul.f32 %v1484, 1.442695
    %v1551 = vpow.pop %v1550
    %v1552 = vmul.f32 %v1485, 1.442695
    %v1553 = vpow.pop %v1552
    %v1554 = vmul.f32 %v1486, 1.442695
    %v1555 = vpow.pop %v1554
    %v1556 = vmul.f32 %v1487, 1.442695
    %v1557 = vpow.pop %v1556
    %v1558 = vmul.f32 %v1488, 1.442695
    %v1559 = vpow.pop %v1558
    %v1560 = vmul.f32 %v1489, 1.442695
    %v1561 = vpow.pop %v1560
    %v1562 = vmul.f32 %v1490, 1.442695
    %v1563 = vpow.pop %v1562
    %v1564 = vmul.f32 %v1491, 1.442695
    %v1565 = vpow.pop %v1564
    %v1566 = vmul.f32 %v1492, 1.442695
    %v1567 = vpow.pop %v1566
    %v1568 = vmul.f32 %v1493, 1.442695
    %v1569 = vpow.pop %v1568
    %v1570 = vmul.f32 %v1494, 1.442695
    %v1571 = vpow.pop %v1570
    %v1572 = vmul.f32 %v1495, 1.442695
    %v1573 = vpow.pop %v1572
    %v1574 = vmul.f32 %v1496, 1.442695
    %v1575 = vpow.pop %v1574
    %v1576 = vmul.f32 %v1497, 1.442695
    %v1577 = vpow.pop %v1576
    %v1578 = vmul.f32 %v1498, 1.442695
    %v1579 = vpow.pop %v1578
    %v1580 = vmul.f32 %v1499, 1.442695
    %v1581 = vpow.pop %v1580
    %v1582 = vmul.f32 %v1500, 1.442695
    %v1583 = vpow.pop %v1582
    %v1584 = vmul.f32 %v1501, 1.442695
    %v1585 = vpow.pop %v1584
    %v1586 = vmul.f32 %v1502, 1.442695
    %v1587 = vpow.pop %v1586
    %v1588 = vmul.f32 %v1503, 1.442695
    %v1589 = vpow.pop %v1588
    %v1590 = vmul.f32 %v1504, 1.442695
    %v1591 = vpow.pop %v1590
    %v1592 = vmul.f32 %v1505, 1.442695
    %v1593 = vpow.pop %v1592
    %v1594 = vmul.f32 %v1506, 1.442695
    %v1595 = vpow.pop %v1594
    %v1596 = vmul.f32 %v1507, 1.442695
    %v1597 = vpow.pop %v1596
    %v1598 = vmul.f32 %v1508, 1.442695
    %v1599 = vpow.pop %v1598
    %v1600 = vmul.f32 %v1509, 1.442695
    %v1601 = vpow.pop %v1600
    %v1602 = vmul.f32 %v1510, 1.442695
    %v1603 = vpow.pop %v1602
    %v1604 = vmul.f32 %v1511, 1.442695
    %v1605 = vpow.pop %v1604
    %v1606 = vmul.f32 %v1512, 1.442695
    %v1607 = vpow.pop %v1606
    %v1608 = vmul.f32 %v1513, 1.442695
    %v1609 = vpow.pop %v1608
    %v1610 = vmul.f32 %v1514, 1.442695
    %v1611 = vpow.pop %v1610
    %v1612 = vmul.f32 %v1515, 1.442695
    %v1613 = vpow.pop %v1612
    %v1614 = vmul.f32 %v1516, 1.442695
    %v1615 = vpow.pop %v1614
    %v1616 = vmul.f32 %v1517, 1.442695
    %v1617 = vpow.pop %v1616
    %v1618 = vmul.f32 %v1518, 1.442695
    %v1619 = vpow.pop %v1618
    %v1620 = vmul.f32 %v1519, 1.442695
    %v1621 = vpow.pop %v1620
    %v1622 = vmul.f32 %v1520, 1.442695
    %v1623 = vpow.pop %v1622
    %v1624 = vmul.f32 %v1521, 1.442695
    %v1625 = vpow.pop %v1624
    %v1626 = vmul.f32 %v1522, 1.442695
    %v1627 = vpow.pop %v1626
    %v1628 = vmul.f32 %v1523, 1.442695
    %v1629 = vpow.pop %v1628
    %v1630 = vmul.f32 %v1524, 1.442695
    %v1631 = vpow.pop %v1630
    %v1632 = vmul.f32 %v1525, 1.442695
    %v1633 = vpow.pop %v1632
    %v1634 = vmul.f32 %v1526, 1.442695
    %v1635 = vpow.pop %v1634
    %v1636 = vmul.f32 %v1527, 1.442695
    %v1637 = vpow.pop %v1636
    %v1638 = vmul.f32 %v1528, 1.442695
    %v1639 = vpow.pop %v1638
    %v1640 = vmul.f32 %v1529, 1.442695
    %v1641 = vpow.pop %v1640
    %v1642 = vmul.f32 %v1530, 1.442695
    %v1643 = vpow.pop %v1642
    %v1644 = vmul.f32 %v1531, 1.442695
    %v1645 = vpow.pop %v1644
    %v1646 = vmul.f32 %v1532, 1.442695
    %v1647 = vpow.pop %v1646
    %v1648 = vmul.f32 %v1533, 1.442695
    %v1649 = vpow.pop %v1648
    %v1650 = vmul.f32 %v1534, 1.442695
    %v1651 = vpow.pop %v1650
    %v1652 = vmul.f32 %v1535, 1.442695
    %v1653 = vpow.pop %v1652
    %v1654 = vmul.f32 %v1536, 1.442695
    %v1655 = vpow.pop %v1654
    %v1656 = vmul.f32 %v1537, 1.442695
    %v1657 = vpow.pop %v1656
    %v1658 = vmul.f32 %v1538, 1.442695
    %v1659 = vpow.pop %v1658
    %v1660 = vmul.f32 %v1539, 1.442695
    %v1661 = vpow.pop %v1660
    %v1662 = vmul.f32 %v1540, 1.442695
    %v1663 = vpow.pop %v1662
    %v1664 = vmul.f32 %v1541, 1.442695
    %v1665 = vpow.pop %v1664
    %v1666 = vmul.f32 %v1542, 1.442695
    %v1667 = vpow.pop %v1666
    %v1668 = vmul.f32 %v1543, 1.442695
    %v1669 = vpow.pop %v1668
    %v1670 = vmul.f32 %v1544, 1.442695
    %v1671 = vpow.pop %v1670
    %v1672 = vmul.f32 %v1545, 1.442695
    %v1673 = vpow.pop %v1672
    %v1674 = vld [vmem:[%s4] sm:$0x1]
    %v1676 = vlaneseq
    %v1677 = vshrl.u32 %v1676, 7
    %v1678 = vsub.s32 0, %v1677
    %v1679 = vrot.slane %v1674, %v1678
    %v1681 = vmul.f32 %v1547, %v1679
    %v1682 = vmul.f32 %v1549, %v1679
    %v1683 = vmul.f32 %v1551, %v1679
    %v1684 = vmul.f32 %v1553, %v1679
    %v1685 = vmul.f32 %v1555, %v1679
    %v1686 = vmul.f32 %v1557, %v1679
    %v1687 = vmul.f32 %v1559, %v1679
    %v1688 = vmul.f32 %v1561, %v1679
    %v1689 = vmul.f32 %v1563, %v1679
    %v1690 = vmul.f32 %v1565, %v1679
    %v1691 = vmul.f32 %v1567, %v1679
    %v1692 = vmul.f32 %v1569, %v1679
    %v1693 = vmul.f32 %v1571, %v1679
    %v1694 = vmul.f32 %v1573, %v1679
    %v1695 = vmul.f32 %v1575, %v1679
    %v1696 = vmul.f32 %v1577, %v1679
    %v1697 = vmul.f32 %v1579, %v1679
    %v1698 = vmul.f32 %v1581, %v1679
    %v1699 = vmul.f32 %v1583, %v1679
    %v1700 = vmul.f32 %v1585, %v1679
    %v1701 = vmul.f32 %v1587, %v1679
    %v1702 = vmul.f32 %v1589, %v1679
    %v1703 = vmul.f32 %v1591, %v1679
    %v1704 = vmul.f32 %v1593, %v1679
    %v1705 = vmul.f32 %v1595, %v1679
    %v1706 = vmul.f32 %v1597, %v1679
    %v1707 = vmul.f32 %v1599, %v1679
    %v1708 = vmul.f32 %v1601, %v1679
    %v1709 = vmul.f32 %v1603, %v1679
    %v1710 = vmul.f32 %v1605, %v1679
    %v1711 = vmul.f32 %v1607, %v1679
    %v1712 = vmul.f32 %v1609, %v1679
    %v1713 = vmul.f32 %v1611, %v1679
    %v1714 = vmul.f32 %v1613, %v1679
    %v1715 = vmul.f32 %v1615, %v1679
    %v1716 = vmul.f32 %v1617, %v1679
    %v1717 = vmul.f32 %v1619, %v1679
    %v1718 = vmul.f32 %v1621, %v1679
    %v1719 = vmul.f32 %v1623, %v1679
    %v1720 = vmul.f32 %v1625, %v1679
    %v1721 = vmul.f32 %v1627, %v1679
    %v1722 = vmul.f32 %v1629, %v1679
    %v1723 = vmul.f32 %v1631, %v1679
    %v1724 = vmul.f32 %v1633, %v1679
    %v1725 = vmul.f32 %v1635, %v1679
    %v1726 = vmul.f32 %v1637, %v1679
    %v1727 = vmul.f32 %v1639, %v1679
    %v1728 = vmul.f32 %v1641, %v1679
    %v1729 = vmul.f32 %v1643, %v1679
    %v1730 = vmul.f32 %v1645, %v1679
    %v1731 = vmul.f32 %v1647, %v1679
    %v1732 = vmul.f32 %v1649, %v1679
    %v1733 = vmul.f32 %v1651, %v1679
    %v1734 = vmul.f32 %v1653, %v1679
    %v1735 = vmul.f32 %v1655, %v1679
    %v1736 = vmul.f32 %v1657, %v1679
    %v1737 = vmul.f32 %v1659, %v1679
    %v1738 = vmul.f32 %v1661, %v1679
    %v1739 = vmul.f32 %v1663, %v1679
    %v1740 = vmul.f32 %v1665, %v1679
    %v1741 = vmul.f32 %v1667, %v1679
    %v1742 = vmul.f32 %v1669, %v1679
    %v1743 = vmul.f32 %v1671, %v1679
    %v1744 = vmul.f32 %v1673, %v1679
    %vm1745 = vcmask 31744
    %v1746 = vsel %vm1745, %v1681, 0.0
    %1747 = vadd.xlane.f32.xlu0 %v1746
    %v1748 = vpop.xlane.xlu0 %1747
    %v1749 = vsel %vm1745, %v1682, 0.0
    %1750 = vadd.xlane.f32.xlu0 %v1749
    %v1751 = vpop.xlane.xlu0 %1750
    %v1752 = vsel %vm1745, %v1683, 0.0
    %1753 = vadd.xlane.f32.xlu0 %v1752
    %v1754 = vpop.xlane.xlu0 %1753
    %v1755 = vsel %vm1745, %v1684, 0.0
    %1756 = vadd.xlane.f32.xlu0 %v1755
    %v1757 = vpop.xlane.xlu0 %1756
    %v1758 = vsel %vm1745, %v1685, 0.0
    %1759 = vadd.xlane.f32.xlu0 %v1758
    %v1760 = vpop.xlane.xlu0 %1759
    %v1761 = vsel %vm1745, %v1686, 0.0
    %1762 = vadd.xlane.f32.xlu0 %v1761
    %v1763 = vpop.xlane.xlu0 %1762
    %v1764 = vsel %vm1745, %v1687, 0.0
    %1765 = vadd.xlane.f32.xlu0 %v1764
    %v1766 = vpop.xlane.xlu0 %1765
    %v1767 = vsel %vm1745, %v1688, 0.0
    %1768 = vadd.xlane.f32.xlu0 %v1767
    %v1769 = vpop.xlane.xlu0 %1768
    %v1770 = vsel %vm1745, %v1689, 0.0
    %1771 = vadd.xlane.f32.xlu0 %v1770
    %v1772 = vpop.xlane.xlu0 %1771
    %v1773 = vsel %vm1745, %v1690, 0.0
    %1774 = vadd.xlane.f32.xlu0 %v1773
    %v1775 = vpop.xlane.xlu0 %1774
    %v1776 = vsel %vm1745, %v1691, 0.0
    %1777 = vadd.xlane.f32.xlu0 %v1776
    %v1778 = vpop.xlane.xlu0 %1777
    %v1779 = vsel %vm1745, %v1692, 0.0
    %1780 = vadd.xlane.f32.xlu0 %v1779
    %v1781 = vpop.xlane.xlu0 %1780
    %v1782 = vsel %vm1745, %v1693, 0.0
    %1783 = vadd.xlane.f32.xlu0 %v1782
    %v1784 = vpop.xlane.xlu0 %1783
    %v1785 = vsel %vm1745, %v1694, 0.0
    %1786 = vadd.xlane.f32.xlu0 %v1785
    %v1787 = vpop.xlane.xlu0 %1786
    %v1788 = vsel %vm1745, %v1695, 0.0
    %1789 = vadd.xlane.f32.xlu0 %v1788
    %v1790 = vpop.xlane.xlu0 %1789
    %v1791 = vsel %vm1745, %v1696, 0.0
    %1792 = vadd.xlane.f32.xlu0 %v1791
    %v1793 = vpop.xlane.xlu0 %1792
    %v1794 = vsel %vm1745, %v1697, 0.0
    %1795 = vadd.xlane.f32.xlu0 %v1794
    %v1796 = vpop.xlane.xlu0 %1795
    %v1797 = vsel %vm1745, %v1698, 0.0
    %1798 = vadd.xlane.f32.xlu0 %v1797
    %v1799 = vpop.xlane.xlu0 %1798
    %v1800 = vsel %vm1745, %v1699, 0.0
    %1801 = vadd.xlane.f32.xlu0 %v1800
    %v1802 = vpop.xlane.xlu0 %1801
    %v1803 = vsel %vm1745, %v1700, 0.0
    %1804 = vadd.xlane.f32.xlu0 %v1803
    %v1805 = vpop.xlane.xlu0 %1804
    %v1806 = vsel %vm1745, %v1701, 0.0
    %1807 = vadd.xlane.f32.xlu0 %v1806
    %v1808 = vpop.xlane.xlu0 %1807
    %v1809 = vsel %vm1745, %v1702, 0.0
    %1810 = vadd.xlane.f32.xlu0 %v1809
    %v1811 = vpop.xlane.xlu0 %1810
    %v1812 = vsel %vm1745, %v1703, 0.0
    %1813 = vadd.xlane.f32.xlu0 %v1812
    %v1814 = vpop.xlane.xlu0 %1813
    %v1815 = vsel %vm1745, %v1704, 0.0
    %1816 = vadd.xlane.f32.xlu0 %v1815
    %v1817 = vpop.xlane.xlu0 %1816
    %v1818 = vsel %vm1745, %v1705, 0.0
    %1819 = vadd.xlane.f32.xlu0 %v1818
    %v1820 = vpop.xlane.xlu0 %1819
    %v1821 = vsel %vm1745, %v1706, 0.0
    %1822 = vadd.xlane.f32.xlu0 %v1821
    %v1823 = vpop.xlane.xlu0 %1822
    %v1824 = vsel %vm1745, %v1707, 0.0
    %1825 = vadd.xlane.f32.xlu0 %v1824
    %v1826 = vpop.xlane.xlu0 %1825
    %v1827 = vsel %vm1745, %v1708, 0.0
    %1828 = vadd.xlane.f32.xlu0 %v1827
    %v1829 = vpop.xlane.xlu0 %1828
    %v1830 = vsel %vm1745, %v1709, 0.0
    %1831 = vadd.xlane.f32.xlu0 %v1830
    %v1832 = vpop.xlane.xlu0 %1831
    %v1833 = vsel %vm1745, %v1710, 0.0
    %1834 = vadd.xlane.f32.xlu0 %v1833
    %v1835 = vpop.xlane.xlu0 %1834
    %v1836 = vsel %vm1745, %v1711, 0.0
    %1837 = vadd.xlane.f32.xlu0 %v1836
    %v1838 = vpop.xlane.xlu0 %1837
    %v1839 = vsel %vm1745, %v1712, 0.0
    %1840 = vadd.xlane.f32.xlu0 %v1839
    %v1841 = vpop.xlane.xlu0 %1840
    %v1842 = vsel %vm1745, %v1713, 0.0
    %1843 = vadd.xlane.f32.xlu0 %v1842
    %v1844 = vpop.xlane.xlu0 %1843
    %v1845 = vsel %vm1745, %v1714, 0.0
    %1846 = vadd.xlane.f32.xlu0 %v1845
    %v1847 = vpop.xlane.xlu0 %1846
    %v1848 = vsel %vm1745, %v1715, 0.0
    %1849 = vadd.xlane.f32.xlu0 %v1848
    %v1850 = vpop.xlane.xlu0 %1849
    %v1851 = vsel %vm1745, %v1716, 0.0
    %1852 = vadd.xlane.f32.xlu0 %v1851
    %v1853 = vpop.xlane.xlu0 %1852
    %v1854 = vsel %vm1745, %v1717, 0.0
    %1855 = vadd.xlane.f32.xlu0 %v1854
    %v1856 = vpop.xlane.xlu0 %1855
    %v1857 = vsel %vm1745, %v1718, 0.0
    %1858 = vadd.xlane.f32.xlu0 %v1857
    %v1859 = vpop.xlane.xlu0 %1858
    %v1860 = vsel %vm1745, %v1719, 0.0
    %1861 = vadd.xlane.f32.xlu0 %v1860
    %v1862 = vpop.xlane.xlu0 %1861
    %v1863 = vsel %vm1745, %v1720, 0.0
    %1864 = vadd.xlane.f32.xlu0 %v1863
    %v1865 = vpop.xlane.xlu0 %1864
    %v1866 = vsel %vm1745, %v1721, 0.0
    %1867 = vadd.xlane.f32.xlu0 %v1866
    %v1868 = vpop.xlane.xlu0 %1867
    %v1869 = vsel %vm1745, %v1722, 0.0
    %1870 = vadd.xlane.f32.xlu0 %v1869
    %v1871 = vpop.xlane.xlu0 %1870
    %v1872 = vsel %vm1745, %v1723, 0.0
    %1873 = vadd.xlane.f32.xlu0 %v1872
    %v1874 = vpop.xlane.xlu0 %1873
    %v1875 = vsel %vm1745, %v1724, 0.0
    %1876 = vadd.xlane.f32.xlu0 %v1875
    %v1877 = vpop.xlane.xlu0 %1876
    %v1878 = vsel %vm1745, %v1725, 0.0
    %1879 = vadd.xlane.f32.xlu0 %v1878
    %v1880 = vpop.xlane.xlu0 %1879
    %v1881 = vsel %vm1745, %v1726, 0.0
    %1882 = vadd.xlane.f32.xlu0 %v1881
    %v1883 = vpop.xlane.xlu0 %1882
    %v1884 = vsel %vm1745, %v1727, 0.0
    %1885 = vadd.xlane.f32.xlu0 %v1884
    %v1886 = vpop.xlane.xlu0 %1885
    %v1887 = vsel %vm1745, %v1728, 0.0
    %1888 = vadd.xlane.f32.xlu0 %v1887
    %v1889 = vpop.xlane.xlu0 %1888
    %v1890 = vsel %vm1745, %v1729, 0.0
    %1891 = vadd.xlane.f32.xlu0 %v1890
    %v1892 = vpop.xlane.xlu0 %1891
    %v1893 = vsel %vm1745, %v1730, 0.0
    %1894 = vadd.xlane.f32.xlu0 %v1893
    %v1895 = vpop.xlane.xlu0 %1894
    %v1896 = vsel %vm1745, %v1731, 0.0
    %1897 = vadd.xlane.f32.xlu0 %v1896
    %v1898 = vpop.xlane.xlu0 %1897
    %v1899 = vsel %vm1745, %v1732, 0.0
    %1900 = vadd.xlane.f32.xlu0 %v1899
    %v1901 = vpop.xlane.xlu0 %1900
    %v1902 = vsel %vm1745, %v1733, 0.0
    %1903 = vadd.xlane.f32.xlu0 %v1902
    %v1904 = vpop.xlane.xlu0 %1903
    %v1905 = vsel %vm1745, %v1734, 0.0
    %1906 = vadd.xlane.f32.xlu0 %v1905
    %v1907 = vpop.xlane.xlu0 %1906
    %v1908 = vsel %vm1745, %v1735, 0.0
    %1909 = vadd.xlane.f32.xlu0 %v1908
    %v1910 = vpop.xlane.xlu0 %1909
    %v1911 = vsel %vm1745, %v1736, 0.0
    %1912 = vadd.xlane.f32.xlu0 %v1911
    %v1913 = vpop.xlane.xlu0 %1912
    %v1914 = vsel %vm1745, %v1737, 0.0
    %1915 = vadd.xlane.f32.xlu0 %v1914
    %v1916 = vpop.xlane.xlu0 %1915
    %v1917 = vsel %vm1745, %v1738, 0.0
    %1918 = vadd.xlane.f32.xlu0 %v1917
    %v1919 = vpop.xlane.xlu0 %1918
    %v1920 = vsel %vm1745, %v1739, 0.0
    %1921 = vadd.xlane.f32.xlu0 %v1920
    %v1922 = vpop.xlane.xlu0 %1921
    %v1923 = vsel %vm1745, %v1740, 0.0
    %1924 = vadd.xlane.f32.xlu0 %v1923
    %v1925 = vpop.xlane.xlu0 %1924
    %v1926 = vsel %vm1745, %v1741, 0.0
    %1927 = vadd.xlane.f32.xlu0 %v1926
    %v1928 = vpop.xlane.xlu0 %1927
    %v1929 = vsel %vm1745, %v1742, 0.0
    %1930 = vadd.xlane.f32.xlu0 %v1929
    %v1931 = vpop.xlane.xlu0 %1930
    %v1932 = vsel %vm1745, %v1743, 0.0
    %1933 = vadd.xlane.f32.xlu0 %v1932
    %v1934 = vpop.xlane.xlu0 %1933
    %v1935 = vsel %vm1745, %v1744, 0.0
    %1936 = vadd.xlane.f32.xlu0 %v1935
    %v1937 = vpop.xlane.xlu0 %1936
    %v1938 = vadd.f32 %v1748, 1e-12
    %v1939 = vadd.f32 %v1751, 1e-12
    %v1940 = vadd.f32 %v1754, 1e-12
    %v1941 = vadd.f32 %v1757, 1e-12
    %v1942 = vadd.f32 %v1760, 1e-12
    %v1943 = vadd.f32 %v1763, 1e-12
    %v1944 = vadd.f32 %v1766, 1e-12
    %v1945 = vadd.f32 %v1769, 1e-12
    %v1946 = vadd.f32 %v1772, 1e-12
    %v1947 = vadd.f32 %v1775, 1e-12
    %v1948 = vadd.f32 %v1778, 1e-12
    %v1949 = vadd.f32 %v1781, 1e-12
    %v1950 = vadd.f32 %v1784, 1e-12
    %v1951 = vadd.f32 %v1787, 1e-12
    %v1952 = vadd.f32 %v1790, 1e-12
    %v1953 = vadd.f32 %v1793, 1e-12
    %v1954 = vadd.f32 %v1796, 1e-12
    %v1955 = vadd.f32 %v1799, 1e-12
    %v1956 = vadd.f32 %v1802, 1e-12
    %v1957 = vadd.f32 %v1805, 1e-12
    %v1958 = vadd.f32 %v1808, 1e-12
    %v1959 = vadd.f32 %v1811, 1e-12
    %v1960 = vadd.f32 %v1814, 1e-12
    %v1961 = vadd.f32 %v1817, 1e-12
    %v1962 = vadd.f32 %v1820, 1e-12
    %v1963 = vadd.f32 %v1823, 1e-12
    %v1964 = vadd.f32 %v1826, 1e-12
    %v1965 = vadd.f32 %v1829, 1e-12
    %v1966 = vadd.f32 %v1832, 1e-12
    %v1967 = vadd.f32 %v1835, 1e-12
    %v1968 = vadd.f32 %v1838, 1e-12
    %v1969 = vadd.f32 %v1841, 1e-12
    %v1970 = vadd.f32 %v1844, 1e-12
    %v1971 = vadd.f32 %v1847, 1e-12
    %v1972 = vadd.f32 %v1850, 1e-12
    %v1973 = vadd.f32 %v1853, 1e-12
    %v1974 = vadd.f32 %v1856, 1e-12
    %v1975 = vadd.f32 %v1859, 1e-12
    %v1976 = vadd.f32 %v1862, 1e-12
    %v1977 = vadd.f32 %v1865, 1e-12
    %v1978 = vadd.f32 %v1868, 1e-12
    %v1979 = vadd.f32 %v1871, 1e-12
    %v1980 = vadd.f32 %v1874, 1e-12
    %v1981 = vadd.f32 %v1877, 1e-12
    %v1982 = vadd.f32 %v1880, 1e-12
    %v1983 = vadd.f32 %v1883, 1e-12
    %v1984 = vadd.f32 %v1886, 1e-12
    %v1985 = vadd.f32 %v1889, 1e-12
    %v1986 = vadd.f32 %v1892, 1e-12
    %v1987 = vadd.f32 %v1895, 1e-12
    %v1988 = vadd.f32 %v1898, 1e-12
    %v1989 = vadd.f32 %v1901, 1e-12
    %v1990 = vadd.f32 %v1904, 1e-12
    %v1991 = vadd.f32 %v1907, 1e-12
    %v1992 = vadd.f32 %v1910, 1e-12
    %v1993 = vadd.f32 %v1913, 1e-12
    %v1994 = vadd.f32 %v1916, 1e-12
    %v1995 = vadd.f32 %v1919, 1e-12
    %v1996 = vadd.f32 %v1922, 1e-12
    %v1997 = vadd.f32 %v1925, 1e-12
    %v1998 = vadd.f32 %v1928, 1e-12
    %v1999 = vadd.f32 %v1931, 1e-12
    %v2000 = vadd.f32 %v1934, 1e-12
    %v2001 = vadd.f32 %v1937, 1e-12
    %v2002 = vlog2.pop %v1938
    %v2003 = vmul.f32 %v2002, 0.6931472
    %v2004 = vlog2.pop %v1939
    %v2005 = vmul.f32 %v2004, 0.6931472
    %v2006 = vlog2.pop %v1940
    %v2007 = vmul.f32 %v2006, 0.6931472
    %v2008 = vlog2.pop %v1941
    %v2009 = vmul.f32 %v2008, 0.6931472
    %v2010 = vlog2.pop %v1942
    %v2011 = vmul.f32 %v2010, 0.6931472
    %v2012 = vlog2.pop %v1943
    %v2013 = vmul.f32 %v2012, 0.6931472
    %v2014 = vlog2.pop %v1944
    %v2015 = vmul.f32 %v2014, 0.6931472
    %v2016 = vlog2.pop %v1945
    %v2017 = vmul.f32 %v2016, 0.6931472
    %v2018 = vlog2.pop %v1946
    %v2019 = vmul.f32 %v2018, 0.6931472
    %v2020 = vlog2.pop %v1947
    %v2021 = vmul.f32 %v2020, 0.6931472
    %v2022 = vlog2.pop %v1948
    %v2023 = vmul.f32 %v2022, 0.6931472
    %v2024 = vlog2.pop %v1949
    %v2025 = vmul.f32 %v2024, 0.6931472
    %v2026 = vlog2.pop %v1950
    %v2027 = vmul.f32 %v2026, 0.6931472
    %v2028 = vlog2.pop %v1951
    %v2029 = vmul.f32 %v2028, 0.6931472
    %v2030 = vlog2.pop %v1952
    %v2031 = vmul.f32 %v2030, 0.6931472
    %v2032 = vlog2.pop %v1953
    %v2033 = vmul.f32 %v2032, 0.6931472
    %v2034 = vlog2.pop %v1954
    %v2035 = vmul.f32 %v2034, 0.6931472
    %v2036 = vlog2.pop %v1955
    %v2037 = vmul.f32 %v2036, 0.6931472
    %v2038 = vlog2.pop %v1956
    %v2039 = vmul.f32 %v2038, 0.6931472
    %v2040 = vlog2.pop %v1957
    %v2041 = vmul.f32 %v2040, 0.6931472
    %v2042 = vlog2.pop %v1958
    %v2043 = vmul.f32 %v2042, 0.6931472
    %v2044 = vlog2.pop %v1959
    %v2045 = vmul.f32 %v2044, 0.6931472
    %v2046 = vlog2.pop %v1960
    %v2047 = vmul.f32 %v2046, 0.6931472
    %v2048 = vlog2.pop %v1961
    %v2049 = vmul.f32 %v2048, 0.6931472
    %v2050 = vlog2.pop %v1962
    %v2051 = vmul.f32 %v2050, 0.6931472
    %v2052 = vlog2.pop %v1963
    %v2053 = vmul.f32 %v2052, 0.6931472
    %v2054 = vlog2.pop %v1964
    %v2055 = vmul.f32 %v2054, 0.6931472
    %v2056 = vlog2.pop %v1965
    %v2057 = vmul.f32 %v2056, 0.6931472
    %v2058 = vlog2.pop %v1966
    %v2059 = vmul.f32 %v2058, 0.6931472
    %v2060 = vlog2.pop %v1967
    %v2061 = vmul.f32 %v2060, 0.6931472
    %v2062 = vlog2.pop %v1968
    %v2063 = vmul.f32 %v2062, 0.6931472
    %v2064 = vlog2.pop %v1969
    %v2065 = vmul.f32 %v2064, 0.6931472
    %v2066 = vlog2.pop %v1970
    %v2067 = vmul.f32 %v2066, 0.6931472
    %v2068 = vlog2.pop %v1971
    %v2069 = vmul.f32 %v2068, 0.6931472
    %v2070 = vlog2.pop %v1972
    %v2071 = vmul.f32 %v2070, 0.6931472
    %v2072 = vlog2.pop %v1973
    %v2073 = vmul.f32 %v2072, 0.6931472
    %v2074 = vlog2.pop %v1974
    %v2075 = vmul.f32 %v2074, 0.6931472
    %v2076 = vlog2.pop %v1975
    %v2077 = vmul.f32 %v2076, 0.6931472
    %v2078 = vlog2.pop %v1976
    %v2079 = vmul.f32 %v2078, 0.6931472
    %v2080 = vlog2.pop %v1977
    %v2081 = vmul.f32 %v2080, 0.6931472
    %v2082 = vlog2.pop %v1978
    %v2083 = vmul.f32 %v2082, 0.6931472
    %v2084 = vlog2.pop %v1979
    %v2085 = vmul.f32 %v2084, 0.6931472
    %v2086 = vlog2.pop %v1980
    %v2087 = vmul.f32 %v2086, 0.6931472
    %v2088 = vlog2.pop %v1981
    %v2089 = vmul.f32 %v2088, 0.6931472
    %v2090 = vlog2.pop %v1982
    %v2091 = vmul.f32 %v2090, 0.6931472
    %v2092 = vlog2.pop %v1983
    %v2093 = vmul.f32 %v2092, 0.6931472
    %v2094 = vlog2.pop %v1984
    %v2095 = vmul.f32 %v2094, 0.6931472
    %v2096 = vlog2.pop %v1985
    %v2097 = vmul.f32 %v2096, 0.6931472
    %v2098 = vlog2.pop %v1986
    %v2099 = vmul.f32 %v2098, 0.6931472
    %v2100 = vlog2.pop %v1987
    %v2101 = vmul.f32 %v2100, 0.6931472
    %v2102 = vlog2.pop %v1988
    %v2103 = vmul.f32 %v2102, 0.6931472
    %v2104 = vlog2.pop %v1989
    %v2105 = vmul.f32 %v2104, 0.6931472
    %v2106 = vlog2.pop %v1990
    %v2107 = vmul.f32 %v2106, 0.6931472
    %v2108 = vlog2.pop %v1991
    %v2109 = vmul.f32 %v2108, 0.6931472
    %v2110 = vlog2.pop %v1992
    %v2111 = vmul.f32 %v2110, 0.6931472
    %v2112 = vlog2.pop %v1993
    %v2113 = vmul.f32 %v2112, 0.6931472
    %v2114 = vlog2.pop %v1994
    %v2115 = vmul.f32 %v2114, 0.6931472
    %v2116 = vlog2.pop %v1995
    %v2117 = vmul.f32 %v2116, 0.6931472
    %v2118 = vlog2.pop %v1996
    %v2119 = vmul.f32 %v2118, 0.6931472
    %v2120 = vlog2.pop %v1997
    %v2121 = vmul.f32 %v2120, 0.6931472
    %v2122 = vlog2.pop %v1998
    %v2123 = vmul.f32 %v2122, 0.6931472
    %v2124 = vlog2.pop %v1999
    %v2125 = vmul.f32 %v2124, 0.6931472
    %v2126 = vlog2.pop %v2000
    %v2127 = vmul.f32 %v2126, 0.6931472
    %v2128 = vlog2.pop %v2001
    %v2129 = vmul.f32 %v2128, 0.6931472
    %v2130 = vsub.f32 0.0, %v2003
    %v2131 = vsub.f32 0.0, %v2005
    %v2132 = vsub.f32 0.0, %v2007
    %v2133 = vsub.f32 0.0, %v2009
    %v2134 = vsub.f32 0.0, %v2011
    %v2135 = vsub.f32 0.0, %v2013
    %v2136 = vsub.f32 0.0, %v2015
    %v2137 = vsub.f32 0.0, %v2017
    %v2138 = vsub.f32 0.0, %v2019
    %v2139 = vsub.f32 0.0, %v2021
    %v2140 = vsub.f32 0.0, %v2023
    %v2141 = vsub.f32 0.0, %v2025
    %v2142 = vsub.f32 0.0, %v2027
    %v2143 = vsub.f32 0.0, %v2029
    %v2144 = vsub.f32 0.0, %v2031
    %v2145 = vsub.f32 0.0, %v2033
    %v2146 = vsub.f32 0.0, %v2035
    %v2147 = vsub.f32 0.0, %v2037
    %v2148 = vsub.f32 0.0, %v2039
    %v2149 = vsub.f32 0.0, %v2041
    %v2150 = vsub.f32 0.0, %v2043
    %v2151 = vsub.f32 0.0, %v2045
    %v2152 = vsub.f32 0.0, %v2047
    %v2153 = vsub.f32 0.0, %v2049
    %v2154 = vsub.f32 0.0, %v2051
    %v2155 = vsub.f32 0.0, %v2053
    %v2156 = vsub.f32 0.0, %v2055
    %v2157 = vsub.f32 0.0, %v2057
    %v2158 = vsub.f32 0.0, %v2059
    %v2159 = vsub.f32 0.0, %v2061
    %v2160 = vsub.f32 0.0, %v2063
    %v2161 = vsub.f32 0.0, %v2065
    %v2162 = vsub.f32 0.0, %v2067
    %v2163 = vsub.f32 0.0, %v2069
    %v2164 = vsub.f32 0.0, %v2071
    %v2165 = vsub.f32 0.0, %v2073
    %v2166 = vsub.f32 0.0, %v2075
    %v2167 = vsub.f32 0.0, %v2077
    %v2168 = vsub.f32 0.0, %v2079
    %v2169 = vsub.f32 0.0, %v2081
    %v2170 = vsub.f32 0.0, %v2083
    %v2171 = vsub.f32 0.0, %v2085
    %v2172 = vsub.f32 0.0, %v2087
    %v2173 = vsub.f32 0.0, %v2089
    %v2174 = vsub.f32 0.0, %v2091
    %v2175 = vsub.f32 0.0, %v2093
    %v2176 = vsub.f32 0.0, %v2095
    %v2177 = vsub.f32 0.0, %v2097
    %v2178 = vsub.f32 0.0, %v2099
    %v2179 = vsub.f32 0.0, %v2101
    %v2180 = vsub.f32 0.0, %v2103
    %v2181 = vsub.f32 0.0, %v2105
    %v2182 = vsub.f32 0.0, %v2107
    %v2183 = vsub.f32 0.0, %v2109
    %v2184 = vsub.f32 0.0, %v2111
    %v2185 = vsub.f32 0.0, %v2113
    %v2186 = vsub.f32 0.0, %v2115
    %v2187 = vsub.f32 0.0, %v2117
    %v2188 = vsub.f32 0.0, %v2119
    %v2189 = vsub.f32 0.0, %v2121
    %v2190 = vsub.f32 0.0, %v2123
    %v2191 = vsub.f32 0.0, %v2125
    %v2192 = vsub.f32 0.0, %v2127
    %v2193 = vsub.f32 0.0, %v2129
    %v2194 = vld [vmem:[#allocation2] sm:$0xff]
    %v2195 = vld [vmem:[#allocation2 + $0x8] sm:$0xff]
    %v2196 = vld [vmem:[#allocation2 + $0x10] sm:$0xff]
    %v2197 = vld [vmem:[#allocation2 + $0x18] sm:$0xff]
    %v2198 = vld [vmem:[#allocation2 + $0x20] sm:$0xff]
    %v2199 = vld [vmem:[#allocation2 + $0x28] sm:$0xff]
    %v2200 = vld [vmem:[#allocation2 + $0x30] sm:$0xff]
    %v2201 = vld [vmem:[#allocation2 + $0x38] sm:$0xff]
    %v2202 = vld [vmem:[#allocation2 + $0x40] sm:$0xff]
    %v2203 = vld [vmem:[#allocation2 + $0x48] sm:$0xff]
    %v2204 = vld [vmem:[#allocation2 + $0x50] sm:$0xff]
    %v2205 = vld [vmem:[#allocation2 + $0x58] sm:$0xff]
    %v2206 = vld [vmem:[#allocation2 + $0x60] sm:$0xff]
    %v2207 = vld [vmem:[#allocation2 + $0x68] sm:$0xff]
    %v2208 = vld [vmem:[#allocation2 + $0x70] sm:$0xff]
    %v2209 = vld [vmem:[#allocation2 + $0x78] sm:$0xff]
    %v2210 = vld [vmem:[#allocation2 + $0x80] sm:$0xff]
    %v2211 = vld [vmem:[#allocation2 + $0x88] sm:$0xff]
    %v2212 = vld [vmem:[#allocation2 + $0x90] sm:$0xff]
    %v2213 = vld [vmem:[#allocation2 + $0x98] sm:$0xff]
    %v2214 = vld [vmem:[#allocation2 + $0xa0] sm:$0xff]
    %v2215 = vld [vmem:[#allocation2 + $0xa8] sm:$0xff]
    %v2216 = vld [vmem:[#allocation2 + $0xb0] sm:$0xff]
    %v2217 = vld [vmem:[#allocation2 + $0xb8] sm:$0xff]
    %v2218 = vld [vmem:[#allocation2 + $0xc0] sm:$0xff]
    %v2219 = vld [vmem:[#allocation2 + $0xc8] sm:$0xff]
    %v2220 = vld [vmem:[#allocation2 + $0xd0] sm:$0xff]
    %v2221 = vld [vmem:[#allocation2 + $0xd8] sm:$0xff]
    %v2222 = vld [vmem:[#allocation2 + $0xe0] sm:$0xff]
    %v2223 = vld [vmem:[#allocation2 + $0xe8] sm:$0xff]
    %v2224 = vld [vmem:[#allocation2 + $0xf0] sm:$0xff]
    %v2225 = vld [vmem:[#allocation2 + $0xf8] sm:$0xff]
    %v2226 = vld [vmem:[#allocation2 + $0x100] sm:$0xff]
    %v2227 = vld [vmem:[#allocation2 + $0x108] sm:$0xff]
    %v2228 = vld [vmem:[#allocation2 + $0x110] sm:$0xff]
    %v2229 = vld [vmem:[#allocation2 + $0x118] sm:$0xff]
    %v2230 = vld [vmem:[#allocation2 + $0x120] sm:$0xff]
    %v2231 = vld [vmem:[#allocation2 + $0x128] sm:$0xff]
    %v2232 = vld [vmem:[#allocation2 + $0x130] sm:$0xff]
    %v2233 = vld [vmem:[#allocation2 + $0x138] sm:$0xff]
    %v2234 = vld [vmem:[#allocation2 + $0x140] sm:$0xff]
    %v2235 = vld [vmem:[#allocation2 + $0x148] sm:$0xff]
    %v2236 = vld [vmem:[#allocation2 + $0x150] sm:$0xff]
    %v2237 = vld [vmem:[#allocation2 + $0x158] sm:$0xff]
    %v2238 = vld [vmem:[#allocation2 + $0x160] sm:$0xff]
    %v2239 = vld [vmem:[#allocation2 + $0x168] sm:$0xff]
    %v2240 = vld [vmem:[#allocation2 + $0x170] sm:$0xff]
    %v2241 = vld [vmem:[#allocation2 + $0x178] sm:$0xff]
    %v2242 = vld [vmem:[#allocation2 + $0x180] sm:$0xff]
    %v2243 = vld [vmem:[#allocation2 + $0x188] sm:$0xff]
    %v2244 = vld [vmem:[#allocation2 + $0x190] sm:$0xff]
    %v2245 = vld [vmem:[#allocation2 + $0x198] sm:$0xff]
    %v2246 = vld [vmem:[#allocation2 + $0x1a0] sm:$0xff]
    %v2247 = vld [vmem:[#allocation2 + $0x1a8] sm:$0xff]
    %v2248 = vld [vmem:[#allocation2 + $0x1b0] sm:$0xff]
    %v2249 = vld [vmem:[#allocation2 + $0x1b8] sm:$0xff]
    %v2250 = vld [vmem:[#allocation2 + $0x1c0] sm:$0xff]
    %v2251 = vld [vmem:[#allocation2 + $0x1c8] sm:$0xff]
    %v2252 = vld [vmem:[#allocation2 + $0x1d0] sm:$0xff]
    %v2253 = vld [vmem:[#allocation2 + $0x1d8] sm:$0xff]
    %v2254 = vld [vmem:[#allocation2 + $0x1e0] sm:$0xff]
    %v2255 = vld [vmem:[#allocation2 + $0x1e8] sm:$0xff]
    %v2256 = vld [vmem:[#allocation2 + $0x1f0] sm:$0xff]
    %v2257 = vld [vmem:[#allocation2 + $0x1f8] sm:$0xff]
    %v2258 = vadd.f32 %v2194, %v2130
    %v2259 = vadd.f32 %v2195, %v2131
    %v2260 = vadd.f32 %v2196, %v2132
    %v2261 = vadd.f32 %v2197, %v2133
    %v2262 = vadd.f32 %v2198, %v2134
    %v2263 = vadd.f32 %v2199, %v2135
    %v2264 = vadd.f32 %v2200, %v2136
    %v2265 = vadd.f32 %v2201, %v2137
    %v2266 = vadd.f32 %v2202, %v2138
    %v2267 = vadd.f32 %v2203, %v2139
    %v2268 = vadd.f32 %v2204, %v2140
    %v2269 = vadd.f32 %v2205, %v2141
    %v2270 = vadd.f32 %v2206, %v2142
    %v2271 = vadd.f32 %v2207, %v2143
    %v2272 = vadd.f32 %v2208, %v2144
    %v2273 = vadd.f32 %v2209, %v2145
    %v2274 = vadd.f32 %v2210, %v2146
    %v2275 = vadd.f32 %v2211, %v2147
    %v2276 = vadd.f32 %v2212, %v2148
    %v2277 = vadd.f32 %v2213, %v2149
    %v2278 = vadd.f32 %v2214, %v2150
    %v2279 = vadd.f32 %v2215, %v2151
    %v2280 = vadd.f32 %v2216, %v2152
    %v2281 = vadd.f32 %v2217, %v2153
    %v2282 = vadd.f32 %v2218, %v2154
    %v2283 = vadd.f32 %v2219, %v2155
    %v2284 = vadd.f32 %v2220, %v2156
    %v2285 = vadd.f32 %v2221, %v2157
    %v2286 = vadd.f32 %v2222, %v2158
    %v2287 = vadd.f32 %v2223, %v2159
    %v2288 = vadd.f32 %v2224, %v2160
    %v2289 = vadd.f32 %v2225, %v2161
    %v2290 = vadd.f32 %v2226, %v2162
    %v2291 = vadd.f32 %v2227, %v2163
    %v2292 = vadd.f32 %v2228, %v2164
    %v2293 = vadd.f32 %v2229, %v2165
    %v2294 = vadd.f32 %v2230, %v2166
    %v2295 = vadd.f32 %v2231, %v2167
    %v2296 = vadd.f32 %v2232, %v2168
    %v2297 = vadd.f32 %v2233, %v2169
    %v2298 = vadd.f32 %v2234, %v2170
    %v2299 = vadd.f32 %v2235, %v2171
    %v2300 = vadd.f32 %v2236, %v2172
    %v2301 = vadd.f32 %v2237, %v2173
    %v2302 = vadd.f32 %v2238, %v2174
    %v2303 = vadd.f32 %v2239, %v2175
    %v2304 = vadd.f32 %v2240, %v2176
    %v2305 = vadd.f32 %v2241, %v2177
    %v2306 = vadd.f32 %v2242, %v2178
    %v2307 = vadd.f32 %v2243, %v2179
    %v2308 = vadd.f32 %v2244, %v2180
    %v2309 = vadd.f32 %v2245, %v2181
    %v2310 = vadd.f32 %v2246, %v2182
    %v2311 = vadd.f32 %v2247, %v2183
    %v2312 = vadd.f32 %v2248, %v2184
    %v2313 = vadd.f32 %v2249, %v2185
    %v2314 = vadd.f32 %v2250, %v2186
    %v2315 = vadd.f32 %v2251, %v2187
    %v2316 = vadd.f32 %v2252, %v2188
    %v2317 = vadd.f32 %v2253, %v2189
    %v2318 = vadd.f32 %v2254, %v2190
    %v2319 = vadd.f32 %v2255, %v2191
    %v2320 = vadd.f32 %v2256, %v2192
    %v2321 = vadd.f32 %v2257, %v2193
    %vm2322 = vcmask 7168
    %2323 = vst.msk [vmem:[#allocation2] sm:$0xff] %vm2322, %v2258
    %2324 = vst.msk [vmem:[#allocation2 + $0x8] sm:$0xff] %vm2322, %v2259
    %2325 = vst.msk [vmem:[#allocation2 + $0x10] sm:$0xff] %vm2322, %v2260
    %2326 = vst.msk [vmem:[#allocation2 + $0x18] sm:$0xff] %vm2322, %v2261
    %2327 = vst.msk [vmem:[#allocation2 + $0x20] sm:$0xff] %vm2322, %v2262
    %2328 = vst.msk [vmem:[#allocation2 + $0x28] sm:$0xff] %vm2322, %v2263
    %2329 = vst.msk [vmem:[#allocation2 + $0x30] sm:$0xff] %vm2322, %v2264
    %2330 = vst.msk [vmem:[#allocation2 + $0x38] sm:$0xff] %vm2322, %v2265
    %2331 = vst.msk [vmem:[#allocation2 + $0x40] sm:$0xff] %vm2322, %v2266
    %2332 = vst.msk [vmem:[#allocation2 + $0x48] sm:$0xff] %vm2322, %v2267
    %2333 = vst.msk [vmem:[#allocation2 + $0x50] sm:$0xff] %vm2322, %v2268
    %2334 = vst.msk [vmem:[#allocation2 + $0x58] sm:$0xff] %vm2322, %v2269
    %2335 = vst.msk [vmem:[#allocation2 + $0x60] sm:$0xff] %vm2322, %v2270
    %2336 = vst.msk [vmem:[#allocation2 + $0x68] sm:$0xff] %vm2322, %v2271
    %2337 = vst.msk [vmem:[#allocation2 + $0x70] sm:$0xff] %vm2322, %v2272
    %2338 = vst.msk [vmem:[#allocation2 + $0x78] sm:$0xff] %vm2322, %v2273
    %2339 = vst.msk [vmem:[#allocation2 + $0x80] sm:$0xff] %vm2322, %v2274
    %2340 = vst.msk [vmem:[#allocation2 + $0x88] sm:$0xff] %vm2322, %v2275
    %2341 = vst.msk [vmem:[#allocation2 + $0x90] sm:$0xff] %vm2322, %v2276
    %2342 = vst.msk [vmem:[#allocation2 + $0x98] sm:$0xff] %vm2322, %v2277
    %2343 = vst.msk [vmem:[#allocation2 + $0xa0] sm:$0xff] %vm2322, %v2278
    %2344 = vst.msk [vmem:[#allocation2 + $0xa8] sm:$0xff] %vm2322, %v2279
    %2345 = vst.msk [vmem:[#allocation2 + $0xb0] sm:$0xff] %vm2322, %v2280
    %2346 = vst.msk [vmem:[#allocation2 + $0xb8] sm:$0xff] %vm2322, %v2281
    %2347 = vst.msk [vmem:[#allocation2 + $0xc0] sm:$0xff] %vm2322, %v2282
    %2348 = vst.msk [vmem:[#allocation2 + $0xc8] sm:$0xff] %vm2322, %v2283
    %2349 = vst.msk [vmem:[#allocation2 + $0xd0] sm:$0xff] %vm2322, %v2284
    %2350 = vst.msk [vmem:[#allocation2 + $0xd8] sm:$0xff] %vm2322, %v2285
    %2351 = vst.msk [vmem:[#allocation2 + $0xe0] sm:$0xff] %vm2322, %v2286
    %2352 = vst.msk [vmem:[#allocation2 + $0xe8] sm:$0xff] %vm2322, %v2287
    %2353 = vst.msk [vmem:[#allocation2 + $0xf0] sm:$0xff] %vm2322, %v2288
    %2354 = vst.msk [vmem:[#allocation2 + $0xf8] sm:$0xff] %vm2322, %v2289
    %2355 = vst.msk [vmem:[#allocation2 + $0x100] sm:$0xff] %vm2322, %v2290
    %2356 = vst.msk [vmem:[#allocation2 + $0x108] sm:$0xff] %vm2322, %v2291
    %2357 = vst.msk [vmem:[#allocation2 + $0x110] sm:$0xff] %vm2322, %v2292
    %2358 = vst.msk [vmem:[#allocation2 + $0x118] sm:$0xff] %vm2322, %v2293
    %2359 = vst.msk [vmem:[#allocation2 + $0x120] sm:$0xff] %vm2322, %v2294
    %2360 = vst.msk [vmem:[#allocation2 + $0x128] sm:$0xff] %vm2322, %v2295
    %2361 = vst.msk [vmem:[#allocation2 + $0x130] sm:$0xff] %vm2322, %v2296
    %2362 = vst.msk [vmem:[#allocation2 + $0x138] sm:$0xff] %vm2322, %v2297
    %2363 = vst.msk [vmem:[#allocation2 + $0x140] sm:$0xff] %vm2322, %v2298
    %2364 = vst.msk [vmem:[#allocation2 + $0x148] sm:$0xff] %vm2322, %v2299
    %2365 = vst.msk [vmem:[#allocation2 + $0x150] sm:$0xff] %vm2322, %v2300
    %2366 = vst.msk [vmem:[#allocation2 + $0x158] sm:$0xff] %vm2322, %v2301
    %2367 = vst.msk [vmem:[#allocation2 + $0x160] sm:$0xff] %vm2322, %v2302
    %2368 = vst.msk [vmem:[#allocation2 + $0x168] sm:$0xff] %vm2322, %v2303
    %2369 = vst.msk [vmem:[#allocation2 + $0x170] sm:$0xff] %vm2322, %v2304
    %2370 = vst.msk [vmem:[#allocation2 + $0x178] sm:$0xff] %vm2322, %v2305
    %2371 = vst.msk [vmem:[#allocation2 + $0x180] sm:$0xff] %vm2322, %v2306
    %2372 = vst.msk [vmem:[#allocation2 + $0x188] sm:$0xff] %vm2322, %v2307
    %2373 = vst.msk [vmem:[#allocation2 + $0x190] sm:$0xff] %vm2322, %v2308
    %2374 = vst.msk [vmem:[#allocation2 + $0x198] sm:$0xff] %vm2322, %v2309
    %2375 = vst.msk [vmem:[#allocation2 + $0x1a0] sm:$0xff] %vm2322, %v2310
    %2376 = vst.msk [vmem:[#allocation2 + $0x1a8] sm:$0xff] %vm2322, %v2311
    %2377 = vst.msk [vmem:[#allocation2 + $0x1b0] sm:$0xff] %vm2322, %v2312
    %2378 = vst.msk [vmem:[#allocation2 + $0x1b8] sm:$0xff] %vm2322, %v2313
    %2379 = vst.msk [vmem:[#allocation2 + $0x1c0] sm:$0xff] %vm2322, %v2314
    %2380 = vst.msk [vmem:[#allocation2 + $0x1c8] sm:$0xff] %vm2322, %v2315
    %2381 = vst.msk [vmem:[#allocation2 + $0x1d0] sm:$0xff] %vm2322, %v2316
    %2382 = vst.msk [vmem:[#allocation2 + $0x1d8] sm:$0xff] %vm2322, %v2317
    %2383 = vst.msk [vmem:[#allocation2 + $0x1e0] sm:$0xff] %vm2322, %v2318
    %2384 = vst.msk [vmem:[#allocation2 + $0x1e8] sm:$0xff] %vm2322, %v2319
    %2385 = vst.msk [vmem:[#allocation2 + $0x1f0] sm:$0xff] %vm2322, %v2320
    %2386 = vst.msk [vmem:[#allocation2 + $0x1f8] sm:$0xff] %vm2322, %v2321
    // Predicated region
    $region26: #{gmm_loss.5} parent=1 // pred_check
      %p2387 = pneg %p53
    $region27: #{gmm_loss.5} parent=1 // pred_check_branch
      %2389 = sbr.rel (%p2387) target = $region29
    $region28: #{gmm_loss.5} parent=1 // pred_region
      %v2390 = vld [vmem:[#allocation2] sm:$0xff]
      %v2391 = vld [vmem:[#allocation2 + $0x8] sm:$0xff]
      %v2392 = vld [vmem:[#allocation2 + $0x10] sm:$0xff]
      %v2393 = vld [vmem:[#allocation2 + $0x18] sm:$0xff]
      %v2394 = vld [vmem:[#allocation2 + $0x20] sm:$0xff]
      %v2395 = vld [vmem:[#allocation2 + $0x28] sm:$0xff]
      %v2396 = vld [vmem:[#allocation2 + $0x30] sm:$0xff]
      %v2397 = vld [vmem:[#allocation2 + $0x38] sm:$0xff]
      %v2398 = vld [vmem:[#allocation2 + $0x40] sm:$0xff]
      %v2399 = vld [vmem:[#allocation2 + $0x48] sm:$0xff]
      %v2400 = vld [vmem:[#allocation2 + $0x50] sm:$0xff]
      %v2401 = vld [vmem:[#allocation2 + $0x58] sm:$0xff]
      %v2402 = vld [vmem:[#allocation2 + $0x60] sm:$0xff]
      %v2403 = vld [vmem:[#allocation2 + $0x68] sm:$0xff]
      %v2404 = vld [vmem:[#allocation2 + $0x70] sm:$0xff]
      %v2405 = vld [vmem:[#allocation2 + $0x78] sm:$0xff]
      %v2406 = vld [vmem:[#allocation2 + $0x80] sm:$0xff]
      %v2407 = vld [vmem:[#allocation2 + $0x88] sm:$0xff]
      %v2408 = vld [vmem:[#allocation2 + $0x90] sm:$0xff]
      %v2409 = vld [vmem:[#allocation2 + $0x98] sm:$0xff]
      %v2410 = vld [vmem:[#allocation2 + $0xa0] sm:$0xff]
      %v2411 = vld [vmem:[#allocation2 + $0xa8] sm:$0xff]
      %v2412 = vld [vmem:[#allocation2 + $0xb0] sm:$0xff]
      %v2413 = vld [vmem:[#allocation2 + $0xb8] sm:$0xff]
      %v2414 = vld [vmem:[#allocation2 + $0xc0] sm:$0xff]
      %v2415 = vld [vmem:[#allocation2 + $0xc8] sm:$0xff]
      %v2416 = vld [vmem:[#allocation2 + $0xd0] sm:$0xff]
      %v2417 = vld [vmem:[#allocation2 + $0xd8] sm:$0xff]
      %v2418 = vld [vmem:[#allocation2 + $0xe0] sm:$0xff]
      %v2419 = vld [vmem:[#allocation2 + $0xe8] sm:$0xff]
      %v2420 = vld [vmem:[#allocation2 + $0xf0] sm:$0xff]
      %v2421 = vld [vmem:[#allocation2 + $0xf8] sm:$0xff]
      %v2422 = vld [vmem:[#allocation2 + $0x100] sm:$0xff]
      %v2423 = vld [vmem:[#allocation2 + $0x108] sm:$0xff]
      %v2424 = vld [vmem:[#allocation2 + $0x110] sm:$0xff]
      %v2425 = vld [vmem:[#allocation2 + $0x118] sm:$0xff]
      %v2426 = vld [vmem:[#allocation2 + $0x120] sm:$0xff]
      %v2427 = vld [vmem:[#allocation2 + $0x128] sm:$0xff]
      %v2428 = vld [vmem:[#allocation2 + $0x130] sm:$0xff]
      %v2429 = vld [vmem:[#allocation2 + $0x138] sm:$0xff]
      %v2430 = vld [vmem:[#allocation2 + $0x140] sm:$0xff]
      %v2431 = vld [vmem:[#allocation2 + $0x148] sm:$0xff]
      %v2432 = vld [vmem:[#allocation2 + $0x150] sm:$0xff]
      %v2433 = vld [vmem:[#allocation2 + $0x158] sm:$0xff]
      %v2434 = vld [vmem:[#allocation2 + $0x160] sm:$0xff]
      %v2435 = vld [vmem:[#allocation2 + $0x168] sm:$0xff]
      %v2436 = vld [vmem:[#allocation2 + $0x170] sm:$0xff]
      %v2437 = vld [vmem:[#allocation2 + $0x178] sm:$0xff]
      %v2438 = vld [vmem:[#allocation2 + $0x180] sm:$0xff]
      %v2439 = vld [vmem:[#allocation2 + $0x188] sm:$0xff]
      %v2440 = vld [vmem:[#allocation2 + $0x190] sm:$0xff]
      %v2441 = vld [vmem:[#allocation2 + $0x198] sm:$0xff]
      %v2442 = vld [vmem:[#allocation2 + $0x1a0] sm:$0xff]
      %v2443 = vld [vmem:[#allocation2 + $0x1a8] sm:$0xff]
      %v2444 = vld [vmem:[#allocation2 + $0x1b0] sm:$0xff]
      %v2445 = vld [vmem:[#allocation2 + $0x1b8] sm:$0xff]
      %v2446 = vld [vmem:[#allocation2 + $0x1c0] sm:$0xff]
      %v2447 = vld [vmem:[#allocation2 + $0x1c8] sm:$0xff]
      %v2448 = vld [vmem:[#allocation2 + $0x1d0] sm:$0xff]
      %v2449 = vld [vmem:[#allocation2 + $0x1d8] sm:$0xff]
      %v2450 = vld [vmem:[#allocation2 + $0x1e0] sm:$0xff]
      %v2451 = vld [vmem:[#allocation2 + $0x1e8] sm:$0xff]
      %v2452 = vld [vmem:[#allocation2 + $0x1f0] sm:$0xff]
      %v2453 = vld [vmem:[#allocation2 + $0x1f8] sm:$0xff]
      %v2454 = vsel %vm2322, %v2390, 0.0
      %v2455 = vsel %vm2322, %v2391, 0.0
      %v2456 = vadd.f32 %v2454, %v2455
      %v2457 = vsel %vm2322, %v2392, 0.0
      %v2458 = vadd.f32 %v2456, %v2457
      %v2459 = vsel %vm2322, %v2393, 0.0
      %v2460 = vadd.f32 %v2458, %v2459
      %v2461 = vsel %vm2322, %v2394, 0.0
      %v2462 = vadd.f32 %v2460, %v2461
      %v2463 = vsel %vm2322, %v2395, 0.0
      %v2464 = vadd.f32 %v2462, %v2463
      %v2465 = vsel %vm2322, %v2396, 0.0
      %v2466 = vadd.f32 %v2464, %v2465
      %v2467 = vsel %vm2322, %v2397, 0.0
      %v2468 = vadd.f32 %v2466, %v2467
      %v2469 = vsel %vm2322, %v2398, 0.0
      %v2470 = vadd.f32 %v2468, %v2469
      %v2471 = vsel %vm2322, %v2399, 0.0
      %v2472 = vadd.f32 %v2470, %v2471
      %v2473 = vsel %vm2322, %v2400, 0.0
      %v2474 = vadd.f32 %v2472, %v2473
      %v2475 = vsel %vm2322, %v2401, 0.0
      %v2476 = vadd.f32 %v2474, %v2475
      %v2477 = vsel %vm2322, %v2402, 0.0
      %v2478 = vadd.f32 %v2476, %v2477
      %v2479 = vsel %vm2322, %v2403, 0.0
      %v2480 = vadd.f32 %v2478, %v2479
      %v2481 = vsel %vm2322, %v2404, 0.0
      %v2482 = vadd.f32 %v2480, %v2481
      %v2483 = vsel %vm2322, %v2405, 0.0
      %v2484 = vadd.f32 %v2482, %v2483
      %v2485 = vsel %vm2322, %v2406, 0.0
      %v2486 = vadd.f32 %v2484, %v2485
      %v2487 = vsel %vm2322, %v2407, 0.0
      %v2488 = vadd.f32 %v2486, %v2487
      %v2489 = vsel %vm2322, %v2408, 0.0
      %v2490 = vadd.f32 %v2488, %v2489
      %v2491 = vsel %vm2322, %v2409, 0.0
      %v2492 = vadd.f32 %v2490, %v2491
      %v2493 = vsel %vm2322, %v2410, 0.0
      %v2494 = vadd.f32 %v2492, %v2493
      %v2495 = vsel %vm2322, %v2411, 0.0
      %v2496 = vadd.f32 %v2494, %v2495
      %v2497 = vsel %vm2322, %v2412, 0.0
      %v2498 = vadd.f32 %v2496, %v2497
      %v2499 = vsel %vm2322, %v2413, 0.0
      %v2500 = vadd.f32 %v2498, %v2499
      %v2501 = vsel %vm2322, %v2414, 0.0
      %v2502 = vadd.f32 %v2500, %v2501
      %v2503 = vsel %vm2322, %v2415, 0.0
      %v2504 = vadd.f32 %v2502, %v2503
      %v2505 = vsel %vm2322, %v2416, 0.0
      %v2506 = vadd.f32 %v2504, %v2505
      %v2507 = vsel %vm2322, %v2417, 0.0
      %v2508 = vadd.f32 %v2506, %v2507
      %v2509 = vsel %vm2322, %v2418, 0.0
      %v2510 = vadd.f32 %v2508, %v2509
      %v2511 = vsel %vm2322, %v2419, 0.0
      %v2512 = vadd.f32 %v2510, %v2511
      %v2513 = vsel %vm2322, %v2420, 0.0
      %v2514 = vadd.f32 %v2512, %v2513
      %v2515 = vsel %vm2322, %v2421, 0.0
      %v2516 = vadd.f32 %v2514, %v2515
      %v2517 = vsel %vm2322, %v2422, 0.0
      %v2518 = vadd.f32 %v2516, %v2517
      %v2519 = vsel %vm2322, %v2423, 0.0
      %v2520 = vadd.f32 %v2518, %v2519
      %v2521 = vsel %vm2322, %v2424, 0.0
      %v2522 = vadd.f32 %v2520, %v2521
      %v2523 = vsel %vm2322, %v2425, 0.0
      %v2524 = vadd.f32 %v2522, %v2523
      %v2525 = vsel %vm2322, %v2426, 0.0
      %v2526 = vadd.f32 %v2524, %v2525
      %v2527 = vsel %vm2322, %v2427, 0.0
      %v2528 = vadd.f32 %v2526, %v2527
      %v2529 = vsel %vm2322, %v2428, 0.0
      %v2530 = vadd.f32 %v2528, %v2529
      %v2531 = vsel %vm2322, %v2429, 0.0
      %v2532 = vadd.f32 %v2530, %v2531
      %v2533 = vsel %vm2322, %v2430, 0.0
      %v2534 = vadd.f32 %v2532, %v2533
      %v2535 = vsel %vm2322, %v2431, 0.0
      %v2536 = vadd.f32 %v2534, %v2535
      %v2537 = vsel %vm2322, %v2432, 0.0
      %v2538 = vadd.f32 %v2536, %v2537
      %v2539 = vsel %vm2322, %v2433, 0.0
      %v2540 = vadd.f32 %v2538, %v2539
      %v2541 = vsel %vm2322, %v2434, 0.0
      %v2542 = vadd.f32 %v2540, %v2541
      %v2543 = vsel %vm2322, %v2435, 0.0
      %v2544 = vadd.f32 %v2542, %v2543
      %v2545 = vsel %vm2322, %v2436, 0.0
      %v2546 = vadd.f32 %v2544, %v2545
      %v2547 = vsel %vm2322, %v2437, 0.0
      %v2548 = vadd.f32 %v2546, %v2547
      %v2549 = vsel %vm2322, %v2438, 0.0
      %v2550 = vadd.f32 %v2548, %v2549
      %v2551 = vsel %vm2322, %v2439, 0.0
      %v2552 = vadd.f32 %v2550, %v2551
      %v2553 = vsel %vm2322, %v2440, 0.0
      %v2554 = vadd.f32 %v2552, %v2553
      %v2555 = vsel %vm2322, %v2441, 0.0
      %v2556 = vadd.f32 %v2554, %v2555
      %v2557 = vsel %vm2322, %v2442, 0.0
      %v2558 = vadd.f32 %v2556, %v2557
      %v2559 = vsel %vm2322, %v2443, 0.0
      %v2560 = vadd.f32 %v2558, %v2559
      %v2561 = vsel %vm2322, %v2444, 0.0
      %v2562 = vadd.f32 %v2560, %v2561
      %v2563 = vsel %vm2322, %v2445, 0.0
      %v2564 = vadd.f32 %v2562, %v2563
      %v2565 = vsel %vm2322, %v2446, 0.0
      %v2566 = vadd.f32 %v2564, %v2565
      %v2567 = vsel %vm2322, %v2447, 0.0
      %v2568 = vadd.f32 %v2566, %v2567
      %v2569 = vsel %vm2322, %v2448, 0.0
      %v2570 = vadd.f32 %v2568, %v2569
      %v2571 = vsel %vm2322, %v2449, 0.0
      %v2572 = vadd.f32 %v2570, %v2571
      %v2573 = vsel %vm2322, %v2450, 0.0
      %v2574 = vadd.f32 %v2572, %v2573
      %v2575 = vsel %vm2322, %v2451, 0.0
      %v2576 = vadd.f32 %v2574, %v2575
      %v2577 = vsel %vm2322, %v2452, 0.0
      %v2578 = vadd.f32 %v2576, %v2577
      %v2579 = vsel %vm2322, %v2453, 0.0
      %v2580 = vadd.f32 %v2578, %v2579
      %2581 = vadd.xlane.f32.xlu0 %v2580
      %v2582 = vpop.xlane.xlu0 %2581
      %v2583 = vrot.slane %v2582, 4
      %v2584 = vadd.f32 %v2582, %v2583
      %v2585 = vrot.slane %v2584, 2
      %v2586 = vadd.f32 %v2584, %v2585
      %v2587 = vrot.slane %v2586, 1
      %v2588 = vadd.f32 %v2586, %v2587
      %s2589 = vtos %v2588
      %v2590 = vstv %s2589
      %v2591 = vadd.f32 %v2590, 0.0
      %vm2592 = vcmask 0
      %2593 = vst.msk [vmem:[#allocation3] sm:$0x1] %vm2592, %v2591
    $region29: #{gmm_loss.5} parent=1 // pred_fallthru
      _
    // Predicated region
    $region30: #{gmm_loss.5} parent=1 // pred_check
      _
    $region31: #{gmm_loss.5} parent=1 // pred_check_branch
      %2595 = sbr.rel (0) target = $region33
    $region32: #{gmm_loss.5} parent=1 // pred_region
      %s2597 = ssub.s32 16, 16
      %2598 = vsyncadd [#allocation4], %s2597
      %s2600 = sshll.u32 [#allocation3], 4
      %s2601 = int_to_ptr.vmem [resolvable:$true] %s2600
      %2603 = dma.vmem_to_hbm [thread:$0]  %s2601, 16, %s5, [#allocation4]
    $region33: #{gmm_loss.5} parent=1 // pred_fallthru
      _
    // Predicated region
    $region34: #{gmm_loss.5} parent=1 // pred_check
      _
    $region35: #{gmm_loss.5} parent=1 // pred_check_branch
      %2605 = sbr.rel (0) target = $region37
    $region36: #{gmm_loss.5} parent=1 // pred_region
      %2606 = dma.done [#allocation4], 16
    $region37: #{gmm_loss.5} parent=1 // pred_fallthru
      _
    %2607 = vsyncpa [#allocation4], 1

</llo_original>
